<compile_context>
chip_gen: v5e
topology: v5e:2x2
jax: 0.10.0
libtpu: 0.0.40
codegen_flags: <defaults>
</compile_context>

<pallas_src>
import functools
import math
from typing import NamedTuple

import jax
import jax.numpy as jnp
from jax.experimental import pallas as pl
from jax.experimental.pallas import tpu as pltpu

N = 1                 # from the PyTorch module
HIDDEN = 64
IN_DIM = 2 * N        # q and p concatenated


def _round_up(x, m):
    return ((x + m - 1) // m) * m


def _default_pack_config():
    """Returns (n_pack, n_sub): MXU packing factor and chains per grid step."""
    try:
        kind = jax.devices()[0].device_kind.lower()
    except Exception:
        kind = ""
    if any(t in kind for t in ("v2", "v3", "v4", "v5")):
        return 2, 4     # 128x128 MXU: 2-way pack; 4 chains hide MRF/EUP latency
    return 4, 2         # 256x256 MXU (v6e/v7x): 4-way pack fills a pass


class KTrainedKernelParams(NamedTuple):
    """Kernel-layout parameters, precomputed once (hoisted off the hot path)."""
    n_pack: int
    n_sub: int
    wf_pk: jax.Array     # [4, K, K]  block-diag forward weights, layers 1..4
    wb_pk: jax.Array     # [4, K, K]  block-diag transposed weights, layers 1..4
    bias_pk: jax.Array   # [4, K, 1]  packed biases, layers 1..4
    vec_pk: jax.Array    # [4, K, 1]  packed [w0q, w0p, b0, w5]


def prepare_params(params, *, n_pack=None, n_sub=None):
    """Build block-diagonal / packed kernel operands once per parameter set."""
    (W0, b0, W1, b1, W2, b2, W3, b3, W4, b4, W5, _b5) = params
    dflt_pack, dflt_sub = _default_pack_config()
    if n_pack is None:
        n_pack = dflt_pack
    if n_sub is None:
        n_sub = dflt_sub
    K = n_pack * HIDDEN
    f32 = lambda a: jnp.asarray(a, jnp.float32)

    def blkdiag(W):
        W = f32(W)
        out = jnp.zeros((K, K), jnp.float32)
        for s in range(n_pack):
            out = out.at[s * HIDDEN:(s + 1) * HIDDEN,
                         s * HIDDEN:(s + 1) * HIDDEN].set(W)
        return out

    def packvec(v):
        return jnp.tile(f32(v).reshape(HIDDEN, 1), (n_pack, 1))   # [K, 1]

    wf_pk = jnp.stack([blkdiag(W1), blkdiag(W2), blkdiag(W3), blkdiag(W4)])
    wb_pk = jnp.stack([blkdiag(W1.T), blkdiag(W2.T), blkdiag(W3.T), blkdiag(W4.T)])
    bias_pk = jnp.stack([packvec(b1), packvec(b2), packvec(b3), packvec(b4)])
    vec_pk = jnp.stack([packvec(W0[:, 0]), packvec(W0[:, 1]),
                        packvec(b0), packvec(W5.reshape(-1))])
    return KTrainedKernelParams(int(n_pack), int(n_sub),
                                wf_pk, wb_pk, bias_pk, vec_pk)


def _ktrained_kernel(n_pack, n_sub,
                     q_ref, p_ref, wf_ref, wb_ref, bias_ref, vec_ref, d_ref):
    """Forward packed MLP + analytic d(sum K)/d(q,p); batch on lanes."""
    H = HIDDEN
    cols_tile = q_ref.shape[1]
    sub = cols_tile // n_sub

    # Small constant operands: loaded once per grid step, VMEM resident.
    wf = [wf_ref[l] for l in range(4)]        # packed W_l,   [K, K]
    wb = [wb_ref[l] for l in range(4)]        # packed W_l^T, [K, K]
    bs = [bias_ref[l] for l in range(4)]      # packed b_l,   [K, 1]
    w0q_pk = vec_ref[0]                       # [K, 1] (tiled W0[:,0])
    w0p_pk = vec_ref[1]                       # [K, 1] (tiled W0[:,1])
    b0_pk = vec_ref[2]                        # [K, 1]
    w5_pk = vec_ref[3]                        # [K, 1] (gradient seed)
    w0q = w0q_pk[0:H, :]                      # single copies for layer 0
    w0p = w0p_pk[0:H, :]
    b0 = b0_pk[0:H, :]

    # Independent packed chains -> scheduler overlaps their MXU/EUP use.
    for c in range(n_sub):
        lo = c * sub
        hi = lo + sub

        # ---- layer 0: 2-feature input as VPU broadcast-FMAs (no MXU pass),
        #      packed along the hidden/sublane dim for the subsequent matmuls.
        h0_parts = []
        for s in range(n_pack):
            q_s = q_ref[s:s + 1, lo:hi]       # [1, sub]
            p_s = p_ref[s:s + 1, lo:hi]
            h0_parts.append(jax.nn.sigmoid(w0q * q_s + w0p * p_s + b0))
        h = jnp.concatenate(h0_parts, axis=0) if n_pack > 1 else h0_parts[0]
        acts = [h]                            # [K, sub]

        # ---- layers 1..4: one packed [K,K]@[K,sub] matmul per layer.
        for l in range(4):
            z = jnp.dot(wf[l], h, preferred_element_type=jnp.float32) + bs[l]
            h = jax.nn.sigmoid(z)
            acts.append(h)

        # ---- analytic backward: g = dK/dz walked down to the input.
        h4 = acts[4]
        g = w5_pk * h4 * (1.0 - h4)                               # dK/dz4
        for l in range(4, 0, -1):
            g = jnp.dot(wb[l - 1], g, preferred_element_type=jnp.float32)
            hp = acts[l - 1]
            g = g * hp * (1.0 - hp)                               # dK/dz_{l-1}

        # ---- dx = W0^T @ g off the MXU: VPU multiply + sublane (XLU) reduce.
        tq = w0q_pk * g                                           # [K, sub]
        tp = w0p_pk * g
        for s in range(n_pack):
            r0 = s * H
            dq_s = jnp.sum(tq[r0:r0 + H, :], axis=0, keepdims=True)   # [1, sub]
            dp_s = jnp.sum(tp[r0:r0 + H, :], axis=0, keepdims=True)
            d_ref[s:s + 1, lo:hi] = dq_s
            d_ref[n_pack + s:n_pack + s + 1, lo:hi] = dp_s


def ktrained_forward(q, p, kparams: KTrainedKernelParams, *,
                     sub_cols=None, n_sub=None):
    """q, p: [B, 1, N] (N == 1). Returns (dK/dq, dK/dp), each [B, 1, N]."""
    assert N == 1, "kernel layout assumes N == 1 (as in the PyTorch module)"
    assert q.shape == p.shape and q.shape[1:] == (1, N)
    B = q.shape[0]
    n_pack = kparams.n_pack
    if n_sub is None:
        n_sub = kparams.n_sub
    if sub_cols is None:
        # Large B: 256-col chains -> b_tile = 2048 (amortizes ~0.35us/step) and
        # B >= 2*b_tile keeps >= 2 grid steps so v7x's 2nd TC gets work.
        sub_cols = 256 if B >= 2 * n_pack * n_sub * 256 else 128
    assert sub_cols % 128 == 0, "sub_cols must be a multiple of 128 (lane dim)"
    assert n_sub >= 1
    # Shrink the chain count for small batches so padding stays modest.
    while n_sub > 1 and B <= n_pack * sub_cols * (n_sub // 2):
        n_sub //= 2

    cols_tile = n_sub * sub_cols
    b_tile = n_pack * cols_tile
    b_pad = _round_up(B, b_tile)
    total_cols = b_pad // n_pack

    qf = q.reshape(B).astype(jnp.float32)
    pf = p.reshape(B).astype(jnp.float32)
    if b_pad != B:
        qf = jnp.pad(qf, (0, b_pad - B))
        pf = jnp.pad(pf, (0, b_pad - B))
    q2 = qf.reshape(n_pack, total_cols)       # row s = batch chunk for pack slot s
    p2 = pf.reshape(n_pack, total_cols)

    row_spec = pl.BlockSpec((n_pack, cols_tile), lambda i: (0, i))
    out_spec = pl.BlockSpec((2 * n_pack, cols_tile), lambda i: (0, i))

    def const_spec(a):
        return pl.BlockSpec(a.shape, lambda i, nd=a.ndim: (0,) * nd)

    d = pl.pallas_call(
        functools.partial(_ktrained_kernel, n_pack, n_sub),
        grid=(total_cols // cols_tile,),
        out_shape=jax.ShapeDtypeStruct((2 * n_pack, total_cols), jnp.float32),
        in_specs=[row_spec, row_spec,
                  const_spec(kparams.wf_pk), const_spec(kparams.wb_pk),
                  const_spec(kparams.bias_pk), const_spec(kparams.vec_pk)],
        out_specs=out_spec,
        compiler_params=pltpu.CompilerParams(
            dimension_semantics=("parallel",)),
    )(q2, p2, kparams.wf_pk, kparams.wb_pk, kparams.bias_pk, kparams.vec_pk)

    dq = d[:n_pack].reshape(b_pad)[:B].reshape(B, 1, N)
    dp = d[n_pack:].reshape(b_pad)[:B].reshape(B, 1, N)
    return dq, dp


def init_params(key):
    """Torch-layout params: W_l [out, in] ~ U(+-sqrt(6/in)), b_l [out] ~ U(+-1/sqrt(in))."""
    dims = [(IN_DIM, HIDDEN)] + [(HIDDEN, HIDDEN)] * 4 + [(HIDDEN, 1)]
    keys = jax.random.split(key, 2 * len(dims))
    params = []
    for i, (fan_in, fan_out) in enumerate(dims):
        wbound = math.sqrt(6.0 / fan_in)
        W = jax.random.uniform(keys[2 * i], (fan_out, fan_in),
                               minval=-wbound, maxval=wbound, dtype=jnp.float32)
        bbound = 1.0 / math.sqrt(fan_in)
        b = jax.random.uniform(keys[2 * i + 1], (fan_out,),
                               minval=-bbound, maxval=bbound, dtype=jnp.float32)
        params.extend([W, b])
    return tuple(params)


def _reference(q, p, params):
    """Pure-JAX autodiff reference (mirrors torch.autograd.grad)."""
    (W0, b0, W1, b1, W2, b2, W3, b3, W4, b4, W5, b5) = params
    B = q.shape[0]

    def k_sum(x2d):
        h = x2d
        for W, b in ((W0, b0), (W1, b1), (W2, b2), (W3, b3), (W4, b4)):
            h = jax.nn.sigmoid(h @ W.T + b)
        return jnp.sum(h @ W5.T + b5)

    x = jnp.concatenate([q, p], axis=2).reshape(B, IN_DIM)
    dk = jax.grad(k_sum)(x).reshape(B, 1, IN_DIM)
    return dk[:, :, :N], dk[:, :, N:IN_DIM]


if __name__ == "__main__":
    key = jax.random.PRNGKey(0)
    kw, kq, kp_key = jax.random.split(key, 3)

    params = init_params(kw)
    kparams = prepare_params(params)          # one-time kernel-layout packing

    fwd = jax.jit(lambda q, p: ktrained_forward(q, p, kparams))

    # Small shape consistent with the module (batch=8, N=1).
    B = 8
    q = jax.random.normal(kq, (B, 1, N), dtype=jnp.float32)
    p = jax.random.normal(kp_key, (B, 1, N), dtype=jnp.float32)
    dq, dp = fwd(q, p)
    jax.block_until_ready((dq, dp))

    dq_ref, dp_ref = _reference(q, p, params)
    assert dq.shape == (B, 1, N) and dp.shape == (B, 1, N)
    assert jnp.allclose(dq, dq_ref, rtol=1e-5, atol=1e-5), \
        float(jnp.max(jnp.abs(dq - dq_ref)))
    assert jnp.allclose(dp, dp_ref, rtol=1e-5, atol=1e-5), \
        float(jnp.max(jnp.abs(dp - dp_ref)))

    # Larger batch: exercises multi-step grid, packed chains and padding.
    B2 = 1200
    kq2, kp2 = jax.random.split(kq)
    q2 = jax.random.normal(kq2, (B2, 1, N), dtype=jnp.float32)
    p2 = jax.random.normal(kp2, (B2, 1, N), dtype=jnp.float32)
    dq2, dp2 = fwd(q2, p2)
    jax.block_until_ready((dq2, dp2))
    dq2_ref, dp2_ref = _reference(q2, p2, params)
    assert jnp.allclose(dq2, dq2_ref, rtol=1e-5, atol=1e-5), \
        float(jnp.max(jnp.abs(dq2 - dq2_ref)))
    assert jnp.allclose(dp2, dp2_ref, rtol=1e-5, atol=1e-5), \
        float(jnp.max(jnp.abs(dp2 - dp2_ref)))

    print("KERNEL_OK")
</pallas_src>

<mosaic_0001>
module attributes {stable_mosaic.version = 11 : i64} {
  func.func @_ktrained_kernel(%arg0: i32, %arg1: memref<4x128xf32, #tpu.memory_space<vmem>>, %arg2: memref<4x128xf32, #tpu.memory_space<vmem>>, %arg3: memref<4x256x256xf32, #tpu.memory_space<vmem>>, %arg4: memref<4x256x256xf32, #tpu.memory_space<vmem>>, %arg5: memref<4x256x1xf32, #tpu.memory_space<vmem>>, %arg6: memref<4x256x1xf32, #tpu.memory_space<vmem>>, %arg7: memref<8x128xf32, #tpu.memory_space<vmem>>) attributes {dimension_semantics = [#tpu.dimension_semantics<parallel>], iteration_bounds = array<i64: 1>, scalar_prefetch = 0 : i64, scratch_operands = 0 : i64, tpu.core_type = #tpu.core_type<tc>, window_params = [{transform_indices = @transform_0, window_bounds = array<i64: 4, 128>}, {transform_indices = @transform_1, window_bounds = array<i64: 4, 128>}, {pipeline_mode = #tpu.pipeline_mode<synchronous>, transform_indices = @transform_2, window_bounds = array<i64: 4, 256, 256>}, {pipeline_mode = #tpu.pipeline_mode<synchronous>, transform_indices = @transform_3, window_bounds = array<i64: 4, 256, 256>}, {pipeline_mode = #tpu.pipeline_mode<synchronous>, transform_indices = @transform_4, window_bounds = array<i64: 4, 256, 1>}, {pipeline_mode = #tpu.pipeline_mode<synchronous>, transform_indices = @transform_5, window_bounds = array<i64: 4, 256, 1>}, {transform_indices = @transform_6, window_bounds = array<i64: 8, 128>}]} {
    %c0 = arith.constant 0 : index
    %c0_0 = arith.constant 0 : index
    %c0_1 = arith.constant 0 : index
    %0 = vector.load %arg3[%c0, %c0_0, %c0_1] : memref<4x256x256xf32, #tpu.memory_space<vmem>>, vector<1x256x256xf32>
    %1 = vector.shape_cast %0 : vector<1x256x256xf32> to vector<256x256xf32>
    %c1 = arith.constant 1 : index
    %c0_2 = arith.constant 0 : index
    %c0_3 = arith.constant 0 : index
    %2 = vector.load %arg3[%c1, %c0_2, %c0_3] : memref<4x256x256xf32, #tpu.memory_space<vmem>>, vector<1x256x256xf32>
    %3 = vector.shape_cast %2 : vector<1x256x256xf32> to vector<256x256xf32>
    %c2 = arith.constant 2 : index
    %c0_4 = arith.constant 0 : index
    %c0_5 = arith.constant 0 : index
    %4 = vector.load %arg3[%c2, %c0_4, %c0_5] : memref<4x256x256xf32, #tpu.memory_space<vmem>>, vector<1x256x256xf32>
    %5 = vector.shape_cast %4 : vector<1x256x256xf32> to vector<256x256xf32>
    %c3 = arith.constant 3 : index
    %c0_6 = arith.constant 0 : index
    %c0_7 = arith.constant 0 : index
    %6 = vector.load %arg3[%c3, %c0_6, %c0_7] : memref<4x256x256xf32, #tpu.memory_space<vmem>>, vector<1x256x256xf32>
    %7 = vector.shape_cast %6 : vector<1x256x256xf32> to vector<256x256xf32>
    %c0_8 = arith.constant 0 : index
    %c0_9 = arith.constant 0 : index
    %c0_10 = arith.constant 0 : index
    %8 = vector.load %arg4[%c0_8, %c0_9, %c0_10] : memref<4x256x256xf32, #tpu.memory_space<vmem>>, vector<1x256x256xf32>
    %9 = vector.shape_cast %8 : vector<1x256x256xf32> to vector<256x256xf32>
    %c1_11 = arith.constant 1 : index
    %c0_12 = arith.constant 0 : index
    %c0_13 = arith.constant 0 : index
    %10 = vector.load %arg4[%c1_11, %c0_12, %c0_13] : memref<4x256x256xf32, #tpu.memory_space<vmem>>, vector<1x256x256xf32>
    %11 = vector.shape_cast %10 : vector<1x256x256xf32> to vector<256x256xf32>
    %c2_14 = arith.constant 2 : index
    %c0_15 = arith.constant 0 : index
    %c0_16 = arith.constant 0 : index
    %12 = vector.load %arg4[%c2_14, %c0_15, %c0_16] : memref<4x256x256xf32, #tpu.memory_space<vmem>>, vector<1x256x256xf32>
    %13 = vector.shape_cast %12 : vector<1x256x256xf32> to vector<256x256xf32>
    %c3_17 = arith.constant 3 : index
    %c0_18 = arith.constant 0 : index
    %c0_19 = arith.constant 0 : index
    %14 = vector.load %arg4[%c3_17, %c0_18, %c0_19] : memref<4x256x256xf32, #tpu.memory_space<vmem>>, vector<1x256x256xf32>
    %15 = vector.shape_cast %14 : vector<1x256x256xf32> to vector<256x256xf32>
    %c0_20 = arith.constant 0 : index
    %c0_21 = arith.constant 0 : index
    %c0_22 = arith.constant 0 : index
    %16 = vector.load %arg5[%c0_20, %c0_21, %c0_22] : memref<4x256x1xf32, #tpu.memory_space<vmem>>, vector<1x256x1xf32>
    %17 = vector.shape_cast %16 : vector<1x256x1xf32> to vector<256x1xf32>
    %c1_23 = arith.constant 1 : index
    %c0_24 = arith.constant 0 : index
    %c0_25 = arith.constant 0 : index
    %18 = vector.load %arg5[%c1_23, %c0_24, %c0_25] : memref<4x256x1xf32, #tpu.memory_space<vmem>>, vector<1x256x1xf32>
    %19 = vector.shape_cast %18 : vector<1x256x1xf32> to vector<256x1xf32>
    %c2_26 = arith.constant 2 : index
    %c0_27 = arith.constant 0 : index
    %c0_28 = arith.constant 0 : index
    %20 = vector.load %arg5[%c2_26, %c0_27, %c0_28] : memref<4x256x1xf32, #tpu.memory_space<vmem>>, vector<1x256x1xf32>
    %21 = vector.shape_cast %20 : vector<1x256x1xf32> to vector<256x1xf32>
    %c3_29 = arith.constant 3 : index
    %c0_30 = arith.constant 0 : index
    %c0_31 = arith.constant 0 : index
    %22 = vector.load %arg5[%c3_29, %c0_30, %c0_31] : memref<4x256x1xf32, #tpu.memory_space<vmem>>, vector<1x256x1xf32>
    %23 = vector.shape_cast %22 : vector<1x256x1xf32> to vector<256x1xf32>
    %c0_32 = arith.constant 0 : index
    %c0_33 = arith.constant 0 : index
    %c0_34 = arith.constant 0 : index
    %24 = vector.load %arg6[%c0_32, %c0_33, %c0_34] : memref<4x256x1xf32, #tpu.memory_space<vmem>>, vector<1x256x1xf32>
    %25 = vector.shape_cast %24 : vector<1x256x1xf32> to vector<256x1xf32>
    %c1_35 = arith.constant 1 : index
    %c0_36 = arith.constant 0 : index
    %c0_37 = arith.constant 0 : index
    %26 = vector.load %arg6[%c1_35, %c0_36, %c0_37] : memref<4x256x1xf32, #tpu.memory_space<vmem>>, vector<1x256x1xf32>
    %27 = vector.shape_cast %26 : vector<1x256x1xf32> to vector<256x1xf32>
    %c2_38 = arith.constant 2 : index
    %c0_39 = arith.constant 0 : index
    %c0_40 = arith.constant 0 : index
    %28 = vector.load %arg6[%c2_38, %c0_39, %c0_40] : memref<4x256x1xf32, #tpu.memory_space<vmem>>, vector<1x256x1xf32>
    %29 = vector.shape_cast %28 : vector<1x256x1xf32> to vector<256x1xf32>
    %c3_41 = arith.constant 3 : index
    %c0_42 = arith.constant 0 : index
    %c0_43 = arith.constant 0 : index
    %30 = vector.load %arg6[%c3_41, %c0_42, %c0_43] : memref<4x256x1xf32, #tpu.memory_space<vmem>>, vector<1x256x1xf32>
    %31 = vector.shape_cast %30 : vector<1x256x1xf32> to vector<256x1xf32>
    %32 = vector.extract_strided_slice %25 {offsets = [0, 0], sizes = [64, 1], strides = [1, 1]} : vector<256x1xf32> to vector<64x1xf32>
    %33 = vector.extract_strided_slice %27 {offsets = [0, 0], sizes = [64, 1], strides = [1, 1]} : vector<256x1xf32> to vector<64x1xf32>
    %34 = vector.extract_strided_slice %29 {offsets = [0, 0], sizes = [64, 1], strides = [1, 1]} : vector<256x1xf32> to vector<64x1xf32>
    %c0_44 = arith.constant 0 : index
    %c0_45 = arith.constant 0 : index
    %35 = vector.load %arg1[%c0_44, %c0_45] : memref<4x128xf32, #tpu.memory_space<vmem>>, vector<1x128xf32>
    %c0_46 = arith.constant 0 : index
    %c0_47 = arith.constant 0 : index
    %36 = vector.load %arg2[%c0_46, %c0_47] : memref<4x128xf32, #tpu.memory_space<vmem>>, vector<1x128xf32>
    %37 = vector.broadcast %32 : vector<64x1xf32> to vector<64x128xf32>
    %38 = vector.broadcast %35 : vector<1x128xf32> to vector<64x128xf32>
    %39 = arith.mulf %37, %38 : vector<64x128xf32>
    %40 = vector.broadcast %33 : vector<64x1xf32> to vector<64x128xf32>
    %41 = vector.broadcast %36 : vector<1x128xf32> to vector<64x128xf32>
    %42 = arith.mulf %40, %41 : vector<64x128xf32>
    %43 = arith.addf %39, %42 : vector<64x128xf32>
    %44 = vector.broadcast %34 : vector<64x1xf32> to vector<64x128xf32>
    %45 = arith.addf %43, %44 : vector<64x128xf32>
    %46 = arith.negf %45 : vector<64x128xf32>
    %47 = math.exp %46 : vector<64x128xf32>
    %cst = arith.constant 1.000000e+00 : f32
    %48 = vector.broadcast %cst : f32 to vector<64x128xf32>
    %49 = arith.addf %48, %47 : vector<64x128xf32>
    %50 = arith.divf %48, %49 : vector<64x128xf32>
    %c1_48 = arith.constant 1 : index
    %c0_49 = arith.constant 0 : index
    %51 = vector.load %arg1[%c1_48, %c0_49] : memref<4x128xf32, #tpu.memory_space<vmem>>, vector<1x128xf32>
    %c1_50 = arith.constant 1 : index
    %c0_51 = arith.constant 0 : index
    %52 = vector.load %arg2[%c1_50, %c0_51] : memref<4x128xf32, #tpu.memory_space<vmem>>, vector<1x128xf32>
    %53 = vector.broadcast %32 : vector<64x1xf32> to vector<64x128xf32>
    %54 = vector.broadcast %51 : vector<1x128xf32> to vector<64x128xf32>
    %55 = arith.mulf %53, %54 : vector<64x128xf32>
    %56 = vector.broadcast %33 : vector<64x1xf32> to vector<64x128xf32>
    %57 = vector.broadcast %52 : vector<1x128xf32> to vector<64x128xf32>
    %58 = arith.mulf %56, %57 : vector<64x128xf32>
    %59 = arith.addf %55, %58 : vector<64x128xf32>
    %60 = vector.broadcast %34 : vector<64x1xf32> to vector<64x128xf32>
    %61 = arith.addf %59, %60 : vector<64x128xf32>
    %62 = arith.negf %61 : vector<64x128xf32>
    %63 = math.exp %62 : vector<64x128xf32>
    %cst_52 = arith.constant 1.000000e+00 : f32
    %64 = vector.broadcast %cst_52 : f32 to vector<64x128xf32>
    %65 = arith.addf %64, %63 : vector<64x128xf32>
    %66 = arith.divf %64, %65 : vector<64x128xf32>
    %c2_53 = arith.constant 2 : index
    %c0_54 = arith.constant 0 : index
    %67 = vector.load %arg1[%c2_53, %c0_54] : memref<4x128xf32, #tpu.memory_space<vmem>>, vector<1x128xf32>
    %c2_55 = arith.constant 2 : index
    %c0_56 = arith.constant 0 : index
    %68 = vector.load %arg2[%c2_55, %c0_56] : memref<4x128xf32, #tpu.memory_space<vmem>>, vector<1x128xf32>
    %69 = vector.broadcast %32 : vector<64x1xf32> to vector<64x128xf32>
    %70 = vector.broadcast %67 : vector<1x128xf32> to vector<64x128xf32>
    %71 = arith.mulf %69, %70 : vector<64x128xf32>
    %72 = vector.broadcast %33 : vector<64x1xf32> to vector<64x128xf32>
    %73 = vector.broadcast %68 : vector<1x128xf32> to vector<64x128xf32>
    %74 = arith.mulf %72, %73 : vector<64x128xf32>
    %75 = arith.addf %71, %74 : vector<64x128xf32>
    %76 = vector.broadcast %34 : vector<64x1xf32> to vector<64x128xf32>
    %77 = arith.addf %75, %76 : vector<64x128xf32>
    %78 = arith.negf %77 : vector<64x128xf32>
    %79 = math.exp %78 : vector<64x128xf32>
    %cst_57 = arith.constant 1.000000e+00 : f32
    %80 = vector.broadcast %cst_57 : f32 to vector<64x128xf32>
    %81 = arith.addf %80, %79 : vector<64x128xf32>
    %82 = arith.divf %80, %81 : vector<64x128xf32>
    %c3_58 = arith.constant 3 : index
    %c0_59 = arith.constant 0 : index
    %83 = vector.load %arg1[%c3_58, %c0_59] : memref<4x128xf32, #tpu.memory_space<vmem>>, vector<1x128xf32>
    %c3_60 = arith.constant 3 : index
    %c0_61 = arith.constant 0 : index
    %84 = vector.load %arg2[%c3_60, %c0_61] : memref<4x128xf32, #tpu.memory_space<vmem>>, vector<1x128xf32>
    %85 = vector.broadcast %32 : vector<64x1xf32> to vector<64x128xf32>
    %86 = vector.broadcast %83 : vector<1x128xf32> to vector<64x128xf32>
    %87 = arith.mulf %85, %86 : vector<64x128xf32>
    %88 = vector.broadcast %33 : vector<64x1xf32> to vector<64x128xf32>
    %89 = vector.broadcast %84 : vector<1x128xf32> to vector<64x128xf32>
    %90 = arith.mulf %88, %89 : vector<64x128xf32>
    %91 = arith.addf %87, %90 : vector<64x128xf32>
    %92 = vector.broadcast %34 : vector<64x1xf32> to vector<64x128xf32>
    %93 = arith.addf %91, %92 : vector<64x128xf32>
    %94 = arith.negf %93 : vector<64x128xf32>
    %95 = math.exp %94 : vector<64x128xf32>
    %cst_62 = arith.constant 1.000000e+00 : f32
    %96 = vector.broadcast %cst_62 : f32 to vector<64x128xf32>
    %97 = arith.addf %96, %95 : vector<64x128xf32>
    %98 = arith.divf %96, %97 : vector<64x128xf32>
    %99 = tpu.concatenate %50, %66, %82, %98 in 0 : vector<64x128xf32>, vector<64x128xf32>, vector<64x128xf32>, vector<64x128xf32> -> vector<256x128xf32>
    %cst_63 = arith.constant dense<0.000000e+00> : vector<256x128xf32>
    %100 = tpu.matmul %1, %99, %cst_63 {dimension_numbers = #tpu.dot_dimension_numbers<[1], [0], [0], [1], [0, 0, 1, 1], [], []>} : vector<256x256xf32>, vector<256x128xf32>, vector<256x128xf32> -> vector<256x128xf32>
    %101 = vector.broadcast %17 : vector<256x1xf32> to vector<256x128xf32>
    %102 = arith.addf %100, %101 : vector<256x128xf32>
    %103 = arith.negf %102 : vector<256x128xf32>
    %104 = math.exp %103 : vector<256x128xf32>
    %cst_64 = arith.constant 1.000000e+00 : f32
    %105 = vector.broadcast %cst_64 : f32 to vector<256x128xf32>
    %106 = arith.addf %105, %104 : vector<256x128xf32>
    %107 = arith.divf %105, %106 : vector<256x128xf32>
    %cst_65 = arith.constant dense<0.000000e+00> : vector<256x128xf32>
    %108 = tpu.matmul %3, %107, %cst_65 {dimension_numbers = #tpu.dot_dimension_numbers<[1], [0], [0], [1], [0, 0, 1, 1], [], []>} : vector<256x256xf32>, vector<256x128xf32>, vector<256x128xf32> -> vector<256x128xf32>
    %109 = vector.broadcast %19 : vector<256x1xf32> to vector<256x128xf32>
    %110 = arith.addf %108, %109 : vector<256x128xf32>
    %111 = arith.negf %110 : vector<256x128xf32>
    %112 = math.exp %111 : vector<256x128xf32>
    %cst_66 = arith.constant 1.000000e+00 : f32
    %113 = vector.broadcast %cst_66 : f32 to vector<256x128xf32>
    %114 = arith.addf %113, %112 : vector<256x128xf32>
    %115 = arith.divf %113, %114 : vector<256x128xf32>
    %cst_67 = arith.constant dense<0.000000e+00> : vector<256x128xf32>
    %116 = tpu.matmul %5, %115, %cst_67 {dimension_numbers = #tpu.dot_dimension_numbers<[1], [0], [0], [1], [0, 0, 1, 1], [], []>} : vector<256x256xf32>, vector<256x128xf32>, vector<256x128xf32> -> vector<256x128xf32>
    %117 = vector.broadcast %21 : vector<256x1xf32> to vector<256x128xf32>
    %118 = arith.addf %116, %117 : vector<256x128xf32>
    %119 = arith.negf %118 : vector<256x128xf32>
    %120 = math.exp %119 : vector<256x128xf32>
    %cst_68 = arith.constant 1.000000e+00 : f32
    %121 = vector.broadcast %cst_68 : f32 to vector<256x128xf32>
    %122 = arith.addf %121, %120 : vector<256x128xf32>
    %123 = arith.divf %121, %122 : vector<256x128xf32>
    %cst_69 = arith.constant dense<0.000000e+00> : vector<256x128xf32>
    %124 = tpu.matmul %7, %123, %cst_69 {dimension_numbers = #tpu.dot_dimension_numbers<[1], [0], [0], [1], [0, 0, 1, 1], [], []>} : vector<256x256xf32>, vector<256x128xf32>, vector<256x128xf32> -> vector<256x128xf32>
    %125 = vector.broadcast %23 : vector<256x1xf32> to vector<256x128xf32>
    %126 = arith.addf %124, %125 : vector<256x128xf32>
    %127 = arith.negf %126 : vector<256x128xf32>
    %128 = math.exp %127 : vector<256x128xf32>
    %cst_70 = arith.constant 1.000000e+00 : f32
    %129 = vector.broadcast %cst_70 : f32 to vector<256x128xf32>
    %130 = arith.addf %129, %128 : vector<256x128xf32>
    %131 = arith.divf %129, %130 : vector<256x128xf32>
    %132 = vector.broadcast %31 : vector<256x1xf32> to vector<256x128xf32>
    %133 = arith.mulf %132, %131 : vector<256x128xf32>
    %cst_71 = arith.constant 1.000000e+00 : f32
    %134 = vector.broadcast %cst_71 : f32 to vector<256x128xf32>
    %135 = arith.subf %134, %131 : vector<256x128xf32>
    %136 = arith.mulf %133, %135 : vector<256x128xf32>
    %cst_72 = arith.constant dense<0.000000e+00> : vector<256x128xf32>
    %137 = tpu.matmul %15, %136, %cst_72 {dimension_numbers = #tpu.dot_dimension_numbers<[1], [0], [0], [1], [0, 0, 1, 1], [], []>} : vector<256x256xf32>, vector<256x128xf32>, vector<256x128xf32> -> vector<256x128xf32>
    %138 = arith.mulf %137, %123 : vector<256x128xf32>
    %cst_73 = arith.constant 1.000000e+00 : f32
    %139 = vector.broadcast %cst_73 : f32 to vector<256x128xf32>
    %140 = arith.subf %139, %123 : vector<256x128xf32>
    %141 = arith.mulf %138, %140 : vector<256x128xf32>
    %cst_74 = arith.constant dense<0.000000e+00> : vector<256x128xf32>
    %142 = tpu.matmul %13, %141, %cst_74 {dimension_numbers = #tpu.dot_dimension_numbers<[1], [0], [0], [1], [0, 0, 1, 1], [], []>} : vector<256x256xf32>, vector<256x128xf32>, vector<256x128xf32> -> vector<256x128xf32>
    %143 = arith.mulf %142, %115 : vector<256x128xf32>
    %cst_75 = arith.constant 1.000000e+00 : f32
    %144 = vector.broadcast %cst_75 : f32 to vector<256x128xf32>
    %145 = arith.subf %144, %115 : vector<256x128xf32>
    %146 = arith.mulf %143, %145 : vector<256x128xf32>
    %cst_76 = arith.constant dense<0.000000e+00> : vector<256x128xf32>
    %147 = tpu.matmul %11, %146, %cst_76 {dimension_numbers = #tpu.dot_dimension_numbers<[1], [0], [0], [1], [0, 0, 1, 1], [], []>} : vector<256x256xf32>, vector<256x128xf32>, vector<256x128xf32> -> vector<256x128xf32>
    %148 = arith.mulf %147, %107 : vector<256x128xf32>
    %cst_77 = arith.constant 1.000000e+00 : f32
    %149 = vector.broadcast %cst_77 : f32 to vector<256x128xf32>
    %150 = arith.subf %149, %107 : vector<256x128xf32>
    %151 = arith.mulf %148, %150 : vector<256x128xf32>
    %cst_78 = arith.constant dense<0.000000e+00> : vector<256x128xf32>
    %152 = tpu.matmul %9, %151, %cst_78 {dimension_numbers = #tpu.dot_dimension_numbers<[1], [0], [0], [1], [0, 0, 1, 1], [], []>} : vector<256x256xf32>, vector<256x128xf32>, vector<256x128xf32> -> vector<256x128xf32>
    %153 = arith.mulf %152, %99 : vector<256x128xf32>
    %cst_79 = arith.constant 1.000000e+00 : f32
    %154 = vector.broadcast %cst_79 : f32 to vector<256x128xf32>
    %155 = arith.subf %154, %99 : vector<256x128xf32>
    %156 = arith.mulf %153, %155 : vector<256x128xf32>
    %157 = vector.broadcast %25 : vector<256x1xf32> to vector<256x128xf32>
    %158 = arith.mulf %157, %156 : vector<256x128xf32>
    %159 = vector.broadcast %27 : vector<256x1xf32> to vector<256x128xf32>
    %160 = arith.mulf %159, %156 : vector<256x128xf32>
    %161 = vector.extract_strided_slice %158 {offsets = [0, 0], sizes = [64, 128], strides = [1, 1]} : vector<256x128xf32> to vector<64x128xf32>
    %cst_80 = arith.constant dense<0.000000e+00> : vector<128xf32>
    %162 = vector.multi_reduction <add>, %161, %cst_80 [0] : vector<64x128xf32> to vector<128xf32>
    %163 = vector.shape_cast %162 : vector<128xf32> to vector<1x128xf32>
    %164 = vector.extract_strided_slice %160 {offsets = [0, 0], sizes = [64, 128], strides = [1, 1]} : vector<256x128xf32> to vector<64x128xf32>
    %cst_81 = arith.constant dense<0.000000e+00> : vector<128xf32>
    %165 = vector.multi_reduction <add>, %164, %cst_81 [0] : vector<64x128xf32> to vector<128xf32>
    %166 = vector.shape_cast %165 : vector<128xf32> to vector<1x128xf32>
    %c0_82 = arith.constant 0 : index
    %c0_83 = arith.constant 0 : index
    %167 = vector.load %arg7[%c0_82, %c0_83] : memref<8x128xf32, #tpu.memory_space<vmem>>, vector<1x128xf32>
    tpu.vector_store %arg7[%c0_82, %c0_83], %163 {strides = array<i32>} : memref<8x128xf32, #tpu.memory_space<vmem>>, vector<1x128xf32>,
    %c4 = arith.constant 4 : index
    %c0_84 = arith.constant 0 : index
    %168 = vector.load %arg7[%c4, %c0_84] : memref<8x128xf32, #tpu.memory_space<vmem>>, vector<1x128xf32>
    tpu.vector_store %arg7[%c4, %c0_84], %166 {strides = array<i32>} : memref<8x128xf32, #tpu.memory_space<vmem>>, vector<1x128xf32>,
    %169 = vector.extract_strided_slice %158 {offsets = [64, 0], sizes = [64, 128], strides = [1, 1]} : vector<256x128xf32> to vector<64x128xf32>
    %cst_85 = arith.constant dense<0.000000e+00> : vector<128xf32>
    %170 = vector.multi_reduction <add>, %169, %cst_85 [0] : vector<64x128xf32> to vector<128xf32>
    %171 = vector.shape_cast %170 : vector<128xf32> to vector<1x128xf32>
    %172 = vector.extract_strided_slice %160 {offsets = [64, 0], sizes = [64, 128], strides = [1, 1]} : vector<256x128xf32> to vector<64x128xf32>
    %cst_86 = arith.constant dense<0.000000e+00> : vector<128xf32>
    %173 = vector.multi_reduction <add>, %172, %cst_86 [0] : vector<64x128xf32> to vector<128xf32>
    %174 = vector.shape_cast %173 : vector<128xf32> to vector<1x128xf32>
    %c1_87 = arith.constant 1 : index
    %c0_88 = arith.constant 0 : index
    %175 = vector.load %arg7[%c1_87, %c0_88] : memref<8x128xf32, #tpu.memory_space<vmem>>, vector<1x128xf32>
    tpu.vector_store %arg7[%c1_87, %c0_88], %171 {strides = array<i32>} : memref<8x128xf32, #tpu.memory_space<vmem>>, vector<1x128xf32>,
    %c5 = arith.constant 5 : index
    %c0_89 = arith.constant 0 : index
    %176 = vector.load %arg7[%c5, %c0_89] : memref<8x128xf32, #tpu.memory_space<vmem>>, vector<1x128xf32>
    tpu.vector_store %arg7[%c5, %c0_89], %174 {strides = array<i32>} : memref<8x128xf32, #tpu.memory_space<vmem>>, vector<1x128xf32>,
    %177 = vector.extract_strided_slice %158 {offsets = [128, 0], sizes = [64, 128], strides = [1, 1]} : vector<256x128xf32> to vector<64x128xf32>
    %cst_90 = arith.constant dense<0.000000e+00> : vector<128xf32>
    %178 = vector.multi_reduction <add>, %177, %cst_90 [0] : vector<64x128xf32> to vector<128xf32>
    %179 = vector.shape_cast %178 : vector<128xf32> to vector<1x128xf32>
    %180 = vector.extract_strided_slice %160 {offsets = [128, 0], sizes = [64, 128], strides = [1, 1]} : vector<256x128xf32> to vector<64x128xf32>
    %cst_91 = arith.constant dense<0.000000e+00> : vector<128xf32>
    %181 = vector.multi_reduction <add>, %180, %cst_91 [0] : vector<64x128xf32> to vector<128xf32>
    %182 = vector.shape_cast %181 : vector<128xf32> to vector<1x128xf32>
    %c2_92 = arith.constant 2 : index
    %c0_93 = arith.constant 0 : index
    %183 = vector.load %arg7[%c2_92, %c0_93] : memref<8x128xf32, #tpu.memory_space<vmem>>, vector<1x128xf32>
    tpu.vector_store %arg7[%c2_92, %c0_93], %179 {strides = array<i32>} : memref<8x128xf32, #tpu.memory_space<vmem>>, vector<1x128xf32>,
    %c6 = arith.constant 6 : index
    %c0_94 = arith.constant 0 : index
    %184 = vector.load %arg7[%c6, %c0_94] : memref<8x128xf32, #tpu.memory_space<vmem>>, vector<1x128xf32>
    tpu.vector_store %arg7[%c6, %c0_94], %182 {strides = array<i32>} : memref<8x128xf32, #tpu.memory_space<vmem>>, vector<1x128xf32>,
    %185 = vector.extract_strided_slice %158 {offsets = [192, 0], sizes = [64, 128], strides = [1, 1]} : vector<256x128xf32> to vector<64x128xf32>
    %cst_95 = arith.constant dense<0.000000e+00> : vector<128xf32>
    %186 = vector.multi_reduction <add>, %185, %cst_95 [0] : vector<64x128xf32> to vector<128xf32>
    %187 = vector.shape_cast %186 : vector<128xf32> to vector<1x128xf32>
    %188 = vector.extract_strided_slice %160 {offsets = [192, 0], sizes = [64, 128], strides = [1, 1]} : vector<256x128xf32> to vector<64x128xf32>
    %cst_96 = arith.constant dense<0.000000e+00> : vector<128xf32>
    %189 = vector.multi_reduction <add>, %188, %cst_96 [0] : vector<64x128xf32> to vector<128xf32>
    %190 = vector.shape_cast %189 : vector<128xf32> to vector<1x128xf32>
    %c3_97 = arith.constant 3 : index
    %c0_98 = arith.constant 0 : index
    %191 = vector.load %arg7[%c3_97, %c0_98] : memref<8x128xf32, #tpu.memory_space<vmem>>, vector<1x128xf32>
    tpu.vector_store %arg7[%c3_97, %c0_98], %187 {strides = array<i32>} : memref<8x128xf32, #tpu.memory_space<vmem>>, vector<1x128xf32>,
    %c7 = arith.constant 7 : index
    %c0_99 = arith.constant 0 : index
    %192 = vector.load %arg7[%c7, %c0_99] : memref<8x128xf32, #tpu.memory_space<vmem>>, vector<1x128xf32>
    tpu.vector_store %arg7[%c7, %c0_99], %190 {strides = array<i32>} : memref<8x128xf32, #tpu.memory_space<vmem>>, vector<1x128xf32>,
    return
  }
  func.func @transform_0(%arg0: i32) -> (i32, i32) {
    %c0_i32 = arith.constant 0 : i32
    %c0_i32_0 = arith.constant 0 : i32
    return %c0_i32, %arg0 : i32, i32
  }
  func.func @transform_1(%arg0: i32) -> (i32, i32) {
    %c0_i32 = arith.constant 0 : i32
    %c0_i32_0 = arith.constant 0 : i32
    return %c0_i32, %arg0 : i32, i32
  }
  func.func @transform_2(%arg0: i32) -> (i32, i32, i32) {
    %c0_i32 = arith.constant 0 : i32
    %c0_i32_0 = arith.constant 0 : i32
    %c0_i32_1 = arith.constant 0 : i32
    %c0_i32_2 = arith.constant 0 : i32
    return %c0_i32, %c0_i32_0, %c0_i32_1 : i32, i32, i32
  }
  func.func @transform_3(%arg0: i32) -> (i32, i32, i32) {
    %c0_i32 = arith.constant 0 : i32
    %c0_i32_0 = arith.constant 0 : i32
    %c0_i32_1 = arith.constant 0 : i32
    %c0_i32_2 = arith.constant 0 : i32
    return %c0_i32, %c0_i32_0, %c0_i32_1 : i32, i32, i32
  }
  func.func @transform_4(%arg0: i32) -> (i32, i32, i32) {
    %c0_i32 = arith.constant 0 : i32
    %c0_i32_0 = arith.constant 0 : i32
    %c0_i32_1 = arith.constant 0 : i32
    %c0_i32_2 = arith.constant 0 : i32
    return %c0_i32, %c0_i32_0, %c0_i32_1 : i32, i32, i32
  }
  func.func @transform_5(%arg0: i32) -> (i32, i32, i32) {
    %c0_i32 = arith.constant 0 : i32
    %c0_i32_0 = arith.constant 0 : i32
    %c0_i32_1 = arith.constant 0 : i32
    %c0_i32_2 = arith.constant 0 : i32
    return %c0_i32, %c0_i32_0, %c0_i32_1 : i32, i32, i32
  }
  func.func @transform_6(%arg0: i32) -> (i32, i32) {
    %c0_i32 = arith.constant 0 : i32
    %c0_i32_0 = arith.constant 0 : i32
    return %c0_i32, %arg0 : i32, i32
  }
}

</mosaic_0001>

<llo_original>
// kernel: _lambda_.1
$region0: #{_lambda_.1}
  #allocation0 [shape = 'u32[]', space=smem, size = 0x4, offset = 0x4, fixed_abs, tag = 'smem constant byte address 0x4 - core index']
  #allocation1 [shape = 'u32[72,128]{1,0:T(1,128)}', space=vmem, size = 0x9000, scoped, tag = 'internal scratch']
  %s0 = inlined_call_operand.vmem [shape: f32[4,128], index: 0, kind: input, shape index: {}]
  %s1 = inlined_call_operand.vmem [shape: f32[4,128], index: 1, kind: input, shape index: {}]
  %s2 = inlined_call_operand.hbm [shape: f32[4,256,256], index: 2, kind: input, shape index: {}]
  %s3 = inlined_call_operand.hbm [shape: f32[4,256,256], index: 3, kind: input, shape index: {}]
  %s4 = inlined_call_operand.hbm [shape: f32[4,256,1], index: 4, kind: input, shape index: {}]
  %s5 = inlined_call_operand.hbm [shape: f32[4,256,1], index: 5, kind: input, shape index: {}]
  %s6 = inlined_call_operand.vmem [shape: f32[8,128], index: 6, kind: output, shape index: {}]
  %s7 = sld [smem:[#allocation0]]
  $region50: #{_lambda_.1} parent=0
    _
  %s9 = ssub.s32 1, %s7
  %s10 = scalar_select 0, %s9, %s7
  $region1: #{_lambda_.1} parent=0
    #allocation2 [shape = 'u8[1048576]{0}', space=vmem, size = 0x100000, scoped, tag = 'input window, operand 2, single buffered']
    #allocation3 [shape = 's32[1]{0}', space=sflag, size = 0x4, scoped, tag = 'scoped memory for _lambda_.1']
    #allocation4 [shape = 'u8[1048576]{0}', space=vmem, size = 0x100000, scoped, tag = 'input window, operand 3, single buffered']
    #allocation5 [shape = 's32[1]{0}', space=sflag, size = 0x4, scoped, tag = 'scoped memory for _lambda_.1']
    #allocation6 [shape = 'u8[524288]{0}', space=vmem, size = 0x80000, scoped, tag = 'input window, operand 4, single buffered']
    #allocation7 [shape = 'u8[524288]{0}', space=vmem, size = 0x80000, scoped, tag = 'input window, operand 5, single buffered']
    #allocation8 [shape = 's32[1]{0}', space=sflag, size = 0x4, scoped, tag = 'scoped memory for _lambda_.1']
    %11 = vsyncpa [#allocation3], 0
    %12 = vsyncpa [#allocation5], 0
    %13 = vsyncpa [#allocation8], 0
    // Predicated region
    $region2: #{_lambda_.1} parent=1 // pred_check
      _
    $region3: #{_lambda_.1} parent=1 // pred_check_branch
      %15 = sbr.rel (0) target = $region5
    $region4: #{_lambda_.1} parent=1 // pred_region
      _
    $region5: #{_lambda_.1} parent=1 // pred_fallthru
      _
    // Predicated region
    $region6: #{_lambda_.1} parent=1 // pred_check
      _
    $region7: #{_lambda_.1} parent=1 // pred_check_branch
      %17 = sbr.rel (0) target = $region9
    $region8: #{_lambda_.1} parent=1 // pred_region
      _
    $region9: #{_lambda_.1} parent=1 // pred_fallthru
      _
    // Predicated region
    $region10: #{_lambda_.1} parent=1 // pred_check
      _
    $region11: #{_lambda_.1} parent=1 // pred_check_branch
      %19 = sbr.rel (0) target = $region13
    $region12: #{_lambda_.1} parent=1 // pred_region
      %21 = vsyncadd [#allocation3], 0
      %s22 = sshll.u32 %s2, 4
      %s23 = int_to_ptr.hbm [resolvable:$true] %s22
      %s24 = sshll.u32 [#allocation2], 4
      %s25 = int_to_ptr.vmem [resolvable:$true] %s24
      %30 = dma.hbm_to_vmem [thread:$0]  %s23, 32768, %s25, [#allocation3], 256, 256, 16
    $region13: #{_lambda_.1} parent=1 // pred_fallthru
      _
    // Predicated region
    $region14: #{_lambda_.1} parent=1 // pred_check
      _
    $region15: #{_lambda_.1} parent=1 // pred_check_branch
      %32 = sbr.rel (0) target = $region17
    $region16: #{_lambda_.1} parent=1 // pred_region
      %34 = vsyncadd [#allocation5], 0
      %s35 = sshll.u32 %s3, 4
      %s36 = int_to_ptr.hbm [resolvable:$true] %s35
      %s37 = sshll.u32 [#allocation4], 4
      %s38 = int_to_ptr.vmem [resolvable:$true] %s37
      %43 = dma.hbm_to_vmem [thread:$0]  %s36, 32768, %s38, [#allocation5], 256, 256, 16
    $region17: #{_lambda_.1} parent=1 // pred_fallthru
      _
    // Predicated region
    $region18: #{_lambda_.1} parent=1 // pred_check
      _
    $region19: #{_lambda_.1} parent=1 // pred_check_branch
      %45 = sbr.rel (0) target = $region21
    $region20: #{_lambda_.1} parent=1 // pred_region
      %47 = vsyncadd [#allocation5], 0
      %s48 = sshll.u32 %s4, 4
      %s49 = int_to_ptr.hbm [resolvable:$true] %s48
      %s50 = sshll.u32 [#allocation6], 4
      %s51 = int_to_ptr.vmem [resolvable:$true] %s50
      %56 = dma.hbm_to_vmem [thread:$0]  %s49, 16384, %s51, [#allocation5], 128, 128, 8
    $region21: #{_lambda_.1} parent=1 // pred_fallthru
      _
    // Predicated region
    $region22: #{_lambda_.1} parent=1 // pred_check
      _
    $region23: #{_lambda_.1} parent=1 // pred_check_branch
      %58 = sbr.rel (0) target = $region25
    $region24: #{_lambda_.1} parent=1 // pred_region
      %60 = vsyncadd [#allocation8], 0
      %s61 = sshll.u32 %s5, 4
      %s62 = int_to_ptr.hbm [resolvable:$true] %s61
      %s63 = sshll.u32 [#allocation7], 4
      %s64 = int_to_ptr.vmem [resolvable:$true] %s63
      %69 = dma.hbm_to_vmem [thread:$0]  %s62, 16384, %s64, [#allocation8], 128, 128, 8
    $region25: #{_lambda_.1} parent=1 // pred_fallthru
      _
    // Predicated region
    $region26: #{_lambda_.1} parent=1 // pred_check
      _
    $region27: #{_lambda_.1} parent=1 // pred_check_branch
      %71 = sbr.rel (0) target = $region29
    $region28: #{_lambda_.1} parent=1 // pred_region
      %73 = dma.done [#allocation3], 32768
    $region29: #{_lambda_.1} parent=1 // pred_fallthru
      _
    // Predicated region
    $region30: #{_lambda_.1} parent=1 // pred_check
      _
    $region31: #{_lambda_.1} parent=1 // pred_check_branch
      %75 = sbr.rel (0) target = $region33
    $region32: #{_lambda_.1} parent=1 // pred_region
      %77 = dma.done [#allocation5], 32768
    $region33: #{_lambda_.1} parent=1 // pred_fallthru
      _
    // Predicated region
    $region34: #{_lambda_.1} parent=1 // pred_check
      _
    $region35: #{_lambda_.1} parent=1 // pred_check_branch
      %79 = sbr.rel (0) target = $region37
    $region36: #{_lambda_.1} parent=1 // pred_region
      %81 = dma.done [#allocation5], 16384
    $region37: #{_lambda_.1} parent=1 // pred_fallthru
      _
    // Predicated region
    $region38: #{_lambda_.1} parent=1 // pred_check
      _
    $region39: #{_lambda_.1} parent=1 // pred_check_branch
      %83 = sbr.rel (0) target = $region41
    $region40: #{_lambda_.1} parent=1 // pred_region
      %85 = dma.done [#allocation8], 16384
    $region41: #{_lambda_.1} parent=1 // pred_fallthru
      _
    %v86 = vld [vmem:[#allocation2] sm:$0xff]
    %v87 = vld [vmem:[#allocation2 + $0x8] sm:$0xff]
    %v88 = vld [vmem:[#allocation2 + $0x10] sm:$0xff]
    %v89 = vld [vmem:[#allocation2 + $0x18] sm:$0xff]
    %v90 = vld [vmem:[#allocation2 + $0x20] sm:$0xff]
    %v91 = vld [vmem:[#allocation2 + $0x28] sm:$0xff]
    %v92 = vld [vmem:[#allocation2 + $0x30] sm:$0xff]
    %v93 = vld [vmem:[#allocation2 + $0x38] sm:$0xff]
    %v94 = vld [vmem:[#allocation2 + $0x40] sm:$0xff]
    %v95 = vld [vmem:[#allocation2 + $0x48] sm:$0xff]
    %v96 = vld [vmem:[#allocation2 + $0x50] sm:$0xff]
    %v97 = vld [vmem:[#allocation2 + $0x58] sm:$0xff]
    %v98 = vld [vmem:[#allocation2 + $0x60] sm:$0xff]
    %v99 = vld [vmem:[#allocation2 + $0x68] sm:$0xff]
    %v100 = vld [vmem:[#allocation2 + $0x70] sm:$0xff]
    %v101 = vld [vmem:[#allocation2 + $0x78] sm:$0xff]
    %v102 = vld [vmem:[#allocation2 + $0x80] sm:$0xff]
    %v103 = vld [vmem:[#allocation2 + $0x88] sm:$0xff]
    %v104 = vld [vmem:[#allocation2 + $0x90] sm:$0xff]
    %v105 = vld [vmem:[#allocation2 + $0x98] sm:$0xff]
    %v106 = vld [vmem:[#allocation2 + $0xa0] sm:$0xff]
    %v107 = vld [vmem:[#allocation2 + $0xa8] sm:$0xff]
    %v108 = vld [vmem:[#allocation2 + $0xb0] sm:$0xff]
    %v109 = vld [vmem:[#allocation2 + $0xb8] sm:$0xff]
    %v110 = vld [vmem:[#allocation2 + $0xc0] sm:$0xff]
    %v111 = vld [vmem:[#allocation2 + $0xc8] sm:$0xff]
    %v112 = vld [vmem:[#allocation2 + $0xd0] sm:$0xff]
    %v113 = vld [vmem:[#allocation2 + $0xd8] sm:$0xff]
    %v114 = vld [vmem:[#allocation2 + $0xe0] sm:$0xff]
    %v115 = vld [vmem:[#allocation2 + $0xe8] sm:$0xff]
    %v116 = vld [vmem:[#allocation2 + $0xf0] sm:$0xff]
    %v117 = vld [vmem:[#allocation2 + $0xf8] sm:$0xff]
    %v118 = vld [vmem:[#allocation2 + $0x100] sm:$0xff]
    %v119 = vld [vmem:[#allocation2 + $0x108] sm:$0xff]
    %v120 = vld [vmem:[#allocation2 + $0x110] sm:$0xff]
    %v121 = vld [vmem:[#allocation2 + $0x118] sm:$0xff]
    %v122 = vld [vmem:[#allocation2 + $0x120] sm:$0xff]
    %v123 = vld [vmem:[#allocation2 + $0x128] sm:$0xff]
    %v124 = vld [vmem:[#allocation2 + $0x130] sm:$0xff]
    %v125 = vld [vmem:[#allocation2 + $0x138] sm:$0xff]
    %v126 = vld [vmem:[#allocation2 + $0x140] sm:$0xff]
    %v127 = vld [vmem:[#allocation2 + $0x148] sm:$0xff]
    %v128 = vld [vmem:[#allocation2 + $0x150] sm:$0xff]
    %v129 = vld [vmem:[#allocation2 + $0x158] sm:$0xff]
    %v130 = vld [vmem:[#allocation2 + $0x160] sm:$0xff]
    %v131 = vld [vmem:[#allocation2 + $0x168] sm:$0xff]
    %v132 = vld [vmem:[#allocation2 + $0x170] sm:$0xff]
    %v133 = vld [vmem:[#allocation2 + $0x178] sm:$0xff]
    %v134 = vld [vmem:[#allocation2 + $0x180] sm:$0xff]
    %v135 = vld [vmem:[#allocation2 + $0x188] sm:$0xff]
    %v136 = vld [vmem:[#allocation2 + $0x190] sm:$0xff]
    %v137 = vld [vmem:[#allocation2 + $0x198] sm:$0xff]
    %v138 = vld [vmem:[#allocation2 + $0x1a0] sm:$0xff]
    %v139 = vld [vmem:[#allocation2 + $0x1a8] sm:$0xff]
    %v140 = vld [vmem:[#allocation2 + $0x1b0] sm:$0xff]
    %v141 = vld [vmem:[#allocation2 + $0x1b8] sm:$0xff]
    %v142 = vld [vmem:[#allocation2 + $0x1c0] sm:$0xff]
    %v143 = vld [vmem:[#allocation2 + $0x1c8] sm:$0xff]
    %v144 = vld [vmem:[#allocation2 + $0x1d0] sm:$0xff]
    %v145 = vld [vmem:[#allocation2 + $0x1d8] sm:$0xff]
    %v146 = vld [vmem:[#allocation2 + $0x1e0] sm:$0xff]
    %v147 = vld [vmem:[#allocation2 + $0x1e8] sm:$0xff]
    %v148 = vld [vmem:[#allocation2 + $0x1f0] sm:$0xff]
    %v149 = vld [vmem:[#allocation2 + $0x1f8] sm:$0xff]
    %s150 = scalar_lea.vmem [#allocation2], 512
    %v151 = vld [vmem:[%s150] sm:$0xff]
    %v152 = vld [vmem:[%s150 + $0x8] sm:$0xff]
    %v153 = vld [vmem:[%s150 + $0x10] sm:$0xff]
    %v154 = vld [vmem:[%s150 + $0x18] sm:$0xff]
    %v155 = vld [vmem:[%s150 + $0x20] sm:$0xff]
    %v156 = vld [vmem:[%s150 + $0x28] sm:$0xff]
    %v157 = vld [vmem:[%s150 + $0x30] sm:$0xff]
    %v158 = vld [vmem:[%s150 + $0x38] sm:$0xff]
    %v159 = vld [vmem:[%s150 + $0x40] sm:$0xff]
    %v160 = vld [vmem:[%s150 + $0x48] sm:$0xff]
    %v161 = vld [vmem:[%s150 + $0x50] sm:$0xff]
    %v162 = vld [vmem:[%s150 + $0x58] sm:$0xff]
    %v163 = vld [vmem:[%s150 + $0x60] sm:$0xff]
    %v164 = vld [vmem:[%s150 + $0x68] sm:$0xff]
    %v165 = vld [vmem:[%s150 + $0x70] sm:$0xff]
    %v166 = vld [vmem:[%s150 + $0x78] sm:$0xff]
    %v167 = vld [vmem:[%s150 + $0x80] sm:$0xff]
    %v168 = vld [vmem:[%s150 + $0x88] sm:$0xff]
    %v169 = vld [vmem:[%s150 + $0x90] sm:$0xff]
    %v170 = vld [vmem:[%s150 + $0x98] sm:$0xff]
    %v171 = vld [vmem:[%s150 + $0xa0] sm:$0xff]
    %v172 = vld [vmem:[%s150 + $0xa8] sm:$0xff]
    %v173 = vld [vmem:[%s150 + $0xb0] sm:$0xff]
    %v174 = vld [vmem:[%s150 + $0xb8] sm:$0xff]
    %v175 = vld [vmem:[%s150 + $0xc0] sm:$0xff]
    %v176 = vld [vmem:[%s150 + $0xc8] sm:$0xff]
    %v177 = vld [vmem:[%s150 + $0xd0] sm:$0xff]
    %v178 = vld [vmem:[%s150 + $0xd8] sm:$0xff]
    %v179 = vld [vmem:[%s150 + $0xe0] sm:$0xff]
    %v180 = vld [vmem:[%s150 + $0xe8] sm:$0xff]
    %v181 = vld [vmem:[%s150 + $0xf0] sm:$0xff]
    %v182 = vld [vmem:[%s150 + $0xf8] sm:$0xff]
    %v183 = vld [vmem:[%s150 + $0x100] sm:$0xff]
    %v184 = vld [vmem:[%s150 + $0x108] sm:$0xff]
    %v185 = vld [vmem:[%s150 + $0x110] sm:$0xff]
    %v186 = vld [vmem:[%s150 + $0x118] sm:$0xff]
    %v187 = vld [vmem:[%s150 + $0x120] sm:$0xff]
    %v188 = vld [vmem:[%s150 + $0x128] sm:$0xff]
    %v189 = vld [vmem:[%s150 + $0x130] sm:$0xff]
    %v190 = vld [vmem:[%s150 + $0x138] sm:$0xff]
    %v191 = vld [vmem:[%s150 + $0x140] sm:$0xff]
    %v192 = vld [vmem:[%s150 + $0x148] sm:$0xff]
    %v193 = vld [vmem:[%s150 + $0x150] sm:$0xff]
    %v194 = vld [vmem:[%s150 + $0x158] sm:$0xff]
    %v195 = vld [vmem:[%s150 + $0x160] sm:$0xff]
    %v196 = vld [vmem:[%s150 + $0x168] sm:$0xff]
    %v197 = vld [vmem:[%s150 + $0x170] sm:$0xff]
    %v198 = vld [vmem:[%s150 + $0x178] sm:$0xff]
    %v199 = vld [vmem:[%s150 + $0x180] sm:$0xff]
    %v200 = vld [vmem:[%s150 + $0x188] sm:$0xff]
    %v201 = vld [vmem:[%s150 + $0x190] sm:$0xff]
    %v202 = vld [vmem:[%s150 + $0x198] sm:$0xff]
    %v203 = vld [vmem:[%s150 + $0x1a0] sm:$0xff]
    %v204 = vld [vmem:[%s150 + $0x1a8] sm:$0xff]
    %v205 = vld [vmem:[%s150 + $0x1b0] sm:$0xff]
    %v206 = vld [vmem:[%s150 + $0x1b8] sm:$0xff]
    %v207 = vld [vmem:[%s150 + $0x1c0] sm:$0xff]
    %v208 = vld [vmem:[%s150 + $0x1c8] sm:$0xff]
    %v209 = vld [vmem:[%s150 + $0x1d0] sm:$0xff]
    %v210 = vld [vmem:[%s150 + $0x1d8] sm:$0xff]
    %v211 = vld [vmem:[%s150 + $0x1e0] sm:$0xff]
    %v212 = vld [vmem:[%s150 + $0x1e8] sm:$0xff]
    %v213 = vld [vmem:[%s150 + $0x1f0] sm:$0xff]
    %v214 = vld [vmem:[%s150 + $0x1f8] sm:$0xff]
    %s215 = scalar_lea.vmem [#allocation2], 1024
    %v216 = vld [vmem:[%s215] sm:$0xff]
    %v217 = vld [vmem:[%s215 + $0x8] sm:$0xff]
    %v218 = vld [vmem:[%s215 + $0x10] sm:$0xff]
    %v219 = vld [vmem:[%s215 + $0x18] sm:$0xff]
    %v220 = vld [vmem:[%s215 + $0x20] sm:$0xff]
    %v221 = vld [vmem:[%s215 + $0x28] sm:$0xff]
    %v222 = vld [vmem:[%s215 + $0x30] sm:$0xff]
    %v223 = vld [vmem:[%s215 + $0x38] sm:$0xff]
    %v224 = vld [vmem:[%s215 + $0x40] sm:$0xff]
    %v225 = vld [vmem:[%s215 + $0x48] sm:$0xff]
    %v226 = vld [vmem:[%s215 + $0x50] sm:$0xff]
    %v227 = vld [vmem:[%s215 + $0x58] sm:$0xff]
    %v228 = vld [vmem:[%s215 + $0x60] sm:$0xff]
    %v229 = vld [vmem:[%s215 + $0x68] sm:$0xff]
    %v230 = vld [vmem:[%s215 + $0x70] sm:$0xff]
    %v231 = vld [vmem:[%s215 + $0x78] sm:$0xff]
    %v232 = vld [vmem:[%s215 + $0x80] sm:$0xff]
    %v233 = vld [vmem:[%s215 + $0x88] sm:$0xff]
    %v234 = vld [vmem:[%s215 + $0x90] sm:$0xff]
    %v235 = vld [vmem:[%s215 + $0x98] sm:$0xff]
    %v236 = vld [vmem:[%s215 + $0xa0] sm:$0xff]
    %v237 = vld [vmem:[%s215 + $0xa8] sm:$0xff]
    %v238 = vld [vmem:[%s215 + $0xb0] sm:$0xff]
    %v239 = vld [vmem:[%s215 + $0xb8] sm:$0xff]
    %v240 = vld [vmem:[%s215 + $0xc0] sm:$0xff]
    %v241 = vld [vmem:[%s215 + $0xc8] sm:$0xff]
    %v242 = vld [vmem:[%s215 + $0xd0] sm:$0xff]
    %v243 = vld [vmem:[%s215 + $0xd8] sm:$0xff]
    %v244 = vld [vmem:[%s215 + $0xe0] sm:$0xff]
    %v245 = vld [vmem:[%s215 + $0xe8] sm:$0xff]
    %v246 = vld [vmem:[%s215 + $0xf0] sm:$0xff]
    %v247 = vld [vmem:[%s215 + $0xf8] sm:$0xff]
    %v248 = vld [vmem:[%s215 + $0x100] sm:$0xff]
    %v249 = vld [vmem:[%s215 + $0x108] sm:$0xff]
    %v250 = vld [vmem:[%s215 + $0x110] sm:$0xff]
    %v251 = vld [vmem:[%s215 + $0x118] sm:$0xff]
    %v252 = vld [vmem:[%s215 + $0x120] sm:$0xff]
    %v253 = vld [vmem:[%s215 + $0x128] sm:$0xff]
    %v254 = vld [vmem:[%s215 + $0x130] sm:$0xff]
    %v255 = vld [vmem:[%s215 + $0x138] sm:$0xff]
    %v256 = vld [vmem:[%s215 + $0x140] sm:$0xff]
    %v257 = vld [vmem:[%s215 + $0x148] sm:$0xff]
    %v258 = vld [vmem:[%s215 + $0x150] sm:$0xff]
    %v259 = vld [vmem:[%s215 + $0x158] sm:$0xff]
    %v260 = vld [vmem:[%s215 + $0x160] sm:$0xff]
    %v261 = vld [vmem:[%s215 + $0x168] sm:$0xff]
    %v262 = vld [vmem:[%s215 + $0x170] sm:$0xff]
    %v263 = vld [vmem:[%s215 + $0x178] sm:$0xff]
    %v264 = vld [vmem:[%s215 + $0x180] sm:$0xff]
    %v265 = vld [vmem:[%s215 + $0x188] sm:$0xff]
    %v266 = vld [vmem:[%s215 + $0x190] sm:$0xff]
    %v267 = vld [vmem:[%s215 + $0x198] sm:$0xff]
    %v268 = vld [vmem:[%s215 + $0x1a0] sm:$0xff]
    %v269 = vld [vmem:[%s215 + $0x1a8] sm:$0xff]
    %v270 = vld [vmem:[%s215 + $0x1b0] sm:$0xff]
    %v271 = vld [vmem:[%s215 + $0x1b8] sm:$0xff]
    %v272 = vld [vmem:[%s215 + $0x1c0] sm:$0xff]
    %v273 = vld [vmem:[%s215 + $0x1c8] sm:$0xff]
    %v274 = vld [vmem:[%s215 + $0x1d0] sm:$0xff]
    %v275 = vld [vmem:[%s215 + $0x1d8] sm:$0xff]
    %v276 = vld [vmem:[%s215 + $0x1e0] sm:$0xff]
    %v277 = vld [vmem:[%s215 + $0x1e8] sm:$0xff]
    %v278 = vld [vmem:[%s215 + $0x1f0] sm:$0xff]
    %v279 = vld [vmem:[%s215 + $0x1f8] sm:$0xff]
    %s280 = scalar_lea.vmem [#allocation2], 1536
    %v281 = vld [vmem:[%s280] sm:$0xff]
    %v282 = vld [vmem:[%s280 + $0x8] sm:$0xff]
    %v283 = vld [vmem:[%s280 + $0x10] sm:$0xff]
    %v284 = vld [vmem:[%s280 + $0x18] sm:$0xff]
    %v285 = vld [vmem:[%s280 + $0x20] sm:$0xff]
    %v286 = vld [vmem:[%s280 + $0x28] sm:$0xff]
    %v287 = vld [vmem:[%s280 + $0x30] sm:$0xff]
    %v288 = vld [vmem:[%s280 + $0x38] sm:$0xff]
    %v289 = vld [vmem:[%s280 + $0x40] sm:$0xff]
    %v290 = vld [vmem:[%s280 + $0x48] sm:$0xff]
    %v291 = vld [vmem:[%s280 + $0x50] sm:$0xff]
    %v292 = vld [vmem:[%s280 + $0x58] sm:$0xff]
    %v293 = vld [vmem:[%s280 + $0x60] sm:$0xff]
    %v294 = vld [vmem:[%s280 + $0x68] sm:$0xff]
    %v295 = vld [vmem:[%s280 + $0x70] sm:$0xff]
    %v296 = vld [vmem:[%s280 + $0x78] sm:$0xff]
    %v297 = vld [vmem:[%s280 + $0x80] sm:$0xff]
    %v298 = vld [vmem:[%s280 + $0x88] sm:$0xff]
    %v299 = vld [vmem:[%s280 + $0x90] sm:$0xff]
    %v300 = vld [vmem:[%s280 + $0x98] sm:$0xff]
    %v301 = vld [vmem:[%s280 + $0xa0] sm:$0xff]
    %v302 = vld [vmem:[%s280 + $0xa8] sm:$0xff]
    %v303 = vld [vmem:[%s280 + $0xb0] sm:$0xff]
    %v304 = vld [vmem:[%s280 + $0xb8] sm:$0xff]
    %v305 = vld [vmem:[%s280 + $0xc0] sm:$0xff]
    %v306 = vld [vmem:[%s280 + $0xc8] sm:$0xff]
    %v307 = vld [vmem:[%s280 + $0xd0] sm:$0xff]
    %v308 = vld [vmem:[%s280 + $0xd8] sm:$0xff]
    %v309 = vld [vmem:[%s280 + $0xe0] sm:$0xff]
    %v310 = vld [vmem:[%s280 + $0xe8] sm:$0xff]
    %v311 = vld [vmem:[%s280 + $0xf0] sm:$0xff]
    %v312 = vld [vmem:[%s280 + $0xf8] sm:$0xff]
    %v313 = vld [vmem:[%s280 + $0x100] sm:$0xff]
    %v314 = vld [vmem:[%s280 + $0x108] sm:$0xff]
    %v315 = vld [vmem:[%s280 + $0x110] sm:$0xff]
    %v316 = vld [vmem:[%s280 + $0x118] sm:$0xff]
    %v317 = vld [vmem:[%s280 + $0x120] sm:$0xff]
    %v318 = vld [vmem:[%s280 + $0x128] sm:$0xff]
    %v319 = vld [vmem:[%s280 + $0x130] sm:$0xff]
    %v320 = vld [vmem:[%s280 + $0x138] sm:$0xff]
    %v321 = vld [vmem:[%s280 + $0x140] sm:$0xff]
    %v322 = vld [vmem:[%s280 + $0x148] sm:$0xff]
    %v323 = vld [vmem:[%s280 + $0x150] sm:$0xff]
    %v324 = vld [vmem:[%s280 + $0x158] sm:$0xff]
    %v325 = vld [vmem:[%s280 + $0x160] sm:$0xff]
    %v326 = vld [vmem:[%s280 + $0x168] sm:$0xff]
    %v327 = vld [vmem:[%s280 + $0x170] sm:$0xff]
    %v328 = vld [vmem:[%s280 + $0x178] sm:$0xff]
    %v329 = vld [vmem:[%s280 + $0x180] sm:$0xff]
    %v330 = vld [vmem:[%s280 + $0x188] sm:$0xff]
    %v331 = vld [vmem:[%s280 + $0x190] sm:$0xff]
    %v332 = vld [vmem:[%s280 + $0x198] sm:$0xff]
    %v333 = vld [vmem:[%s280 + $0x1a0] sm:$0xff]
    %v334 = vld [vmem:[%s280 + $0x1a8] sm:$0xff]
    %v335 = vld [vmem:[%s280 + $0x1b0] sm:$0xff]
    %v336 = vld [vmem:[%s280 + $0x1b8] sm:$0xff]
    %v337 = vld [vmem:[%s280 + $0x1c0] sm:$0xff]
    %v338 = vld [vmem:[%s280 + $0x1c8] sm:$0xff]
    %v339 = vld [vmem:[%s280 + $0x1d0] sm:$0xff]
    %v340 = vld [vmem:[%s280 + $0x1d8] sm:$0xff]
    %v341 = vld [vmem:[%s280 + $0x1e0] sm:$0xff]
    %v342 = vld [vmem:[%s280 + $0x1e8] sm:$0xff]
    %v343 = vld [vmem:[%s280 + $0x1f0] sm:$0xff]
    %v344 = vld [vmem:[%s280 + $0x1f8] sm:$0xff]
    %v345 = vld [vmem:[#allocation4] sm:$0xff]
    %v346 = vld [vmem:[#allocation4 + $0x8] sm:$0xff]
    %v347 = vld [vmem:[#allocation4 + $0x10] sm:$0xff]
    %v348 = vld [vmem:[#allocation4 + $0x18] sm:$0xff]
    %v349 = vld [vmem:[#allocation4 + $0x20] sm:$0xff]
    %v350 = vld [vmem:[#allocation4 + $0x28] sm:$0xff]
    %v351 = vld [vmem:[#allocation4 + $0x30] sm:$0xff]
    %v352 = vld [vmem:[#allocation4 + $0x38] sm:$0xff]
    %v353 = vld [vmem:[#allocation4 + $0x40] sm:$0xff]
    %v354 = vld [vmem:[#allocation4 + $0x48] sm:$0xff]
    %v355 = vld [vmem:[#allocation4 + $0x50] sm:$0xff]
    %v356 = vld [vmem:[#allocation4 + $0x58] sm:$0xff]
    %v357 = vld [vmem:[#allocation4 + $0x60] sm:$0xff]
    %v358 = vld [vmem:[#allocation4 + $0x68] sm:$0xff]
    %v359 = vld [vmem:[#allocation4 + $0x70] sm:$0xff]
    %v360 = vld [vmem:[#allocation4 + $0x78] sm:$0xff]
    %v361 = vld [vmem:[#allocation4 + $0x80] sm:$0xff]
    %v362 = vld [vmem:[#allocation4 + $0x88] sm:$0xff]
    %v363 = vld [vmem:[#allocation4 + $0x90] sm:$0xff]
    %v364 = vld [vmem:[#allocation4 + $0x98] sm:$0xff]
    %v365 = vld [vmem:[#allocation4 + $0xa0] sm:$0xff]
    %v366 = vld [vmem:[#allocation4 + $0xa8] sm:$0xff]
    %v367 = vld [vmem:[#allocation4 + $0xb0] sm:$0xff]
    %v368 = vld [vmem:[#allocation4 + $0xb8] sm:$0xff]
    %v369 = vld [vmem:[#allocation4 + $0xc0] sm:$0xff]
    %v370 = vld [vmem:[#allocation4 + $0xc8] sm:$0xff]
    %v371 = vld [vmem:[#allocation4 + $0xd0] sm:$0xff]
    %v372 = vld [vmem:[#allocation4 + $0xd8] sm:$0xff]
    %v373 = vld [vmem:[#allocation4 + $0xe0] sm:$0xff]
    %v374 = vld [vmem:[#allocation4 + $0xe8] sm:$0xff]
    %v375 = vld [vmem:[#allocation4 + $0xf0] sm:$0xff]
    %v376 = vld [vmem:[#allocation4 + $0xf8] sm:$0xff]
    %v377 = vld [vmem:[#allocation4 + $0x100] sm:$0xff]
    %v378 = vld [vmem:[#allocation4 + $0x108] sm:$0xff]
    %v379 = vld [vmem:[#allocation4 + $0x110] sm:$0xff]
    %v380 = vld [vmem:[#allocation4 + $0x118] sm:$0xff]
    %v381 = vld [vmem:[#allocation4 + $0x120] sm:$0xff]
    %v382 = vld [vmem:[#allocation4 + $0x128] sm:$0xff]
    %v383 = vld [vmem:[#allocation4 + $0x130] sm:$0xff]
    %v384 = vld [vmem:[#allocation4 + $0x138] sm:$0xff]
    %v385 = vld [vmem:[#allocation4 + $0x140] sm:$0xff]
    %v386 = vld [vmem:[#allocation4 + $0x148] sm:$0xff]
    %v387 = vld [vmem:[#allocation4 + $0x150] sm:$0xff]
    %v388 = vld [vmem:[#allocation4 + $0x158] sm:$0xff]
    %v389 = vld [vmem:[#allocation4 + $0x160] sm:$0xff]
    %v390 = vld [vmem:[#allocation4 + $0x168] sm:$0xff]
    %v391 = vld [vmem:[#allocation4 + $0x170] sm:$0xff]
    %v392 = vld [vmem:[#allocation4 + $0x178] sm:$0xff]
    %v393 = vld [vmem:[#allocation4 + $0x180] sm:$0xff]
    %v394 = vld [vmem:[#allocation4 + $0x188] sm:$0xff]
    %v395 = vld [vmem:[#allocation4 + $0x190] sm:$0xff]
    %v396 = vld [vmem:[#allocation4 + $0x198] sm:$0xff]
    %v397 = vld [vmem:[#allocation4 + $0x1a0] sm:$0xff]
    %v398 = vld [vmem:[#allocation4 + $0x1a8] sm:$0xff]
    %v399 = vld [vmem:[#allocation4 + $0x1b0] sm:$0xff]
    %v400 = vld [vmem:[#allocation4 + $0x1b8] sm:$0xff]
    %v401 = vld [vmem:[#allocation4 + $0x1c0] sm:$0xff]
    %v402 = vld [vmem:[#allocation4 + $0x1c8] sm:$0xff]
    %v403 = vld [vmem:[#allocation4 + $0x1d0] sm:$0xff]
    %v404 = vld [vmem:[#allocation4 + $0x1d8] sm:$0xff]
    %v405 = vld [vmem:[#allocation4 + $0x1e0] sm:$0xff]
    %v406 = vld [vmem:[#allocation4 + $0x1e8] sm:$0xff]
    %v407 = vld [vmem:[#allocation4 + $0x1f0] sm:$0xff]
    %v408 = vld [vmem:[#allocation4 + $0x1f8] sm:$0xff]
    %s409 = scalar_lea.vmem [#allocation4], 512
    %v410 = vld [vmem:[%s409] sm:$0xff]
    %v411 = vld [vmem:[%s409 + $0x8] sm:$0xff]
    %v412 = vld [vmem:[%s409 + $0x10] sm:$0xff]
    %v413 = vld [vmem:[%s409 + $0x18] sm:$0xff]
    %v414 = vld [vmem:[%s409 + $0x20] sm:$0xff]
    %v415 = vld [vmem:[%s409 + $0x28] sm:$0xff]
    %v416 = vld [vmem:[%s409 + $0x30] sm:$0xff]
    %v417 = vld [vmem:[%s409 + $0x38] sm:$0xff]
    %v418 = vld [vmem:[%s409 + $0x40] sm:$0xff]
    %v419 = vld [vmem:[%s409 + $0x48] sm:$0xff]
    %v420 = vld [vmem:[%s409 + $0x50] sm:$0xff]
    %v421 = vld [vmem:[%s409 + $0x58] sm:$0xff]
    %v422 = vld [vmem:[%s409 + $0x60] sm:$0xff]
    %v423 = vld [vmem:[%s409 + $0x68] sm:$0xff]
    %v424 = vld [vmem:[%s409 + $0x70] sm:$0xff]
    %v425 = vld [vmem:[%s409 + $0x78] sm:$0xff]
    %v426 = vld [vmem:[%s409 + $0x80] sm:$0xff]
    %v427 = vld [vmem:[%s409 + $0x88] sm:$0xff]
    %v428 = vld [vmem:[%s409 + $0x90] sm:$0xff]
    %v429 = vld [vmem:[%s409 + $0x98] sm:$0xff]
    %v430 = vld [vmem:[%s409 + $0xa0] sm:$0xff]
    %v431 = vld [vmem:[%s409 + $0xa8] sm:$0xff]
    %v432 = vld [vmem:[%s409 + $0xb0] sm:$0xff]
    %v433 = vld [vmem:[%s409 + $0xb8] sm:$0xff]
    %v434 = vld [vmem:[%s409 + $0xc0] sm:$0xff]
    %v435 = vld [vmem:[%s409 + $0xc8] sm:$0xff]
    %v436 = vld [vmem:[%s409 + $0xd0] sm:$0xff]
    %v437 = vld [vmem:[%s409 + $0xd8] sm:$0xff]
    %v438 = vld [vmem:[%s409 + $0xe0] sm:$0xff]
    %v439 = vld [vmem:[%s409 + $0xe8] sm:$0xff]
    %v440 = vld [vmem:[%s409 + $0xf0] sm:$0xff]
    %v441 = vld [vmem:[%s409 + $0xf8] sm:$0xff]
    %v442 = vld [vmem:[%s409 + $0x100] sm:$0xff]
    %v443 = vld [vmem:[%s409 + $0x108] sm:$0xff]
    %v444 = vld [vmem:[%s409 + $0x110] sm:$0xff]
    %v445 = vld [vmem:[%s409 + $0x118] sm:$0xff]
    %v446 = vld [vmem:[%s409 + $0x120] sm:$0xff]
    %v447 = vld [vmem:[%s409 + $0x128] sm:$0xff]
    %v448 = vld [vmem:[%s409 + $0x130] sm:$0xff]
    %v449 = vld [vmem:[%s409 + $0x138] sm:$0xff]
    %v450 = vld [vmem:[%s409 + $0x140] sm:$0xff]
    %v451 = vld [vmem:[%s409 + $0x148] sm:$0xff]
    %v452 = vld [vmem:[%s409 + $0x150] sm:$0xff]
    %v453 = vld [vmem:[%s409 + $0x158] sm:$0xff]
    %v454 = vld [vmem:[%s409 + $0x160] sm:$0xff]
    %v455 = vld [vmem:[%s409 + $0x168] sm:$0xff]
    %v456 = vld [vmem:[%s409 + $0x170] sm:$0xff]
    %v457 = vld [vmem:[%s409 + $0x178] sm:$0xff]
    %v458 = vld [vmem:[%s409 + $0x180] sm:$0xff]
    %v459 = vld [vmem:[%s409 + $0x188] sm:$0xff]
    %v460 = vld [vmem:[%s409 + $0x190] sm:$0xff]
    %v461 = vld [vmem:[%s409 + $0x198] sm:$0xff]
    %v462 = vld [vmem:[%s409 + $0x1a0] sm:$0xff]
    %v463 = vld [vmem:[%s409 + $0x1a8] sm:$0xff]
    %v464 = vld [vmem:[%s409 + $0x1b0] sm:$0xff]
    %v465 = vld [vmem:[%s409 + $0x1b8] sm:$0xff]
    %v466 = vld [vmem:[%s409 + $0x1c0] sm:$0xff]
    %v467 = vld [vmem:[%s409 + $0x1c8] sm:$0xff]
    %v468 = vld [vmem:[%s409 + $0x1d0] sm:$0xff]
    %v469 = vld [vmem:[%s409 + $0x1d8] sm:$0xff]
    %v470 = vld [vmem:[%s409 + $0x1e0] sm:$0xff]
    %v471 = vld [vmem:[%s409 + $0x1e8] sm:$0xff]
    %v472 = vld [vmem:[%s409 + $0x1f0] sm:$0xff]
    %v473 = vld [vmem:[%s409 + $0x1f8] sm:$0xff]
    %s474 = scalar_lea.vmem [#allocation4], 1024
    %v475 = vld [vmem:[%s474] sm:$0xff]
    %v476 = vld [vmem:[%s474 + $0x8] sm:$0xff]
    %v477 = vld [vmem:[%s474 + $0x10] sm:$0xff]
    %v478 = vld [vmem:[%s474 + $0x18] sm:$0xff]
    %v479 = vld [vmem:[%s474 + $0x20] sm:$0xff]
    %v480 = vld [vmem:[%s474 + $0x28] sm:$0xff]
    %v481 = vld [vmem:[%s474 + $0x30] sm:$0xff]
    %v482 = vld [vmem:[%s474 + $0x38] sm:$0xff]
    %v483 = vld [vmem:[%s474 + $0x40] sm:$0xff]
    %v484 = vld [vmem:[%s474 + $0x48] sm:$0xff]
    %v485 = vld [vmem:[%s474 + $0x50] sm:$0xff]
    %v486 = vld [vmem:[%s474 + $0x58] sm:$0xff]
    %v487 = vld [vmem:[%s474 + $0x60] sm:$0xff]
    %v488 = vld [vmem:[%s474 + $0x68] sm:$0xff]
    %v489 = vld [vmem:[%s474 + $0x70] sm:$0xff]
    %v490 = vld [vmem:[%s474 + $0x78] sm:$0xff]
    %v491 = vld [vmem:[%s474 + $0x80] sm:$0xff]
    %v492 = vld [vmem:[%s474 + $0x88] sm:$0xff]
    %v493 = vld [vmem:[%s474 + $0x90] sm:$0xff]
    %v494 = vld [vmem:[%s474 + $0x98] sm:$0xff]
    %v495 = vld [vmem:[%s474 + $0xa0] sm:$0xff]
    %v496 = vld [vmem:[%s474 + $0xa8] sm:$0xff]
    %v497 = vld [vmem:[%s474 + $0xb0] sm:$0xff]
    %v498 = vld [vmem:[%s474 + $0xb8] sm:$0xff]
    %v499 = vld [vmem:[%s474 + $0xc0] sm:$0xff]
    %v500 = vld [vmem:[%s474 + $0xc8] sm:$0xff]
    %v501 = vld [vmem:[%s474 + $0xd0] sm:$0xff]
    %v502 = vld [vmem:[%s474 + $0xd8] sm:$0xff]
    %v503 = vld [vmem:[%s474 + $0xe0] sm:$0xff]
    %v504 = vld [vmem:[%s474 + $0xe8] sm:$0xff]
    %v505 = vld [vmem:[%s474 + $0xf0] sm:$0xff]
    %v506 = vld [vmem:[%s474 + $0xf8] sm:$0xff]
    %v507 = vld [vmem:[%s474 + $0x100] sm:$0xff]
    %v508 = vld [vmem:[%s474 + $0x108] sm:$0xff]
    %v509 = vld [vmem:[%s474 + $0x110] sm:$0xff]
    %v510 = vld [vmem:[%s474 + $0x118] sm:$0xff]
    %v511 = vld [vmem:[%s474 + $0x120] sm:$0xff]
    %v512 = vld [vmem:[%s474 + $0x128] sm:$0xff]
    %v513 = vld [vmem:[%s474 + $0x130] sm:$0xff]
    %v514 = vld [vmem:[%s474 + $0x138] sm:$0xff]
    %v515 = vld [vmem:[%s474 + $0x140] sm:$0xff]
    %v516 = vld [vmem:[%s474 + $0x148] sm:$0xff]
    %v517 = vld [vmem:[%s474 + $0x150] sm:$0xff]
    %v518 = vld [vmem:[%s474 + $0x158] sm:$0xff]
    %v519 = vld [vmem:[%s474 + $0x160] sm:$0xff]
    %v520 = vld [vmem:[%s474 + $0x168] sm:$0xff]
    %v521 = vld [vmem:[%s474 + $0x170] sm:$0xff]
    %v522 = vld [vmem:[%s474 + $0x178] sm:$0xff]
    %v523 = vld [vmem:[%s474 + $0x180] sm:$0xff]
    %v524 = vld [vmem:[%s474 + $0x188] sm:$0xff]
    %v525 = vld [vmem:[%s474 + $0x190] sm:$0xff]
    %v526 = vld [vmem:[%s474 + $0x198] sm:$0xff]
    %v527 = vld [vmem:[%s474 + $0x1a0] sm:$0xff]
    %v528 = vld [vmem:[%s474 + $0x1a8] sm:$0xff]
    %v529 = vld [vmem:[%s474 + $0x1b0] sm:$0xff]
    %v530 = vld [vmem:[%s474 + $0x1b8] sm:$0xff]
    %v531 = vld [vmem:[%s474 + $0x1c0] sm:$0xff]
    %v532 = vld [vmem:[%s474 + $0x1c8] sm:$0xff]
    %v533 = vld [vmem:[%s474 + $0x1d0] sm:$0xff]
    %v534 = vld [vmem:[%s474 + $0x1d8] sm:$0xff]
    %v535 = vld [vmem:[%s474 + $0x1e0] sm:$0xff]
    %v536 = vld [vmem:[%s474 + $0x1e8] sm:$0xff]
    %v537 = vld [vmem:[%s474 + $0x1f0] sm:$0xff]
    %v538 = vld [vmem:[%s474 + $0x1f8] sm:$0xff]
    %s539 = scalar_lea.vmem [#allocation4], 1536
    %v540 = vld [vmem:[%s539] sm:$0xff]
    %v541 = vld [vmem:[%s539 + $0x8] sm:$0xff]
    %v542 = vld [vmem:[%s539 + $0x10] sm:$0xff]
    %v543 = vld [vmem:[%s539 + $0x18] sm:$0xff]
    %v544 = vld [vmem:[%s539 + $0x20] sm:$0xff]
    %v545 = vld [vmem:[%s539 + $0x28] sm:$0xff]
    %v546 = vld [vmem:[%s539 + $0x30] sm:$0xff]
    %v547 = vld [vmem:[%s539 + $0x38] sm:$0xff]
    %v548 = vld [vmem:[%s539 + $0x40] sm:$0xff]
    %v549 = vld [vmem:[%s539 + $0x48] sm:$0xff]
    %v550 = vld [vmem:[%s539 + $0x50] sm:$0xff]
    %v551 = vld [vmem:[%s539 + $0x58] sm:$0xff]
    %v552 = vld [vmem:[%s539 + $0x60] sm:$0xff]
    %v553 = vld [vmem:[%s539 + $0x68] sm:$0xff]
    %v554 = vld [vmem:[%s539 + $0x70] sm:$0xff]
    %v555 = vld [vmem:[%s539 + $0x78] sm:$0xff]
    %v556 = vld [vmem:[%s539 + $0x80] sm:$0xff]
    %v557 = vld [vmem:[%s539 + $0x88] sm:$0xff]
    %v558 = vld [vmem:[%s539 + $0x90] sm:$0xff]
    %v559 = vld [vmem:[%s539 + $0x98] sm:$0xff]
    %v560 = vld [vmem:[%s539 + $0xa0] sm:$0xff]
    %v561 = vld [vmem:[%s539 + $0xa8] sm:$0xff]
    %v562 = vld [vmem:[%s539 + $0xb0] sm:$0xff]
    %v563 = vld [vmem:[%s539 + $0xb8] sm:$0xff]
    %v564 = vld [vmem:[%s539 + $0xc0] sm:$0xff]
    %v565 = vld [vmem:[%s539 + $0xc8] sm:$0xff]
    %v566 = vld [vmem:[%s539 + $0xd0] sm:$0xff]
    %v567 = vld [vmem:[%s539 + $0xd8] sm:$0xff]
    %v568 = vld [vmem:[%s539 + $0xe0] sm:$0xff]
    %v569 = vld [vmem:[%s539 + $0xe8] sm:$0xff]
    %v570 = vld [vmem:[%s539 + $0xf0] sm:$0xff]
    %v571 = vld [vmem:[%s539 + $0xf8] sm:$0xff]
    %v572 = vld [vmem:[%s539 + $0x100] sm:$0xff]
    %v573 = vld [vmem:[%s539 + $0x108] sm:$0xff]
    %v574 = vld [vmem:[%s539 + $0x110] sm:$0xff]
    %v575 = vld [vmem:[%s539 + $0x118] sm:$0xff]
    %v576 = vld [vmem:[%s539 + $0x120] sm:$0xff]
    %v577 = vld [vmem:[%s539 + $0x128] sm:$0xff]
    %v578 = vld [vmem:[%s539 + $0x130] sm:$0xff]
    %v579 = vld [vmem:[%s539 + $0x138] sm:$0xff]
    %v580 = vld [vmem:[%s539 + $0x140] sm:$0xff]
    %v581 = vld [vmem:[%s539 + $0x148] sm:$0xff]
    %v582 = vld [vmem:[%s539 + $0x150] sm:$0xff]
    %v583 = vld [vmem:[%s539 + $0x158] sm:$0xff]
    %v584 = vld [vmem:[%s539 + $0x160] sm:$0xff]
    %v585 = vld [vmem:[%s539 + $0x168] sm:$0xff]
    %v586 = vld [vmem:[%s539 + $0x170] sm:$0xff]
    %v587 = vld [vmem:[%s539 + $0x178] sm:$0xff]
    %v588 = vld [vmem:[%s539 + $0x180] sm:$0xff]
    %v589 = vld [vmem:[%s539 + $0x188] sm:$0xff]
    %v590 = vld [vmem:[%s539 + $0x190] sm:$0xff]
    %v591 = vld [vmem:[%s539 + $0x198] sm:$0xff]
    %v592 = vld [vmem:[%s539 + $0x1a0] sm:$0xff]
    %v593 = vld [vmem:[%s539 + $0x1a8] sm:$0xff]
    %v594 = vld [vmem:[%s539 + $0x1b0] sm:$0xff]
    %v595 = vld [vmem:[%s539 + $0x1b8] sm:$0xff]
    %v596 = vld [vmem:[%s539 + $0x1c0] sm:$0xff]
    %v597 = vld [vmem:[%s539 + $0x1c8] sm:$0xff]
    %v598 = vld [vmem:[%s539 + $0x1d0] sm:$0xff]
    %v599 = vld [vmem:[%s539 + $0x1d8] sm:$0xff]
    %v600 = vld [vmem:[%s539 + $0x1e0] sm:$0xff]
    %v601 = vld [vmem:[%s539 + $0x1e8] sm:$0xff]
    %v602 = vld [vmem:[%s539 + $0x1f0] sm:$0xff]
    %v603 = vld [vmem:[%s539 + $0x1f8] sm:$0xff]
    %v604 = vld [vmem:[#allocation6] sm:$0xff]
    %v605 = vld [vmem:[#allocation6 + $0x8] sm:$0xff]
    %v606 = vld [vmem:[#allocation6 + $0x10] sm:$0xff]
    %v607 = vld [vmem:[#allocation6 + $0x18] sm:$0xff]
    %v608 = vld [vmem:[#allocation6 + $0x20] sm:$0xff]
    %v609 = vld [vmem:[#allocation6 + $0x28] sm:$0xff]
    %v610 = vld [vmem:[#allocation6 + $0x30] sm:$0xff]
    %v611 = vld [vmem:[#allocation6 + $0x38] sm:$0xff]
    %v612 = vld [vmem:[#allocation6 + $0x40] sm:$0xff]
    %v613 = vld [vmem:[#allocation6 + $0x48] sm:$0xff]
    %v614 = vld [vmem:[#allocation6 + $0x50] sm:$0xff]
    %v615 = vld [vmem:[#allocation6 + $0x58] sm:$0xff]
    %v616 = vld [vmem:[#allocation6 + $0x60] sm:$0xff]
    %v617 = vld [vmem:[#allocation6 + $0x68] sm:$0xff]
    %v618 = vld [vmem:[#allocation6 + $0x70] sm:$0xff]
    %v619 = vld [vmem:[#allocation6 + $0x78] sm:$0xff]
    %v620 = vld [vmem:[#allocation6 + $0x80] sm:$0xff]
    %v621 = vld [vmem:[#allocation6 + $0x88] sm:$0xff]
    %v622 = vld [vmem:[#allocation6 + $0x90] sm:$0xff]
    %v623 = vld [vmem:[#allocation6 + $0x98] sm:$0xff]
    %v624 = vld [vmem:[#allocation6 + $0xa0] sm:$0xff]
    %v625 = vld [vmem:[#allocation6 + $0xa8] sm:$0xff]
    %v626 = vld [vmem:[#allocation6 + $0xb0] sm:$0xff]
    %v627 = vld [vmem:[#allocation6 + $0xb8] sm:$0xff]
    %v628 = vld [vmem:[#allocation6 + $0xc0] sm:$0xff]
    %v629 = vld [vmem:[#allocation6 + $0xc8] sm:$0xff]
    %v630 = vld [vmem:[#allocation6 + $0xd0] sm:$0xff]
    %v631 = vld [vmem:[#allocation6 + $0xd8] sm:$0xff]
    %v632 = vld [vmem:[#allocation6 + $0xe0] sm:$0xff]
    %v633 = vld [vmem:[#allocation6 + $0xe8] sm:$0xff]
    %v634 = vld [vmem:[#allocation6 + $0xf0] sm:$0xff]
    %v635 = vld [vmem:[#allocation6 + $0xf8] sm:$0xff]
    %s636 = scalar_lea.vmem [#allocation6], 256
    %v637 = vld [vmem:[%s636] sm:$0xff]
    %v638 = vld [vmem:[%s636 + $0x8] sm:$0xff]
    %v639 = vld [vmem:[%s636 + $0x10] sm:$0xff]
    %v640 = vld [vmem:[%s636 + $0x18] sm:$0xff]
    %v641 = vld [vmem:[%s636 + $0x20] sm:$0xff]
    %v642 = vld [vmem:[%s636 + $0x28] sm:$0xff]
    %v643 = vld [vmem:[%s636 + $0x30] sm:$0xff]
    %v644 = vld [vmem:[%s636 + $0x38] sm:$0xff]
    %v645 = vld [vmem:[%s636 + $0x40] sm:$0xff]
    %v646 = vld [vmem:[%s636 + $0x48] sm:$0xff]
    %v647 = vld [vmem:[%s636 + $0x50] sm:$0xff]
    %v648 = vld [vmem:[%s636 + $0x58] sm:$0xff]
    %v649 = vld [vmem:[%s636 + $0x60] sm:$0xff]
    %v650 = vld [vmem:[%s636 + $0x68] sm:$0xff]
    %v651 = vld [vmem:[%s636 + $0x70] sm:$0xff]
    %v652 = vld [vmem:[%s636 + $0x78] sm:$0xff]
    %v653 = vld [vmem:[%s636 + $0x80] sm:$0xff]
    %v654 = vld [vmem:[%s636 + $0x88] sm:$0xff]
    %v655 = vld [vmem:[%s636 + $0x90] sm:$0xff]
    %v656 = vld [vmem:[%s636 + $0x98] sm:$0xff]
    %v657 = vld [vmem:[%s636 + $0xa0] sm:$0xff]
    %v658 = vld [vmem:[%s636 + $0xa8] sm:$0xff]
    %v659 = vld [vmem:[%s636 + $0xb0] sm:$0xff]
    %v660 = vld [vmem:[%s636 + $0xb8] sm:$0xff]
    %v661 = vld [vmem:[%s636 + $0xc0] sm:$0xff]
    %v662 = vld [vmem:[%s636 + $0xc8] sm:$0xff]
    %v663 = vld [vmem:[%s636 + $0xd0] sm:$0xff]
    %v664 = vld [vmem:[%s636 + $0xd8] sm:$0xff]
    %v665 = vld [vmem:[%s636 + $0xe0] sm:$0xff]
    %v666 = vld [vmem:[%s636 + $0xe8] sm:$0xff]
    %v667 = vld [vmem:[%s636 + $0xf0] sm:$0xff]
    %v668 = vld [vmem:[%s636 + $0xf8] sm:$0xff]
    %s669 = scalar_lea.vmem [#allocation6], 512
    %v670 = vld [vmem:[%s669] sm:$0xff]
    %v671 = vld [vmem:[%s669 + $0x8] sm:$0xff]
    %v672 = vld [vmem:[%s669 + $0x10] sm:$0xff]
    %v673 = vld [vmem:[%s669 + $0x18] sm:$0xff]
    %v674 = vld [vmem:[%s669 + $0x20] sm:$0xff]
    %v675 = vld [vmem:[%s669 + $0x28] sm:$0xff]
    %v676 = vld [vmem:[%s669 + $0x30] sm:$0xff]
    %v677 = vld [vmem:[%s669 + $0x38] sm:$0xff]
    %v678 = vld [vmem:[%s669 + $0x40] sm:$0xff]
    %v679 = vld [vmem:[%s669 + $0x48] sm:$0xff]
    %v680 = vld [vmem:[%s669 + $0x50] sm:$0xff]
    %v681 = vld [vmem:[%s669 + $0x58] sm:$0xff]
    %v682 = vld [vmem:[%s669 + $0x60] sm:$0xff]
    %v683 = vld [vmem:[%s669 + $0x68] sm:$0xff]
    %v684 = vld [vmem:[%s669 + $0x70] sm:$0xff]
    %v685 = vld [vmem:[%s669 + $0x78] sm:$0xff]
    %v686 = vld [vmem:[%s669 + $0x80] sm:$0xff]
    %v687 = vld [vmem:[%s669 + $0x88] sm:$0xff]
    %v688 = vld [vmem:[%s669 + $0x90] sm:$0xff]
    %v689 = vld [vmem:[%s669 + $0x98] sm:$0xff]
    %v690 = vld [vmem:[%s669 + $0xa0] sm:$0xff]
    %v691 = vld [vmem:[%s669 + $0xa8] sm:$0xff]
    %v692 = vld [vmem:[%s669 + $0xb0] sm:$0xff]
    %v693 = vld [vmem:[%s669 + $0xb8] sm:$0xff]
    %v694 = vld [vmem:[%s669 + $0xc0] sm:$0xff]
    %v695 = vld [vmem:[%s669 + $0xc8] sm:$0xff]
    %v696 = vld [vmem:[%s669 + $0xd0] sm:$0xff]
    %v697 = vld [vmem:[%s669 + $0xd8] sm:$0xff]
    %v698 = vld [vmem:[%s669 + $0xe0] sm:$0xff]
    %v699 = vld [vmem:[%s669 + $0xe8] sm:$0xff]
    %v700 = vld [vmem:[%s669 + $0xf0] sm:$0xff]
    %v701 = vld [vmem:[%s669 + $0xf8] sm:$0xff]
    %s702 = scalar_lea.vmem [#allocation6], 768
    %v703 = vld [vmem:[%s702] sm:$0xff]
    %v704 = vld [vmem:[%s702 + $0x8] sm:$0xff]
    %v705 = vld [vmem:[%s702 + $0x10] sm:$0xff]
    %v706 = vld [vmem:[%s702 + $0x18] sm:$0xff]
    %v707 = vld [vmem:[%s702 + $0x20] sm:$0xff]
    %v708 = vld [vmem:[%s702 + $0x28] sm:$0xff]
    %v709 = vld [vmem:[%s702 + $0x30] sm:$0xff]
    %v710 = vld [vmem:[%s702 + $0x38] sm:$0xff]
    %v711 = vld [vmem:[%s702 + $0x40] sm:$0xff]
    %v712 = vld [vmem:[%s702 + $0x48] sm:$0xff]
    %v713 = vld [vmem:[%s702 + $0x50] sm:$0xff]
    %v714 = vld [vmem:[%s702 + $0x58] sm:$0xff]
    %v715 = vld [vmem:[%s702 + $0x60] sm:$0xff]
    %v716 = vld [vmem:[%s702 + $0x68] sm:$0xff]
    %v717 = vld [vmem:[%s702 + $0x70] sm:$0xff]
    %v718 = vld [vmem:[%s702 + $0x78] sm:$0xff]
    %v719 = vld [vmem:[%s702 + $0x80] sm:$0xff]
    %v720 = vld [vmem:[%s702 + $0x88] sm:$0xff]
    %v721 = vld [vmem:[%s702 + $0x90] sm:$0xff]
    %v722 = vld [vmem:[%s702 + $0x98] sm:$0xff]
    %v723 = vld [vmem:[%s702 + $0xa0] sm:$0xff]
    %v724 = vld [vmem:[%s702 + $0xa8] sm:$0xff]
    %v725 = vld [vmem:[%s702 + $0xb0] sm:$0xff]
    %v726 = vld [vmem:[%s702 + $0xb8] sm:$0xff]
    %v727 = vld [vmem:[%s702 + $0xc0] sm:$0xff]
    %v728 = vld [vmem:[%s702 + $0xc8] sm:$0xff]
    %v729 = vld [vmem:[%s702 + $0xd0] sm:$0xff]
    %v730 = vld [vmem:[%s702 + $0xd8] sm:$0xff]
    %v731 = vld [vmem:[%s702 + $0xe0] sm:$0xff]
    %v732 = vld [vmem:[%s702 + $0xe8] sm:$0xff]
    %v733 = vld [vmem:[%s702 + $0xf0] sm:$0xff]
    %v734 = vld [vmem:[%s702 + $0xf8] sm:$0xff]
    %v735 = vld [vmem:[#allocation7] sm:$0xff]
    %v736 = vld [vmem:[#allocation7 + $0x8] sm:$0xff]
    %v737 = vld [vmem:[#allocation7 + $0x10] sm:$0xff]
    %v738 = vld [vmem:[#allocation7 + $0x18] sm:$0xff]
    %v739 = vld [vmem:[#allocation7 + $0x20] sm:$0xff]
    %v740 = vld [vmem:[#allocation7 + $0x28] sm:$0xff]
    %v741 = vld [vmem:[#allocation7 + $0x30] sm:$0xff]
    %v742 = vld [vmem:[#allocation7 + $0x38] sm:$0xff]
    %v743 = vld [vmem:[#allocation7 + $0x40] sm:$0xff]
    %v744 = vld [vmem:[#allocation7 + $0x48] sm:$0xff]
    %v745 = vld [vmem:[#allocation7 + $0x50] sm:$0xff]
    %v746 = vld [vmem:[#allocation7 + $0x58] sm:$0xff]
    %v747 = vld [vmem:[#allocation7 + $0x60] sm:$0xff]
    %v748 = vld [vmem:[#allocation7 + $0x68] sm:$0xff]
    %v749 = vld [vmem:[#allocation7 + $0x70] sm:$0xff]
    %v750 = vld [vmem:[#allocation7 + $0x78] sm:$0xff]
    %v751 = vld [vmem:[#allocation7 + $0x80] sm:$0xff]
    %v752 = vld [vmem:[#allocation7 + $0x88] sm:$0xff]
    %v753 = vld [vmem:[#allocation7 + $0x90] sm:$0xff]
    %v754 = vld [vmem:[#allocation7 + $0x98] sm:$0xff]
    %v755 = vld [vmem:[#allocation7 + $0xa0] sm:$0xff]
    %v756 = vld [vmem:[#allocation7 + $0xa8] sm:$0xff]
    %v757 = vld [vmem:[#allocation7 + $0xb0] sm:$0xff]
    %v758 = vld [vmem:[#allocation7 + $0xb8] sm:$0xff]
    %v759 = vld [vmem:[#allocation7 + $0xc0] sm:$0xff]
    %v760 = vld [vmem:[#allocation7 + $0xc8] sm:$0xff]
    %v761 = vld [vmem:[#allocation7 + $0xd0] sm:$0xff]
    %v762 = vld [vmem:[#allocation7 + $0xd8] sm:$0xff]
    %v763 = vld [vmem:[#allocation7 + $0xe0] sm:$0xff]
    %v764 = vld [vmem:[#allocation7 + $0xe8] sm:$0xff]
    %v765 = vld [vmem:[#allocation7 + $0xf0] sm:$0xff]
    %v766 = vld [vmem:[#allocation7 + $0xf8] sm:$0xff]
    %s767 = scalar_lea.vmem [#allocation7], 256
    %v768 = vld [vmem:[%s767] sm:$0xff]
    %v769 = vld [vmem:[%s767 + $0x8] sm:$0xff]
    %v770 = vld [vmem:[%s767 + $0x10] sm:$0xff]
    %v771 = vld [vmem:[%s767 + $0x18] sm:$0xff]
    %v772 = vld [vmem:[%s767 + $0x20] sm:$0xff]
    %v773 = vld [vmem:[%s767 + $0x28] sm:$0xff]
    %v774 = vld [vmem:[%s767 + $0x30] sm:$0xff]
    %v775 = vld [vmem:[%s767 + $0x38] sm:$0xff]
    %v776 = vld [vmem:[%s767 + $0x40] sm:$0xff]
    %v777 = vld [vmem:[%s767 + $0x48] sm:$0xff]
    %v778 = vld [vmem:[%s767 + $0x50] sm:$0xff]
    %v779 = vld [vmem:[%s767 + $0x58] sm:$0xff]
    %v780 = vld [vmem:[%s767 + $0x60] sm:$0xff]
    %v781 = vld [vmem:[%s767 + $0x68] sm:$0xff]
    %v782 = vld [vmem:[%s767 + $0x70] sm:$0xff]
    %v783 = vld [vmem:[%s767 + $0x78] sm:$0xff]
    %v784 = vld [vmem:[%s767 + $0x80] sm:$0xff]
    %v785 = vld [vmem:[%s767 + $0x88] sm:$0xff]
    %v786 = vld [vmem:[%s767 + $0x90] sm:$0xff]
    %v787 = vld [vmem:[%s767 + $0x98] sm:$0xff]
    %v788 = vld [vmem:[%s767 + $0xa0] sm:$0xff]
    %v789 = vld [vmem:[%s767 + $0xa8] sm:$0xff]
    %v790 = vld [vmem:[%s767 + $0xb0] sm:$0xff]
    %v791 = vld [vmem:[%s767 + $0xb8] sm:$0xff]
    %v792 = vld [vmem:[%s767 + $0xc0] sm:$0xff]
    %v793 = vld [vmem:[%s767 + $0xc8] sm:$0xff]
    %v794 = vld [vmem:[%s767 + $0xd0] sm:$0xff]
    %v795 = vld [vmem:[%s767 + $0xd8] sm:$0xff]
    %v796 = vld [vmem:[%s767 + $0xe0] sm:$0xff]
    %v797 = vld [vmem:[%s767 + $0xe8] sm:$0xff]
    %v798 = vld [vmem:[%s767 + $0xf0] sm:$0xff]
    %v799 = vld [vmem:[%s767 + $0xf8] sm:$0xff]
    %s800 = scalar_lea.vmem [#allocation7], 512
    %v801 = vld [vmem:[%s800] sm:$0xff]
    %v802 = vld [vmem:[%s800 + $0x8] sm:$0xff]
    %v803 = vld [vmem:[%s800 + $0x10] sm:$0xff]
    %v804 = vld [vmem:[%s800 + $0x18] sm:$0xff]
    %v805 = vld [vmem:[%s800 + $0x20] sm:$0xff]
    %v806 = vld [vmem:[%s800 + $0x28] sm:$0xff]
    %v807 = vld [vmem:[%s800 + $0x30] sm:$0xff]
    %v808 = vld [vmem:[%s800 + $0x38] sm:$0xff]
    %s809 = scalar_lea.vmem [#allocation7], 768
    %v810 = vld [vmem:[%s809] sm:$0xff]
    %v811 = vld [vmem:[%s809 + $0x8] sm:$0xff]
    %v812 = vld [vmem:[%s809 + $0x10] sm:$0xff]
    %v813 = vld [vmem:[%s809 + $0x18] sm:$0xff]
    %v814 = vld [vmem:[%s809 + $0x20] sm:$0xff]
    %v815 = vld [vmem:[%s809 + $0x28] sm:$0xff]
    %v816 = vld [vmem:[%s809 + $0x30] sm:$0xff]
    %v817 = vld [vmem:[%s809 + $0x38] sm:$0xff]
    %v818 = vld [vmem:[%s809 + $0x40] sm:$0xff]
    %v819 = vld [vmem:[%s809 + $0x48] sm:$0xff]
    %v820 = vld [vmem:[%s809 + $0x50] sm:$0xff]
    %v821 = vld [vmem:[%s809 + $0x58] sm:$0xff]
    %v822 = vld [vmem:[%s809 + $0x60] sm:$0xff]
    %v823 = vld [vmem:[%s809 + $0x68] sm:$0xff]
    %v824 = vld [vmem:[%s809 + $0x70] sm:$0xff]
    %v825 = vld [vmem:[%s809 + $0x78] sm:$0xff]
    %v826 = vld [vmem:[%s809 + $0x80] sm:$0xff]
    %v827 = vld [vmem:[%s809 + $0x88] sm:$0xff]
    %v828 = vld [vmem:[%s809 + $0x90] sm:$0xff]
    %v829 = vld [vmem:[%s809 + $0x98] sm:$0xff]
    %v830 = vld [vmem:[%s809 + $0xa0] sm:$0xff]
    %v831 = vld [vmem:[%s809 + $0xa8] sm:$0xff]
    %v832 = vld [vmem:[%s809 + $0xb0] sm:$0xff]
    %v833 = vld [vmem:[%s809 + $0xb8] sm:$0xff]
    %v834 = vld [vmem:[%s809 + $0xc0] sm:$0xff]
    %v835 = vld [vmem:[%s809 + $0xc8] sm:$0xff]
    %v836 = vld [vmem:[%s809 + $0xd0] sm:$0xff]
    %v837 = vld [vmem:[%s809 + $0xd8] sm:$0xff]
    %v838 = vld [vmem:[%s809 + $0xe0] sm:$0xff]
    %v839 = vld [vmem:[%s809 + $0xe8] sm:$0xff]
    %v840 = vld [vmem:[%s809 + $0xf0] sm:$0xff]
    %v841 = vld [vmem:[%s809 + $0xf8] sm:$0xff]
    %v842 = vld [vmem:[%s0] sm:$0x1]
    %v843 = vld [vmem:[%s1] sm:$0x1]
    %845 = vset.pattern.permute.xlu0 0
    %846 = vperm.xlu0 %845, %v735
    %v847 = vpop.permute.xlu0 %846
    %850 = vset.pattern.permute.xlu0 0
    %851 = vperm.xlu0 %850, %v736
    %v852 = vpop.permute.xlu0 %851
    %855 = vset.pattern.permute.xlu0 0
    %856 = vperm.xlu0 %855, %v737
    %v857 = vpop.permute.xlu0 %856
    %860 = vset.pattern.permute.xlu0 0
    %861 = vperm.xlu0 %860, %v738
    %v862 = vpop.permute.xlu0 %861
    %865 = vset.pattern.permute.xlu0 0
    %866 = vperm.xlu0 %865, %v739
    %v867 = vpop.permute.xlu0 %866
    %870 = vset.pattern.permute.xlu0 0
    %871 = vperm.xlu0 %870, %v740
    %v872 = vpop.permute.xlu0 %871
    %875 = vset.pattern.permute.xlu0 0
    %876 = vperm.xlu0 %875, %v741
    %v877 = vpop.permute.xlu0 %876
    %880 = vset.pattern.permute.xlu0 0
    %881 = vperm.xlu0 %880, %v742
    %v882 = vpop.permute.xlu0 %881
    %v884 = vperm.slane %v842, 0
    %v885 = vmul.f32 %v847, %v884
    %v886 = vmul.f32 %v852, %v884
    %v887 = vmul.f32 %v857, %v884
    %v888 = vmul.f32 %v862, %v884
    %v889 = vmul.f32 %v867, %v884
    %v890 = vmul.f32 %v872, %v884
    %v891 = vmul.f32 %v877, %v884
    %v892 = vmul.f32 %v882, %v884
    %894 = vset.pattern.permute.xlu0 0
    %895 = vperm.xlu0 %894, %v768
    %v896 = vpop.permute.xlu0 %895
    %899 = vset.pattern.permute.xlu0 0
    %900 = vperm.xlu0 %899, %v769
    %v901 = vpop.permute.xlu0 %900
    %904 = vset.pattern.permute.xlu0 0
    %905 = vperm.xlu0 %904, %v770
    %v906 = vpop.permute.xlu0 %905
    %909 = vset.pattern.permute.xlu0 0
    %910 = vperm.xlu0 %909, %v771
    %v911 = vpop.permute.xlu0 %910
    %914 = vset.pattern.permute.xlu0 0
    %915 = vperm.xlu0 %914, %v772
    %v916 = vpop.permute.xlu0 %915
    %919 = vset.pattern.permute.xlu0 0
    %920 = vperm.xlu0 %919, %v773
    %v921 = vpop.permute.xlu0 %920
    %924 = vset.pattern.permute.xlu0 0
    %925 = vperm.xlu0 %924, %v774
    %v926 = vpop.permute.xlu0 %925
    %929 = vset.pattern.permute.xlu0 0
    %930 = vperm.xlu0 %929, %v775
    %v931 = vpop.permute.xlu0 %930
    %v933 = vperm.slane %v843, 0
    %v934 = vmul.f32 %v896, %v933
    %v935 = vmul.f32 %v901, %v933
    %v936 = vmul.f32 %v906, %v933
    %v937 = vmul.f32 %v911, %v933
    %v938 = vmul.f32 %v916, %v933
    %v939 = vmul.f32 %v921, %v933
    %v940 = vmul.f32 %v926, %v933
    %v941 = vmul.f32 %v931, %v933
    %v942 = vadd.f32 %v885, %v934
    %v943 = vadd.f32 %v886, %v935
    %v944 = vadd.f32 %v887, %v936
    %v945 = vadd.f32 %v888, %v937
    %v946 = vadd.f32 %v889, %v938
    %v947 = vadd.f32 %v890, %v939
    %v948 = vadd.f32 %v891, %v940
    %v949 = vadd.f32 %v892, %v941
    %951 = vset.pattern.permute.xlu0 0
    %952 = vperm.xlu0 %951, %v801
    %v953 = vpop.permute.xlu0 %952
    %956 = vset.pattern.permute.xlu0 0
    %957 = vperm.xlu0 %956, %v802
    %v958 = vpop.permute.xlu0 %957
    %961 = vset.pattern.permute.xlu0 0
    %962 = vperm.xlu0 %961, %v803
    %v963 = vpop.permute.xlu0 %962
    %966 = vset.pattern.permute.xlu0 0
    %967 = vperm.xlu0 %966, %v804
    %v968 = vpop.permute.xlu0 %967
    %971 = vset.pattern.permute.xlu0 0
    %972 = vperm.xlu0 %971, %v805
    %v973 = vpop.permute.xlu0 %972
    %976 = vset.pattern.permute.xlu0 0
    %977 = vperm.xlu0 %976, %v806
    %v978 = vpop.permute.xlu0 %977
    %981 = vset.pattern.permute.xlu0 0
    %982 = vperm.xlu0 %981, %v807
    %v983 = vpop.permute.xlu0 %982
    %986 = vset.pattern.permute.xlu0 0
    %987 = vperm.xlu0 %986, %v808
    %v988 = vpop.permute.xlu0 %987
    %v990 = vadd.f32 %v942, %v953
    %v991 = vadd.f32 %v943, %v958
    %v992 = vadd.f32 %v944, %v963
    %v993 = vadd.f32 %v945, %v968
    %v994 = vadd.f32 %v946, %v973
    %v995 = vadd.f32 %v947, %v978
    %v996 = vadd.f32 %v948, %v983
    %v997 = vadd.f32 %v949, %v988
    %v998 = vxor.u32 %v990, 2147483648
    %v999 = vxor.u32 %v991, 2147483648
    %v1000 = vxor.u32 %v992, 2147483648
    %v1001 = vxor.u32 %v993, 2147483648
    %v1002 = vxor.u32 %v994, 2147483648
    %v1003 = vxor.u32 %v995, 2147483648
    %v1004 = vxor.u32 %v996, 2147483648
    %v1005 = vxor.u32 %v997, 2147483648
    %v1006 = vmul.f32 %v998, 1.442695
    %v1007 = vpow.pop %v1006
    %v1008 = vmul.f32 %v999, 1.442695
    %v1009 = vpow.pop %v1008
    %v1010 = vmul.f32 %v1000, 1.442695
    %v1011 = vpow.pop %v1010
    %v1012 = vmul.f32 %v1001, 1.442695
    %v1013 = vpow.pop %v1012
    %v1014 = vmul.f32 %v1002, 1.442695
    %v1015 = vpow.pop %v1014
    %v1016 = vmul.f32 %v1003, 1.442695
    %v1017 = vpow.pop %v1016
    %v1018 = vmul.f32 %v1004, 1.442695
    %v1019 = vpow.pop %v1018
    %v1020 = vmul.f32 %v1005, 1.442695
    %v1021 = vpow.pop %v1020
    %v1022 = vadd.f32 %v1007, 1.0
    %v1023 = vadd.f32 %v1009, 1.0
    %v1024 = vadd.f32 %v1011, 1.0
    %v1025 = vadd.f32 %v1013, 1.0
    %v1026 = vadd.f32 %v1015, 1.0
    %v1027 = vadd.f32 %v1017, 1.0
    %v1028 = vadd.f32 %v1019, 1.0
    %v1029 = vadd.f32 %v1021, 1.0
    %v1030 = vrcp.pop %v1022
    %v1031 = vmul.f32 %v1022, %v1030
    %v1032 = vsub.f32 1.0, %v1031
    %v1033 = vmul.f32 %v1030, %v1032
    %v1034 = vadd.f32 %v1030, %v1033
    %vm1035 = vweird.f32 %v1022
    %vm1036 = vweird.f32 %v1030
    %vm1037 = vmor %vm1035, %vm1036
    %v1038 = vsel %vm1037, %v1030, %v1034
    %v1039 = vand.u32 2147483647, %v1022
    %vm1040 = vcmp.eq.f32.partialorder %v1039, 8.507059e+37
    %v1041 = vand.u32 %v1022, 2147483648
    %v1042 = vor.u32 1.1754944e-38, %v1041
    %v1043 = vsel %vm1040, %v1042, %v1038
    %v1044 = vmul.f32 1.0, %v1043
    %v1045 = vrcp.pop %v1023
    %v1046 = vmul.f32 %v1023, %v1045
    %v1047 = vsub.f32 1.0, %v1046
    %v1048 = vmul.f32 %v1045, %v1047
    %v1049 = vadd.f32 %v1045, %v1048
    %vm1050 = vweird.f32 %v1023
    %vm1051 = vweird.f32 %v1045
    %vm1052 = vmor %vm1050, %vm1051
    %v1053 = vsel %vm1052, %v1045, %v1049
    %v1054 = vand.u32 2147483647, %v1023
    %vm1055 = vcmp.eq.f32.partialorder %v1054, 8.507059e+37
    %v1056 = vand.u32 %v1023, 2147483648
    %v1057 = vor.u32 1.1754944e-38, %v1056
    %v1058 = vsel %vm1055, %v1057, %v1053
    %v1059 = vmul.f32 1.0, %v1058
    %v1060 = vrcp.pop %v1024
    %v1061 = vmul.f32 %v1024, %v1060
    %v1062 = vsub.f32 1.0, %v1061
    %v1063 = vmul.f32 %v1060, %v1062
    %v1064 = vadd.f32 %v1060, %v1063
    %vm1065 = vweird.f32 %v1024
    %vm1066 = vweird.f32 %v1060
    %vm1067 = vmor %vm1065, %vm1066
    %v1068 = vsel %vm1067, %v1060, %v1064
    %v1069 = vand.u32 2147483647, %v1024
    %vm1070 = vcmp.eq.f32.partialorder %v1069, 8.507059e+37
    %v1071 = vand.u32 %v1024, 2147483648
    %v1072 = vor.u32 1.1754944e-38, %v1071
    %v1073 = vsel %vm1070, %v1072, %v1068
    %v1074 = vmul.f32 1.0, %v1073
    %v1075 = vrcp.pop %v1025
    %v1076 = vmul.f32 %v1025, %v1075
    %v1077 = vsub.f32 1.0, %v1076
    %v1078 = vmul.f32 %v1075, %v1077
    %v1079 = vadd.f32 %v1075, %v1078
    %vm1080 = vweird.f32 %v1025
    %vm1081 = vweird.f32 %v1075
    %vm1082 = vmor %vm1080, %vm1081
    %v1083 = vsel %vm1082, %v1075, %v1079
    %v1084 = vand.u32 2147483647, %v1025
    %vm1085 = vcmp.eq.f32.partialorder %v1084, 8.507059e+37
    %v1086 = vand.u32 %v1025, 2147483648
    %v1087 = vor.u32 1.1754944e-38, %v1086
    %v1088 = vsel %vm1085, %v1087, %v1083
    %v1089 = vmul.f32 1.0, %v1088
    %v1090 = vrcp.pop %v1026
    %v1091 = vmul.f32 %v1026, %v1090
    %v1092 = vsub.f32 1.0, %v1091
    %v1093 = vmul.f32 %v1090, %v1092
    %v1094 = vadd.f32 %v1090, %v1093
    %vm1095 = vweird.f32 %v1026
    %vm1096 = vweird.f32 %v1090
    %vm1097 = vmor %vm1095, %vm1096
    %v1098 = vsel %vm1097, %v1090, %v1094
    %v1099 = vand.u32 2147483647, %v1026
    %vm1100 = vcmp.eq.f32.partialorder %v1099, 8.507059e+37
    %v1101 = vand.u32 %v1026, 2147483648
    %v1102 = vor.u32 1.1754944e-38, %v1101
    %v1103 = vsel %vm1100, %v1102, %v1098
    %v1104 = vmul.f32 1.0, %v1103
    %v1105 = vrcp.pop %v1027
    %v1106 = vmul.f32 %v1027, %v1105
    %v1107 = vsub.f32 1.0, %v1106
    %v1108 = vmul.f32 %v1105, %v1107
    %v1109 = vadd.f32 %v1105, %v1108
    %vm1110 = vweird.f32 %v1027
    %vm1111 = vweird.f32 %v1105
    %vm1112 = vmor %vm1110, %vm1111
    %v1113 = vsel %vm1112, %v1105, %v1109
    %v1114 = vand.u32 2147483647, %v1027
    %vm1115 = vcmp.eq.f32.partialorder %v1114, 8.507059e+37
    %v1116 = vand.u32 %v1027, 2147483648
    %v1117 = vor.u32 1.1754944e-38, %v1116
    %v1118 = vsel %vm1115, %v1117, %v1113
    %v1119 = vmul.f32 1.0, %v1118
    %v1120 = vrcp.pop %v1028
    %v1121 = vmul.f32 %v1028, %v1120
    %v1122 = vsub.f32 1.0, %v1121
    %v1123 = vmul.f32 %v1120, %v1122
    %v1124 = vadd.f32 %v1120, %v1123
    %vm1125 = vweird.f32 %v1028
    %vm1126 = vweird.f32 %v1120
    %vm1127 = vmor %vm1125, %vm1126
    %v1128 = vsel %vm1127, %v1120, %v1124
    %v1129 = vand.u32 2147483647, %v1028
    %vm1130 = vcmp.eq.f32.partialorder %v1129, 8.507059e+37
    %v1131 = vand.u32 %v1028, 2147483648
    %v1132 = vor.u32 1.1754944e-38, %v1131
    %v1133 = vsel %vm1130, %v1132, %v1128
    %v1134 = vmul.f32 1.0, %v1133
    %v1135 = vrcp.pop %v1029
    %v1136 = vmul.f32 %v1029, %v1135
    %v1137 = vsub.f32 1.0, %v1136
    %v1138 = vmul.f32 %v1135, %v1137
    %v1139 = vadd.f32 %v1135, %v1138
    %vm1140 = vweird.f32 %v1029
    %vm1141 = vweird.f32 %v1135
    %vm1142 = vmor %vm1140, %vm1141
    %v1143 = vsel %vm1142, %v1135, %v1139
    %v1144 = vand.u32 2147483647, %v1029
    %vm1145 = vcmp.eq.f32.partialorder %v1144, 8.507059e+37
    %v1146 = vand.u32 %v1029, 2147483648
    %v1147 = vor.u32 1.1754944e-38, %v1146
    %v1148 = vsel %vm1145, %v1147, %v1143
    %v1149 = vmul.f32 1.0, %v1148
    %v1150 = vld [vmem:[%s0 + $0x1] sm:$0x1]
    %v1151 = vld [vmem:[%s1 + $0x1] sm:$0x1]
    %v1152 = vperm.slane %v1150, 0
    %v1153 = vmul.f32 %v847, %v1152
    %v1154 = vmul.f32 %v852, %v1152
    %v1155 = vmul.f32 %v857, %v1152
    %v1156 = vmul.f32 %v862, %v1152
    %v1157 = vmul.f32 %v867, %v1152
    %v1158 = vmul.f32 %v872, %v1152
    %v1159 = vmul.f32 %v877, %v1152
    %v1160 = vmul.f32 %v882, %v1152
    %v1161 = vperm.slane %v1151, 0
    %v1162 = vmul.f32 %v896, %v1161
    %v1163 = vmul.f32 %v901, %v1161
    %v1164 = vmul.f32 %v906, %v1161
    %v1165 = vmul.f32 %v911, %v1161
    %v1166 = vmul.f32 %v916, %v1161
    %v1167 = vmul.f32 %v921, %v1161
    %v1168 = vmul.f32 %v926, %v1161
    %v1169 = vmul.f32 %v931, %v1161
    %v1170 = vadd.f32 %v1153, %v1162
    %v1171 = vadd.f32 %v1154, %v1163
    %v1172 = vadd.f32 %v1155, %v1164
    %v1173 = vadd.f32 %v1156, %v1165
    %v1174 = vadd.f32 %v1157, %v1166
    %v1175 = vadd.f32 %v1158, %v1167
    %v1176 = vadd.f32 %v1159, %v1168
    %v1177 = vadd.f32 %v1160, %v1169
    %v1178 = vadd.f32 %v1170, %v953
    %v1179 = vadd.f32 %v1171, %v958
    %v1180 = vadd.f32 %v1172, %v963
    %v1181 = vadd.f32 %v1173, %v968
    %v1182 = vadd.f32 %v1174, %v973
    %v1183 = vadd.f32 %v1175, %v978
    %v1184 = vadd.f32 %v1176, %v983
    %v1185 = vadd.f32 %v1177, %v988
    %v1186 = vxor.u32 %v1178, 2147483648
    %v1187 = vxor.u32 %v1179, 2147483648
    %v1188 = vxor.u32 %v1180, 2147483648
    %v1189 = vxor.u32 %v1181, 2147483648
    %v1190 = vxor.u32 %v1182, 2147483648
    %v1191 = vxor.u32 %v1183, 2147483648
    %v1192 = vxor.u32 %v1184, 2147483648
    %v1193 = vxor.u32 %v1185, 2147483648
    %v1194 = vmul.f32 %v1186, 1.442695
    %v1195 = vpow.pop %v1194
    %v1196 = vmul.f32 %v1187, 1.442695
    %v1197 = vpow.pop %v1196
    %v1198 = vmul.f32 %v1188, 1.442695
    %v1199 = vpow.pop %v1198
    %v1200 = vmul.f32 %v1189, 1.442695
    %v1201 = vpow.pop %v1200
    %v1202 = vmul.f32 %v1190, 1.442695
    %v1203 = vpow.pop %v1202
    %v1204 = vmul.f32 %v1191, 1.442695
    %v1205 = vpow.pop %v1204
    %v1206 = vmul.f32 %v1192, 1.442695
    %v1207 = vpow.pop %v1206
    %v1208 = vmul.f32 %v1193, 1.442695
    %v1209 = vpow.pop %v1208
    %v1210 = vadd.f32 %v1195, 1.0
    %v1211 = vadd.f32 %v1197, 1.0
    %v1212 = vadd.f32 %v1199, 1.0
    %v1213 = vadd.f32 %v1201, 1.0
    %v1214 = vadd.f32 %v1203, 1.0
    %v1215 = vadd.f32 %v1205, 1.0
    %v1216 = vadd.f32 %v1207, 1.0
    %v1217 = vadd.f32 %v1209, 1.0
    %v1218 = vrcp.pop %v1210
    %v1219 = vmul.f32 %v1210, %v1218
    %v1220 = vsub.f32 1.0, %v1219
    %v1221 = vmul.f32 %v1218, %v1220
    %v1222 = vadd.f32 %v1218, %v1221
    %vm1223 = vweird.f32 %v1210
    %vm1224 = vweird.f32 %v1218
    %vm1225 = vmor %vm1223, %vm1224
    %v1226 = vsel %vm1225, %v1218, %v1222
    %v1227 = vand.u32 2147483647, %v1210
    %vm1228 = vcmp.eq.f32.partialorder %v1227, 8.507059e+37
    %v1229 = vand.u32 %v1210, 2147483648
    %v1230 = vor.u32 1.1754944e-38, %v1229
    %v1231 = vsel %vm1228, %v1230, %v1226
    %v1232 = vmul.f32 1.0, %v1231
    %v1233 = vrcp.pop %v1211
    %v1234 = vmul.f32 %v1211, %v1233
    %v1235 = vsub.f32 1.0, %v1234
    %v1236 = vmul.f32 %v1233, %v1235
    %v1237 = vadd.f32 %v1233, %v1236
    %vm1238 = vweird.f32 %v1211
    %vm1239 = vweird.f32 %v1233
    %vm1240 = vmor %vm1238, %vm1239
    %v1241 = vsel %vm1240, %v1233, %v1237
    %v1242 = vand.u32 2147483647, %v1211
    %vm1243 = vcmp.eq.f32.partialorder %v1242, 8.507059e+37
    %v1244 = vand.u32 %v1211, 2147483648
    %v1245 = vor.u32 1.1754944e-38, %v1244
    %v1246 = vsel %vm1243, %v1245, %v1241
    %v1247 = vmul.f32 1.0, %v1246
    %v1248 = vrcp.pop %v1212
    %v1249 = vmul.f32 %v1212, %v1248
    %v1250 = vsub.f32 1.0, %v1249
    %v1251 = vmul.f32 %v1248, %v1250
    %v1252 = vadd.f32 %v1248, %v1251
    %vm1253 = vweird.f32 %v1212
    %vm1254 = vweird.f32 %v1248
    %vm1255 = vmor %vm1253, %vm1254
    %v1256 = vsel %vm1255, %v1248, %v1252
    %v1257 = vand.u32 2147483647, %v1212
    %vm1258 = vcmp.eq.f32.partialorder %v1257, 8.507059e+37
    %v1259 = vand.u32 %v1212, 2147483648
    %v1260 = vor.u32 1.1754944e-38, %v1259
    %v1261 = vsel %vm1258, %v1260, %v1256
    %v1262 = vmul.f32 1.0, %v1261
    %v1263 = vrcp.pop %v1213
    %v1264 = vmul.f32 %v1213, %v1263
    %v1265 = vsub.f32 1.0, %v1264
    %v1266 = vmul.f32 %v1263, %v1265
    %v1267 = vadd.f32 %v1263, %v1266
    %vm1268 = vweird.f32 %v1213
    %vm1269 = vweird.f32 %v1263
    %vm1270 = vmor %vm1268, %vm1269
    %v1271 = vsel %vm1270, %v1263, %v1267
    %v1272 = vand.u32 2147483647, %v1213
    %vm1273 = vcmp.eq.f32.partialorder %v1272, 8.507059e+37
    %v1274 = vand.u32 %v1213, 2147483648
    %v1275 = vor.u32 1.1754944e-38, %v1274
    %v1276 = vsel %vm1273, %v1275, %v1271
    %v1277 = vmul.f32 1.0, %v1276
    %v1278 = vrcp.pop %v1214
    %v1279 = vmul.f32 %v1214, %v1278
    %v1280 = vsub.f32 1.0, %v1279
    %v1281 = vmul.f32 %v1278, %v1280
    %v1282 = vadd.f32 %v1278, %v1281
    %vm1283 = vweird.f32 %v1214
    %vm1284 = vweird.f32 %v1278
    %vm1285 = vmor %vm1283, %vm1284
    %v1286 = vsel %vm1285, %v1278, %v1282
    %v1287 = vand.u32 2147483647, %v1214
    %vm1288 = vcmp.eq.f32.partialorder %v1287, 8.507059e+37
    %v1289 = vand.u32 %v1214, 2147483648
    %v1290 = vor.u32 1.1754944e-38, %v1289
    %v1291 = vsel %vm1288, %v1290, %v1286
    %v1292 = vmul.f32 1.0, %v1291
    %v1293 = vrcp.pop %v1215
    %v1294 = vmul.f32 %v1215, %v1293
    %v1295 = vsub.f32 1.0, %v1294
    %v1296 = vmul.f32 %v1293, %v1295
    %v1297 = vadd.f32 %v1293, %v1296
    %vm1298 = vweird.f32 %v1215
    %vm1299 = vweird.f32 %v1293
    %vm1300 = vmor %vm1298, %vm1299
    %v1301 = vsel %vm1300, %v1293, %v1297
    %v1302 = vand.u32 2147483647, %v1215
    %vm1303 = vcmp.eq.f32.partialorder %v1302, 8.507059e+37
    %v1304 = vand.u32 %v1215, 2147483648
    %v1305 = vor.u32 1.1754944e-38, %v1304
    %v1306 = vsel %vm1303, %v1305, %v1301
    %v1307 = vmul.f32 1.0, %v1306
    %v1308 = vrcp.pop %v1216
    %v1309 = vmul.f32 %v1216, %v1308
    %v1310 = vsub.f32 1.0, %v1309
    %v1311 = vmul.f32 %v1308, %v1310
    %v1312 = vadd.f32 %v1308, %v1311
    %vm1313 = vweird.f32 %v1216
    %vm1314 = vweird.f32 %v1308
    %vm1315 = vmor %vm1313, %vm1314
    %v1316 = vsel %vm1315, %v1308, %v1312
    %v1317 = vand.u32 2147483647, %v1216
    %vm1318 = vcmp.eq.f32.partialorder %v1317, 8.507059e+37
    %v1319 = vand.u32 %v1216, 2147483648
    %v1320 = vor.u32 1.1754944e-38, %v1319
    %v1321 = vsel %vm1318, %v1320, %v1316
    %v1322 = vmul.f32 1.0, %v1321
    %v1323 = vrcp.pop %v1217
    %v1324 = vmul.f32 %v1217, %v1323
    %v1325 = vsub.f32 1.0, %v1324
    %v1326 = vmul.f32 %v1323, %v1325
    %v1327 = vadd.f32 %v1323, %v1326
    %vm1328 = vweird.f32 %v1217
    %vm1329 = vweird.f32 %v1323
    %vm1330 = vmor %vm1328, %vm1329
    %v1331 = vsel %vm1330, %v1323, %v1327
    %v1332 = vand.u32 2147483647, %v1217
    %vm1333 = vcmp.eq.f32.partialorder %v1332, 8.507059e+37
    %v1334 = vand.u32 %v1217, 2147483648
    %v1335 = vor.u32 1.1754944e-38, %v1334
    %v1336 = vsel %vm1333, %v1335, %v1331
    %v1337 = vmul.f32 1.0, %v1336
    %v1338 = vld [vmem:[%s0 + $0x2] sm:$0x1]
    %v1339 = vld [vmem:[%s1 + $0x2] sm:$0x1]
    %v1340 = vperm.slane %v1338, 0
    %v1341 = vmul.f32 %v847, %v1340
    %v1342 = vmul.f32 %v852, %v1340
    %v1343 = vmul.f32 %v857, %v1340
    %v1344 = vmul.f32 %v862, %v1340
    %v1345 = vmul.f32 %v867, %v1340
    %v1346 = vmul.f32 %v872, %v1340
    %v1347 = vmul.f32 %v877, %v1340
    %v1348 = vmul.f32 %v882, %v1340
    %v1349 = vperm.slane %v1339, 0
    %v1350 = vmul.f32 %v896, %v1349
    %v1351 = vmul.f32 %v901, %v1349
    %v1352 = vmul.f32 %v906, %v1349
    %v1353 = vmul.f32 %v911, %v1349
    %v1354 = vmul.f32 %v916, %v1349
    %v1355 = vmul.f32 %v921, %v1349
    %v1356 = vmul.f32 %v926, %v1349
    %v1357 = vmul.f32 %v931, %v1349
    %v1358 = vadd.f32 %v1341, %v1350
    %v1359 = vadd.f32 %v1342, %v1351
    %v1360 = vadd.f32 %v1343, %v1352
    %v1361 = vadd.f32 %v1344, %v1353
    %v1362 = vadd.f32 %v1345, %v1354
    %v1363 = vadd.f32 %v1346, %v1355
    %v1364 = vadd.f32 %v1347, %v1356
    %v1365 = vadd.f32 %v1348, %v1357
    %v1366 = vadd.f32 %v1358, %v953
    %v1367 = vadd.f32 %v1359, %v958
    %v1368 = vadd.f32 %v1360, %v963
    %v1369 = vadd.f32 %v1361, %v968
    %v1370 = vadd.f32 %v1362, %v973
    %v1371 = vadd.f32 %v1363, %v978
    %v1372 = vadd.f32 %v1364, %v983
    %v1373 = vadd.f32 %v1365, %v988
    %v1374 = vxor.u32 %v1366, 2147483648
    %v1375 = vxor.u32 %v1367, 2147483648
    %v1376 = vxor.u32 %v1368, 2147483648
    %v1377 = vxor.u32 %v1369, 2147483648
    %v1378 = vxor.u32 %v1370, 2147483648
    %v1379 = vxor.u32 %v1371, 2147483648
    %v1380 = vxor.u32 %v1372, 2147483648
    %v1381 = vxor.u32 %v1373, 2147483648
    %v1382 = vmul.f32 %v1374, 1.442695
    %v1383 = vpow.pop %v1382
    %v1384 = vmul.f32 %v1375, 1.442695
    %v1385 = vpow.pop %v1384
    %v1386 = vmul.f32 %v1376, 1.442695
    %v1387 = vpow.pop %v1386
    %v1388 = vmul.f32 %v1377, 1.442695
    %v1389 = vpow.pop %v1388
    %v1390 = vmul.f32 %v1378, 1.442695
    %v1391 = vpow.pop %v1390
    %v1392 = vmul.f32 %v1379, 1.442695
    %v1393 = vpow.pop %v1392
    %v1394 = vmul.f32 %v1380, 1.442695
    %v1395 = vpow.pop %v1394
    %v1396 = vmul.f32 %v1381, 1.442695
    %v1397 = vpow.pop %v1396
    %v1398 = vadd.f32 %v1383, 1.0
    %v1399 = vadd.f32 %v1385, 1.0
    %v1400 = vadd.f32 %v1387, 1.0
    %v1401 = vadd.f32 %v1389, 1.0
    %v1402 = vadd.f32 %v1391, 1.0
    %v1403 = vadd.f32 %v1393, 1.0
    %v1404 = vadd.f32 %v1395, 1.0
    %v1405 = vadd.f32 %v1397, 1.0
    %v1406 = vrcp.pop %v1398
    %v1407 = vmul.f32 %v1398, %v1406
    %v1408 = vsub.f32 1.0, %v1407
    %v1409 = vmul.f32 %v1406, %v1408
    %v1410 = vadd.f32 %v1406, %v1409
    %vm1411 = vweird.f32 %v1398
    %vm1412 = vweird.f32 %v1406
    %vm1413 = vmor %vm1411, %vm1412
    %v1414 = vsel %vm1413, %v1406, %v1410
    %v1415 = vand.u32 2147483647, %v1398
    %vm1416 = vcmp.eq.f32.partialorder %v1415, 8.507059e+37
    %v1417 = vand.u32 %v1398, 2147483648
    %v1418 = vor.u32 1.1754944e-38, %v1417
    %v1419 = vsel %vm1416, %v1418, %v1414
    %v1420 = vmul.f32 1.0, %v1419
    %v1421 = vrcp.pop %v1399
    %v1422 = vmul.f32 %v1399, %v1421
    %v1423 = vsub.f32 1.0, %v1422
    %v1424 = vmul.f32 %v1421, %v1423
    %v1425 = vadd.f32 %v1421, %v1424
    %vm1426 = vweird.f32 %v1399
    %vm1427 = vweird.f32 %v1421
    %vm1428 = vmor %vm1426, %vm1427
    %v1429 = vsel %vm1428, %v1421, %v1425
    %v1430 = vand.u32 2147483647, %v1399
    %vm1431 = vcmp.eq.f32.partialorder %v1430, 8.507059e+37
    %v1432 = vand.u32 %v1399, 2147483648
    %v1433 = vor.u32 1.1754944e-38, %v1432
    %v1434 = vsel %vm1431, %v1433, %v1429
    %v1435 = vmul.f32 1.0, %v1434
    %v1436 = vrcp.pop %v1400
    %v1437 = vmul.f32 %v1400, %v1436
    %v1438 = vsub.f32 1.0, %v1437
    %v1439 = vmul.f32 %v1436, %v1438
    %v1440 = vadd.f32 %v1436, %v1439
    %vm1441 = vweird.f32 %v1400
    %vm1442 = vweird.f32 %v1436
    %vm1443 = vmor %vm1441, %vm1442
    %v1444 = vsel %vm1443, %v1436, %v1440
    %v1445 = vand.u32 2147483647, %v1400
    %vm1446 = vcmp.eq.f32.partialorder %v1445, 8.507059e+37
    %v1447 = vand.u32 %v1400, 2147483648
    %v1448 = vor.u32 1.1754944e-38, %v1447
    %v1449 = vsel %vm1446, %v1448, %v1444
    %v1450 = vmul.f32 1.0, %v1449
    %v1451 = vrcp.pop %v1401
    %v1452 = vmul.f32 %v1401, %v1451
    %v1453 = vsub.f32 1.0, %v1452
    %v1454 = vmul.f32 %v1451, %v1453
    %v1455 = vadd.f32 %v1451, %v1454
    %vm1456 = vweird.f32 %v1401
    %vm1457 = vweird.f32 %v1451
    %vm1458 = vmor %vm1456, %vm1457
    %v1459 = vsel %vm1458, %v1451, %v1455
    %v1460 = vand.u32 2147483647, %v1401
    %vm1461 = vcmp.eq.f32.partialorder %v1460, 8.507059e+37
    %v1462 = vand.u32 %v1401, 2147483648
    %v1463 = vor.u32 1.1754944e-38, %v1462
    %v1464 = vsel %vm1461, %v1463, %v1459
    %v1465 = vmul.f32 1.0, %v1464
    %v1466 = vrcp.pop %v1402
    %v1467 = vmul.f32 %v1402, %v1466
    %v1468 = vsub.f32 1.0, %v1467
    %v1469 = vmul.f32 %v1466, %v1468
    %v1470 = vadd.f32 %v1466, %v1469
    %vm1471 = vweird.f32 %v1402
    %vm1472 = vweird.f32 %v1466
    %vm1473 = vmor %vm1471, %vm1472
    %v1474 = vsel %vm1473, %v1466, %v1470
    %v1475 = vand.u32 2147483647, %v1402
    %vm1476 = vcmp.eq.f32.partialorder %v1475, 8.507059e+37
    %v1477 = vand.u32 %v1402, 2147483648
    %v1478 = vor.u32 1.1754944e-38, %v1477
    %v1479 = vsel %vm1476, %v1478, %v1474
    %v1480 = vmul.f32 1.0, %v1479
    %v1481 = vrcp.pop %v1403
    %v1482 = vmul.f32 %v1403, %v1481
    %v1483 = vsub.f32 1.0, %v1482
    %v1484 = vmul.f32 %v1481, %v1483
    %v1485 = vadd.f32 %v1481, %v1484
    %vm1486 = vweird.f32 %v1403
    %vm1487 = vweird.f32 %v1481
    %vm1488 = vmor %vm1486, %vm1487
    %v1489 = vsel %vm1488, %v1481, %v1485
    %v1490 = vand.u32 2147483647, %v1403
    %vm1491 = vcmp.eq.f32.partialorder %v1490, 8.507059e+37
    %v1492 = vand.u32 %v1403, 2147483648
    %v1493 = vor.u32 1.1754944e-38, %v1492
    %v1494 = vsel %vm1491, %v1493, %v1489
    %v1495 = vmul.f32 1.0, %v1494
    %v1496 = vrcp.pop %v1404
    %v1497 = vmul.f32 %v1404, %v1496
    %v1498 = vsub.f32 1.0, %v1497
    %v1499 = vmul.f32 %v1496, %v1498
    %v1500 = vadd.f32 %v1496, %v1499
    %vm1501 = vweird.f32 %v1404
    %vm1502 = vweird.f32 %v1496
    %vm1503 = vmor %vm1501, %vm1502
    %v1504 = vsel %vm1503, %v1496, %v1500
    %v1505 = vand.u32 2147483647, %v1404
    %vm1506 = vcmp.eq.f32.partialorder %v1505, 8.507059e+37
    %v1507 = vand.u32 %v1404, 2147483648
    %v1508 = vor.u32 1.1754944e-38, %v1507
    %v1509 = vsel %vm1506, %v1508, %v1504
    %v1510 = vmul.f32 1.0, %v1509
    %v1511 = vrcp.pop %v1405
    %v1512 = vmul.f32 %v1405, %v1511
    %v1513 = vsub.f32 1.0, %v1512
    %v1514 = vmul.f32 %v1511, %v1513
    %v1515 = vadd.f32 %v1511, %v1514
    %vm1516 = vweird.f32 %v1405
    %vm1517 = vweird.f32 %v1511
    %vm1518 = vmor %vm1516, %vm1517
    %v1519 = vsel %vm1518, %v1511, %v1515
    %v1520 = vand.u32 2147483647, %v1405
    %vm1521 = vcmp.eq.f32.partialorder %v1520, 8.507059e+37
    %v1522 = vand.u32 %v1405, 2147483648
    %v1523 = vor.u32 1.1754944e-38, %v1522
    %v1524 = vsel %vm1521, %v1523, %v1519
    %v1525 = vmul.f32 1.0, %v1524
    %v1526 = vld [vmem:[%s0 + $0x3] sm:$0x1]
    %v1527 = vld [vmem:[%s1 + $0x3] sm:$0x1]
    %v1528 = vperm.slane %v1526, 0
    %v1529 = vmul.f32 %v847, %v1528
    %v1530 = vmul.f32 %v852, %v1528
    %v1531 = vmul.f32 %v857, %v1528
    %v1532 = vmul.f32 %v862, %v1528
    %v1533 = vmul.f32 %v867, %v1528
    %v1534 = vmul.f32 %v872, %v1528
    %v1535 = vmul.f32 %v877, %v1528
    %v1536 = vmul.f32 %v882, %v1528
    %v1537 = vperm.slane %v1527, 0
    %v1538 = vmul.f32 %v896, %v1537
    %v1539 = vmul.f32 %v901, %v1537
    %v1540 = vmul.f32 %v906, %v1537
    %v1541 = vmul.f32 %v911, %v1537
    %v1542 = vmul.f32 %v916, %v1537
    %v1543 = vmul.f32 %v921, %v1537
    %v1544 = vmul.f32 %v926, %v1537
    %v1545 = vmul.f32 %v931, %v1537
    %v1546 = vadd.f32 %v1529, %v1538
    %v1547 = vadd.f32 %v1530, %v1539
    %v1548 = vadd.f32 %v1531, %v1540
    %v1549 = vadd.f32 %v1532, %v1541
    %v1550 = vadd.f32 %v1533, %v1542
    %v1551 = vadd.f32 %v1534, %v1543
    %v1552 = vadd.f32 %v1535, %v1544
    %v1553 = vadd.f32 %v1536, %v1545
    %v1554 = vadd.f32 %v1546, %v953
    %v1555 = vadd.f32 %v1547, %v958
    %v1556 = vadd.f32 %v1548, %v963
    %v1557 = vadd.f32 %v1549, %v968
    %v1558 = vadd.f32 %v1550, %v973
    %v1559 = vadd.f32 %v1551, %v978
    %v1560 = vadd.f32 %v1552, %v983
    %v1561 = vadd.f32 %v1553, %v988
    %v1562 = vxor.u32 %v1554, 2147483648
    %v1563 = vxor.u32 %v1555, 2147483648
    %v1564 = vxor.u32 %v1556, 2147483648
    %v1565 = vxor.u32 %v1557, 2147483648
    %v1566 = vxor.u32 %v1558, 2147483648
    %v1567 = vxor.u32 %v1559, 2147483648
    %v1568 = vxor.u32 %v1560, 2147483648
    %v1569 = vxor.u32 %v1561, 2147483648
    %v1570 = vmul.f32 %v1562, 1.442695
    %v1571 = vpow.pop %v1570
    %v1572 = vmul.f32 %v1563, 1.442695
    %v1573 = vpow.pop %v1572
    %v1574 = vmul.f32 %v1564, 1.442695
    %v1575 = vpow.pop %v1574
    %v1576 = vmul.f32 %v1565, 1.442695
    %v1577 = vpow.pop %v1576
    %v1578 = vmul.f32 %v1566, 1.442695
    %v1579 = vpow.pop %v1578
    %v1580 = vmul.f32 %v1567, 1.442695
    %v1581 = vpow.pop %v1580
    %v1582 = vmul.f32 %v1568, 1.442695
    %v1583 = vpow.pop %v1582
    %v1584 = vmul.f32 %v1569, 1.442695
    %v1585 = vpow.pop %v1584
    %v1586 = vadd.f32 %v1571, 1.0
    %v1587 = vadd.f32 %v1573, 1.0
    %v1588 = vadd.f32 %v1575, 1.0
    %v1589 = vadd.f32 %v1577, 1.0
    %v1590 = vadd.f32 %v1579, 1.0
    %v1591 = vadd.f32 %v1581, 1.0
    %v1592 = vadd.f32 %v1583, 1.0
    %v1593 = vadd.f32 %v1585, 1.0
    %v1594 = vrcp.pop %v1586
    %v1595 = vmul.f32 %v1586, %v1594
    %v1596 = vsub.f32 1.0, %v1595
    %v1597 = vmul.f32 %v1594, %v1596
    %v1598 = vadd.f32 %v1594, %v1597
    %vm1599 = vweird.f32 %v1586
    %vm1600 = vweird.f32 %v1594
    %vm1601 = vmor %vm1599, %vm1600
    %v1602 = vsel %vm1601, %v1594, %v1598
    %v1603 = vand.u32 2147483647, %v1586
    %vm1604 = vcmp.eq.f32.partialorder %v1603, 8.507059e+37
    %v1605 = vand.u32 %v1586, 2147483648
    %v1606 = vor.u32 1.1754944e-38, %v1605
    %v1607 = vsel %vm1604, %v1606, %v1602
    %v1608 = vmul.f32 1.0, %v1607
    %v1609 = vrcp.pop %v1587
    %v1610 = vmul.f32 %v1587, %v1609
    %v1611 = vsub.f32 1.0, %v1610
    %v1612 = vmul.f32 %v1609, %v1611
    %v1613 = vadd.f32 %v1609, %v1612
    %vm1614 = vweird.f32 %v1587
    %vm1615 = vweird.f32 %v1609
    %vm1616 = vmor %vm1614, %vm1615
    %v1617 = vsel %vm1616, %v1609, %v1613
    %v1618 = vand.u32 2147483647, %v1587
    %vm1619 = vcmp.eq.f32.partialorder %v1618, 8.507059e+37
    %v1620 = vand.u32 %v1587, 2147483648
    %v1621 = vor.u32 1.1754944e-38, %v1620
    %v1622 = vsel %vm1619, %v1621, %v1617
    %v1623 = vmul.f32 1.0, %v1622
    %v1624 = vrcp.pop %v1588
    %v1625 = vmul.f32 %v1588, %v1624
    %v1626 = vsub.f32 1.0, %v1625
    %v1627 = vmul.f32 %v1624, %v1626
    %v1628 = vadd.f32 %v1624, %v1627
    %vm1629 = vweird.f32 %v1588
    %vm1630 = vweird.f32 %v1624
    %vm1631 = vmor %vm1629, %vm1630
    %v1632 = vsel %vm1631, %v1624, %v1628
    %v1633 = vand.u32 2147483647, %v1588
    %vm1634 = vcmp.eq.f32.partialorder %v1633, 8.507059e+37
    %v1635 = vand.u32 %v1588, 2147483648
    %v1636 = vor.u32 1.1754944e-38, %v1635
    %v1637 = vsel %vm1634, %v1636, %v1632
    %v1638 = vmul.f32 1.0, %v1637
    %v1639 = vrcp.pop %v1589
    %v1640 = vmul.f32 %v1589, %v1639
    %v1641 = vsub.f32 1.0, %v1640
    %v1642 = vmul.f32 %v1639, %v1641
    %v1643 = vadd.f32 %v1639, %v1642
    %vm1644 = vweird.f32 %v1589
    %vm1645 = vweird.f32 %v1639
    %vm1646 = vmor %vm1644, %vm1645
    %v1647 = vsel %vm1646, %v1639, %v1643
    %v1648 = vand.u32 2147483647, %v1589
    %vm1649 = vcmp.eq.f32.partialorder %v1648, 8.507059e+37
    %v1650 = vand.u32 %v1589, 2147483648
    %v1651 = vor.u32 1.1754944e-38, %v1650
    %v1652 = vsel %vm1649, %v1651, %v1647
    %v1653 = vmul.f32 1.0, %v1652
    %v1654 = vrcp.pop %v1590
    %v1655 = vmul.f32 %v1590, %v1654
    %v1656 = vsub.f32 1.0, %v1655
    %v1657 = vmul.f32 %v1654, %v1656
    %v1658 = vadd.f32 %v1654, %v1657
    %vm1659 = vweird.f32 %v1590
    %vm1660 = vweird.f32 %v1654
    %vm1661 = vmor %vm1659, %vm1660
    %v1662 = vsel %vm1661, %v1654, %v1658
    %v1663 = vand.u32 2147483647, %v1590
    %vm1664 = vcmp.eq.f32.partialorder %v1663, 8.507059e+37
    %v1665 = vand.u32 %v1590, 2147483648
    %v1666 = vor.u32 1.1754944e-38, %v1665
    %v1667 = vsel %vm1664, %v1666, %v1662
    %v1668 = vmul.f32 1.0, %v1667
    %v1669 = vrcp.pop %v1591
    %v1670 = vmul.f32 %v1591, %v1669
    %v1671 = vsub.f32 1.0, %v1670
    %v1672 = vmul.f32 %v1669, %v1671
    %v1673 = vadd.f32 %v1669, %v1672
    %vm1674 = vweird.f32 %v1591
    %vm1675 = vweird.f32 %v1669
    %vm1676 = vmor %vm1674, %vm1675
    %v1677 = vsel %vm1676, %v1669, %v1673
    %v1678 = vand.u32 2147483647, %v1591
    %vm1679 = vcmp.eq.f32.partialorder %v1678, 8.507059e+37
    %v1680 = vand.u32 %v1591, 2147483648
    %v1681 = vor.u32 1.1754944e-38, %v1680
    %v1682 = vsel %vm1679, %v1681, %v1677
    %v1683 = vmul.f32 1.0, %v1682
    %v1684 = vrcp.pop %v1592
    %v1685 = vmul.f32 %v1592, %v1684
    %v1686 = vsub.f32 1.0, %v1685
    %v1687 = vmul.f32 %v1684, %v1686
    %v1688 = vadd.f32 %v1684, %v1687
    %vm1689 = vweird.f32 %v1592
    %vm1690 = vweird.f32 %v1684
    %vm1691 = vmor %vm1689, %vm1690
    %v1692 = vsel %vm1691, %v1684, %v1688
    %v1693 = vand.u32 2147483647, %v1592
    %vm1694 = vcmp.eq.f32.partialorder %v1693, 8.507059e+37
    %v1695 = vand.u32 %v1592, 2147483648
    %v1696 = vor.u32 1.1754944e-38, %v1695
    %v1697 = vsel %vm1694, %v1696, %v1692
    %v1698 = vmul.f32 1.0, %v1697
    %v1699 = vrcp.pop %v1593
    %v1700 = vmul.f32 %v1593, %v1699
    %v1701 = vsub.f32 1.0, %v1700
    %v1702 = vmul.f32 %v1699, %v1701
    %v1703 = vadd.f32 %v1699, %v1702
    %vm1704 = vweird.f32 %v1593
    %vm1705 = vweird.f32 %v1699
    %vm1706 = vmor %vm1704, %vm1705
    %v1707 = vsel %vm1706, %v1699, %v1703
    %v1708 = vand.u32 2147483647, %v1593
    %vm1709 = vcmp.eq.f32.partialorder %v1708, 8.507059e+37
    %v1710 = vand.u32 %v1593, 2147483648
    %v1711 = vor.u32 1.1754944e-38, %v1710
    %v1712 = vsel %vm1709, %v1711, %v1707
    %v1713 = vmul.f32 1.0, %v1712
    %1715 = vset.pattern.permute.xlu0 0
    %1716 = vperm.xlu0 %1715, %v604
    %v1717 = vpop.permute.xlu0 %1716
    %1720 = vset.pattern.permute.xlu0 0
    %1721 = vperm.xlu0 %1720, %v605
    %v1722 = vpop.permute.xlu0 %1721
    %1725 = vset.pattern.permute.xlu0 0
    %1726 = vperm.xlu0 %1725, %v606
    %v1727 = vpop.permute.xlu0 %1726
    %1730 = vset.pattern.permute.xlu0 0
    %1731 = vperm.xlu0 %1730, %v607
    %v1732 = vpop.permute.xlu0 %1731
    %1735 = vset.pattern.permute.xlu0 0
    %1736 = vperm.xlu0 %1735, %v608
    %v1737 = vpop.permute.xlu0 %1736
    %1740 = vset.pattern.permute.xlu0 0
    %1741 = vperm.xlu0 %1740, %v609
    %v1742 = vpop.permute.xlu0 %1741
    %1745 = vset.pattern.permute.xlu0 0
    %1746 = vperm.xlu0 %1745, %v610
    %v1747 = vpop.permute.xlu0 %1746
    %1750 = vset.pattern.permute.xlu0 0
    %1751 = vperm.xlu0 %1750, %v611
    %v1752 = vpop.permute.xlu0 %1751
    %1755 = vset.pattern.permute.xlu0 0
    %1756 = vperm.xlu0 %1755, %v612
    %v1757 = vpop.permute.xlu0 %1756
    %1760 = vset.pattern.permute.xlu0 0
    %1761 = vperm.xlu0 %1760, %v613
    %v1762 = vpop.permute.xlu0 %1761
    %1765 = vset.pattern.permute.xlu0 0
    %1766 = vperm.xlu0 %1765, %v614
    %v1767 = vpop.permute.xlu0 %1766
    %1770 = vset.pattern.permute.xlu0 0
    %1771 = vperm.xlu0 %1770, %v615
    %v1772 = vpop.permute.xlu0 %1771
    %1775 = vset.pattern.permute.xlu0 0
    %1776 = vperm.xlu0 %1775, %v616
    %v1777 = vpop.permute.xlu0 %1776
    %1780 = vset.pattern.permute.xlu0 0
    %1781 = vperm.xlu0 %1780, %v617
    %v1782 = vpop.permute.xlu0 %1781
    %1785 = vset.pattern.permute.xlu0 0
    %1786 = vperm.xlu0 %1785, %v618
    %v1787 = vpop.permute.xlu0 %1786
    %1790 = vset.pattern.permute.xlu0 0
    %1791 = vperm.xlu0 %1790, %v619
    %v1792 = vpop.permute.xlu0 %1791
    %1795 = vset.pattern.permute.xlu0 0
    %1796 = vperm.xlu0 %1795, %v620
    %v1797 = vpop.permute.xlu0 %1796
    %1800 = vset.pattern.permute.xlu0 0
    %1801 = vperm.xlu0 %1800, %v621
    %v1802 = vpop.permute.xlu0 %1801
    %1805 = vset.pattern.permute.xlu0 0
    %1806 = vperm.xlu0 %1805, %v622
    %v1807 = vpop.permute.xlu0 %1806
    %1810 = vset.pattern.permute.xlu0 0
    %1811 = vperm.xlu0 %1810, %v623
    %v1812 = vpop.permute.xlu0 %1811
    %1815 = vset.pattern.permute.xlu0 0
    %1816 = vperm.xlu0 %1815, %v624
    %v1817 = vpop.permute.xlu0 %1816
    %1820 = vset.pattern.permute.xlu0 0
    %1821 = vperm.xlu0 %1820, %v625
    %v1822 = vpop.permute.xlu0 %1821
    %1825 = vset.pattern.permute.xlu0 0
    %1826 = vperm.xlu0 %1825, %v626
    %v1827 = vpop.permute.xlu0 %1826
    %1830 = vset.pattern.permute.xlu0 0
    %1831 = vperm.xlu0 %1830, %v627
    %v1832 = vpop.permute.xlu0 %1831
    %1835 = vset.pattern.permute.xlu0 0
    %1836 = vperm.xlu0 %1835, %v628
    %v1837 = vpop.permute.xlu0 %1836
    %1840 = vset.pattern.permute.xlu0 0
    %1841 = vperm.xlu0 %1840, %v629
    %v1842 = vpop.permute.xlu0 %1841
    %1845 = vset.pattern.permute.xlu0 0
    %1846 = vperm.xlu0 %1845, %v630
    %v1847 = vpop.permute.xlu0 %1846
    %1850 = vset.pattern.permute.xlu0 0
    %1851 = vperm.xlu0 %1850, %v631
    %v1852 = vpop.permute.xlu0 %1851
    %1855 = vset.pattern.permute.xlu0 0
    %1856 = vperm.xlu0 %1855, %v632
    %v1857 = vpop.permute.xlu0 %1856
    %1860 = vset.pattern.permute.xlu0 0
    %1861 = vperm.xlu0 %1860, %v633
    %v1862 = vpop.permute.xlu0 %1861
    %1865 = vset.pattern.permute.xlu0 0
    %1866 = vperm.xlu0 %1865, %v634
    %v1867 = vpop.permute.xlu0 %1866
    %1870 = vset.pattern.permute.xlu0 0
    %1871 = vperm.xlu0 %1870, %v635
    %v1872 = vpop.permute.xlu0 %1871
    %1874 = vmatpush.msra.mxu0 %v1337
    %1875 = vmatpush.msra.mxu0 %v1322
    %1876 = vmatpush.msra.mxu0 %v1307
    %1877 = vmatpush.msra.mxu0 %v1292
    %1878 = vmatpush.msra.mxu0 %v1277
    %1879 = vmatpush.msra.mxu0 %v1262
    %1880 = vmatpush.msra.mxu0 %v1247
    %1881 = vmatpush.msra.mxu0 %v1232
    %1882 = vmatpush.msra.mxu0 %v1149
    %1883 = vmatpush.msra.mxu0 %v1134
    %1884 = vmatpush.msra.mxu0 %v1119
    %1885 = vmatpush.msra.mxu0 %v1104
    %1886 = vmatpush.msra.mxu0 %v1089
    %1887 = vmatpush.msra.mxu0 %v1074
    %1888 = vmatpush.msra.mxu0 %v1059
    %1889 = vmatpush.msra.mxu0 %v1044
    %1890 = vmatmul.f32.gmra.mxu0 %v86
    %v1891 = vpop.f32.mrf.mxu0
    %v1892 = vadd.f32 %v1717, %v1891
    %1893 = vmatmul.f32.gmra.mxu0 %v88
    %v1894 = vpop.f32.mrf.mxu0
    %v1895 = vadd.f32 %v1722, %v1894
    %1896 = vmatmul.f32.gmra.mxu0 %v90
    %v1897 = vpop.f32.mrf.mxu0
    %v1898 = vadd.f32 %v1727, %v1897
    %1899 = vmatmul.f32.gmra.mxu0 %v92
    %v1900 = vpop.f32.mrf.mxu0
    %v1901 = vadd.f32 %v1732, %v1900
    %1902 = vmatmul.f32.gmra.mxu0 %v94
    %v1903 = vpop.f32.mrf.mxu0
    %v1904 = vadd.f32 %v1737, %v1903
    %1905 = vmatmul.f32.gmra.mxu0 %v96
    %v1906 = vpop.f32.mrf.mxu0
    %v1907 = vadd.f32 %v1742, %v1906
    %1908 = vmatmul.f32.gmra.mxu0 %v98
    %v1909 = vpop.f32.mrf.mxu0
    %v1910 = vadd.f32 %v1747, %v1909
    %1911 = vmatmul.f32.gmra.mxu0 %v100
    %v1912 = vpop.f32.mrf.mxu0
    %v1913 = vadd.f32 %v1752, %v1912
    %1914 = vmatmul.f32.gmra.mxu0 %v102
    %v1915 = vpop.f32.mrf.mxu0
    %v1916 = vadd.f32 %v1757, %v1915
    %1917 = vmatmul.f32.gmra.mxu0 %v104
    %v1918 = vpop.f32.mrf.mxu0
    %v1919 = vadd.f32 %v1762, %v1918
    %1920 = vmatmul.f32.gmra.mxu0 %v106
    %v1921 = vpop.f32.mrf.mxu0
    %v1922 = vadd.f32 %v1767, %v1921
    %1923 = vmatmul.f32.gmra.mxu0 %v108
    %v1924 = vpop.f32.mrf.mxu0
    %v1925 = vadd.f32 %v1772, %v1924
    %1926 = vmatmul.f32.gmra.mxu0 %v110
    %v1927 = vpop.f32.mrf.mxu0
    %v1928 = vadd.f32 %v1777, %v1927
    %1929 = vmatmul.f32.gmra.mxu0 %v112
    %v1930 = vpop.f32.mrf.mxu0
    %v1931 = vadd.f32 %v1782, %v1930
    %1932 = vmatmul.f32.gmra.mxu0 %v114
    %v1933 = vpop.f32.mrf.mxu0
    %v1934 = vadd.f32 %v1787, %v1933
    %1935 = vmatmul.f32.gmra.mxu0 %v116
    %v1936 = vpop.f32.mrf.mxu0
    %v1937 = vadd.f32 %v1792, %v1936
    %1938 = vmatmul.f32.gmra.mxu0 %v118
    %v1939 = vpop.f32.mrf.mxu0
    %v1940 = vadd.f32 %v1797, %v1939
    %1941 = vmatmul.f32.gmra.mxu0 %v120
    %v1942 = vpop.f32.mrf.mxu0
    %v1943 = vadd.f32 %v1802, %v1942
    %1944 = vmatmul.f32.gmra.mxu0 %v122
    %v1945 = vpop.f32.mrf.mxu0
    %v1946 = vadd.f32 %v1807, %v1945
    %1947 = vmatmul.f32.gmra.mxu0 %v124
    %v1948 = vpop.f32.mrf.mxu0
    %v1949 = vadd.f32 %v1812, %v1948
    %1950 = vmatmul.f32.gmra.mxu0 %v126
    %v1951 = vpop.f32.mrf.mxu0
    %v1952 = vadd.f32 %v1817, %v1951
    %1953 = vmatmul.f32.gmra.mxu0 %v128
    %v1954 = vpop.f32.mrf.mxu0
    %v1955 = vadd.f32 %v1822, %v1954
    %1956 = vmatmul.f32.gmra.mxu0 %v130
    %v1957 = vpop.f32.mrf.mxu0
    %v1958 = vadd.f32 %v1827, %v1957
    %1959 = vmatmul.f32.gmra.mxu0 %v132
    %v1960 = vpop.f32.mrf.mxu0
    %v1961 = vadd.f32 %v1832, %v1960
    %1962 = vmatmul.f32.gmra.mxu0 %v134
    %v1963 = vpop.f32.mrf.mxu0
    %v1964 = vadd.f32 %v1837, %v1963
    %1965 = vmatmul.f32.gmra.mxu0 %v136
    %v1966 = vpop.f32.mrf.mxu0
    %v1967 = vadd.f32 %v1842, %v1966
    %1968 = vmatmul.f32.gmra.mxu0 %v138
    %v1969 = vpop.f32.mrf.mxu0
    %v1970 = vadd.f32 %v1847, %v1969
    %1971 = vmatmul.f32.gmra.mxu0 %v140
    %v1972 = vpop.f32.mrf.mxu0
    %v1973 = vadd.f32 %v1852, %v1972
    %1974 = vmatmul.f32.gmra.mxu0 %v142
    %v1975 = vpop.f32.mrf.mxu0
    %v1976 = vadd.f32 %v1857, %v1975
    %1977 = vmatmul.f32.gmra.mxu0 %v144
    %v1978 = vpop.f32.mrf.mxu0
    %v1979 = vadd.f32 %v1862, %v1978
    %1980 = vmatmul.f32.gmra.mxu0 %v146
    %v1981 = vpop.f32.mrf.mxu0
    %v1982 = vadd.f32 %v1867, %v1981
    %1983 = vmatmul.f32.gmra.mxu0 %v148
    %v1984 = vpop.f32.mrf.mxu0
    %v1985 = vadd.f32 %v1872, %v1984
    %1986 = vdwg.mxu0
    %1987 = vmatpush.msra.mxu0 %v1713
    %1988 = vmatpush.msra.mxu0 %v1698
    %1989 = vmatpush.msra.mxu0 %v1683
    %1990 = vmatpush.msra.mxu0 %v1668
    %1991 = vmatpush.msra.mxu0 %v1653
    %1992 = vmatpush.msra.mxu0 %v1638
    %1993 = vmatpush.msra.mxu0 %v1623
    %1994 = vmatpush.msra.mxu0 %v1608
    %1995 = vmatpush.msra.mxu0 %v1525
    %1996 = vmatpush.msra.mxu0 %v1510
    %1997 = vmatpush.msra.mxu0 %v1495
    %1998 = vmatpush.msra.mxu0 %v1480
    %1999 = vmatpush.msra.mxu0 %v1465
    %2000 = vmatpush.msra.mxu0 %v1450
    %2001 = vmatpush.msra.mxu0 %v1435
    %2002 = vmatpush.msra.mxu0 %v1420
    %2003 = vmatmul.f32.gmra.mxu0 %v87
    %v2004 = vpop.f32.mrf.mxu0
    %v2005 = vadd.f32 %v1892, %v2004
    %2006 = vmatmul.f32.gmra.mxu0 %v89
    %v2007 = vpop.f32.mrf.mxu0
    %v2008 = vadd.f32 %v1895, %v2007
    %2009 = vmatmul.f32.gmra.mxu0 %v91
    %v2010 = vpop.f32.mrf.mxu0
    %v2011 = vadd.f32 %v1898, %v2010
    %2012 = vmatmul.f32.gmra.mxu0 %v93
    %v2013 = vpop.f32.mrf.mxu0
    %v2014 = vadd.f32 %v1901, %v2013
    %2015 = vmatmul.f32.gmra.mxu0 %v95
    %v2016 = vpop.f32.mrf.mxu0
    %v2017 = vadd.f32 %v1904, %v2016
    %2018 = vmatmul.f32.gmra.mxu0 %v97
    %v2019 = vpop.f32.mrf.mxu0
    %v2020 = vadd.f32 %v1907, %v2019
    %2021 = vmatmul.f32.gmra.mxu0 %v99
    %v2022 = vpop.f32.mrf.mxu0
    %v2023 = vadd.f32 %v1910, %v2022
    %2024 = vmatmul.f32.gmra.mxu0 %v101
    %v2025 = vpop.f32.mrf.mxu0
    %v2026 = vadd.f32 %v1913, %v2025
    %2027 = vmatmul.f32.gmra.mxu0 %v103
    %v2028 = vpop.f32.mrf.mxu0
    %v2029 = vadd.f32 %v1916, %v2028
    %2030 = vmatmul.f32.gmra.mxu0 %v105
    %v2031 = vpop.f32.mrf.mxu0
    %v2032 = vadd.f32 %v1919, %v2031
    %2033 = vmatmul.f32.gmra.mxu0 %v107
    %v2034 = vpop.f32.mrf.mxu0
    %v2035 = vadd.f32 %v1922, %v2034
    %2036 = vmatmul.f32.gmra.mxu0 %v109
    %v2037 = vpop.f32.mrf.mxu0
    %v2038 = vadd.f32 %v1925, %v2037
    %2039 = vmatmul.f32.gmra.mxu0 %v111
    %v2040 = vpop.f32.mrf.mxu0
    %v2041 = vadd.f32 %v1928, %v2040
    %2042 = vmatmul.f32.gmra.mxu0 %v113
    %v2043 = vpop.f32.mrf.mxu0
    %v2044 = vadd.f32 %v1931, %v2043
    %2045 = vmatmul.f32.gmra.mxu0 %v115
    %v2046 = vpop.f32.mrf.mxu0
    %v2047 = vadd.f32 %v1934, %v2046
    %2048 = vmatmul.f32.gmra.mxu0 %v117
    %v2049 = vpop.f32.mrf.mxu0
    %v2050 = vadd.f32 %v1937, %v2049
    %2051 = vmatmul.f32.gmra.mxu0 %v119
    %v2052 = vpop.f32.mrf.mxu0
    %v2053 = vadd.f32 %v1940, %v2052
    %2054 = vmatmul.f32.gmra.mxu0 %v121
    %v2055 = vpop.f32.mrf.mxu0
    %v2056 = vadd.f32 %v1943, %v2055
    %2057 = vmatmul.f32.gmra.mxu0 %v123
    %v2058 = vpop.f32.mrf.mxu0
    %v2059 = vadd.f32 %v1946, %v2058
    %2060 = vmatmul.f32.gmra.mxu0 %v125
    %v2061 = vpop.f32.mrf.mxu0
    %v2062 = vadd.f32 %v1949, %v2061
    %2063 = vmatmul.f32.gmra.mxu0 %v127
    %v2064 = vpop.f32.mrf.mxu0
    %v2065 = vadd.f32 %v1952, %v2064
    %2066 = vmatmul.f32.gmra.mxu0 %v129
    %v2067 = vpop.f32.mrf.mxu0
    %v2068 = vadd.f32 %v1955, %v2067
    %2069 = vmatmul.f32.gmra.mxu0 %v131
    %v2070 = vpop.f32.mrf.mxu0
    %v2071 = vadd.f32 %v1958, %v2070
    %2072 = vmatmul.f32.gmra.mxu0 %v133
    %v2073 = vpop.f32.mrf.mxu0
    %v2074 = vadd.f32 %v1961, %v2073
    %2075 = vmatmul.f32.gmra.mxu0 %v135
    %v2076 = vpop.f32.mrf.mxu0
    %v2077 = vadd.f32 %v1964, %v2076
    %2078 = vmatmul.f32.gmra.mxu0 %v137
    %v2079 = vpop.f32.mrf.mxu0
    %v2080 = vadd.f32 %v1967, %v2079
    %2081 = vmatmul.f32.gmra.mxu0 %v139
    %v2082 = vpop.f32.mrf.mxu0
    %v2083 = vadd.f32 %v1970, %v2082
    %2084 = vmatmul.f32.gmra.mxu0 %v141
    %v2085 = vpop.f32.mrf.mxu0
    %v2086 = vadd.f32 %v1973, %v2085
    %2087 = vmatmul.f32.gmra.mxu0 %v143
    %v2088 = vpop.f32.mrf.mxu0
    %v2089 = vadd.f32 %v1976, %v2088
    %2090 = vmatmul.f32.gmra.mxu0 %v145
    %v2091 = vpop.f32.mrf.mxu0
    %v2092 = vadd.f32 %v1979, %v2091
    %2093 = vmatmul.f32.gmra.mxu0 %v147
    %v2094 = vpop.f32.mrf.mxu0
    %v2095 = vadd.f32 %v1982, %v2094
    %2096 = vmatmul.f32.gmra.mxu0 %v149
    %v2097 = vpop.f32.mrf.mxu0
    %v2098 = vadd.f32 %v1985, %v2097
    %2099 = vdwg.mxu0
    %v2100 = vxor.u32 %v2005, 2147483648
    %v2101 = vxor.u32 %v2008, 2147483648
    %v2102 = vxor.u32 %v2011, 2147483648
    %v2103 = vxor.u32 %v2014, 2147483648
    %v2104 = vxor.u32 %v2017, 2147483648
    %v2105 = vxor.u32 %v2020, 2147483648
    %v2106 = vxor.u32 %v2023, 2147483648
    %v2107 = vxor.u32 %v2026, 2147483648
    %v2108 = vxor.u32 %v2029, 2147483648
    %v2109 = vxor.u32 %v2032, 2147483648
    %v2110 = vxor.u32 %v2035, 2147483648
    %v2111 = vxor.u32 %v2038, 2147483648
    %v2112 = vxor.u32 %v2041, 2147483648
    %v2113 = vxor.u32 %v2044, 2147483648
    %v2114 = vxor.u32 %v2047, 2147483648
    %v2115 = vxor.u32 %v2050, 2147483648
    %v2116 = vxor.u32 %v2053, 2147483648
    %v2117 = vxor.u32 %v2056, 2147483648
    %v2118 = vxor.u32 %v2059, 2147483648
    %v2119 = vxor.u32 %v2062, 2147483648
    %v2120 = vxor.u32 %v2065, 2147483648
    %v2121 = vxor.u32 %v2068, 2147483648
    %v2122 = vxor.u32 %v2071, 2147483648
    %v2123 = vxor.u32 %v2074, 2147483648
    %v2124 = vxor.u32 %v2077, 2147483648
    %v2125 = vxor.u32 %v2080, 2147483648
    %v2126 = vxor.u32 %v2083, 2147483648
    %v2127 = vxor.u32 %v2086, 2147483648
    %v2128 = vxor.u32 %v2089, 2147483648
    %v2129 = vxor.u32 %v2092, 2147483648
    %v2130 = vxor.u32 %v2095, 2147483648
    %v2131 = vxor.u32 %v2098, 2147483648
    %v2132 = vmul.f32 %v2100, 1.442695
    %v2133 = vpow.pop %v2132
    %v2134 = vmul.f32 %v2101, 1.442695
    %v2135 = vpow.pop %v2134
    %v2136 = vmul.f32 %v2102, 1.442695
    %v2137 = vpow.pop %v2136
    %v2138 = vmul.f32 %v2103, 1.442695
    %v2139 = vpow.pop %v2138
    %v2140 = vmul.f32 %v2104, 1.442695
    %v2141 = vpow.pop %v2140
    %v2142 = vmul.f32 %v2105, 1.442695
    %v2143 = vpow.pop %v2142
    %v2144 = vmul.f32 %v2106, 1.442695
    %v2145 = vpow.pop %v2144
    %v2146 = vmul.f32 %v2107, 1.442695
    %v2147 = vpow.pop %v2146
    %v2148 = vmul.f32 %v2108, 1.442695
    %v2149 = vpow.pop %v2148
    %v2150 = vmul.f32 %v2109, 1.442695
    %v2151 = vpow.pop %v2150
    %v2152 = vmul.f32 %v2110, 1.442695
    %v2153 = vpow.pop %v2152
    %v2154 = vmul.f32 %v2111, 1.442695
    %v2155 = vpow.pop %v2154
    %v2156 = vmul.f32 %v2112, 1.442695
    %v2157 = vpow.pop %v2156
    %v2158 = vmul.f32 %v2113, 1.442695
    %v2159 = vpow.pop %v2158
    %v2160 = vmul.f32 %v2114, 1.442695
    %v2161 = vpow.pop %v2160
    %v2162 = vmul.f32 %v2115, 1.442695
    %v2163 = vpow.pop %v2162
    %v2164 = vmul.f32 %v2116, 1.442695
    %v2165 = vpow.pop %v2164
    %v2166 = vmul.f32 %v2117, 1.442695
    %v2167 = vpow.pop %v2166
    %v2168 = vmul.f32 %v2118, 1.442695
    %v2169 = vpow.pop %v2168
    %v2170 = vmul.f32 %v2119, 1.442695
    %v2171 = vpow.pop %v2170
    %v2172 = vmul.f32 %v2120, 1.442695
    %v2173 = vpow.pop %v2172
    %v2174 = vmul.f32 %v2121, 1.442695
    %v2175 = vpow.pop %v2174
    %v2176 = vmul.f32 %v2122, 1.442695
    %v2177 = vpow.pop %v2176
    %v2178 = vmul.f32 %v2123, 1.442695
    %v2179 = vpow.pop %v2178
    %v2180 = vmul.f32 %v2124, 1.442695
    %v2181 = vpow.pop %v2180
    %v2182 = vmul.f32 %v2125, 1.442695
    %v2183 = vpow.pop %v2182
    %v2184 = vmul.f32 %v2126, 1.442695
    %v2185 = vpow.pop %v2184
    %v2186 = vmul.f32 %v2127, 1.442695
    %v2187 = vpow.pop %v2186
    %v2188 = vmul.f32 %v2128, 1.442695
    %v2189 = vpow.pop %v2188
    %v2190 = vmul.f32 %v2129, 1.442695
    %v2191 = vpow.pop %v2190
    %v2192 = vmul.f32 %v2130, 1.442695
    %v2193 = vpow.pop %v2192
    %v2194 = vmul.f32 %v2131, 1.442695
    %v2195 = vpow.pop %v2194
    %v2196 = vadd.f32 %v2133, 1.0
    %v2197 = vadd.f32 %v2135, 1.0
    %v2198 = vadd.f32 %v2137, 1.0
    %v2199 = vadd.f32 %v2139, 1.0
    %v2200 = vadd.f32 %v2141, 1.0
    %v2201 = vadd.f32 %v2143, 1.0
    %v2202 = vadd.f32 %v2145, 1.0
    %v2203 = vadd.f32 %v2147, 1.0
    %v2204 = vadd.f32 %v2149, 1.0
    %v2205 = vadd.f32 %v2151, 1.0
    %v2206 = vadd.f32 %v2153, 1.0
    %v2207 = vadd.f32 %v2155, 1.0
    %v2208 = vadd.f32 %v2157, 1.0
    %v2209 = vadd.f32 %v2159, 1.0
    %v2210 = vadd.f32 %v2161, 1.0
    %v2211 = vadd.f32 %v2163, 1.0
    %v2212 = vadd.f32 %v2165, 1.0
    %v2213 = vadd.f32 %v2167, 1.0
    %v2214 = vadd.f32 %v2169, 1.0
    %v2215 = vadd.f32 %v2171, 1.0
    %v2216 = vadd.f32 %v2173, 1.0
    %v2217 = vadd.f32 %v2175, 1.0
    %v2218 = vadd.f32 %v2177, 1.0
    %v2219 = vadd.f32 %v2179, 1.0
    %v2220 = vadd.f32 %v2181, 1.0
    %v2221 = vadd.f32 %v2183, 1.0
    %v2222 = vadd.f32 %v2185, 1.0
    %v2223 = vadd.f32 %v2187, 1.0
    %v2224 = vadd.f32 %v2189, 1.0
    %v2225 = vadd.f32 %v2191, 1.0
    %v2226 = vadd.f32 %v2193, 1.0
    %v2227 = vadd.f32 %v2195, 1.0
    %v2228 = vrcp.pop %v2196
    %v2229 = vmul.f32 %v2196, %v2228
    %v2230 = vsub.f32 1.0, %v2229
    %v2231 = vmul.f32 %v2228, %v2230
    %v2232 = vadd.f32 %v2228, %v2231
    %vm2233 = vweird.f32 %v2196
    %vm2234 = vweird.f32 %v2228
    %vm2235 = vmor %vm2233, %vm2234
    %v2236 = vsel %vm2235, %v2228, %v2232
    %v2237 = vand.u32 2147483647, %v2196
    %vm2238 = vcmp.eq.f32.partialorder %v2237, 8.507059e+37
    %v2239 = vand.u32 %v2196, 2147483648
    %v2240 = vor.u32 1.1754944e-38, %v2239
    %v2241 = vsel %vm2238, %v2240, %v2236
    %v2242 = vmul.f32 1.0, %v2241
    %v2243 = vrcp.pop %v2197
    %v2244 = vmul.f32 %v2197, %v2243
    %v2245 = vsub.f32 1.0, %v2244
    %v2246 = vmul.f32 %v2243, %v2245
    %v2247 = vadd.f32 %v2243, %v2246
    %vm2248 = vweird.f32 %v2197
    %vm2249 = vweird.f32 %v2243
    %vm2250 = vmor %vm2248, %vm2249
    %v2251 = vsel %vm2250, %v2243, %v2247
    %v2252 = vand.u32 2147483647, %v2197
    %vm2253 = vcmp.eq.f32.partialorder %v2252, 8.507059e+37
    %v2254 = vand.u32 %v2197, 2147483648
    %v2255 = vor.u32 1.1754944e-38, %v2254
    %v2256 = vsel %vm2253, %v2255, %v2251
    %v2257 = vmul.f32 1.0, %v2256
    %v2258 = vrcp.pop %v2198
    %v2259 = vmul.f32 %v2198, %v2258
    %v2260 = vsub.f32 1.0, %v2259
    %v2261 = vmul.f32 %v2258, %v2260
    %v2262 = vadd.f32 %v2258, %v2261
    %vm2263 = vweird.f32 %v2198
    %vm2264 = vweird.f32 %v2258
    %vm2265 = vmor %vm2263, %vm2264
    %v2266 = vsel %vm2265, %v2258, %v2262
    %v2267 = vand.u32 2147483647, %v2198
    %vm2268 = vcmp.eq.f32.partialorder %v2267, 8.507059e+37
    %v2269 = vand.u32 %v2198, 2147483648
    %v2270 = vor.u32 1.1754944e-38, %v2269
    %v2271 = vsel %vm2268, %v2270, %v2266
    %v2272 = vmul.f32 1.0, %v2271
    %v2273 = vrcp.pop %v2199
    %v2274 = vmul.f32 %v2199, %v2273
    %v2275 = vsub.f32 1.0, %v2274
    %v2276 = vmul.f32 %v2273, %v2275
    %v2277 = vadd.f32 %v2273, %v2276
    %vm2278 = vweird.f32 %v2199
    %vm2279 = vweird.f32 %v2273
    %vm2280 = vmor %vm2278, %vm2279
    %v2281 = vsel %vm2280, %v2273, %v2277
    %v2282 = vand.u32 2147483647, %v2199
    %vm2283 = vcmp.eq.f32.partialorder %v2282, 8.507059e+37
    %v2284 = vand.u32 %v2199, 2147483648
    %v2285 = vor.u32 1.1754944e-38, %v2284
    %v2286 = vsel %vm2283, %v2285, %v2281
    %v2287 = vmul.f32 1.0, %v2286
    %v2288 = vrcp.pop %v2200
    %v2289 = vmul.f32 %v2200, %v2288
    %v2290 = vsub.f32 1.0, %v2289
    %v2291 = vmul.f32 %v2288, %v2290
    %v2292 = vadd.f32 %v2288, %v2291
    %vm2293 = vweird.f32 %v2200
    %vm2294 = vweird.f32 %v2288
    %vm2295 = vmor %vm2293, %vm2294
    %v2296 = vsel %vm2295, %v2288, %v2292
    %v2297 = vand.u32 2147483647, %v2200
    %vm2298 = vcmp.eq.f32.partialorder %v2297, 8.507059e+37
    %v2299 = vand.u32 %v2200, 2147483648
    %v2300 = vor.u32 1.1754944e-38, %v2299
    %v2301 = vsel %vm2298, %v2300, %v2296
    %v2302 = vmul.f32 1.0, %v2301
    %v2303 = vrcp.pop %v2201
    %v2304 = vmul.f32 %v2201, %v2303
    %v2305 = vsub.f32 1.0, %v2304
    %v2306 = vmul.f32 %v2303, %v2305
    %v2307 = vadd.f32 %v2303, %v2306
    %vm2308 = vweird.f32 %v2201
    %vm2309 = vweird.f32 %v2303
    %vm2310 = vmor %vm2308, %vm2309
    %v2311 = vsel %vm2310, %v2303, %v2307
    %v2312 = vand.u32 2147483647, %v2201
    %vm2313 = vcmp.eq.f32.partialorder %v2312, 8.507059e+37
    %v2314 = vand.u32 %v2201, 2147483648
    %v2315 = vor.u32 1.1754944e-38, %v2314
    %v2316 = vsel %vm2313, %v2315, %v2311
    %v2317 = vmul.f32 1.0, %v2316
    %v2318 = vrcp.pop %v2202
    %v2319 = vmul.f32 %v2202, %v2318
    %v2320 = vsub.f32 1.0, %v2319
    %v2321 = vmul.f32 %v2318, %v2320
    %v2322 = vadd.f32 %v2318, %v2321
    %vm2323 = vweird.f32 %v2202
    %vm2324 = vweird.f32 %v2318
    %vm2325 = vmor %vm2323, %vm2324
    %v2326 = vsel %vm2325, %v2318, %v2322
    %v2327 = vand.u32 2147483647, %v2202
    %vm2328 = vcmp.eq.f32.partialorder %v2327, 8.507059e+37
    %v2329 = vand.u32 %v2202, 2147483648
    %v2330 = vor.u32 1.1754944e-38, %v2329
    %v2331 = vsel %vm2328, %v2330, %v2326
    %v2332 = vmul.f32 1.0, %v2331
    %v2333 = vrcp.pop %v2203
    %v2334 = vmul.f32 %v2203, %v2333
    %v2335 = vsub.f32 1.0, %v2334
    %v2336 = vmul.f32 %v2333, %v2335
    %v2337 = vadd.f32 %v2333, %v2336
    %vm2338 = vweird.f32 %v2203
    %vm2339 = vweird.f32 %v2333
    %vm2340 = vmor %vm2338, %vm2339
    %v2341 = vsel %vm2340, %v2333, %v2337
    %v2342 = vand.u32 2147483647, %v2203
    %vm2343 = vcmp.eq.f32.partialorder %v2342, 8.507059e+37
    %v2344 = vand.u32 %v2203, 2147483648
    %v2345 = vor.u32 1.1754944e-38, %v2344
    %v2346 = vsel %vm2343, %v2345, %v2341
    %v2347 = vmul.f32 1.0, %v2346
    %v2348 = vrcp.pop %v2204
    %v2349 = vmul.f32 %v2204, %v2348
    %v2350 = vsub.f32 1.0, %v2349
    %v2351 = vmul.f32 %v2348, %v2350
    %v2352 = vadd.f32 %v2348, %v2351
    %vm2353 = vweird.f32 %v2204
    %vm2354 = vweird.f32 %v2348
    %vm2355 = vmor %vm2353, %vm2354
    %v2356 = vsel %vm2355, %v2348, %v2352
    %v2357 = vand.u32 2147483647, %v2204
    %vm2358 = vcmp.eq.f32.partialorder %v2357, 8.507059e+37
    %v2359 = vand.u32 %v2204, 2147483648
    %v2360 = vor.u32 1.1754944e-38, %v2359
    %v2361 = vsel %vm2358, %v2360, %v2356
    %v2362 = vmul.f32 1.0, %v2361
    %v2363 = vrcp.pop %v2205
    %v2364 = vmul.f32 %v2205, %v2363
    %v2365 = vsub.f32 1.0, %v2364
    %v2366 = vmul.f32 %v2363, %v2365
    %v2367 = vadd.f32 %v2363, %v2366
    %vm2368 = vweird.f32 %v2205
    %vm2369 = vweird.f32 %v2363
    %vm2370 = vmor %vm2368, %vm2369
    %v2371 = vsel %vm2370, %v2363, %v2367
    %v2372 = vand.u32 2147483647, %v2205
    %vm2373 = vcmp.eq.f32.partialorder %v2372, 8.507059e+37
    %v2374 = vand.u32 %v2205, 2147483648
    %v2375 = vor.u32 1.1754944e-38, %v2374
    %v2376 = vsel %vm2373, %v2375, %v2371
    %v2377 = vmul.f32 1.0, %v2376
    %v2378 = vrcp.pop %v2206
    %v2379 = vmul.f32 %v2206, %v2378
    %v2380 = vsub.f32 1.0, %v2379
    %v2381 = vmul.f32 %v2378, %v2380
    %v2382 = vadd.f32 %v2378, %v2381
    %vm2383 = vweird.f32 %v2206
    %vm2384 = vweird.f32 %v2378
    %vm2385 = vmor %vm2383, %vm2384
    %v2386 = vsel %vm2385, %v2378, %v2382
    %v2387 = vand.u32 2147483647, %v2206
    %vm2388 = vcmp.eq.f32.partialorder %v2387, 8.507059e+37
    %v2389 = vand.u32 %v2206, 2147483648
    %v2390 = vor.u32 1.1754944e-38, %v2389
    %v2391 = vsel %vm2388, %v2390, %v2386
    %v2392 = vmul.f32 1.0, %v2391
    %v2393 = vrcp.pop %v2207
    %v2394 = vmul.f32 %v2207, %v2393
    %v2395 = vsub.f32 1.0, %v2394
    %v2396 = vmul.f32 %v2393, %v2395
    %v2397 = vadd.f32 %v2393, %v2396
    %vm2398 = vweird.f32 %v2207
    %vm2399 = vweird.f32 %v2393
    %vm2400 = vmor %vm2398, %vm2399
    %v2401 = vsel %vm2400, %v2393, %v2397
    %v2402 = vand.u32 2147483647, %v2207
    %vm2403 = vcmp.eq.f32.partialorder %v2402, 8.507059e+37
    %v2404 = vand.u32 %v2207, 2147483648
    %v2405 = vor.u32 1.1754944e-38, %v2404
    %v2406 = vsel %vm2403, %v2405, %v2401
    %v2407 = vmul.f32 1.0, %v2406
    %v2408 = vrcp.pop %v2208
    %v2409 = vmul.f32 %v2208, %v2408
    %v2410 = vsub.f32 1.0, %v2409
    %v2411 = vmul.f32 %v2408, %v2410
    %v2412 = vadd.f32 %v2408, %v2411
    %vm2413 = vweird.f32 %v2208
    %vm2414 = vweird.f32 %v2408
    %vm2415 = vmor %vm2413, %vm2414
    %v2416 = vsel %vm2415, %v2408, %v2412
    %v2417 = vand.u32 2147483647, %v2208
    %vm2418 = vcmp.eq.f32.partialorder %v2417, 8.507059e+37
    %v2419 = vand.u32 %v2208, 2147483648
    %v2420 = vor.u32 1.1754944e-38, %v2419
    %v2421 = vsel %vm2418, %v2420, %v2416
    %v2422 = vmul.f32 1.0, %v2421
    %v2423 = vrcp.pop %v2209
    %v2424 = vmul.f32 %v2209, %v2423
    %v2425 = vsub.f32 1.0, %v2424
    %v2426 = vmul.f32 %v2423, %v2425
    %v2427 = vadd.f32 %v2423, %v2426
    %vm2428 = vweird.f32 %v2209
    %vm2429 = vweird.f32 %v2423
    %vm2430 = vmor %vm2428, %vm2429
    %v2431 = vsel %vm2430, %v2423, %v2427
    %v2432 = vand.u32 2147483647, %v2209
    %vm2433 = vcmp.eq.f32.partialorder %v2432, 8.507059e+37
    %v2434 = vand.u32 %v2209, 2147483648
    %v2435 = vor.u32 1.1754944e-38, %v2434
    %v2436 = vsel %vm2433, %v2435, %v2431
    %v2437 = vmul.f32 1.0, %v2436
    %v2438 = vrcp.pop %v2210
    %v2439 = vmul.f32 %v2210, %v2438
    %v2440 = vsub.f32 1.0, %v2439
    %v2441 = vmul.f32 %v2438, %v2440
    %v2442 = vadd.f32 %v2438, %v2441
    %vm2443 = vweird.f32 %v2210
    %vm2444 = vweird.f32 %v2438
    %vm2445 = vmor %vm2443, %vm2444
    %v2446 = vsel %vm2445, %v2438, %v2442
    %v2447 = vand.u32 2147483647, %v2210
    %vm2448 = vcmp.eq.f32.partialorder %v2447, 8.507059e+37
    %v2449 = vand.u32 %v2210, 2147483648
    %v2450 = vor.u32 1.1754944e-38, %v2449
    %v2451 = vsel %vm2448, %v2450, %v2446
    %v2452 = vmul.f32 1.0, %v2451
    %v2453 = vrcp.pop %v2211
    %v2454 = vmul.f32 %v2211, %v2453
    %v2455 = vsub.f32 1.0, %v2454
    %v2456 = vmul.f32 %v2453, %v2455
    %v2457 = vadd.f32 %v2453, %v2456
    %vm2458 = vweird.f32 %v2211
    %vm2459 = vweird.f32 %v2453
    %vm2460 = vmor %vm2458, %vm2459
    %v2461 = vsel %vm2460, %v2453, %v2457
    %v2462 = vand.u32 2147483647, %v2211
    %vm2463 = vcmp.eq.f32.partialorder %v2462, 8.507059e+37
    %v2464 = vand.u32 %v2211, 2147483648
    %v2465 = vor.u32 1.1754944e-38, %v2464
    %v2466 = vsel %vm2463, %v2465, %v2461
    %v2467 = vmul.f32 1.0, %v2466
    %v2468 = vrcp.pop %v2212
    %v2469 = vmul.f32 %v2212, %v2468
    %v2470 = vsub.f32 1.0, %v2469
    %v2471 = vmul.f32 %v2468, %v2470
    %v2472 = vadd.f32 %v2468, %v2471
    %vm2473 = vweird.f32 %v2212
    %vm2474 = vweird.f32 %v2468
    %vm2475 = vmor %vm2473, %vm2474
    %v2476 = vsel %vm2475, %v2468, %v2472
    %v2477 = vand.u32 2147483647, %v2212
    %vm2478 = vcmp.eq.f32.partialorder %v2477, 8.507059e+37
    %v2479 = vand.u32 %v2212, 2147483648
    %v2480 = vor.u32 1.1754944e-38, %v2479
    %v2481 = vsel %vm2478, %v2480, %v2476
    %v2482 = vmul.f32 1.0, %v2481
    %v2483 = vrcp.pop %v2213
    %v2484 = vmul.f32 %v2213, %v2483
    %v2485 = vsub.f32 1.0, %v2484
    %v2486 = vmul.f32 %v2483, %v2485
    %v2487 = vadd.f32 %v2483, %v2486
    %vm2488 = vweird.f32 %v2213
    %vm2489 = vweird.f32 %v2483
    %vm2490 = vmor %vm2488, %vm2489
    %v2491 = vsel %vm2490, %v2483, %v2487
    %v2492 = vand.u32 2147483647, %v2213
    %vm2493 = vcmp.eq.f32.partialorder %v2492, 8.507059e+37
    %v2494 = vand.u32 %v2213, 2147483648
    %v2495 = vor.u32 1.1754944e-38, %v2494
    %v2496 = vsel %vm2493, %v2495, %v2491
    %v2497 = vmul.f32 1.0, %v2496
    %v2498 = vrcp.pop %v2214
    %v2499 = vmul.f32 %v2214, %v2498
    %v2500 = vsub.f32 1.0, %v2499
    %v2501 = vmul.f32 %v2498, %v2500
    %v2502 = vadd.f32 %v2498, %v2501
    %vm2503 = vweird.f32 %v2214
    %vm2504 = vweird.f32 %v2498
    %vm2505 = vmor %vm2503, %vm2504
    %v2506 = vsel %vm2505, %v2498, %v2502
    %v2507 = vand.u32 2147483647, %v2214
    %vm2508 = vcmp.eq.f32.partialorder %v2507, 8.507059e+37
    %v2509 = vand.u32 %v2214, 2147483648
    %v2510 = vor.u32 1.1754944e-38, %v2509
    %v2511 = vsel %vm2508, %v2510, %v2506
    %v2512 = vmul.f32 1.0, %v2511
    %v2513 = vrcp.pop %v2215
    %v2514 = vmul.f32 %v2215, %v2513
    %v2515 = vsub.f32 1.0, %v2514
    %v2516 = vmul.f32 %v2513, %v2515
    %v2517 = vadd.f32 %v2513, %v2516
    %vm2518 = vweird.f32 %v2215
    %vm2519 = vweird.f32 %v2513
    %vm2520 = vmor %vm2518, %vm2519
    %v2521 = vsel %vm2520, %v2513, %v2517
    %v2522 = vand.u32 2147483647, %v2215
    %vm2523 = vcmp.eq.f32.partialorder %v2522, 8.507059e+37
    %v2524 = vand.u32 %v2215, 2147483648
    %v2525 = vor.u32 1.1754944e-38, %v2524
    %v2526 = vsel %vm2523, %v2525, %v2521
    %v2527 = vmul.f32 1.0, %v2526
    %v2528 = vrcp.pop %v2216
    %v2529 = vmul.f32 %v2216, %v2528
    %v2530 = vsub.f32 1.0, %v2529
    %v2531 = vmul.f32 %v2528, %v2530
    %v2532 = vadd.f32 %v2528, %v2531
    %vm2533 = vweird.f32 %v2216
    %vm2534 = vweird.f32 %v2528
    %vm2535 = vmor %vm2533, %vm2534
    %v2536 = vsel %vm2535, %v2528, %v2532
    %v2537 = vand.u32 2147483647, %v2216
    %vm2538 = vcmp.eq.f32.partialorder %v2537, 8.507059e+37
    %v2539 = vand.u32 %v2216, 2147483648
    %v2540 = vor.u32 1.1754944e-38, %v2539
    %v2541 = vsel %vm2538, %v2540, %v2536
    %v2542 = vmul.f32 1.0, %v2541
    %v2543 = vrcp.pop %v2217
    %v2544 = vmul.f32 %v2217, %v2543
    %v2545 = vsub.f32 1.0, %v2544
    %v2546 = vmul.f32 %v2543, %v2545
    %v2547 = vadd.f32 %v2543, %v2546
    %vm2548 = vweird.f32 %v2217
    %vm2549 = vweird.f32 %v2543
    %vm2550 = vmor %vm2548, %vm2549
    %v2551 = vsel %vm2550, %v2543, %v2547
    %v2552 = vand.u32 2147483647, %v2217
    %vm2553 = vcmp.eq.f32.partialorder %v2552, 8.507059e+37
    %v2554 = vand.u32 %v2217, 2147483648
    %v2555 = vor.u32 1.1754944e-38, %v2554
    %v2556 = vsel %vm2553, %v2555, %v2551
    %v2557 = vmul.f32 1.0, %v2556
    %v2558 = vrcp.pop %v2218
    %v2559 = vmul.f32 %v2218, %v2558
    %v2560 = vsub.f32 1.0, %v2559
    %v2561 = vmul.f32 %v2558, %v2560
    %v2562 = vadd.f32 %v2558, %v2561
    %vm2563 = vweird.f32 %v2218
    %vm2564 = vweird.f32 %v2558
    %vm2565 = vmor %vm2563, %vm2564
    %v2566 = vsel %vm2565, %v2558, %v2562
    %v2567 = vand.u32 2147483647, %v2218
    %vm2568 = vcmp.eq.f32.partialorder %v2567, 8.507059e+37
    %v2569 = vand.u32 %v2218, 2147483648
    %v2570 = vor.u32 1.1754944e-38, %v2569
    %v2571 = vsel %vm2568, %v2570, %v2566
    %v2572 = vmul.f32 1.0, %v2571
    %v2573 = vrcp.pop %v2219
    %v2574 = vmul.f32 %v2219, %v2573
    %v2575 = vsub.f32 1.0, %v2574
    %v2576 = vmul.f32 %v2573, %v2575
    %v2577 = vadd.f32 %v2573, %v2576
    %vm2578 = vweird.f32 %v2219
    %vm2579 = vweird.f32 %v2573
    %vm2580 = vmor %vm2578, %vm2579
    %v2581 = vsel %vm2580, %v2573, %v2577
    %v2582 = vand.u32 2147483647, %v2219
    %vm2583 = vcmp.eq.f32.partialorder %v2582, 8.507059e+37
    %v2584 = vand.u32 %v2219, 2147483648
    %v2585 = vor.u32 1.1754944e-38, %v2584
    %v2586 = vsel %vm2583, %v2585, %v2581
    %v2587 = vmul.f32 1.0, %v2586
    %v2588 = vrcp.pop %v2220
    %v2589 = vmul.f32 %v2220, %v2588
    %v2590 = vsub.f32 1.0, %v2589
    %v2591 = vmul.f32 %v2588, %v2590
    %v2592 = vadd.f32 %v2588, %v2591
    %vm2593 = vweird.f32 %v2220
    %vm2594 = vweird.f32 %v2588
    %vm2595 = vmor %vm2593, %vm2594
    %v2596 = vsel %vm2595, %v2588, %v2592
    %v2597 = vand.u32 2147483647, %v2220
    %vm2598 = vcmp.eq.f32.partialorder %v2597, 8.507059e+37
    %v2599 = vand.u32 %v2220, 2147483648
    %v2600 = vor.u32 1.1754944e-38, %v2599
    %v2601 = vsel %vm2598, %v2600, %v2596
    %v2602 = vmul.f32 1.0, %v2601
    %v2603 = vrcp.pop %v2221
    %v2604 = vmul.f32 %v2221, %v2603
    %v2605 = vsub.f32 1.0, %v2604
    %v2606 = vmul.f32 %v2603, %v2605
    %v2607 = vadd.f32 %v2603, %v2606
    %vm2608 = vweird.f32 %v2221
    %vm2609 = vweird.f32 %v2603
    %vm2610 = vmor %vm2608, %vm2609
    %v2611 = vsel %vm2610, %v2603, %v2607
    %v2612 = vand.u32 2147483647, %v2221
    %vm2613 = vcmp.eq.f32.partialorder %v2612, 8.507059e+37
    %v2614 = vand.u32 %v2221, 2147483648
    %v2615 = vor.u32 1.1754944e-38, %v2614
    %v2616 = vsel %vm2613, %v2615, %v2611
    %v2617 = vmul.f32 1.0, %v2616
    %v2618 = vrcp.pop %v2222
    %v2619 = vmul.f32 %v2222, %v2618
    %v2620 = vsub.f32 1.0, %v2619
    %v2621 = vmul.f32 %v2618, %v2620
    %v2622 = vadd.f32 %v2618, %v2621
    %vm2623 = vweird.f32 %v2222
    %vm2624 = vweird.f32 %v2618
    %vm2625 = vmor %vm2623, %vm2624
    %v2626 = vsel %vm2625, %v2618, %v2622
    %v2627 = vand.u32 2147483647, %v2222
    %vm2628 = vcmp.eq.f32.partialorder %v2627, 8.507059e+37
    %v2629 = vand.u32 %v2222, 2147483648
    %v2630 = vor.u32 1.1754944e-38, %v2629
    %v2631 = vsel %vm2628, %v2630, %v2626
    %v2632 = vmul.f32 1.0, %v2631
    %v2633 = vrcp.pop %v2223
    %v2634 = vmul.f32 %v2223, %v2633
    %v2635 = vsub.f32 1.0, %v2634
    %v2636 = vmul.f32 %v2633, %v2635
    %v2637 = vadd.f32 %v2633, %v2636
    %vm2638 = vweird.f32 %v2223
    %vm2639 = vweird.f32 %v2633
    %vm2640 = vmor %vm2638, %vm2639
    %v2641 = vsel %vm2640, %v2633, %v2637
    %v2642 = vand.u32 2147483647, %v2223
    %vm2643 = vcmp.eq.f32.partialorder %v2642, 8.507059e+37
    %v2644 = vand.u32 %v2223, 2147483648
    %v2645 = vor.u32 1.1754944e-38, %v2644
    %v2646 = vsel %vm2643, %v2645, %v2641
    %v2647 = vmul.f32 1.0, %v2646
    %v2648 = vrcp.pop %v2224
    %v2649 = vmul.f32 %v2224, %v2648
    %v2650 = vsub.f32 1.0, %v2649
    %v2651 = vmul.f32 %v2648, %v2650
    %v2652 = vadd.f32 %v2648, %v2651
    %vm2653 = vweird.f32 %v2224
    %vm2654 = vweird.f32 %v2648
    %vm2655 = vmor %vm2653, %vm2654
    %v2656 = vsel %vm2655, %v2648, %v2652
    %v2657 = vand.u32 2147483647, %v2224
    %vm2658 = vcmp.eq.f32.partialorder %v2657, 8.507059e+37
    %v2659 = vand.u32 %v2224, 2147483648
    %v2660 = vor.u32 1.1754944e-38, %v2659
    %v2661 = vsel %vm2658, %v2660, %v2656
    %v2662 = vmul.f32 1.0, %v2661
    %v2663 = vrcp.pop %v2225
    %v2664 = vmul.f32 %v2225, %v2663
    %v2665 = vsub.f32 1.0, %v2664
    %v2666 = vmul.f32 %v2663, %v2665
    %v2667 = vadd.f32 %v2663, %v2666
    %vm2668 = vweird.f32 %v2225
    %vm2669 = vweird.f32 %v2663
    %vm2670 = vmor %vm2668, %vm2669
    %v2671 = vsel %vm2670, %v2663, %v2667
    %v2672 = vand.u32 2147483647, %v2225
    %vm2673 = vcmp.eq.f32.partialorder %v2672, 8.507059e+37
    %v2674 = vand.u32 %v2225, 2147483648
    %v2675 = vor.u32 1.1754944e-38, %v2674
    %v2676 = vsel %vm2673, %v2675, %v2671
    %v2677 = vmul.f32 1.0, %v2676
    %v2678 = vrcp.pop %v2226
    %v2679 = vmul.f32 %v2226, %v2678
    %v2680 = vsub.f32 1.0, %v2679
    %v2681 = vmul.f32 %v2678, %v2680
    %v2682 = vadd.f32 %v2678, %v2681
    %vm2683 = vweird.f32 %v2226
    %vm2684 = vweird.f32 %v2678
    %vm2685 = vmor %vm2683, %vm2684
    %v2686 = vsel %vm2685, %v2678, %v2682
    %v2687 = vand.u32 2147483647, %v2226
    %vm2688 = vcmp.eq.f32.partialorder %v2687, 8.507059e+37
    %v2689 = vand.u32 %v2226, 2147483648
    %v2690 = vor.u32 1.1754944e-38, %v2689
    %v2691 = vsel %vm2688, %v2690, %v2686
    %v2692 = vmul.f32 1.0, %v2691
    %v2693 = vrcp.pop %v2227
    %v2694 = vmul.f32 %v2227, %v2693
    %v2695 = vsub.f32 1.0, %v2694
    %v2696 = vmul.f32 %v2693, %v2695
    %v2697 = vadd.f32 %v2693, %v2696
    %vm2698 = vweird.f32 %v2227
    %vm2699 = vweird.f32 %v2693
    %vm2700 = vmor %vm2698, %vm2699
    %v2701 = vsel %vm2700, %v2693, %v2697
    %v2702 = vand.u32 2147483647, %v2227
    %vm2703 = vcmp.eq.f32.partialorder %v2702, 8.507059e+37
    %v2704 = vand.u32 %v2227, 2147483648
    %v2705 = vor.u32 1.1754944e-38, %v2704
    %v2706 = vsel %vm2703, %v2705, %v2701
    %v2707 = vmul.f32 1.0, %v2706
    %2709 = vset.pattern.permute.xlu0 0
    %2710 = vperm.xlu0 %2709, %v637
    %v2711 = vpop.permute.xlu0 %2710
    %2714 = vset.pattern.permute.xlu0 0
    %2715 = vperm.xlu0 %2714, %v638
    %v2716 = vpop.permute.xlu0 %2715
    %2719 = vset.pattern.permute.xlu0 0
    %2720 = vperm.xlu0 %2719, %v639
    %v2721 = vpop.permute.xlu0 %2720
    %2724 = vset.pattern.permute.xlu0 0
    %2725 = vperm.xlu0 %2724, %v640
    %v2726 = vpop.permute.xlu0 %2725
    %2729 = vset.pattern.permute.xlu0 0
    %2730 = vperm.xlu0 %2729, %v641
    %v2731 = vpop.permute.xlu0 %2730
    %2734 = vset.pattern.permute.xlu0 0
    %2735 = vperm.xlu0 %2734, %v642
    %v2736 = vpop.permute.xlu0 %2735
    %2739 = vset.pattern.permute.xlu0 0
    %2740 = vperm.xlu0 %2739, %v643
    %v2741 = vpop.permute.xlu0 %2740
    %2744 = vset.pattern.permute.xlu0 0
    %2745 = vperm.xlu0 %2744, %v644
    %v2746 = vpop.permute.xlu0 %2745
    %2749 = vset.pattern.permute.xlu0 0
    %2750 = vperm.xlu0 %2749, %v645
    %v2751 = vpop.permute.xlu0 %2750
    %2754 = vset.pattern.permute.xlu0 0
    %2755 = vperm.xlu0 %2754, %v646
    %v2756 = vpop.permute.xlu0 %2755
    %2759 = vset.pattern.permute.xlu0 0
    %2760 = vperm.xlu0 %2759, %v647
    %v2761 = vpop.permute.xlu0 %2760
    %2764 = vset.pattern.permute.xlu0 0
    %2765 = vperm.xlu0 %2764, %v648
    %v2766 = vpop.permute.xlu0 %2765
    %2769 = vset.pattern.permute.xlu0 0
    %2770 = vperm.xlu0 %2769, %v649
    %v2771 = vpop.permute.xlu0 %2770
    %2774 = vset.pattern.permute.xlu0 0
    %2775 = vperm.xlu0 %2774, %v650
    %v2776 = vpop.permute.xlu0 %2775
    %2779 = vset.pattern.permute.xlu0 0
    %2780 = vperm.xlu0 %2779, %v651
    %v2781 = vpop.permute.xlu0 %2780
    %2784 = vset.pattern.permute.xlu0 0
    %2785 = vperm.xlu0 %2784, %v652
    %v2786 = vpop.permute.xlu0 %2785
    %2789 = vset.pattern.permute.xlu0 0
    %2790 = vperm.xlu0 %2789, %v653
    %v2791 = vpop.permute.xlu0 %2790
    %2794 = vset.pattern.permute.xlu0 0
    %2795 = vperm.xlu0 %2794, %v654
    %v2796 = vpop.permute.xlu0 %2795
    %2799 = vset.pattern.permute.xlu0 0
    %2800 = vperm.xlu0 %2799, %v655
    %v2801 = vpop.permute.xlu0 %2800
    %2804 = vset.pattern.permute.xlu0 0
    %2805 = vperm.xlu0 %2804, %v656
    %v2806 = vpop.permute.xlu0 %2805
    %2809 = vset.pattern.permute.xlu0 0
    %2810 = vperm.xlu0 %2809, %v657
    %v2811 = vpop.permute.xlu0 %2810
    %2814 = vset.pattern.permute.xlu0 0
    %2815 = vperm.xlu0 %2814, %v658
    %v2816 = vpop.permute.xlu0 %2815
    %2819 = vset.pattern.permute.xlu0 0
    %2820 = vperm.xlu0 %2819, %v659
    %v2821 = vpop.permute.xlu0 %2820
    %2824 = vset.pattern.permute.xlu0 0
    %2825 = vperm.xlu0 %2824, %v660
    %v2826 = vpop.permute.xlu0 %2825
    %2829 = vset.pattern.permute.xlu0 0
    %2830 = vperm.xlu0 %2829, %v661
    %v2831 = vpop.permute.xlu0 %2830
    %2834 = vset.pattern.permute.xlu0 0
    %2835 = vperm.xlu0 %2834, %v662
    %v2836 = vpop.permute.xlu0 %2835
    %2839 = vset.pattern.permute.xlu0 0
    %2840 = vperm.xlu0 %2839, %v663
    %v2841 = vpop.permute.xlu0 %2840
    %2844 = vset.pattern.permute.xlu0 0
    %2845 = vperm.xlu0 %2844, %v664
    %v2846 = vpop.permute.xlu0 %2845
    %2849 = vset.pattern.permute.xlu0 0
    %2850 = vperm.xlu0 %2849, %v665
    %v2851 = vpop.permute.xlu0 %2850
    %2854 = vset.pattern.permute.xlu0 0
    %2855 = vperm.xlu0 %2854, %v666
    %v2856 = vpop.permute.xlu0 %2855
    %2859 = vset.pattern.permute.xlu0 0
    %2860 = vperm.xlu0 %2859, %v667
    %v2861 = vpop.permute.xlu0 %2860
    %2864 = vset.pattern.permute.xlu0 0
    %2865 = vperm.xlu0 %2864, %v668
    %v2866 = vpop.permute.xlu0 %2865
    %2868 = vmatpush.msra.mxu0 %v2467
    %2869 = vmatpush.msra.mxu0 %v2452
    %2870 = vmatpush.msra.mxu0 %v2437
    %2871 = vmatpush.msra.mxu0 %v2422
    %2872 = vmatpush.msra.mxu0 %v2407
    %2873 = vmatpush.msra.mxu0 %v2392
    %2874 = vmatpush.msra.mxu0 %v2377
    %2875 = vmatpush.msra.mxu0 %v2362
    %2876 = vmatpush.msra.mxu0 %v2347
    %2877 = vmatpush.msra.mxu0 %v2332
    %2878 = vmatpush.msra.mxu0 %v2317
    %2879 = vmatpush.msra.mxu0 %v2302
    %2880 = vmatpush.msra.mxu0 %v2287
    %2881 = vmatpush.msra.mxu0 %v2272
    %2882 = vmatpush.msra.mxu0 %v2257
    %2883 = vmatpush.msra.mxu0 %v2242
    %2884 = vmatmul.f32.gmra.mxu0 %v151
    %v2885 = vpop.f32.mrf.mxu0
    %v2886 = vadd.f32 %v2711, %v2885
    %2887 = vmatmul.f32.gmra.mxu0 %v153
    %v2888 = vpop.f32.mrf.mxu0
    %v2889 = vadd.f32 %v2716, %v2888
    %2890 = vmatmul.f32.gmra.mxu0 %v155
    %v2891 = vpop.f32.mrf.mxu0
    %v2892 = vadd.f32 %v2721, %v2891
    %2893 = vmatmul.f32.gmra.mxu0 %v157
    %v2894 = vpop.f32.mrf.mxu0
    %v2895 = vadd.f32 %v2726, %v2894
    %2896 = vmatmul.f32.gmra.mxu0 %v159
    %v2897 = vpop.f32.mrf.mxu0
    %v2898 = vadd.f32 %v2731, %v2897
    %2899 = vmatmul.f32.gmra.mxu0 %v161
    %v2900 = vpop.f32.mrf.mxu0
    %v2901 = vadd.f32 %v2736, %v2900
    %2902 = vmatmul.f32.gmra.mxu0 %v163
    %v2903 = vpop.f32.mrf.mxu0
    %v2904 = vadd.f32 %v2741, %v2903
    %2905 = vmatmul.f32.gmra.mxu0 %v165
    %v2906 = vpop.f32.mrf.mxu0
    %v2907 = vadd.f32 %v2746, %v2906
    %2908 = vmatmul.f32.gmra.mxu0 %v167
    %v2909 = vpop.f32.mrf.mxu0
    %v2910 = vadd.f32 %v2751, %v2909
    %2911 = vmatmul.f32.gmra.mxu0 %v169
    %v2912 = vpop.f32.mrf.mxu0
    %v2913 = vadd.f32 %v2756, %v2912
    %2914 = vmatmul.f32.gmra.mxu0 %v171
    %v2915 = vpop.f32.mrf.mxu0
    %v2916 = vadd.f32 %v2761, %v2915
    %2917 = vmatmul.f32.gmra.mxu0 %v173
    %v2918 = vpop.f32.mrf.mxu0
    %v2919 = vadd.f32 %v2766, %v2918
    %2920 = vmatmul.f32.gmra.mxu0 %v175
    %v2921 = vpop.f32.mrf.mxu0
    %v2922 = vadd.f32 %v2771, %v2921
    %2923 = vmatmul.f32.gmra.mxu0 %v177
    %v2924 = vpop.f32.mrf.mxu0
    %v2925 = vadd.f32 %v2776, %v2924
    %2926 = vmatmul.f32.gmra.mxu0 %v179
    %v2927 = vpop.f32.mrf.mxu0
    %v2928 = vadd.f32 %v2781, %v2927
    %2929 = vmatmul.f32.gmra.mxu0 %v181
    %v2930 = vpop.f32.mrf.mxu0
    %v2931 = vadd.f32 %v2786, %v2930
    %2932 = vmatmul.f32.gmra.mxu0 %v183
    %v2933 = vpop.f32.mrf.mxu0
    %v2934 = vadd.f32 %v2791, %v2933
    %2935 = vmatmul.f32.gmra.mxu0 %v185
    %v2936 = vpop.f32.mrf.mxu0
    %v2937 = vadd.f32 %v2796, %v2936
    %2938 = vmatmul.f32.gmra.mxu0 %v187
    %v2939 = vpop.f32.mrf.mxu0
    %v2940 = vadd.f32 %v2801, %v2939
    %2941 = vmatmul.f32.gmra.mxu0 %v189
    %v2942 = vpop.f32.mrf.mxu0
    %v2943 = vadd.f32 %v2806, %v2942
    %2944 = vmatmul.f32.gmra.mxu0 %v191
    %v2945 = vpop.f32.mrf.mxu0
    %v2946 = vadd.f32 %v2811, %v2945
    %2947 = vmatmul.f32.gmra.mxu0 %v193
    %v2948 = vpop.f32.mrf.mxu0
    %v2949 = vadd.f32 %v2816, %v2948
    %2950 = vmatmul.f32.gmra.mxu0 %v195
    %v2951 = vpop.f32.mrf.mxu0
    %v2952 = vadd.f32 %v2821, %v2951
    %2953 = vmatmul.f32.gmra.mxu0 %v197
    %v2954 = vpop.f32.mrf.mxu0
    %v2955 = vadd.f32 %v2826, %v2954
    %2956 = vmatmul.f32.gmra.mxu0 %v199
    %v2957 = vpop.f32.mrf.mxu0
    %v2958 = vadd.f32 %v2831, %v2957
    %2959 = vmatmul.f32.gmra.mxu0 %v201
    %v2960 = vpop.f32.mrf.mxu0
    %v2961 = vadd.f32 %v2836, %v2960
    %2962 = vmatmul.f32.gmra.mxu0 %v203
    %v2963 = vpop.f32.mrf.mxu0
    %v2964 = vadd.f32 %v2841, %v2963
    %2965 = vmatmul.f32.gmra.mxu0 %v205
    %v2966 = vpop.f32.mrf.mxu0
    %v2967 = vadd.f32 %v2846, %v2966
    %2968 = vmatmul.f32.gmra.mxu0 %v207
    %v2969 = vpop.f32.mrf.mxu0
    %v2970 = vadd.f32 %v2851, %v2969
    %2971 = vmatmul.f32.gmra.mxu0 %v209
    %v2972 = vpop.f32.mrf.mxu0
    %v2973 = vadd.f32 %v2856, %v2972
    %2974 = vmatmul.f32.gmra.mxu0 %v211
    %v2975 = vpop.f32.mrf.mxu0
    %v2976 = vadd.f32 %v2861, %v2975
    %2977 = vmatmul.f32.gmra.mxu0 %v213
    %v2978 = vpop.f32.mrf.mxu0
    %v2979 = vadd.f32 %v2866, %v2978
    %2980 = vdwg.mxu0
    %2981 = vmatpush.msra.mxu0 %v2707
    %2982 = vmatpush.msra.mxu0 %v2692
    %2983 = vmatpush.msra.mxu0 %v2677
    %2984 = vmatpush.msra.mxu0 %v2662
    %2985 = vmatpush.msra.mxu0 %v2647
    %2986 = vmatpush.msra.mxu0 %v2632
    %2987 = vmatpush.msra.mxu0 %v2617
    %2988 = vmatpush.msra.mxu0 %v2602
    %2989 = vmatpush.msra.mxu0 %v2587
    %2990 = vmatpush.msra.mxu0 %v2572
    %2991 = vmatpush.msra.mxu0 %v2557
    %2992 = vmatpush.msra.mxu0 %v2542
    %2993 = vmatpush.msra.mxu0 %v2527
    %2994 = vmatpush.msra.mxu0 %v2512
    %2995 = vmatpush.msra.mxu0 %v2497
    %2996 = vmatpush.msra.mxu0 %v2482
    %2997 = vmatmul.f32.gmra.mxu0 %v152
    %v2998 = vpop.f32.mrf.mxu0
    %v2999 = vadd.f32 %v2886, %v2998
    %3000 = vmatmul.f32.gmra.mxu0 %v154
    %v3001 = vpop.f32.mrf.mxu0
    %v3002 = vadd.f32 %v2889, %v3001
    %3003 = vmatmul.f32.gmra.mxu0 %v156
    %v3004 = vpop.f32.mrf.mxu0
    %v3005 = vadd.f32 %v2892, %v3004
    %3006 = vmatmul.f32.gmra.mxu0 %v158
    %v3007 = vpop.f32.mrf.mxu0
    %v3008 = vadd.f32 %v2895, %v3007
    %3009 = vmatmul.f32.gmra.mxu0 %v160
    %v3010 = vpop.f32.mrf.mxu0
    %v3011 = vadd.f32 %v2898, %v3010
    %3012 = vmatmul.f32.gmra.mxu0 %v162
    %v3013 = vpop.f32.mrf.mxu0
    %v3014 = vadd.f32 %v2901, %v3013
    %3015 = vmatmul.f32.gmra.mxu0 %v164
    %v3016 = vpop.f32.mrf.mxu0
    %v3017 = vadd.f32 %v2904, %v3016
    %3018 = vmatmul.f32.gmra.mxu0 %v166
    %v3019 = vpop.f32.mrf.mxu0
    %v3020 = vadd.f32 %v2907, %v3019
    %3021 = vmatmul.f32.gmra.mxu0 %v168
    %v3022 = vpop.f32.mrf.mxu0
    %v3023 = vadd.f32 %v2910, %v3022
    %3024 = vmatmul.f32.gmra.mxu0 %v170
    %v3025 = vpop.f32.mrf.mxu0
    %v3026 = vadd.f32 %v2913, %v3025
    %3027 = vmatmul.f32.gmra.mxu0 %v172
    %v3028 = vpop.f32.mrf.mxu0
    %v3029 = vadd.f32 %v2916, %v3028
    %3030 = vmatmul.f32.gmra.mxu0 %v174
    %v3031 = vpop.f32.mrf.mxu0
    %v3032 = vadd.f32 %v2919, %v3031
    %3033 = vmatmul.f32.gmra.mxu0 %v176
    %v3034 = vpop.f32.mrf.mxu0
    %v3035 = vadd.f32 %v2922, %v3034
    %3036 = vmatmul.f32.gmra.mxu0 %v178
    %v3037 = vpop.f32.mrf.mxu0
    %v3038 = vadd.f32 %v2925, %v3037
    %3039 = vmatmul.f32.gmra.mxu0 %v180
    %v3040 = vpop.f32.mrf.mxu0
    %v3041 = vadd.f32 %v2928, %v3040
    %3042 = vmatmul.f32.gmra.mxu0 %v182
    %v3043 = vpop.f32.mrf.mxu0
    %v3044 = vadd.f32 %v2931, %v3043
    %3045 = vmatmul.f32.gmra.mxu0 %v184
    %v3046 = vpop.f32.mrf.mxu0
    %v3047 = vadd.f32 %v2934, %v3046
    %3048 = vmatmul.f32.gmra.mxu0 %v186
    %v3049 = vpop.f32.mrf.mxu0
    %v3050 = vadd.f32 %v2937, %v3049
    %3051 = vmatmul.f32.gmra.mxu0 %v188
    %v3052 = vpop.f32.mrf.mxu0
    %v3053 = vadd.f32 %v2940, %v3052
    %3054 = vmatmul.f32.gmra.mxu0 %v190
    %v3055 = vpop.f32.mrf.mxu0
    %v3056 = vadd.f32 %v2943, %v3055
    %3057 = vmatmul.f32.gmra.mxu0 %v192
    %v3058 = vpop.f32.mrf.mxu0
    %v3059 = vadd.f32 %v2946, %v3058
    %3060 = vmatmul.f32.gmra.mxu0 %v194
    %v3061 = vpop.f32.mrf.mxu0
    %v3062 = vadd.f32 %v2949, %v3061
    %3063 = vmatmul.f32.gmra.mxu0 %v196
    %v3064 = vpop.f32.mrf.mxu0
    %v3065 = vadd.f32 %v2952, %v3064
    %3066 = vmatmul.f32.gmra.mxu0 %v198
    %v3067 = vpop.f32.mrf.mxu0
    %v3068 = vadd.f32 %v2955, %v3067
    %3069 = vmatmul.f32.gmra.mxu0 %v200
    %v3070 = vpop.f32.mrf.mxu0
    %v3071 = vadd.f32 %v2958, %v3070
    %3072 = vmatmul.f32.gmra.mxu0 %v202
    %v3073 = vpop.f32.mrf.mxu0
    %v3074 = vadd.f32 %v2961, %v3073
    %3075 = vmatmul.f32.gmra.mxu0 %v204
    %v3076 = vpop.f32.mrf.mxu0
    %v3077 = vadd.f32 %v2964, %v3076
    %3078 = vmatmul.f32.gmra.mxu0 %v206
    %v3079 = vpop.f32.mrf.mxu0
    %v3080 = vadd.f32 %v2967, %v3079
    %3081 = vmatmul.f32.gmra.mxu0 %v208
    %v3082 = vpop.f32.mrf.mxu0
    %v3083 = vadd.f32 %v2970, %v3082
    %3084 = vmatmul.f32.gmra.mxu0 %v210
    %v3085 = vpop.f32.mrf.mxu0
    %v3086 = vadd.f32 %v2973, %v3085
    %3087 = vmatmul.f32.gmra.mxu0 %v212
    %v3088 = vpop.f32.mrf.mxu0
    %v3089 = vadd.f32 %v2976, %v3088
    %3090 = vmatmul.f32.gmra.mxu0 %v214
    %v3091 = vpop.f32.mrf.mxu0
    %v3092 = vadd.f32 %v2979, %v3091
    %3093 = vdwg.mxu0
    %v3094 = vxor.u32 %v2999, 2147483648
    %v3095 = vxor.u32 %v3002, 2147483648
    %v3096 = vxor.u32 %v3005, 2147483648
    %v3097 = vxor.u32 %v3008, 2147483648
    %v3098 = vxor.u32 %v3011, 2147483648
    %v3099 = vxor.u32 %v3014, 2147483648
    %v3100 = vxor.u32 %v3017, 2147483648
    %v3101 = vxor.u32 %v3020, 2147483648
    %v3102 = vxor.u32 %v3023, 2147483648
    %v3103 = vxor.u32 %v3026, 2147483648
    %v3104 = vxor.u32 %v3029, 2147483648
    %v3105 = vxor.u32 %v3032, 2147483648
    %v3106 = vxor.u32 %v3035, 2147483648
    %v3107 = vxor.u32 %v3038, 2147483648
    %v3108 = vxor.u32 %v3041, 2147483648
    %v3109 = vxor.u32 %v3044, 2147483648
    %v3110 = vxor.u32 %v3047, 2147483648
    %v3111 = vxor.u32 %v3050, 2147483648
    %v3112 = vxor.u32 %v3053, 2147483648
    %v3113 = vxor.u32 %v3056, 2147483648
    %v3114 = vxor.u32 %v3059, 2147483648
    %v3115 = vxor.u32 %v3062, 2147483648
    %v3116 = vxor.u32 %v3065, 2147483648
    %v3117 = vxor.u32 %v3068, 2147483648
    %v3118 = vxor.u32 %v3071, 2147483648
    %v3119 = vxor.u32 %v3074, 2147483648
    %v3120 = vxor.u32 %v3077, 2147483648
    %v3121 = vxor.u32 %v3080, 2147483648
    %v3122 = vxor.u32 %v3083, 2147483648
    %v3123 = vxor.u32 %v3086, 2147483648
    %v3124 = vxor.u32 %v3089, 2147483648
    %v3125 = vxor.u32 %v3092, 2147483648
    %v3126 = vmul.f32 %v3094, 1.442695
    %v3127 = vpow.pop %v3126
    %v3128 = vmul.f32 %v3095, 1.442695
    %v3129 = vpow.pop %v3128
    %v3130 = vmul.f32 %v3096, 1.442695
    %v3131 = vpow.pop %v3130
    %v3132 = vmul.f32 %v3097, 1.442695
    %v3133 = vpow.pop %v3132
    %v3134 = vmul.f32 %v3098, 1.442695
    %v3135 = vpow.pop %v3134
    %v3136 = vmul.f32 %v3099, 1.442695
    %v3137 = vpow.pop %v3136
    %v3138 = vmul.f32 %v3100, 1.442695
    %v3139 = vpow.pop %v3138
    %v3140 = vmul.f32 %v3101, 1.442695
    %v3141 = vpow.pop %v3140
    %v3142 = vmul.f32 %v3102, 1.442695
    %v3143 = vpow.pop %v3142
    %v3144 = vmul.f32 %v3103, 1.442695
    %v3145 = vpow.pop %v3144
    %v3146 = vmul.f32 %v3104, 1.442695
    %v3147 = vpow.pop %v3146
    %v3148 = vmul.f32 %v3105, 1.442695
    %v3149 = vpow.pop %v3148
    %v3150 = vmul.f32 %v3106, 1.442695
    %v3151 = vpow.pop %v3150
    %v3152 = vmul.f32 %v3107, 1.442695
    %v3153 = vpow.pop %v3152
    %v3154 = vmul.f32 %v3108, 1.442695
    %v3155 = vpow.pop %v3154
    %v3156 = vmul.f32 %v3109, 1.442695
    %v3157 = vpow.pop %v3156
    %v3158 = vmul.f32 %v3110, 1.442695
    %v3159 = vpow.pop %v3158
    %v3160 = vmul.f32 %v3111, 1.442695
    %v3161 = vpow.pop %v3160
    %v3162 = vmul.f32 %v3112, 1.442695
    %v3163 = vpow.pop %v3162
    %v3164 = vmul.f32 %v3113, 1.442695
    %v3165 = vpow.pop %v3164
    %v3166 = vmul.f32 %v3114, 1.442695
    %v3167 = vpow.pop %v3166
    %v3168 = vmul.f32 %v3115, 1.442695
    %v3169 = vpow.pop %v3168
    %v3170 = vmul.f32 %v3116, 1.442695
    %v3171 = vpow.pop %v3170
    %v3172 = vmul.f32 %v3117, 1.442695
    %v3173 = vpow.pop %v3172
    %v3174 = vmul.f32 %v3118, 1.442695
    %v3175 = vpow.pop %v3174
    %v3176 = vmul.f32 %v3119, 1.442695
    %v3177 = vpow.pop %v3176
    %v3178 = vmul.f32 %v3120, 1.442695
    %v3179 = vpow.pop %v3178
    %v3180 = vmul.f32 %v3121, 1.442695
    %v3181 = vpow.pop %v3180
    %v3182 = vmul.f32 %v3122, 1.442695
    %v3183 = vpow.pop %v3182
    %v3184 = vmul.f32 %v3123, 1.442695
    %v3185 = vpow.pop %v3184
    %v3186 = vmul.f32 %v3124, 1.442695
    %v3187 = vpow.pop %v3186
    %v3188 = vmul.f32 %v3125, 1.442695
    %v3189 = vpow.pop %v3188
    %v3190 = vadd.f32 %v3127, 1.0
    %v3191 = vadd.f32 %v3129, 1.0
    %v3192 = vadd.f32 %v3131, 1.0
    %v3193 = vadd.f32 %v3133, 1.0
    %v3194 = vadd.f32 %v3135, 1.0
    %v3195 = vadd.f32 %v3137, 1.0
    %v3196 = vadd.f32 %v3139, 1.0
    %v3197 = vadd.f32 %v3141, 1.0
    %v3198 = vadd.f32 %v3143, 1.0
    %v3199 = vadd.f32 %v3145, 1.0
    %v3200 = vadd.f32 %v3147, 1.0
    %v3201 = vadd.f32 %v3149, 1.0
    %v3202 = vadd.f32 %v3151, 1.0
    %v3203 = vadd.f32 %v3153, 1.0
    %v3204 = vadd.f32 %v3155, 1.0
    %v3205 = vadd.f32 %v3157, 1.0
    %v3206 = vadd.f32 %v3159, 1.0
    %v3207 = vadd.f32 %v3161, 1.0
    %v3208 = vadd.f32 %v3163, 1.0
    %v3209 = vadd.f32 %v3165, 1.0
    %v3210 = vadd.f32 %v3167, 1.0
    %v3211 = vadd.f32 %v3169, 1.0
    %v3212 = vadd.f32 %v3171, 1.0
    %v3213 = vadd.f32 %v3173, 1.0
    %v3214 = vadd.f32 %v3175, 1.0
    %v3215 = vadd.f32 %v3177, 1.0
    %v3216 = vadd.f32 %v3179, 1.0
    %v3217 = vadd.f32 %v3181, 1.0
    %v3218 = vadd.f32 %v3183, 1.0
    %v3219 = vadd.f32 %v3185, 1.0
    %v3220 = vadd.f32 %v3187, 1.0
    %v3221 = vadd.f32 %v3189, 1.0
    %v3222 = vrcp.pop %v3190
    %v3223 = vmul.f32 %v3190, %v3222
    %v3224 = vsub.f32 1.0, %v3223
    %v3225 = vmul.f32 %v3222, %v3224
    %v3226 = vadd.f32 %v3222, %v3225
    %vm3227 = vweird.f32 %v3190
    %vm3228 = vweird.f32 %v3222
    %vm3229 = vmor %vm3227, %vm3228
    %v3230 = vsel %vm3229, %v3222, %v3226
    %v3231 = vand.u32 2147483647, %v3190
    %vm3232 = vcmp.eq.f32.partialorder %v3231, 8.507059e+37
    %v3233 = vand.u32 %v3190, 2147483648
    %v3234 = vor.u32 1.1754944e-38, %v3233
    %v3235 = vsel %vm3232, %v3234, %v3230
    %v3236 = vmul.f32 1.0, %v3235
    %v3237 = vrcp.pop %v3191
    %v3238 = vmul.f32 %v3191, %v3237
    %v3239 = vsub.f32 1.0, %v3238
    %v3240 = vmul.f32 %v3237, %v3239
    %v3241 = vadd.f32 %v3237, %v3240
    %vm3242 = vweird.f32 %v3191
    %vm3243 = vweird.f32 %v3237
    %vm3244 = vmor %vm3242, %vm3243
    %v3245 = vsel %vm3244, %v3237, %v3241
    %v3246 = vand.u32 2147483647, %v3191
    %vm3247 = vcmp.eq.f32.partialorder %v3246, 8.507059e+37
    %v3248 = vand.u32 %v3191, 2147483648
    %v3249 = vor.u32 1.1754944e-38, %v3248
    %v3250 = vsel %vm3247, %v3249, %v3245
    %v3251 = vmul.f32 1.0, %v3250
    %v3252 = vrcp.pop %v3192
    %v3253 = vmul.f32 %v3192, %v3252
    %v3254 = vsub.f32 1.0, %v3253
    %v3255 = vmul.f32 %v3252, %v3254
    %v3256 = vadd.f32 %v3252, %v3255
    %vm3257 = vweird.f32 %v3192
    %vm3258 = vweird.f32 %v3252
    %vm3259 = vmor %vm3257, %vm3258
    %v3260 = vsel %vm3259, %v3252, %v3256
    %v3261 = vand.u32 2147483647, %v3192
    %vm3262 = vcmp.eq.f32.partialorder %v3261, 8.507059e+37
    %v3263 = vand.u32 %v3192, 2147483648
    %v3264 = vor.u32 1.1754944e-38, %v3263
    %v3265 = vsel %vm3262, %v3264, %v3260
    %v3266 = vmul.f32 1.0, %v3265
    %v3267 = vrcp.pop %v3193
    %v3268 = vmul.f32 %v3193, %v3267
    %v3269 = vsub.f32 1.0, %v3268
    %v3270 = vmul.f32 %v3267, %v3269
    %v3271 = vadd.f32 %v3267, %v3270
    %vm3272 = vweird.f32 %v3193
    %vm3273 = vweird.f32 %v3267
    %vm3274 = vmor %vm3272, %vm3273
    %v3275 = vsel %vm3274, %v3267, %v3271
    %v3276 = vand.u32 2147483647, %v3193
    %vm3277 = vcmp.eq.f32.partialorder %v3276, 8.507059e+37
    %v3278 = vand.u32 %v3193, 2147483648
    %v3279 = vor.u32 1.1754944e-38, %v3278
    %v3280 = vsel %vm3277, %v3279, %v3275
    %v3281 = vmul.f32 1.0, %v3280
    %v3282 = vrcp.pop %v3194
    %v3283 = vmul.f32 %v3194, %v3282
    %v3284 = vsub.f32 1.0, %v3283
    %v3285 = vmul.f32 %v3282, %v3284
    %v3286 = vadd.f32 %v3282, %v3285
    %vm3287 = vweird.f32 %v3194
    %vm3288 = vweird.f32 %v3282
    %vm3289 = vmor %vm3287, %vm3288
    %v3290 = vsel %vm3289, %v3282, %v3286
    %v3291 = vand.u32 2147483647, %v3194
    %vm3292 = vcmp.eq.f32.partialorder %v3291, 8.507059e+37
    %v3293 = vand.u32 %v3194, 2147483648
    %v3294 = vor.u32 1.1754944e-38, %v3293
    %v3295 = vsel %vm3292, %v3294, %v3290
    %v3296 = vmul.f32 1.0, %v3295
    %v3297 = vrcp.pop %v3195
    %v3298 = vmul.f32 %v3195, %v3297
    %v3299 = vsub.f32 1.0, %v3298
    %v3300 = vmul.f32 %v3297, %v3299
    %v3301 = vadd.f32 %v3297, %v3300
    %vm3302 = vweird.f32 %v3195
    %vm3303 = vweird.f32 %v3297
    %vm3304 = vmor %vm3302, %vm3303
    %v3305 = vsel %vm3304, %v3297, %v3301
    %v3306 = vand.u32 2147483647, %v3195
    %vm3307 = vcmp.eq.f32.partialorder %v3306, 8.507059e+37
    %v3308 = vand.u32 %v3195, 2147483648
    %v3309 = vor.u32 1.1754944e-38, %v3308
    %v3310 = vsel %vm3307, %v3309, %v3305
    %v3311 = vmul.f32 1.0, %v3310
    %v3312 = vrcp.pop %v3196
    %v3313 = vmul.f32 %v3196, %v3312
    %v3314 = vsub.f32 1.0, %v3313
    %v3315 = vmul.f32 %v3312, %v3314
    %v3316 = vadd.f32 %v3312, %v3315
    %vm3317 = vweird.f32 %v3196
    %vm3318 = vweird.f32 %v3312
    %vm3319 = vmor %vm3317, %vm3318
    %v3320 = vsel %vm3319, %v3312, %v3316
    %v3321 = vand.u32 2147483647, %v3196
    %vm3322 = vcmp.eq.f32.partialorder %v3321, 8.507059e+37
    %v3323 = vand.u32 %v3196, 2147483648
    %v3324 = vor.u32 1.1754944e-38, %v3323
    %v3325 = vsel %vm3322, %v3324, %v3320
    %v3326 = vmul.f32 1.0, %v3325
    %v3327 = vrcp.pop %v3197
    %v3328 = vmul.f32 %v3197, %v3327
    %v3329 = vsub.f32 1.0, %v3328
    %v3330 = vmul.f32 %v3327, %v3329
    %v3331 = vadd.f32 %v3327, %v3330
    %vm3332 = vweird.f32 %v3197
    %vm3333 = vweird.f32 %v3327
    %vm3334 = vmor %vm3332, %vm3333
    %v3335 = vsel %vm3334, %v3327, %v3331
    %v3336 = vand.u32 2147483647, %v3197
    %vm3337 = vcmp.eq.f32.partialorder %v3336, 8.507059e+37
    %v3338 = vand.u32 %v3197, 2147483648
    %v3339 = vor.u32 1.1754944e-38, %v3338
    %v3340 = vsel %vm3337, %v3339, %v3335
    %v3341 = vmul.f32 1.0, %v3340
    %v3342 = vrcp.pop %v3198
    %v3343 = vmul.f32 %v3198, %v3342
    %v3344 = vsub.f32 1.0, %v3343
    %v3345 = vmul.f32 %v3342, %v3344
    %v3346 = vadd.f32 %v3342, %v3345
    %vm3347 = vweird.f32 %v3198
    %vm3348 = vweird.f32 %v3342
    %vm3349 = vmor %vm3347, %vm3348
    %v3350 = vsel %vm3349, %v3342, %v3346
    %v3351 = vand.u32 2147483647, %v3198
    %vm3352 = vcmp.eq.f32.partialorder %v3351, 8.507059e+37
    %v3353 = vand.u32 %v3198, 2147483648
    %v3354 = vor.u32 1.1754944e-38, %v3353
    %v3355 = vsel %vm3352, %v3354, %v3350
    %v3356 = vmul.f32 1.0, %v3355
    %v3357 = vrcp.pop %v3199
    %v3358 = vmul.f32 %v3199, %v3357
    %v3359 = vsub.f32 1.0, %v3358
    %v3360 = vmul.f32 %v3357, %v3359
    %v3361 = vadd.f32 %v3357, %v3360
    %vm3362 = vweird.f32 %v3199
    %vm3363 = vweird.f32 %v3357
    %vm3364 = vmor %vm3362, %vm3363
    %v3365 = vsel %vm3364, %v3357, %v3361
    %v3366 = vand.u32 2147483647, %v3199
    %vm3367 = vcmp.eq.f32.partialorder %v3366, 8.507059e+37
    %v3368 = vand.u32 %v3199, 2147483648
    %v3369 = vor.u32 1.1754944e-38, %v3368
    %v3370 = vsel %vm3367, %v3369, %v3365
    %v3371 = vmul.f32 1.0, %v3370
    %v3372 = vrcp.pop %v3200
    %v3373 = vmul.f32 %v3200, %v3372
    %v3374 = vsub.f32 1.0, %v3373
    %v3375 = vmul.f32 %v3372, %v3374
    %v3376 = vadd.f32 %v3372, %v3375
    %vm3377 = vweird.f32 %v3200
    %vm3378 = vweird.f32 %v3372
    %vm3379 = vmor %vm3377, %vm3378
    %v3380 = vsel %vm3379, %v3372, %v3376
    %v3381 = vand.u32 2147483647, %v3200
    %vm3382 = vcmp.eq.f32.partialorder %v3381, 8.507059e+37
    %v3383 = vand.u32 %v3200, 2147483648
    %v3384 = vor.u32 1.1754944e-38, %v3383
    %v3385 = vsel %vm3382, %v3384, %v3380
    %v3386 = vmul.f32 1.0, %v3385
    %v3387 = vrcp.pop %v3201
    %v3388 = vmul.f32 %v3201, %v3387
    %v3389 = vsub.f32 1.0, %v3388
    %v3390 = vmul.f32 %v3387, %v3389
    %v3391 = vadd.f32 %v3387, %v3390
    %vm3392 = vweird.f32 %v3201
    %vm3393 = vweird.f32 %v3387
    %vm3394 = vmor %vm3392, %vm3393
    %v3395 = vsel %vm3394, %v3387, %v3391
    %v3396 = vand.u32 2147483647, %v3201
    %vm3397 = vcmp.eq.f32.partialorder %v3396, 8.507059e+37
    %v3398 = vand.u32 %v3201, 2147483648
    %v3399 = vor.u32 1.1754944e-38, %v3398
    %v3400 = vsel %vm3397, %v3399, %v3395
    %v3401 = vmul.f32 1.0, %v3400
    %v3402 = vrcp.pop %v3202
    %v3403 = vmul.f32 %v3202, %v3402
    %v3404 = vsub.f32 1.0, %v3403
    %v3405 = vmul.f32 %v3402, %v3404
    %v3406 = vadd.f32 %v3402, %v3405
    %vm3407 = vweird.f32 %v3202
    %vm3408 = vweird.f32 %v3402
    %vm3409 = vmor %vm3407, %vm3408
    %v3410 = vsel %vm3409, %v3402, %v3406
    %v3411 = vand.u32 2147483647, %v3202
    %vm3412 = vcmp.eq.f32.partialorder %v3411, 8.507059e+37
    %v3413 = vand.u32 %v3202, 2147483648
    %v3414 = vor.u32 1.1754944e-38, %v3413
    %v3415 = vsel %vm3412, %v3414, %v3410
    %v3416 = vmul.f32 1.0, %v3415
    %v3417 = vrcp.pop %v3203
    %v3418 = vmul.f32 %v3203, %v3417
    %v3419 = vsub.f32 1.0, %v3418
    %v3420 = vmul.f32 %v3417, %v3419
    %v3421 = vadd.f32 %v3417, %v3420
    %vm3422 = vweird.f32 %v3203
    %vm3423 = vweird.f32 %v3417
    %vm3424 = vmor %vm3422, %vm3423
    %v3425 = vsel %vm3424, %v3417, %v3421
    %v3426 = vand.u32 2147483647, %v3203
    %vm3427 = vcmp.eq.f32.partialorder %v3426, 8.507059e+37
    %v3428 = vand.u32 %v3203, 2147483648
    %v3429 = vor.u32 1.1754944e-38, %v3428
    %v3430 = vsel %vm3427, %v3429, %v3425
    %v3431 = vmul.f32 1.0, %v3430
    %v3432 = vrcp.pop %v3204
    %v3433 = vmul.f32 %v3204, %v3432
    %v3434 = vsub.f32 1.0, %v3433
    %v3435 = vmul.f32 %v3432, %v3434
    %v3436 = vadd.f32 %v3432, %v3435
    %vm3437 = vweird.f32 %v3204
    %vm3438 = vweird.f32 %v3432
    %vm3439 = vmor %vm3437, %vm3438
    %v3440 = vsel %vm3439, %v3432, %v3436
    %v3441 = vand.u32 2147483647, %v3204
    %vm3442 = vcmp.eq.f32.partialorder %v3441, 8.507059e+37
    %v3443 = vand.u32 %v3204, 2147483648
    %v3444 = vor.u32 1.1754944e-38, %v3443
    %v3445 = vsel %vm3442, %v3444, %v3440
    %v3446 = vmul.f32 1.0, %v3445
    %v3447 = vrcp.pop %v3205
    %v3448 = vmul.f32 %v3205, %v3447
    %v3449 = vsub.f32 1.0, %v3448
    %v3450 = vmul.f32 %v3447, %v3449
    %v3451 = vadd.f32 %v3447, %v3450
    %vm3452 = vweird.f32 %v3205
    %vm3453 = vweird.f32 %v3447
    %vm3454 = vmor %vm3452, %vm3453
    %v3455 = vsel %vm3454, %v3447, %v3451
    %v3456 = vand.u32 2147483647, %v3205
    %vm3457 = vcmp.eq.f32.partialorder %v3456, 8.507059e+37
    %v3458 = vand.u32 %v3205, 2147483648
    %v3459 = vor.u32 1.1754944e-38, %v3458
    %v3460 = vsel %vm3457, %v3459, %v3455
    %v3461 = vmul.f32 1.0, %v3460
    %v3462 = vrcp.pop %v3206
    %v3463 = vmul.f32 %v3206, %v3462
    %v3464 = vsub.f32 1.0, %v3463
    %v3465 = vmul.f32 %v3462, %v3464
    %v3466 = vadd.f32 %v3462, %v3465
    %vm3467 = vweird.f32 %v3206
    %vm3468 = vweird.f32 %v3462
    %vm3469 = vmor %vm3467, %vm3468
    %v3470 = vsel %vm3469, %v3462, %v3466
    %v3471 = vand.u32 2147483647, %v3206
    %vm3472 = vcmp.eq.f32.partialorder %v3471, 8.507059e+37
    %v3473 = vand.u32 %v3206, 2147483648
    %v3474 = vor.u32 1.1754944e-38, %v3473
    %v3475 = vsel %vm3472, %v3474, %v3470
    %v3476 = vmul.f32 1.0, %v3475
    %v3477 = vrcp.pop %v3207
    %v3478 = vmul.f32 %v3207, %v3477
    %v3479 = vsub.f32 1.0, %v3478
    %v3480 = vmul.f32 %v3477, %v3479
    %v3481 = vadd.f32 %v3477, %v3480
    %vm3482 = vweird.f32 %v3207
    %vm3483 = vweird.f32 %v3477
    %vm3484 = vmor %vm3482, %vm3483
    %v3485 = vsel %vm3484, %v3477, %v3481
    %v3486 = vand.u32 2147483647, %v3207
    %vm3487 = vcmp.eq.f32.partialorder %v3486, 8.507059e+37
    %v3488 = vand.u32 %v3207, 2147483648
    %v3489 = vor.u32 1.1754944e-38, %v3488
    %v3490 = vsel %vm3487, %v3489, %v3485
    %v3491 = vmul.f32 1.0, %v3490
    %v3492 = vrcp.pop %v3208
    %v3493 = vmul.f32 %v3208, %v3492
    %v3494 = vsub.f32 1.0, %v3493
    %v3495 = vmul.f32 %v3492, %v3494
    %v3496 = vadd.f32 %v3492, %v3495
    %vm3497 = vweird.f32 %v3208
    %vm3498 = vweird.f32 %v3492
    %vm3499 = vmor %vm3497, %vm3498
    %v3500 = vsel %vm3499, %v3492, %v3496
    %v3501 = vand.u32 2147483647, %v3208
    %vm3502 = vcmp.eq.f32.partialorder %v3501, 8.507059e+37
    %v3503 = vand.u32 %v3208, 2147483648
    %v3504 = vor.u32 1.1754944e-38, %v3503
    %v3505 = vsel %vm3502, %v3504, %v3500
    %v3506 = vmul.f32 1.0, %v3505
    %v3507 = vrcp.pop %v3209
    %v3508 = vmul.f32 %v3209, %v3507
    %v3509 = vsub.f32 1.0, %v3508
    %v3510 = vmul.f32 %v3507, %v3509
    %v3511 = vadd.f32 %v3507, %v3510
    %vm3512 = vweird.f32 %v3209
    %vm3513 = vweird.f32 %v3507
    %vm3514 = vmor %vm3512, %vm3513
    %v3515 = vsel %vm3514, %v3507, %v3511
    %v3516 = vand.u32 2147483647, %v3209
    %vm3517 = vcmp.eq.f32.partialorder %v3516, 8.507059e+37
    %v3518 = vand.u32 %v3209, 2147483648
    %v3519 = vor.u32 1.1754944e-38, %v3518
    %v3520 = vsel %vm3517, %v3519, %v3515
    %v3521 = vmul.f32 1.0, %v3520
    %v3522 = vrcp.pop %v3210
    %v3523 = vmul.f32 %v3210, %v3522
    %v3524 = vsub.f32 1.0, %v3523
    %v3525 = vmul.f32 %v3522, %v3524
    %v3526 = vadd.f32 %v3522, %v3525
    %vm3527 = vweird.f32 %v3210
    %vm3528 = vweird.f32 %v3522
    %vm3529 = vmor %vm3527, %vm3528
    %v3530 = vsel %vm3529, %v3522, %v3526
    %v3531 = vand.u32 2147483647, %v3210
    %vm3532 = vcmp.eq.f32.partialorder %v3531, 8.507059e+37
    %v3533 = vand.u32 %v3210, 2147483648
    %v3534 = vor.u32 1.1754944e-38, %v3533
    %v3535 = vsel %vm3532, %v3534, %v3530
    %v3536 = vmul.f32 1.0, %v3535
    %v3537 = vrcp.pop %v3211
    %v3538 = vmul.f32 %v3211, %v3537
    %v3539 = vsub.f32 1.0, %v3538
    %v3540 = vmul.f32 %v3537, %v3539
    %v3541 = vadd.f32 %v3537, %v3540
    %vm3542 = vweird.f32 %v3211
    %vm3543 = vweird.f32 %v3537
    %vm3544 = vmor %vm3542, %vm3543
    %v3545 = vsel %vm3544, %v3537, %v3541
    %v3546 = vand.u32 2147483647, %v3211
    %vm3547 = vcmp.eq.f32.partialorder %v3546, 8.507059e+37
    %v3548 = vand.u32 %v3211, 2147483648
    %v3549 = vor.u32 1.1754944e-38, %v3548
    %v3550 = vsel %vm3547, %v3549, %v3545
    %v3551 = vmul.f32 1.0, %v3550
    %v3552 = vrcp.pop %v3212
    %v3553 = vmul.f32 %v3212, %v3552
    %v3554 = vsub.f32 1.0, %v3553
    %v3555 = vmul.f32 %v3552, %v3554
    %v3556 = vadd.f32 %v3552, %v3555
    %vm3557 = vweird.f32 %v3212
    %vm3558 = vweird.f32 %v3552
    %vm3559 = vmor %vm3557, %vm3558
    %v3560 = vsel %vm3559, %v3552, %v3556
    %v3561 = vand.u32 2147483647, %v3212
    %vm3562 = vcmp.eq.f32.partialorder %v3561, 8.507059e+37
    %v3563 = vand.u32 %v3212, 2147483648
    %v3564 = vor.u32 1.1754944e-38, %v3563
    %v3565 = vsel %vm3562, %v3564, %v3560
    %v3566 = vmul.f32 1.0, %v3565
    %v3567 = vrcp.pop %v3213
    %v3568 = vmul.f32 %v3213, %v3567
    %v3569 = vsub.f32 1.0, %v3568
    %v3570 = vmul.f32 %v3567, %v3569
    %v3571 = vadd.f32 %v3567, %v3570
    %vm3572 = vweird.f32 %v3213
    %vm3573 = vweird.f32 %v3567
    %vm3574 = vmor %vm3572, %vm3573
    %v3575 = vsel %vm3574, %v3567, %v3571
    %v3576 = vand.u32 2147483647, %v3213
    %vm3577 = vcmp.eq.f32.partialorder %v3576, 8.507059e+37
    %v3578 = vand.u32 %v3213, 2147483648
    %v3579 = vor.u32 1.1754944e-38, %v3578
    %v3580 = vsel %vm3577, %v3579, %v3575
    %v3581 = vmul.f32 1.0, %v3580
    %v3582 = vrcp.pop %v3214
    %v3583 = vmul.f32 %v3214, %v3582
    %v3584 = vsub.f32 1.0, %v3583
    %v3585 = vmul.f32 %v3582, %v3584
    %v3586 = vadd.f32 %v3582, %v3585
    %vm3587 = vweird.f32 %v3214
    %vm3588 = vweird.f32 %v3582
    %vm3589 = vmor %vm3587, %vm3588
    %v3590 = vsel %vm3589, %v3582, %v3586
    %v3591 = vand.u32 2147483647, %v3214
    %vm3592 = vcmp.eq.f32.partialorder %v3591, 8.507059e+37
    %v3593 = vand.u32 %v3214, 2147483648
    %v3594 = vor.u32 1.1754944e-38, %v3593
    %v3595 = vsel %vm3592, %v3594, %v3590
    %v3596 = vmul.f32 1.0, %v3595
    %v3597 = vrcp.pop %v3215
    %v3598 = vmul.f32 %v3215, %v3597
    %v3599 = vsub.f32 1.0, %v3598
    %v3600 = vmul.f32 %v3597, %v3599
    %v3601 = vadd.f32 %v3597, %v3600
    %vm3602 = vweird.f32 %v3215
    %vm3603 = vweird.f32 %v3597
    %vm3604 = vmor %vm3602, %vm3603
    %v3605 = vsel %vm3604, %v3597, %v3601
    %v3606 = vand.u32 2147483647, %v3215
    %vm3607 = vcmp.eq.f32.partialorder %v3606, 8.507059e+37
    %v3608 = vand.u32 %v3215, 2147483648
    %v3609 = vor.u32 1.1754944e-38, %v3608
    %v3610 = vsel %vm3607, %v3609, %v3605
    %v3611 = vmul.f32 1.0, %v3610
    %v3612 = vrcp.pop %v3216
    %v3613 = vmul.f32 %v3216, %v3612
    %v3614 = vsub.f32 1.0, %v3613
    %v3615 = vmul.f32 %v3612, %v3614
    %v3616 = vadd.f32 %v3612, %v3615
    %vm3617 = vweird.f32 %v3216
    %vm3618 = vweird.f32 %v3612
    %vm3619 = vmor %vm3617, %vm3618
    %v3620 = vsel %vm3619, %v3612, %v3616
    %v3621 = vand.u32 2147483647, %v3216
    %vm3622 = vcmp.eq.f32.partialorder %v3621, 8.507059e+37
    %v3623 = vand.u32 %v3216, 2147483648
    %v3624 = vor.u32 1.1754944e-38, %v3623
    %v3625 = vsel %vm3622, %v3624, %v3620
    %v3626 = vmul.f32 1.0, %v3625
    %v3627 = vrcp.pop %v3217
    %v3628 = vmul.f32 %v3217, %v3627
    %v3629 = vsub.f32 1.0, %v3628
    %v3630 = vmul.f32 %v3627, %v3629
    %v3631 = vadd.f32 %v3627, %v3630
    %vm3632 = vweird.f32 %v3217
    %vm3633 = vweird.f32 %v3627
    %vm3634 = vmor %vm3632, %vm3633
    %v3635 = vsel %vm3634, %v3627, %v3631
    %v3636 = vand.u32 2147483647, %v3217
    %vm3637 = vcmp.eq.f32.partialorder %v3636, 8.507059e+37
    %v3638 = vand.u32 %v3217, 2147483648
    %v3639 = vor.u32 1.1754944e-38, %v3638
    %v3640 = vsel %vm3637, %v3639, %v3635
    %v3641 = vmul.f32 1.0, %v3640
    %v3642 = vrcp.pop %v3218
    %v3643 = vmul.f32 %v3218, %v3642
    %v3644 = vsub.f32 1.0, %v3643
    %v3645 = vmul.f32 %v3642, %v3644
    %v3646 = vadd.f32 %v3642, %v3645
    %vm3647 = vweird.f32 %v3218
    %vm3648 = vweird.f32 %v3642
    %vm3649 = vmor %vm3647, %vm3648
    %v3650 = vsel %vm3649, %v3642, %v3646
    %v3651 = vand.u32 2147483647, %v3218
    %vm3652 = vcmp.eq.f32.partialorder %v3651, 8.507059e+37
    %v3653 = vand.u32 %v3218, 2147483648
    %v3654 = vor.u32 1.1754944e-38, %v3653
    %v3655 = vsel %vm3652, %v3654, %v3650
    %v3656 = vmul.f32 1.0, %v3655
    %v3657 = vrcp.pop %v3219
    %v3658 = vmul.f32 %v3219, %v3657
    %v3659 = vsub.f32 1.0, %v3658
    %v3660 = vmul.f32 %v3657, %v3659
    %v3661 = vadd.f32 %v3657, %v3660
    %vm3662 = vweird.f32 %v3219
    %vm3663 = vweird.f32 %v3657
    %vm3664 = vmor %vm3662, %vm3663
    %v3665 = vsel %vm3664, %v3657, %v3661
    %v3666 = vand.u32 2147483647, %v3219
    %vm3667 = vcmp.eq.f32.partialorder %v3666, 8.507059e+37
    %v3668 = vand.u32 %v3219, 2147483648
    %v3669 = vor.u32 1.1754944e-38, %v3668
    %v3670 = vsel %vm3667, %v3669, %v3665
    %v3671 = vmul.f32 1.0, %v3670
    %v3672 = vrcp.pop %v3220
    %v3673 = vmul.f32 %v3220, %v3672
    %v3674 = vsub.f32 1.0, %v3673
    %v3675 = vmul.f32 %v3672, %v3674
    %v3676 = vadd.f32 %v3672, %v3675
    %vm3677 = vweird.f32 %v3220
    %vm3678 = vweird.f32 %v3672
    %vm3679 = vmor %vm3677, %vm3678
    %v3680 = vsel %vm3679, %v3672, %v3676
    %v3681 = vand.u32 2147483647, %v3220
    %vm3682 = vcmp.eq.f32.partialorder %v3681, 8.507059e+37
    %v3683 = vand.u32 %v3220, 2147483648
    %v3684 = vor.u32 1.1754944e-38, %v3683
    %v3685 = vsel %vm3682, %v3684, %v3680
    %v3686 = vmul.f32 1.0, %v3685
    %v3687 = vrcp.pop %v3221
    %v3688 = vmul.f32 %v3221, %v3687
    %v3689 = vsub.f32 1.0, %v3688
    %v3690 = vmul.f32 %v3687, %v3689
    %v3691 = vadd.f32 %v3687, %v3690
    %vm3692 = vweird.f32 %v3221
    %vm3693 = vweird.f32 %v3687
    %vm3694 = vmor %vm3692, %vm3693
    %v3695 = vsel %vm3694, %v3687, %v3691
    %v3696 = vand.u32 2147483647, %v3221
    %vm3697 = vcmp.eq.f32.partialorder %v3696, 8.507059e+37
    %v3698 = vand.u32 %v3221, 2147483648
    %v3699 = vor.u32 1.1754944e-38, %v3698
    %v3700 = vsel %vm3697, %v3699, %v3695
    %v3701 = vmul.f32 1.0, %v3700
    %3703 = vset.pattern.permute.xlu0 0
    %3704 = vperm.xlu0 %3703, %v670
    %v3705 = vpop.permute.xlu0 %3704
    %3708 = vset.pattern.permute.xlu0 0
    %3709 = vperm.xlu0 %3708, %v671
    %v3710 = vpop.permute.xlu0 %3709
    %3713 = vset.pattern.permute.xlu0 0
    %3714 = vperm.xlu0 %3713, %v672
    %v3715 = vpop.permute.xlu0 %3714
    %3718 = vset.pattern.permute.xlu0 0
    %3719 = vperm.xlu0 %3718, %v673
    %v3720 = vpop.permute.xlu0 %3719
    %3723 = vset.pattern.permute.xlu0 0
    %3724 = vperm.xlu0 %3723, %v674
    %v3725 = vpop.permute.xlu0 %3724
    %3728 = vset.pattern.permute.xlu0 0
    %3729 = vperm.xlu0 %3728, %v675
    %v3730 = vpop.permute.xlu0 %3729
    %3733 = vset.pattern.permute.xlu0 0
    %3734 = vperm.xlu0 %3733, %v676
    %v3735 = vpop.permute.xlu0 %3734
    %3738 = vset.pattern.permute.xlu0 0
    %3739 = vperm.xlu0 %3738, %v677
    %v3740 = vpop.permute.xlu0 %3739
    %3743 = vset.pattern.permute.xlu0 0
    %3744 = vperm.xlu0 %3743, %v678
    %v3745 = vpop.permute.xlu0 %3744
    %3748 = vset.pattern.permute.xlu0 0
    %3749 = vperm.xlu0 %3748, %v679
    %v3750 = vpop.permute.xlu0 %3749
    %3753 = vset.pattern.permute.xlu0 0
    %3754 = vperm.xlu0 %3753, %v680
    %v3755 = vpop.permute.xlu0 %3754
    %3758 = vset.pattern.permute.xlu0 0
    %3759 = vperm.xlu0 %3758, %v681
    %v3760 = vpop.permute.xlu0 %3759
    %3763 = vset.pattern.permute.xlu0 0
    %3764 = vperm.xlu0 %3763, %v682
    %v3765 = vpop.permute.xlu0 %3764
    %3768 = vset.pattern.permute.xlu0 0
    %3769 = vperm.xlu0 %3768, %v683
    %v3770 = vpop.permute.xlu0 %3769
    %3773 = vset.pattern.permute.xlu0 0
    %3774 = vperm.xlu0 %3773, %v684
    %v3775 = vpop.permute.xlu0 %3774
    %3778 = vset.pattern.permute.xlu0 0
    %3779 = vperm.xlu0 %3778, %v685
    %v3780 = vpop.permute.xlu0 %3779
    %3783 = vset.pattern.permute.xlu0 0
    %3784 = vperm.xlu0 %3783, %v686
    %v3785 = vpop.permute.xlu0 %3784
    %3788 = vset.pattern.permute.xlu0 0
    %3789 = vperm.xlu0 %3788, %v687
    %v3790 = vpop.permute.xlu0 %3789
    %3793 = vset.pattern.permute.xlu0 0
    %3794 = vperm.xlu0 %3793, %v688
    %v3795 = vpop.permute.xlu0 %3794
    %3798 = vset.pattern.permute.xlu0 0
    %3799 = vperm.xlu0 %3798, %v689
    %v3800 = vpop.permute.xlu0 %3799
    %3803 = vset.pattern.permute.xlu0 0
    %3804 = vperm.xlu0 %3803, %v690
    %v3805 = vpop.permute.xlu0 %3804
    %3808 = vset.pattern.permute.xlu0 0
    %3809 = vperm.xlu0 %3808, %v691
    %v3810 = vpop.permute.xlu0 %3809
    %3813 = vset.pattern.permute.xlu0 0
    %3814 = vperm.xlu0 %3813, %v692
    %v3815 = vpop.permute.xlu0 %3814
    %3818 = vset.pattern.permute.xlu0 0
    %3819 = vperm.xlu0 %3818, %v693
    %v3820 = vpop.permute.xlu0 %3819
    %3823 = vset.pattern.permute.xlu0 0
    %3824 = vperm.xlu0 %3823, %v694
    %v3825 = vpop.permute.xlu0 %3824
    %3828 = vset.pattern.permute.xlu0 0
    %3829 = vperm.xlu0 %3828, %v695
    %v3830 = vpop.permute.xlu0 %3829
    %3833 = vset.pattern.permute.xlu0 0
    %3834 = vperm.xlu0 %3833, %v696
    %v3835 = vpop.permute.xlu0 %3834
    %3838 = vset.pattern.permute.xlu0 0
    %3839 = vperm.xlu0 %3838, %v697
    %v3840 = vpop.permute.xlu0 %3839
    %3843 = vset.pattern.permute.xlu0 0
    %3844 = vperm.xlu0 %3843, %v698
    %v3845 = vpop.permute.xlu0 %3844
    %3848 = vset.pattern.permute.xlu0 0
    %3849 = vperm.xlu0 %3848, %v699
    %v3850 = vpop.permute.xlu0 %3849
    %3853 = vset.pattern.permute.xlu0 0
    %3854 = vperm.xlu0 %3853, %v700
    %v3855 = vpop.permute.xlu0 %3854
    %3858 = vset.pattern.permute.xlu0 0
    %3859 = vperm.xlu0 %3858, %v701
    %v3860 = vpop.permute.xlu0 %3859
    %3862 = vmatpush.msra.mxu0 %v3461
    %3863 = vmatpush.msra.mxu0 %v3446
    %3864 = vmatpush.msra.mxu0 %v3431
    %3865 = vmatpush.msra.mxu0 %v3416
    %3866 = vmatpush.msra.mxu0 %v3401
    %3867 = vmatpush.msra.mxu0 %v3386
    %3868 = vmatpush.msra.mxu0 %v3371
    %3869 = vmatpush.msra.mxu0 %v3356
    %3870 = vmatpush.msra.mxu0 %v3341
    %3871 = vmatpush.msra.mxu0 %v3326
    %3872 = vmatpush.msra.mxu0 %v3311
    %3873 = vmatpush.msra.mxu0 %v3296
    %3874 = vmatpush.msra.mxu0 %v3281
    %3875 = vmatpush.msra.mxu0 %v3266
    %3876 = vmatpush.msra.mxu0 %v3251
    %3877 = vmatpush.msra.mxu0 %v3236
    %3878 = vmatmul.f32.gmra.mxu0 %v216
    %v3879 = vpop.f32.mrf.mxu0
    %v3880 = vadd.f32 %v3705, %v3879
    %3881 = vmatmul.f32.gmra.mxu0 %v218
    %v3882 = vpop.f32.mrf.mxu0
    %v3883 = vadd.f32 %v3710, %v3882
    %3884 = vmatmul.f32.gmra.mxu0 %v220
    %v3885 = vpop.f32.mrf.mxu0
    %v3886 = vadd.f32 %v3715, %v3885
    %3887 = vmatmul.f32.gmra.mxu0 %v222
    %v3888 = vpop.f32.mrf.mxu0
    %v3889 = vadd.f32 %v3720, %v3888
    %3890 = vmatmul.f32.gmra.mxu0 %v224
    %v3891 = vpop.f32.mrf.mxu0
    %v3892 = vadd.f32 %v3725, %v3891
    %3893 = vmatmul.f32.gmra.mxu0 %v226
    %v3894 = vpop.f32.mrf.mxu0
    %v3895 = vadd.f32 %v3730, %v3894
    %3896 = vmatmul.f32.gmra.mxu0 %v228
    %v3897 = vpop.f32.mrf.mxu0
    %v3898 = vadd.f32 %v3735, %v3897
    %3899 = vmatmul.f32.gmra.mxu0 %v230
    %v3900 = vpop.f32.mrf.mxu0
    %v3901 = vadd.f32 %v3740, %v3900
    %3902 = vmatmul.f32.gmra.mxu0 %v232
    %v3903 = vpop.f32.mrf.mxu0
    %v3904 = vadd.f32 %v3745, %v3903
    %3905 = vmatmul.f32.gmra.mxu0 %v234
    %v3906 = vpop.f32.mrf.mxu0
    %v3907 = vadd.f32 %v3750, %v3906
    %3908 = vmatmul.f32.gmra.mxu0 %v236
    %v3909 = vpop.f32.mrf.mxu0
    %v3910 = vadd.f32 %v3755, %v3909
    %3911 = vmatmul.f32.gmra.mxu0 %v238
    %v3912 = vpop.f32.mrf.mxu0
    %v3913 = vadd.f32 %v3760, %v3912
    %3914 = vmatmul.f32.gmra.mxu0 %v240
    %v3915 = vpop.f32.mrf.mxu0
    %v3916 = vadd.f32 %v3765, %v3915
    %3917 = vmatmul.f32.gmra.mxu0 %v242
    %v3918 = vpop.f32.mrf.mxu0
    %v3919 = vadd.f32 %v3770, %v3918
    %3920 = vmatmul.f32.gmra.mxu0 %v244
    %v3921 = vpop.f32.mrf.mxu0
    %v3922 = vadd.f32 %v3775, %v3921
    %3923 = vmatmul.f32.gmra.mxu0 %v246
    %v3924 = vpop.f32.mrf.mxu0
    %v3925 = vadd.f32 %v3780, %v3924
    %3926 = vmatmul.f32.gmra.mxu0 %v248
    %v3927 = vpop.f32.mrf.mxu0
    %v3928 = vadd.f32 %v3785, %v3927
    %3929 = vmatmul.f32.gmra.mxu0 %v250
    %v3930 = vpop.f32.mrf.mxu0
    %v3931 = vadd.f32 %v3790, %v3930
    %3932 = vmatmul.f32.gmra.mxu0 %v252
    %v3933 = vpop.f32.mrf.mxu0
    %v3934 = vadd.f32 %v3795, %v3933
    %3935 = vmatmul.f32.gmra.mxu0 %v254
    %v3936 = vpop.f32.mrf.mxu0
    %v3937 = vadd.f32 %v3800, %v3936
    %3938 = vmatmul.f32.gmra.mxu0 %v256
    %v3939 = vpop.f32.mrf.mxu0
    %v3940 = vadd.f32 %v3805, %v3939
    %3941 = vmatmul.f32.gmra.mxu0 %v258
    %v3942 = vpop.f32.mrf.mxu0
    %v3943 = vadd.f32 %v3810, %v3942
    %3944 = vmatmul.f32.gmra.mxu0 %v260
    %v3945 = vpop.f32.mrf.mxu0
    %v3946 = vadd.f32 %v3815, %v3945
    %3947 = vmatmul.f32.gmra.mxu0 %v262
    %v3948 = vpop.f32.mrf.mxu0
    %v3949 = vadd.f32 %v3820, %v3948
    %3950 = vmatmul.f32.gmra.mxu0 %v264
    %v3951 = vpop.f32.mrf.mxu0
    %v3952 = vadd.f32 %v3825, %v3951
    %3953 = vmatmul.f32.gmra.mxu0 %v266
    %v3954 = vpop.f32.mrf.mxu0
    %v3955 = vadd.f32 %v3830, %v3954
    %3956 = vmatmul.f32.gmra.mxu0 %v268
    %v3957 = vpop.f32.mrf.mxu0
    %v3958 = vadd.f32 %v3835, %v3957
    %3959 = vmatmul.f32.gmra.mxu0 %v270
    %v3960 = vpop.f32.mrf.mxu0
    %v3961 = vadd.f32 %v3840, %v3960
    %3962 = vmatmul.f32.gmra.mxu0 %v272
    %v3963 = vpop.f32.mrf.mxu0
    %v3964 = vadd.f32 %v3845, %v3963
    %3965 = vmatmul.f32.gmra.mxu0 %v274
    %v3966 = vpop.f32.mrf.mxu0
    %v3967 = vadd.f32 %v3850, %v3966
    %3968 = vmatmul.f32.gmra.mxu0 %v276
    %v3969 = vpop.f32.mrf.mxu0
    %v3970 = vadd.f32 %v3855, %v3969
    %3971 = vmatmul.f32.gmra.mxu0 %v278
    %v3972 = vpop.f32.mrf.mxu0
    %v3973 = vadd.f32 %v3860, %v3972
    %3974 = vdwg.mxu0
    %3975 = vmatpush.msra.mxu0 %v3701
    %3976 = vmatpush.msra.mxu0 %v3686
    %3977 = vmatpush.msra.mxu0 %v3671
    %3978 = vmatpush.msra.mxu0 %v3656
    %3979 = vmatpush.msra.mxu0 %v3641
    %3980 = vmatpush.msra.mxu0 %v3626
    %3981 = vmatpush.msra.mxu0 %v3611
    %3982 = vmatpush.msra.mxu0 %v3596
    %3983 = vmatpush.msra.mxu0 %v3581
    %3984 = vmatpush.msra.mxu0 %v3566
    %3985 = vmatpush.msra.mxu0 %v3551
    %3986 = vmatpush.msra.mxu0 %v3536
    %3987 = vmatpush.msra.mxu0 %v3521
    %3988 = vmatpush.msra.mxu0 %v3506
    %3989 = vmatpush.msra.mxu0 %v3491
    %3990 = vmatpush.msra.mxu0 %v3476
    %3991 = vmatmul.f32.gmra.mxu0 %v217
    %v3992 = vpop.f32.mrf.mxu0
    %v3993 = vadd.f32 %v3880, %v3992
    %3994 = vmatmul.f32.gmra.mxu0 %v219
    %v3995 = vpop.f32.mrf.mxu0
    %v3996 = vadd.f32 %v3883, %v3995
    %3997 = vmatmul.f32.gmra.mxu0 %v221
    %v3998 = vpop.f32.mrf.mxu0
    %v3999 = vadd.f32 %v3886, %v3998
    %4000 = vmatmul.f32.gmra.mxu0 %v223
    %v4001 = vpop.f32.mrf.mxu0
    %v4002 = vadd.f32 %v3889, %v4001
    %4003 = vmatmul.f32.gmra.mxu0 %v225
    %v4004 = vpop.f32.mrf.mxu0
    %v4005 = vadd.f32 %v3892, %v4004
    %4006 = vmatmul.f32.gmra.mxu0 %v227
    %v4007 = vpop.f32.mrf.mxu0
    %v4008 = vadd.f32 %v3895, %v4007
    %4009 = vmatmul.f32.gmra.mxu0 %v229
    %v4010 = vpop.f32.mrf.mxu0
    %v4011 = vadd.f32 %v3898, %v4010
    %4012 = vmatmul.f32.gmra.mxu0 %v231
    %v4013 = vpop.f32.mrf.mxu0
    %v4014 = vadd.f32 %v3901, %v4013
    %4015 = vmatmul.f32.gmra.mxu0 %v233
    %v4016 = vpop.f32.mrf.mxu0
    %v4017 = vadd.f32 %v3904, %v4016
    %4018 = vmatmul.f32.gmra.mxu0 %v235
    %v4019 = vpop.f32.mrf.mxu0
    %v4020 = vadd.f32 %v3907, %v4019
    %4021 = vmatmul.f32.gmra.mxu0 %v237
    %v4022 = vpop.f32.mrf.mxu0
    %v4023 = vadd.f32 %v3910, %v4022
    %4024 = vmatmul.f32.gmra.mxu0 %v239
    %v4025 = vpop.f32.mrf.mxu0
    %v4026 = vadd.f32 %v3913, %v4025
    %4027 = vmatmul.f32.gmra.mxu0 %v241
    %v4028 = vpop.f32.mrf.mxu0
    %v4029 = vadd.f32 %v3916, %v4028
    %4030 = vmatmul.f32.gmra.mxu0 %v243
    %v4031 = vpop.f32.mrf.mxu0
    %v4032 = vadd.f32 %v3919, %v4031
    %4033 = vmatmul.f32.gmra.mxu0 %v245
    %v4034 = vpop.f32.mrf.mxu0
    %v4035 = vadd.f32 %v3922, %v4034
    %4036 = vmatmul.f32.gmra.mxu0 %v247
    %v4037 = vpop.f32.mrf.mxu0
    %v4038 = vadd.f32 %v3925, %v4037
    %4039 = vmatmul.f32.gmra.mxu0 %v249
    %v4040 = vpop.f32.mrf.mxu0
    %v4041 = vadd.f32 %v3928, %v4040
    %4042 = vmatmul.f32.gmra.mxu0 %v251
    %v4043 = vpop.f32.mrf.mxu0
    %v4044 = vadd.f32 %v3931, %v4043
    %4045 = vmatmul.f32.gmra.mxu0 %v253
    %v4046 = vpop.f32.mrf.mxu0
    %v4047 = vadd.f32 %v3934, %v4046
    %4048 = vmatmul.f32.gmra.mxu0 %v255
    %v4049 = vpop.f32.mrf.mxu0
    %v4050 = vadd.f32 %v3937, %v4049
    %4051 = vmatmul.f32.gmra.mxu0 %v257
    %v4052 = vpop.f32.mrf.mxu0
    %v4053 = vadd.f32 %v3940, %v4052
    %4054 = vmatmul.f32.gmra.mxu0 %v259
    %v4055 = vpop.f32.mrf.mxu0
    %v4056 = vadd.f32 %v3943, %v4055
    %4057 = vmatmul.f32.gmra.mxu0 %v261
    %v4058 = vpop.f32.mrf.mxu0
    %v4059 = vadd.f32 %v3946, %v4058
    %4060 = vmatmul.f32.gmra.mxu0 %v263
    %v4061 = vpop.f32.mrf.mxu0
    %v4062 = vadd.f32 %v3949, %v4061
    %4063 = vmatmul.f32.gmra.mxu0 %v265
    %v4064 = vpop.f32.mrf.mxu0
    %v4065 = vadd.f32 %v3952, %v4064
    %4066 = vmatmul.f32.gmra.mxu0 %v267
    %v4067 = vpop.f32.mrf.mxu0
    %v4068 = vadd.f32 %v3955, %v4067
    %4069 = vmatmul.f32.gmra.mxu0 %v269
    %v4070 = vpop.f32.mrf.mxu0
    %v4071 = vadd.f32 %v3958, %v4070
    %4072 = vmatmul.f32.gmra.mxu0 %v271
    %v4073 = vpop.f32.mrf.mxu0
    %v4074 = vadd.f32 %v3961, %v4073
    %4075 = vmatmul.f32.gmra.mxu0 %v273
    %v4076 = vpop.f32.mrf.mxu0
    %v4077 = vadd.f32 %v3964, %v4076
    %4078 = vmatmul.f32.gmra.mxu0 %v275
    %v4079 = vpop.f32.mrf.mxu0
    %v4080 = vadd.f32 %v3967, %v4079
    %4081 = vmatmul.f32.gmra.mxu0 %v277
    %v4082 = vpop.f32.mrf.mxu0
    %v4083 = vadd.f32 %v3970, %v4082
    %4084 = vmatmul.f32.gmra.mxu0 %v279
    %v4085 = vpop.f32.mrf.mxu0
    %v4086 = vadd.f32 %v3973, %v4085
    %4087 = vdwg.mxu0
    %v4088 = vxor.u32 %v3993, 2147483648
    %v4089 = vxor.u32 %v3996, 2147483648
    %v4090 = vxor.u32 %v3999, 2147483648
    %v4091 = vxor.u32 %v4002, 2147483648
    %v4092 = vxor.u32 %v4005, 2147483648
    %v4093 = vxor.u32 %v4008, 2147483648
    %v4094 = vxor.u32 %v4011, 2147483648
    %v4095 = vxor.u32 %v4014, 2147483648
    %v4096 = vxor.u32 %v4017, 2147483648
    %v4097 = vxor.u32 %v4020, 2147483648
    %v4098 = vxor.u32 %v4023, 2147483648
    %v4099 = vxor.u32 %v4026, 2147483648
    %v4100 = vxor.u32 %v4029, 2147483648
    %v4101 = vxor.u32 %v4032, 2147483648
    %v4102 = vxor.u32 %v4035, 2147483648
    %v4103 = vxor.u32 %v4038, 2147483648
    %v4104 = vxor.u32 %v4041, 2147483648
    %v4105 = vxor.u32 %v4044, 2147483648
    %v4106 = vxor.u32 %v4047, 2147483648
    %v4107 = vxor.u32 %v4050, 2147483648
    %v4108 = vxor.u32 %v4053, 2147483648
    %v4109 = vxor.u32 %v4056, 2147483648
    %v4110 = vxor.u32 %v4059, 2147483648
    %v4111 = vxor.u32 %v4062, 2147483648
    %v4112 = vxor.u32 %v4065, 2147483648
    %v4113 = vxor.u32 %v4068, 2147483648
    %v4114 = vxor.u32 %v4071, 2147483648
    %v4115 = vxor.u32 %v4074, 2147483648
    %v4116 = vxor.u32 %v4077, 2147483648
    %v4117 = vxor.u32 %v4080, 2147483648
    %v4118 = vxor.u32 %v4083, 2147483648
    %v4119 = vxor.u32 %v4086, 2147483648
    %v4120 = vmul.f32 %v4088, 1.442695
    %v4121 = vpow.pop %v4120
    %v4122 = vmul.f32 %v4089, 1.442695
    %v4123 = vpow.pop %v4122
    %v4124 = vmul.f32 %v4090, 1.442695
    %v4125 = vpow.pop %v4124
    %v4126 = vmul.f32 %v4091, 1.442695
    %v4127 = vpow.pop %v4126
    %v4128 = vmul.f32 %v4092, 1.442695
    %v4129 = vpow.pop %v4128
    %v4130 = vmul.f32 %v4093, 1.442695
    %v4131 = vpow.pop %v4130
    %v4132 = vmul.f32 %v4094, 1.442695
    %v4133 = vpow.pop %v4132
    %v4134 = vmul.f32 %v4095, 1.442695
    %v4135 = vpow.pop %v4134
    %v4136 = vmul.f32 %v4096, 1.442695
    %v4137 = vpow.pop %v4136
    %v4138 = vmul.f32 %v4097, 1.442695
    %v4139 = vpow.pop %v4138
    %v4140 = vmul.f32 %v4098, 1.442695
    %v4141 = vpow.pop %v4140
    %v4142 = vmul.f32 %v4099, 1.442695
    %v4143 = vpow.pop %v4142
    %v4144 = vmul.f32 %v4100, 1.442695
    %v4145 = vpow.pop %v4144
    %v4146 = vmul.f32 %v4101, 1.442695
    %v4147 = vpow.pop %v4146
    %v4148 = vmul.f32 %v4102, 1.442695
    %v4149 = vpow.pop %v4148
    %v4150 = vmul.f32 %v4103, 1.442695
    %v4151 = vpow.pop %v4150
    %v4152 = vmul.f32 %v4104, 1.442695
    %v4153 = vpow.pop %v4152
    %v4154 = vmul.f32 %v4105, 1.442695
    %v4155 = vpow.pop %v4154
    %v4156 = vmul.f32 %v4106, 1.442695
    %v4157 = vpow.pop %v4156
    %v4158 = vmul.f32 %v4107, 1.442695
    %v4159 = vpow.pop %v4158
    %v4160 = vmul.f32 %v4108, 1.442695
    %v4161 = vpow.pop %v4160
    %v4162 = vmul.f32 %v4109, 1.442695
    %v4163 = vpow.pop %v4162
    %v4164 = vmul.f32 %v4110, 1.442695
    %v4165 = vpow.pop %v4164
    %v4166 = vmul.f32 %v4111, 1.442695
    %v4167 = vpow.pop %v4166
    %v4168 = vmul.f32 %v4112, 1.442695
    %v4169 = vpow.pop %v4168
    %v4170 = vmul.f32 %v4113, 1.442695
    %v4171 = vpow.pop %v4170
    %v4172 = vmul.f32 %v4114, 1.442695
    %v4173 = vpow.pop %v4172
    %v4174 = vmul.f32 %v4115, 1.442695
    %v4175 = vpow.pop %v4174
    %v4176 = vmul.f32 %v4116, 1.442695
    %v4177 = vpow.pop %v4176
    %v4178 = vmul.f32 %v4117, 1.442695
    %v4179 = vpow.pop %v4178
    %v4180 = vmul.f32 %v4118, 1.442695
    %v4181 = vpow.pop %v4180
    %v4182 = vmul.f32 %v4119, 1.442695
    %v4183 = vpow.pop %v4182
    %v4184 = vadd.f32 %v4121, 1.0
    %v4185 = vadd.f32 %v4123, 1.0
    %v4186 = vadd.f32 %v4125, 1.0
    %v4187 = vadd.f32 %v4127, 1.0
    %v4188 = vadd.f32 %v4129, 1.0
    %v4189 = vadd.f32 %v4131, 1.0
    %v4190 = vadd.f32 %v4133, 1.0
    %v4191 = vadd.f32 %v4135, 1.0
    %v4192 = vadd.f32 %v4137, 1.0
    %v4193 = vadd.f32 %v4139, 1.0
    %v4194 = vadd.f32 %v4141, 1.0
    %v4195 = vadd.f32 %v4143, 1.0
    %v4196 = vadd.f32 %v4145, 1.0
    %v4197 = vadd.f32 %v4147, 1.0
    %v4198 = vadd.f32 %v4149, 1.0
    %v4199 = vadd.f32 %v4151, 1.0
    %v4200 = vadd.f32 %v4153, 1.0
    %v4201 = vadd.f32 %v4155, 1.0
    %v4202 = vadd.f32 %v4157, 1.0
    %v4203 = vadd.f32 %v4159, 1.0
    %v4204 = vadd.f32 %v4161, 1.0
    %v4205 = vadd.f32 %v4163, 1.0
    %v4206 = vadd.f32 %v4165, 1.0
    %v4207 = vadd.f32 %v4167, 1.0
    %v4208 = vadd.f32 %v4169, 1.0
    %v4209 = vadd.f32 %v4171, 1.0
    %v4210 = vadd.f32 %v4173, 1.0
    %v4211 = vadd.f32 %v4175, 1.0
    %v4212 = vadd.f32 %v4177, 1.0
    %v4213 = vadd.f32 %v4179, 1.0
    %v4214 = vadd.f32 %v4181, 1.0
    %v4215 = vadd.f32 %v4183, 1.0
    %v4216 = vrcp.pop %v4184
    %v4217 = vmul.f32 %v4184, %v4216
    %v4218 = vsub.f32 1.0, %v4217
    %v4219 = vmul.f32 %v4216, %v4218
    %v4220 = vadd.f32 %v4216, %v4219
    %vm4221 = vweird.f32 %v4184
    %vm4222 = vweird.f32 %v4216
    %vm4223 = vmor %vm4221, %vm4222
    %v4224 = vsel %vm4223, %v4216, %v4220
    %v4225 = vand.u32 2147483647, %v4184
    %vm4226 = vcmp.eq.f32.partialorder %v4225, 8.507059e+37
    %v4227 = vand.u32 %v4184, 2147483648
    %v4228 = vor.u32 1.1754944e-38, %v4227
    %v4229 = vsel %vm4226, %v4228, %v4224
    %v4230 = vmul.f32 1.0, %v4229
    %v4231 = vrcp.pop %v4185
    %v4232 = vmul.f32 %v4185, %v4231
    %v4233 = vsub.f32 1.0, %v4232
    %v4234 = vmul.f32 %v4231, %v4233
    %v4235 = vadd.f32 %v4231, %v4234
    %vm4236 = vweird.f32 %v4185
    %vm4237 = vweird.f32 %v4231
    %vm4238 = vmor %vm4236, %vm4237
    %v4239 = vsel %vm4238, %v4231, %v4235
    %v4240 = vand.u32 2147483647, %v4185
    %vm4241 = vcmp.eq.f32.partialorder %v4240, 8.507059e+37
    %v4242 = vand.u32 %v4185, 2147483648
    %v4243 = vor.u32 1.1754944e-38, %v4242
    %v4244 = vsel %vm4241, %v4243, %v4239
    %v4245 = vmul.f32 1.0, %v4244
    %v4246 = vrcp.pop %v4186
    %v4247 = vmul.f32 %v4186, %v4246
    %v4248 = vsub.f32 1.0, %v4247
    %v4249 = vmul.f32 %v4246, %v4248
    %v4250 = vadd.f32 %v4246, %v4249
    %vm4251 = vweird.f32 %v4186
    %vm4252 = vweird.f32 %v4246
    %vm4253 = vmor %vm4251, %vm4252
    %v4254 = vsel %vm4253, %v4246, %v4250
    %v4255 = vand.u32 2147483647, %v4186
    %vm4256 = vcmp.eq.f32.partialorder %v4255, 8.507059e+37
    %v4257 = vand.u32 %v4186, 2147483648
    %v4258 = vor.u32 1.1754944e-38, %v4257
    %v4259 = vsel %vm4256, %v4258, %v4254
    %v4260 = vmul.f32 1.0, %v4259
    %v4261 = vrcp.pop %v4187
    %v4262 = vmul.f32 %v4187, %v4261
    %v4263 = vsub.f32 1.0, %v4262
    %v4264 = vmul.f32 %v4261, %v4263
    %v4265 = vadd.f32 %v4261, %v4264
    %vm4266 = vweird.f32 %v4187
    %vm4267 = vweird.f32 %v4261
    %vm4268 = vmor %vm4266, %vm4267
    %v4269 = vsel %vm4268, %v4261, %v4265
    %v4270 = vand.u32 2147483647, %v4187
    %vm4271 = vcmp.eq.f32.partialorder %v4270, 8.507059e+37
    %v4272 = vand.u32 %v4187, 2147483648
    %v4273 = vor.u32 1.1754944e-38, %v4272
    %v4274 = vsel %vm4271, %v4273, %v4269
    %v4275 = vmul.f32 1.0, %v4274
    %v4276 = vrcp.pop %v4188
    %v4277 = vmul.f32 %v4188, %v4276
    %v4278 = vsub.f32 1.0, %v4277
    %v4279 = vmul.f32 %v4276, %v4278
    %v4280 = vadd.f32 %v4276, %v4279
    %vm4281 = vweird.f32 %v4188
    %vm4282 = vweird.f32 %v4276
    %vm4283 = vmor %vm4281, %vm4282
    %v4284 = vsel %vm4283, %v4276, %v4280
    %v4285 = vand.u32 2147483647, %v4188
    %vm4286 = vcmp.eq.f32.partialorder %v4285, 8.507059e+37
    %v4287 = vand.u32 %v4188, 2147483648
    %v4288 = vor.u32 1.1754944e-38, %v4287
    %v4289 = vsel %vm4286, %v4288, %v4284
    %v4290 = vmul.f32 1.0, %v4289
    %v4291 = vrcp.pop %v4189
    %v4292 = vmul.f32 %v4189, %v4291
    %v4293 = vsub.f32 1.0, %v4292
    %v4294 = vmul.f32 %v4291, %v4293
    %v4295 = vadd.f32 %v4291, %v4294
    %vm4296 = vweird.f32 %v4189
    %vm4297 = vweird.f32 %v4291
    %vm4298 = vmor %vm4296, %vm4297
    %v4299 = vsel %vm4298, %v4291, %v4295
    %v4300 = vand.u32 2147483647, %v4189
    %vm4301 = vcmp.eq.f32.partialorder %v4300, 8.507059e+37
    %v4302 = vand.u32 %v4189, 2147483648
    %v4303 = vor.u32 1.1754944e-38, %v4302
    %v4304 = vsel %vm4301, %v4303, %v4299
    %v4305 = vmul.f32 1.0, %v4304
    %v4306 = vrcp.pop %v4190
    %v4307 = vmul.f32 %v4190, %v4306
    %v4308 = vsub.f32 1.0, %v4307
    %v4309 = vmul.f32 %v4306, %v4308
    %v4310 = vadd.f32 %v4306, %v4309
    %vm4311 = vweird.f32 %v4190
    %vm4312 = vweird.f32 %v4306
    %vm4313 = vmor %vm4311, %vm4312
    %v4314 = vsel %vm4313, %v4306, %v4310
    %v4315 = vand.u32 2147483647, %v4190
    %vm4316 = vcmp.eq.f32.partialorder %v4315, 8.507059e+37
    %v4317 = vand.u32 %v4190, 2147483648
    %v4318 = vor.u32 1.1754944e-38, %v4317
    %v4319 = vsel %vm4316, %v4318, %v4314
    %v4320 = vmul.f32 1.0, %v4319
    %v4321 = vrcp.pop %v4191
    %v4322 = vmul.f32 %v4191, %v4321
    %v4323 = vsub.f32 1.0, %v4322
    %v4324 = vmul.f32 %v4321, %v4323
    %v4325 = vadd.f32 %v4321, %v4324
    %vm4326 = vweird.f32 %v4191
    %vm4327 = vweird.f32 %v4321
    %vm4328 = vmor %vm4326, %vm4327
    %v4329 = vsel %vm4328, %v4321, %v4325
    %v4330 = vand.u32 2147483647, %v4191
    %vm4331 = vcmp.eq.f32.partialorder %v4330, 8.507059e+37
    %v4332 = vand.u32 %v4191, 2147483648
    %v4333 = vor.u32 1.1754944e-38, %v4332
    %v4334 = vsel %vm4331, %v4333, %v4329
    %v4335 = vmul.f32 1.0, %v4334
    %v4336 = vrcp.pop %v4192
    %v4337 = vmul.f32 %v4192, %v4336
    %v4338 = vsub.f32 1.0, %v4337
    %v4339 = vmul.f32 %v4336, %v4338
    %v4340 = vadd.f32 %v4336, %v4339
    %vm4341 = vweird.f32 %v4192
    %vm4342 = vweird.f32 %v4336
    %vm4343 = vmor %vm4341, %vm4342
    %v4344 = vsel %vm4343, %v4336, %v4340
    %v4345 = vand.u32 2147483647, %v4192
    %vm4346 = vcmp.eq.f32.partialorder %v4345, 8.507059e+37
    %v4347 = vand.u32 %v4192, 2147483648
    %v4348 = vor.u32 1.1754944e-38, %v4347
    %v4349 = vsel %vm4346, %v4348, %v4344
    %v4350 = vmul.f32 1.0, %v4349
    %v4351 = vrcp.pop %v4193
    %v4352 = vmul.f32 %v4193, %v4351
    %v4353 = vsub.f32 1.0, %v4352
    %v4354 = vmul.f32 %v4351, %v4353
    %v4355 = vadd.f32 %v4351, %v4354
    %vm4356 = vweird.f32 %v4193
    %vm4357 = vweird.f32 %v4351
    %vm4358 = vmor %vm4356, %vm4357
    %v4359 = vsel %vm4358, %v4351, %v4355
    %v4360 = vand.u32 2147483647, %v4193
    %vm4361 = vcmp.eq.f32.partialorder %v4360, 8.507059e+37
    %v4362 = vand.u32 %v4193, 2147483648
    %v4363 = vor.u32 1.1754944e-38, %v4362
    %v4364 = vsel %vm4361, %v4363, %v4359
    %v4365 = vmul.f32 1.0, %v4364
    %v4366 = vrcp.pop %v4194
    %v4367 = vmul.f32 %v4194, %v4366
    %v4368 = vsub.f32 1.0, %v4367
    %v4369 = vmul.f32 %v4366, %v4368
    %v4370 = vadd.f32 %v4366, %v4369
    %vm4371 = vweird.f32 %v4194
    %vm4372 = vweird.f32 %v4366
    %vm4373 = vmor %vm4371, %vm4372
    %v4374 = vsel %vm4373, %v4366, %v4370
    %v4375 = vand.u32 2147483647, %v4194
    %vm4376 = vcmp.eq.f32.partialorder %v4375, 8.507059e+37
    %v4377 = vand.u32 %v4194, 2147483648
    %v4378 = vor.u32 1.1754944e-38, %v4377
    %v4379 = vsel %vm4376, %v4378, %v4374
    %v4380 = vmul.f32 1.0, %v4379
    %v4381 = vrcp.pop %v4195
    %v4382 = vmul.f32 %v4195, %v4381
    %v4383 = vsub.f32 1.0, %v4382
    %v4384 = vmul.f32 %v4381, %v4383
    %v4385 = vadd.f32 %v4381, %v4384
    %vm4386 = vweird.f32 %v4195
    %vm4387 = vweird.f32 %v4381
    %vm4388 = vmor %vm4386, %vm4387
    %v4389 = vsel %vm4388, %v4381, %v4385
    %v4390 = vand.u32 2147483647, %v4195
    %vm4391 = vcmp.eq.f32.partialorder %v4390, 8.507059e+37
    %v4392 = vand.u32 %v4195, 2147483648
    %v4393 = vor.u32 1.1754944e-38, %v4392
    %v4394 = vsel %vm4391, %v4393, %v4389
    %v4395 = vmul.f32 1.0, %v4394
    %v4396 = vrcp.pop %v4196
    %v4397 = vmul.f32 %v4196, %v4396
    %v4398 = vsub.f32 1.0, %v4397
    %v4399 = vmul.f32 %v4396, %v4398
    %v4400 = vadd.f32 %v4396, %v4399
    %vm4401 = vweird.f32 %v4196
    %vm4402 = vweird.f32 %v4396
    %vm4403 = vmor %vm4401, %vm4402
    %v4404 = vsel %vm4403, %v4396, %v4400
    %v4405 = vand.u32 2147483647, %v4196
    %vm4406 = vcmp.eq.f32.partialorder %v4405, 8.507059e+37
    %v4407 = vand.u32 %v4196, 2147483648
    %v4408 = vor.u32 1.1754944e-38, %v4407
    %v4409 = vsel %vm4406, %v4408, %v4404
    %v4410 = vmul.f32 1.0, %v4409
    %v4411 = vrcp.pop %v4197
    %v4412 = vmul.f32 %v4197, %v4411
    %v4413 = vsub.f32 1.0, %v4412
    %v4414 = vmul.f32 %v4411, %v4413
    %v4415 = vadd.f32 %v4411, %v4414
    %vm4416 = vweird.f32 %v4197
    %vm4417 = vweird.f32 %v4411
    %vm4418 = vmor %vm4416, %vm4417
    %v4419 = vsel %vm4418, %v4411, %v4415
    %v4420 = vand.u32 2147483647, %v4197
    %vm4421 = vcmp.eq.f32.partialorder %v4420, 8.507059e+37
    %v4422 = vand.u32 %v4197, 2147483648
    %v4423 = vor.u32 1.1754944e-38, %v4422
    %v4424 = vsel %vm4421, %v4423, %v4419
    %v4425 = vmul.f32 1.0, %v4424
    %v4426 = vrcp.pop %v4198
    %v4427 = vmul.f32 %v4198, %v4426
    %v4428 = vsub.f32 1.0, %v4427
    %v4429 = vmul.f32 %v4426, %v4428
    %v4430 = vadd.f32 %v4426, %v4429
    %vm4431 = vweird.f32 %v4198
    %vm4432 = vweird.f32 %v4426
    %vm4433 = vmor %vm4431, %vm4432
    %v4434 = vsel %vm4433, %v4426, %v4430
    %v4435 = vand.u32 2147483647, %v4198
    %vm4436 = vcmp.eq.f32.partialorder %v4435, 8.507059e+37
    %v4437 = vand.u32 %v4198, 2147483648
    %v4438 = vor.u32 1.1754944e-38, %v4437
    %v4439 = vsel %vm4436, %v4438, %v4434
    %v4440 = vmul.f32 1.0, %v4439
    %v4441 = vrcp.pop %v4199
    %v4442 = vmul.f32 %v4199, %v4441
    %v4443 = vsub.f32 1.0, %v4442
    %v4444 = vmul.f32 %v4441, %v4443
    %v4445 = vadd.f32 %v4441, %v4444
    %vm4446 = vweird.f32 %v4199
    %vm4447 = vweird.f32 %v4441
    %vm4448 = vmor %vm4446, %vm4447
    %v4449 = vsel %vm4448, %v4441, %v4445
    %v4450 = vand.u32 2147483647, %v4199
    %vm4451 = vcmp.eq.f32.partialorder %v4450, 8.507059e+37
    %v4452 = vand.u32 %v4199, 2147483648
    %v4453 = vor.u32 1.1754944e-38, %v4452
    %v4454 = vsel %vm4451, %v4453, %v4449
    %v4455 = vmul.f32 1.0, %v4454
    %v4456 = vrcp.pop %v4200
    %v4457 = vmul.f32 %v4200, %v4456
    %v4458 = vsub.f32 1.0, %v4457
    %v4459 = vmul.f32 %v4456, %v4458
    %v4460 = vadd.f32 %v4456, %v4459
    %vm4461 = vweird.f32 %v4200
    %vm4462 = vweird.f32 %v4456
    %vm4463 = vmor %vm4461, %vm4462
    %v4464 = vsel %vm4463, %v4456, %v4460
    %v4465 = vand.u32 2147483647, %v4200
    %vm4466 = vcmp.eq.f32.partialorder %v4465, 8.507059e+37
    %v4467 = vand.u32 %v4200, 2147483648
    %v4468 = vor.u32 1.1754944e-38, %v4467
    %v4469 = vsel %vm4466, %v4468, %v4464
    %v4470 = vmul.f32 1.0, %v4469
    %v4471 = vrcp.pop %v4201
    %v4472 = vmul.f32 %v4201, %v4471
    %v4473 = vsub.f32 1.0, %v4472
    %v4474 = vmul.f32 %v4471, %v4473
    %v4475 = vadd.f32 %v4471, %v4474
    %vm4476 = vweird.f32 %v4201
    %vm4477 = vweird.f32 %v4471
    %vm4478 = vmor %vm4476, %vm4477
    %v4479 = vsel %vm4478, %v4471, %v4475
    %v4480 = vand.u32 2147483647, %v4201
    %vm4481 = vcmp.eq.f32.partialorder %v4480, 8.507059e+37
    %v4482 = vand.u32 %v4201, 2147483648
    %v4483 = vor.u32 1.1754944e-38, %v4482
    %v4484 = vsel %vm4481, %v4483, %v4479
    %v4485 = vmul.f32 1.0, %v4484
    %v4486 = vrcp.pop %v4202
    %v4487 = vmul.f32 %v4202, %v4486
    %v4488 = vsub.f32 1.0, %v4487
    %v4489 = vmul.f32 %v4486, %v4488
    %v4490 = vadd.f32 %v4486, %v4489
    %vm4491 = vweird.f32 %v4202
    %vm4492 = vweird.f32 %v4486
    %vm4493 = vmor %vm4491, %vm4492
    %v4494 = vsel %vm4493, %v4486, %v4490
    %v4495 = vand.u32 2147483647, %v4202
    %vm4496 = vcmp.eq.f32.partialorder %v4495, 8.507059e+37
    %v4497 = vand.u32 %v4202, 2147483648
    %v4498 = vor.u32 1.1754944e-38, %v4497
    %v4499 = vsel %vm4496, %v4498, %v4494
    %v4500 = vmul.f32 1.0, %v4499
    %v4501 = vrcp.pop %v4203
    %v4502 = vmul.f32 %v4203, %v4501
    %v4503 = vsub.f32 1.0, %v4502
    %v4504 = vmul.f32 %v4501, %v4503
    %v4505 = vadd.f32 %v4501, %v4504
    %vm4506 = vweird.f32 %v4203
    %vm4507 = vweird.f32 %v4501
    %vm4508 = vmor %vm4506, %vm4507
    %v4509 = vsel %vm4508, %v4501, %v4505
    %v4510 = vand.u32 2147483647, %v4203
    %vm4511 = vcmp.eq.f32.partialorder %v4510, 8.507059e+37
    %v4512 = vand.u32 %v4203, 2147483648
    %v4513 = vor.u32 1.1754944e-38, %v4512
    %v4514 = vsel %vm4511, %v4513, %v4509
    %v4515 = vmul.f32 1.0, %v4514
    %v4516 = vrcp.pop %v4204
    %v4517 = vmul.f32 %v4204, %v4516
    %v4518 = vsub.f32 1.0, %v4517
    %v4519 = vmul.f32 %v4516, %v4518
    %v4520 = vadd.f32 %v4516, %v4519
    %vm4521 = vweird.f32 %v4204
    %vm4522 = vweird.f32 %v4516
    %vm4523 = vmor %vm4521, %vm4522
    %v4524 = vsel %vm4523, %v4516, %v4520
    %v4525 = vand.u32 2147483647, %v4204
    %vm4526 = vcmp.eq.f32.partialorder %v4525, 8.507059e+37
    %v4527 = vand.u32 %v4204, 2147483648
    %v4528 = vor.u32 1.1754944e-38, %v4527
    %v4529 = vsel %vm4526, %v4528, %v4524
    %v4530 = vmul.f32 1.0, %v4529
    %v4531 = vrcp.pop %v4205
    %v4532 = vmul.f32 %v4205, %v4531
    %v4533 = vsub.f32 1.0, %v4532
    %v4534 = vmul.f32 %v4531, %v4533
    %v4535 = vadd.f32 %v4531, %v4534
    %vm4536 = vweird.f32 %v4205
    %vm4537 = vweird.f32 %v4531
    %vm4538 = vmor %vm4536, %vm4537
    %v4539 = vsel %vm4538, %v4531, %v4535
    %v4540 = vand.u32 2147483647, %v4205
    %vm4541 = vcmp.eq.f32.partialorder %v4540, 8.507059e+37
    %v4542 = vand.u32 %v4205, 2147483648
    %v4543 = vor.u32 1.1754944e-38, %v4542
    %v4544 = vsel %vm4541, %v4543, %v4539
    %v4545 = vmul.f32 1.0, %v4544
    %v4546 = vrcp.pop %v4206
    %v4547 = vmul.f32 %v4206, %v4546
    %v4548 = vsub.f32 1.0, %v4547
    %v4549 = vmul.f32 %v4546, %v4548
    %v4550 = vadd.f32 %v4546, %v4549
    %vm4551 = vweird.f32 %v4206
    %vm4552 = vweird.f32 %v4546
    %vm4553 = vmor %vm4551, %vm4552
    %v4554 = vsel %vm4553, %v4546, %v4550
    %v4555 = vand.u32 2147483647, %v4206
    %vm4556 = vcmp.eq.f32.partialorder %v4555, 8.507059e+37
    %v4557 = vand.u32 %v4206, 2147483648
    %v4558 = vor.u32 1.1754944e-38, %v4557
    %v4559 = vsel %vm4556, %v4558, %v4554
    %v4560 = vmul.f32 1.0, %v4559
    %v4561 = vrcp.pop %v4207
    %v4562 = vmul.f32 %v4207, %v4561
    %v4563 = vsub.f32 1.0, %v4562
    %v4564 = vmul.f32 %v4561, %v4563
    %v4565 = vadd.f32 %v4561, %v4564
    %vm4566 = vweird.f32 %v4207
    %vm4567 = vweird.f32 %v4561
    %vm4568 = vmor %vm4566, %vm4567
    %v4569 = vsel %vm4568, %v4561, %v4565
    %v4570 = vand.u32 2147483647, %v4207
    %vm4571 = vcmp.eq.f32.partialorder %v4570, 8.507059e+37
    %v4572 = vand.u32 %v4207, 2147483648
    %v4573 = vor.u32 1.1754944e-38, %v4572
    %v4574 = vsel %vm4571, %v4573, %v4569
    %v4575 = vmul.f32 1.0, %v4574
    %v4576 = vrcp.pop %v4208
    %v4577 = vmul.f32 %v4208, %v4576
    %v4578 = vsub.f32 1.0, %v4577
    %v4579 = vmul.f32 %v4576, %v4578
    %v4580 = vadd.f32 %v4576, %v4579
    %vm4581 = vweird.f32 %v4208
    %vm4582 = vweird.f32 %v4576
    %vm4583 = vmor %vm4581, %vm4582
    %v4584 = vsel %vm4583, %v4576, %v4580
    %v4585 = vand.u32 2147483647, %v4208
    %vm4586 = vcmp.eq.f32.partialorder %v4585, 8.507059e+37
    %v4587 = vand.u32 %v4208, 2147483648
    %v4588 = vor.u32 1.1754944e-38, %v4587
    %v4589 = vsel %vm4586, %v4588, %v4584
    %v4590 = vmul.f32 1.0, %v4589
    %v4591 = vrcp.pop %v4209
    %v4592 = vmul.f32 %v4209, %v4591
    %v4593 = vsub.f32 1.0, %v4592
    %v4594 = vmul.f32 %v4591, %v4593
    %v4595 = vadd.f32 %v4591, %v4594
    %vm4596 = vweird.f32 %v4209
    %vm4597 = vweird.f32 %v4591
    %vm4598 = vmor %vm4596, %vm4597
    %v4599 = vsel %vm4598, %v4591, %v4595
    %v4600 = vand.u32 2147483647, %v4209
    %vm4601 = vcmp.eq.f32.partialorder %v4600, 8.507059e+37
    %v4602 = vand.u32 %v4209, 2147483648
    %v4603 = vor.u32 1.1754944e-38, %v4602
    %v4604 = vsel %vm4601, %v4603, %v4599
    %v4605 = vmul.f32 1.0, %v4604
    %v4606 = vrcp.pop %v4210
    %v4607 = vmul.f32 %v4210, %v4606
    %v4608 = vsub.f32 1.0, %v4607
    %v4609 = vmul.f32 %v4606, %v4608
    %v4610 = vadd.f32 %v4606, %v4609
    %vm4611 = vweird.f32 %v4210
    %vm4612 = vweird.f32 %v4606
    %vm4613 = vmor %vm4611, %vm4612
    %v4614 = vsel %vm4613, %v4606, %v4610
    %v4615 = vand.u32 2147483647, %v4210
    %vm4616 = vcmp.eq.f32.partialorder %v4615, 8.507059e+37
    %v4617 = vand.u32 %v4210, 2147483648
    %v4618 = vor.u32 1.1754944e-38, %v4617
    %v4619 = vsel %vm4616, %v4618, %v4614
    %v4620 = vmul.f32 1.0, %v4619
    %v4621 = vrcp.pop %v4211
    %v4622 = vmul.f32 %v4211, %v4621
    %v4623 = vsub.f32 1.0, %v4622
    %v4624 = vmul.f32 %v4621, %v4623
    %v4625 = vadd.f32 %v4621, %v4624
    %vm4626 = vweird.f32 %v4211
    %vm4627 = vweird.f32 %v4621
    %vm4628 = vmor %vm4626, %vm4627
    %v4629 = vsel %vm4628, %v4621, %v4625
    %v4630 = vand.u32 2147483647, %v4211
    %vm4631 = vcmp.eq.f32.partialorder %v4630, 8.507059e+37
    %v4632 = vand.u32 %v4211, 2147483648
    %v4633 = vor.u32 1.1754944e-38, %v4632
    %v4634 = vsel %vm4631, %v4633, %v4629
    %v4635 = vmul.f32 1.0, %v4634
    %v4636 = vrcp.pop %v4212
    %v4637 = vmul.f32 %v4212, %v4636
    %v4638 = vsub.f32 1.0, %v4637
    %v4639 = vmul.f32 %v4636, %v4638
    %v4640 = vadd.f32 %v4636, %v4639
    %vm4641 = vweird.f32 %v4212
    %vm4642 = vweird.f32 %v4636
    %vm4643 = vmor %vm4641, %vm4642
    %v4644 = vsel %vm4643, %v4636, %v4640
    %v4645 = vand.u32 2147483647, %v4212
    %vm4646 = vcmp.eq.f32.partialorder %v4645, 8.507059e+37
    %v4647 = vand.u32 %v4212, 2147483648
    %v4648 = vor.u32 1.1754944e-38, %v4647
    %v4649 = vsel %vm4646, %v4648, %v4644
    %v4650 = vmul.f32 1.0, %v4649
    %v4651 = vrcp.pop %v4213
    %v4652 = vmul.f32 %v4213, %v4651
    %v4653 = vsub.f32 1.0, %v4652
    %v4654 = vmul.f32 %v4651, %v4653
    %v4655 = vadd.f32 %v4651, %v4654
    %vm4656 = vweird.f32 %v4213
    %vm4657 = vweird.f32 %v4651
    %vm4658 = vmor %vm4656, %vm4657
    %v4659 = vsel %vm4658, %v4651, %v4655
    %v4660 = vand.u32 2147483647, %v4213
    %vm4661 = vcmp.eq.f32.partialorder %v4660, 8.507059e+37
    %v4662 = vand.u32 %v4213, 2147483648
    %v4663 = vor.u32 1.1754944e-38, %v4662
    %v4664 = vsel %vm4661, %v4663, %v4659
    %v4665 = vmul.f32 1.0, %v4664
    %v4666 = vrcp.pop %v4214
    %v4667 = vmul.f32 %v4214, %v4666
    %v4668 = vsub.f32 1.0, %v4667
    %v4669 = vmul.f32 %v4666, %v4668
    %v4670 = vadd.f32 %v4666, %v4669
    %vm4671 = vweird.f32 %v4214
    %vm4672 = vweird.f32 %v4666
    %vm4673 = vmor %vm4671, %vm4672
    %v4674 = vsel %vm4673, %v4666, %v4670
    %v4675 = vand.u32 2147483647, %v4214
    %vm4676 = vcmp.eq.f32.partialorder %v4675, 8.507059e+37
    %v4677 = vand.u32 %v4214, 2147483648
    %v4678 = vor.u32 1.1754944e-38, %v4677
    %v4679 = vsel %vm4676, %v4678, %v4674
    %v4680 = vmul.f32 1.0, %v4679
    %v4681 = vrcp.pop %v4215
    %v4682 = vmul.f32 %v4215, %v4681
    %v4683 = vsub.f32 1.0, %v4682
    %v4684 = vmul.f32 %v4681, %v4683
    %v4685 = vadd.f32 %v4681, %v4684
    %vm4686 = vweird.f32 %v4215
    %vm4687 = vweird.f32 %v4681
    %vm4688 = vmor %vm4686, %vm4687
    %v4689 = vsel %vm4688, %v4681, %v4685
    %v4690 = vand.u32 2147483647, %v4215
    %vm4691 = vcmp.eq.f32.partialorder %v4690, 8.507059e+37
    %v4692 = vand.u32 %v4215, 2147483648
    %v4693 = vor.u32 1.1754944e-38, %v4692
    %v4694 = vsel %vm4691, %v4693, %v4689
    %v4695 = vmul.f32 1.0, %v4694
    %4697 = vset.pattern.permute.xlu0 0
    %4698 = vperm.xlu0 %4697, %v703
    %v4699 = vpop.permute.xlu0 %4698
    %4702 = vset.pattern.permute.xlu0 0
    %4703 = vperm.xlu0 %4702, %v704
    %v4704 = vpop.permute.xlu0 %4703
    %4707 = vset.pattern.permute.xlu0 0
    %4708 = vperm.xlu0 %4707, %v705
    %v4709 = vpop.permute.xlu0 %4708
    %4712 = vset.pattern.permute.xlu0 0
    %4713 = vperm.xlu0 %4712, %v706
    %v4714 = vpop.permute.xlu0 %4713
    %4717 = vset.pattern.permute.xlu0 0
    %4718 = vperm.xlu0 %4717, %v707
    %v4719 = vpop.permute.xlu0 %4718
    %4722 = vset.pattern.permute.xlu0 0
    %4723 = vperm.xlu0 %4722, %v708
    %v4724 = vpop.permute.xlu0 %4723
    %4727 = vset.pattern.permute.xlu0 0
    %4728 = vperm.xlu0 %4727, %v709
    %v4729 = vpop.permute.xlu0 %4728
    %4732 = vset.pattern.permute.xlu0 0
    %4733 = vperm.xlu0 %4732, %v710
    %v4734 = vpop.permute.xlu0 %4733
    %4737 = vset.pattern.permute.xlu0 0
    %4738 = vperm.xlu0 %4737, %v711
    %v4739 = vpop.permute.xlu0 %4738
    %4742 = vset.pattern.permute.xlu0 0
    %4743 = vperm.xlu0 %4742, %v712
    %v4744 = vpop.permute.xlu0 %4743
    %4747 = vset.pattern.permute.xlu0 0
    %4748 = vperm.xlu0 %4747, %v713
    %v4749 = vpop.permute.xlu0 %4748
    %4752 = vset.pattern.permute.xlu0 0
    %4753 = vperm.xlu0 %4752, %v714
    %v4754 = vpop.permute.xlu0 %4753
    %4757 = vset.pattern.permute.xlu0 0
    %4758 = vperm.xlu0 %4757, %v715
    %v4759 = vpop.permute.xlu0 %4758
    %4762 = vset.pattern.permute.xlu0 0
    %4763 = vperm.xlu0 %4762, %v716
    %v4764 = vpop.permute.xlu0 %4763
    %4767 = vset.pattern.permute.xlu0 0
    %4768 = vperm.xlu0 %4767, %v717
    %v4769 = vpop.permute.xlu0 %4768
    %4772 = vset.pattern.permute.xlu0 0
    %4773 = vperm.xlu0 %4772, %v718
    %v4774 = vpop.permute.xlu0 %4773
    %4777 = vset.pattern.permute.xlu0 0
    %4778 = vperm.xlu0 %4777, %v719
    %v4779 = vpop.permute.xlu0 %4778
    %4782 = vset.pattern.permute.xlu0 0
    %4783 = vperm.xlu0 %4782, %v720
    %v4784 = vpop.permute.xlu0 %4783
    %4787 = vset.pattern.permute.xlu0 0
    %4788 = vperm.xlu0 %4787, %v721
    %v4789 = vpop.permute.xlu0 %4788
    %4792 = vset.pattern.permute.xlu0 0
    %4793 = vperm.xlu0 %4792, %v722
    %v4794 = vpop.permute.xlu0 %4793
    %4797 = vset.pattern.permute.xlu0 0
    %4798 = vperm.xlu0 %4797, %v723
    %v4799 = vpop.permute.xlu0 %4798
    %4802 = vset.pattern.permute.xlu0 0
    %4803 = vperm.xlu0 %4802, %v724
    %v4804 = vpop.permute.xlu0 %4803
    %4807 = vset.pattern.permute.xlu0 0
    %4808 = vperm.xlu0 %4807, %v725
    %v4809 = vpop.permute.xlu0 %4808
    %4812 = vset.pattern.permute.xlu0 0
    %4813 = vperm.xlu0 %4812, %v726
    %v4814 = vpop.permute.xlu0 %4813
    %4817 = vset.pattern.permute.xlu0 0
    %4818 = vperm.xlu0 %4817, %v727
    %v4819 = vpop.permute.xlu0 %4818
    %4822 = vset.pattern.permute.xlu0 0
    %4823 = vperm.xlu0 %4822, %v728
    %v4824 = vpop.permute.xlu0 %4823
    %4827 = vset.pattern.permute.xlu0 0
    %4828 = vperm.xlu0 %4827, %v729
    %v4829 = vpop.permute.xlu0 %4828
    %4832 = vset.pattern.permute.xlu0 0
    %4833 = vperm.xlu0 %4832, %v730
    %v4834 = vpop.permute.xlu0 %4833
    %4837 = vset.pattern.permute.xlu0 0
    %4838 = vperm.xlu0 %4837, %v731
    %v4839 = vpop.permute.xlu0 %4838
    %4842 = vset.pattern.permute.xlu0 0
    %4843 = vperm.xlu0 %4842, %v732
    %v4844 = vpop.permute.xlu0 %4843
    %4847 = vset.pattern.permute.xlu0 0
    %4848 = vperm.xlu0 %4847, %v733
    %v4849 = vpop.permute.xlu0 %4848
    %4852 = vset.pattern.permute.xlu0 0
    %4853 = vperm.xlu0 %4852, %v734
    %v4854 = vpop.permute.xlu0 %4853
    %4856 = vmatpush.msra.mxu0 %v4455
    %4857 = vmatpush.msra.mxu0 %v4440
    %4858 = vmatpush.msra.mxu0 %v4425
    %4859 = vmatpush.msra.mxu0 %v4410
    %4860 = vmatpush.msra.mxu0 %v4395
    %4861 = vmatpush.msra.mxu0 %v4380
    %4862 = vmatpush.msra.mxu0 %v4365
    %4863 = vmatpush.msra.mxu0 %v4350
    %4864 = vmatpush.msra.mxu0 %v4335
    %4865 = vmatpush.msra.mxu0 %v4320
    %4866 = vmatpush.msra.mxu0 %v4305
    %4867 = vmatpush.msra.mxu0 %v4290
    %4868 = vmatpush.msra.mxu0 %v4275
    %4869 = vmatpush.msra.mxu0 %v4260
    %4870 = vmatpush.msra.mxu0 %v4245
    %4871 = vmatpush.msra.mxu0 %v4230
    %4872 = vmatmul.f32.gmra.mxu0 %v281
    %v4873 = vpop.f32.mrf.mxu0
    %v4874 = vadd.f32 %v4699, %v4873
    %4875 = vmatmul.f32.gmra.mxu0 %v283
    %v4876 = vpop.f32.mrf.mxu0
    %v4877 = vadd.f32 %v4704, %v4876
    %4878 = vmatmul.f32.gmra.mxu0 %v285
    %v4879 = vpop.f32.mrf.mxu0
    %v4880 = vadd.f32 %v4709, %v4879
    %4881 = vmatmul.f32.gmra.mxu0 %v287
    %v4882 = vpop.f32.mrf.mxu0
    %v4883 = vadd.f32 %v4714, %v4882
    %4884 = vmatmul.f32.gmra.mxu0 %v289
    %v4885 = vpop.f32.mrf.mxu0
    %v4886 = vadd.f32 %v4719, %v4885
    %4887 = vmatmul.f32.gmra.mxu0 %v291
    %v4888 = vpop.f32.mrf.mxu0
    %v4889 = vadd.f32 %v4724, %v4888
    %4890 = vmatmul.f32.gmra.mxu0 %v293
    %v4891 = vpop.f32.mrf.mxu0
    %v4892 = vadd.f32 %v4729, %v4891
    %4893 = vmatmul.f32.gmra.mxu0 %v295
    %v4894 = vpop.f32.mrf.mxu0
    %v4895 = vadd.f32 %v4734, %v4894
    %4896 = vmatmul.f32.gmra.mxu0 %v297
    %v4897 = vpop.f32.mrf.mxu0
    %v4898 = vadd.f32 %v4739, %v4897
    %4899 = vmatmul.f32.gmra.mxu0 %v299
    %v4900 = vpop.f32.mrf.mxu0
    %v4901 = vadd.f32 %v4744, %v4900
    %4902 = vmatmul.f32.gmra.mxu0 %v301
    %v4903 = vpop.f32.mrf.mxu0
    %v4904 = vadd.f32 %v4749, %v4903
    %4905 = vmatmul.f32.gmra.mxu0 %v303
    %v4906 = vpop.f32.mrf.mxu0
    %v4907 = vadd.f32 %v4754, %v4906
    %4908 = vmatmul.f32.gmra.mxu0 %v305
    %v4909 = vpop.f32.mrf.mxu0
    %v4910 = vadd.f32 %v4759, %v4909
    %4911 = vmatmul.f32.gmra.mxu0 %v307
    %v4912 = vpop.f32.mrf.mxu0
    %v4913 = vadd.f32 %v4764, %v4912
    %4914 = vmatmul.f32.gmra.mxu0 %v309
    %v4915 = vpop.f32.mrf.mxu0
    %v4916 = vadd.f32 %v4769, %v4915
    %4917 = vmatmul.f32.gmra.mxu0 %v311
    %v4918 = vpop.f32.mrf.mxu0
    %v4919 = vadd.f32 %v4774, %v4918
    %4920 = vmatmul.f32.gmra.mxu0 %v313
    %v4921 = vpop.f32.mrf.mxu0
    %v4922 = vadd.f32 %v4779, %v4921
    %4923 = vmatmul.f32.gmra.mxu0 %v315
    %v4924 = vpop.f32.mrf.mxu0
    %v4925 = vadd.f32 %v4784, %v4924
    %4926 = vmatmul.f32.gmra.mxu0 %v317
    %v4927 = vpop.f32.mrf.mxu0
    %v4928 = vadd.f32 %v4789, %v4927
    %4929 = vmatmul.f32.gmra.mxu0 %v319
    %v4930 = vpop.f32.mrf.mxu0
    %v4931 = vadd.f32 %v4794, %v4930
    %4932 = vmatmul.f32.gmra.mxu0 %v321
    %v4933 = vpop.f32.mrf.mxu0
    %v4934 = vadd.f32 %v4799, %v4933
    %4935 = vmatmul.f32.gmra.mxu0 %v323
    %v4936 = vpop.f32.mrf.mxu0
    %v4937 = vadd.f32 %v4804, %v4936
    %4938 = vmatmul.f32.gmra.mxu0 %v325
    %v4939 = vpop.f32.mrf.mxu0
    %v4940 = vadd.f32 %v4809, %v4939
    %4941 = vmatmul.f32.gmra.mxu0 %v327
    %v4942 = vpop.f32.mrf.mxu0
    %v4943 = vadd.f32 %v4814, %v4942
    %4944 = vmatmul.f32.gmra.mxu0 %v329
    %v4945 = vpop.f32.mrf.mxu0
    %v4946 = vadd.f32 %v4819, %v4945
    %4947 = vmatmul.f32.gmra.mxu0 %v331
    %v4948 = vpop.f32.mrf.mxu0
    %v4949 = vadd.f32 %v4824, %v4948
    %4950 = vmatmul.f32.gmra.mxu0 %v333
    %v4951 = vpop.f32.mrf.mxu0
    %v4952 = vadd.f32 %v4829, %v4951
    %4953 = vmatmul.f32.gmra.mxu0 %v335
    %v4954 = vpop.f32.mrf.mxu0
    %v4955 = vadd.f32 %v4834, %v4954
    %4956 = vmatmul.f32.gmra.mxu0 %v337
    %v4957 = vpop.f32.mrf.mxu0
    %v4958 = vadd.f32 %v4839, %v4957
    %4959 = vmatmul.f32.gmra.mxu0 %v339
    %v4960 = vpop.f32.mrf.mxu0
    %v4961 = vadd.f32 %v4844, %v4960
    %4962 = vmatmul.f32.gmra.mxu0 %v341
    %v4963 = vpop.f32.mrf.mxu0
    %v4964 = vadd.f32 %v4849, %v4963
    %4965 = vmatmul.f32.gmra.mxu0 %v343
    %v4966 = vpop.f32.mrf.mxu0
    %v4967 = vadd.f32 %v4854, %v4966
    %4968 = vdwg.mxu0
    %4969 = vmatpush.msra.mxu0 %v4695
    %4970 = vmatpush.msra.mxu0 %v4680
    %4971 = vmatpush.msra.mxu0 %v4665
    %4972 = vmatpush.msra.mxu0 %v4650
    %4973 = vmatpush.msra.mxu0 %v4635
    %4974 = vmatpush.msra.mxu0 %v4620
    %4975 = vmatpush.msra.mxu0 %v4605
    %4976 = vmatpush.msra.mxu0 %v4590
    %4977 = vmatpush.msra.mxu0 %v4575
    %4978 = vmatpush.msra.mxu0 %v4560
    %4979 = vmatpush.msra.mxu0 %v4545
    %4980 = vmatpush.msra.mxu0 %v4530
    %4981 = vmatpush.msra.mxu0 %v4515
    %4982 = vmatpush.msra.mxu0 %v4500
    %4983 = vmatpush.msra.mxu0 %v4485
    %4984 = vmatpush.msra.mxu0 %v4470
    %4985 = vmatmul.f32.gmra.mxu0 %v282
    %v4986 = vpop.f32.mrf.mxu0
    %v4987 = vadd.f32 %v4874, %v4986
    %4988 = vmatmul.f32.gmra.mxu0 %v284
    %v4989 = vpop.f32.mrf.mxu0
    %v4990 = vadd.f32 %v4877, %v4989
    %4991 = vmatmul.f32.gmra.mxu0 %v286
    %v4992 = vpop.f32.mrf.mxu0
    %v4993 = vadd.f32 %v4880, %v4992
    %4994 = vmatmul.f32.gmra.mxu0 %v288
    %v4995 = vpop.f32.mrf.mxu0
    %v4996 = vadd.f32 %v4883, %v4995
    %4997 = vmatmul.f32.gmra.mxu0 %v290
    %v4998 = vpop.f32.mrf.mxu0
    %v4999 = vadd.f32 %v4886, %v4998
    %5000 = vmatmul.f32.gmra.mxu0 %v292
    %v5001 = vpop.f32.mrf.mxu0
    %v5002 = vadd.f32 %v4889, %v5001
    %5003 = vmatmul.f32.gmra.mxu0 %v294
    %v5004 = vpop.f32.mrf.mxu0
    %v5005 = vadd.f32 %v4892, %v5004
    %5006 = vmatmul.f32.gmra.mxu0 %v296
    %v5007 = vpop.f32.mrf.mxu0
    %v5008 = vadd.f32 %v4895, %v5007
    %5009 = vmatmul.f32.gmra.mxu0 %v298
    %v5010 = vpop.f32.mrf.mxu0
    %v5011 = vadd.f32 %v4898, %v5010
    %5012 = vmatmul.f32.gmra.mxu0 %v300
    %v5013 = vpop.f32.mrf.mxu0
    %v5014 = vadd.f32 %v4901, %v5013
    %5015 = vmatmul.f32.gmra.mxu0 %v302
    %v5016 = vpop.f32.mrf.mxu0
    %v5017 = vadd.f32 %v4904, %v5016
    %5018 = vmatmul.f32.gmra.mxu0 %v304
    %v5019 = vpop.f32.mrf.mxu0
    %v5020 = vadd.f32 %v4907, %v5019
    %5021 = vmatmul.f32.gmra.mxu0 %v306
    %v5022 = vpop.f32.mrf.mxu0
    %v5023 = vadd.f32 %v4910, %v5022
    %5024 = vmatmul.f32.gmra.mxu0 %v308
    %v5025 = vpop.f32.mrf.mxu0
    %v5026 = vadd.f32 %v4913, %v5025
    %5027 = vmatmul.f32.gmra.mxu0 %v310
    %v5028 = vpop.f32.mrf.mxu0
    %v5029 = vadd.f32 %v4916, %v5028
    %5030 = vmatmul.f32.gmra.mxu0 %v312
    %v5031 = vpop.f32.mrf.mxu0
    %v5032 = vadd.f32 %v4919, %v5031
    %5033 = vmatmul.f32.gmra.mxu0 %v314
    %v5034 = vpop.f32.mrf.mxu0
    %v5035 = vadd.f32 %v4922, %v5034
    %5036 = vmatmul.f32.gmra.mxu0 %v316
    %v5037 = vpop.f32.mrf.mxu0
    %v5038 = vadd.f32 %v4925, %v5037
    %5039 = vmatmul.f32.gmra.mxu0 %v318
    %v5040 = vpop.f32.mrf.mxu0
    %v5041 = vadd.f32 %v4928, %v5040
    %5042 = vmatmul.f32.gmra.mxu0 %v320
    %v5043 = vpop.f32.mrf.mxu0
    %v5044 = vadd.f32 %v4931, %v5043
    %5045 = vmatmul.f32.gmra.mxu0 %v322
    %v5046 = vpop.f32.mrf.mxu0
    %v5047 = vadd.f32 %v4934, %v5046
    %5048 = vmatmul.f32.gmra.mxu0 %v324
    %v5049 = vpop.f32.mrf.mxu0
    %v5050 = vadd.f32 %v4937, %v5049
    %5051 = vmatmul.f32.gmra.mxu0 %v326
    %v5052 = vpop.f32.mrf.mxu0
    %v5053 = vadd.f32 %v4940, %v5052
    %5054 = vmatmul.f32.gmra.mxu0 %v328
    %v5055 = vpop.f32.mrf.mxu0
    %v5056 = vadd.f32 %v4943, %v5055
    %5057 = vmatmul.f32.gmra.mxu0 %v330
    %v5058 = vpop.f32.mrf.mxu0
    %v5059 = vadd.f32 %v4946, %v5058
    %5060 = vmatmul.f32.gmra.mxu0 %v332
    %v5061 = vpop.f32.mrf.mxu0
    %v5062 = vadd.f32 %v4949, %v5061
    %5063 = vmatmul.f32.gmra.mxu0 %v334
    %v5064 = vpop.f32.mrf.mxu0
    %v5065 = vadd.f32 %v4952, %v5064
    %5066 = vmatmul.f32.gmra.mxu0 %v336
    %v5067 = vpop.f32.mrf.mxu0
    %v5068 = vadd.f32 %v4955, %v5067
    %5069 = vmatmul.f32.gmra.mxu0 %v338
    %v5070 = vpop.f32.mrf.mxu0
    %v5071 = vadd.f32 %v4958, %v5070
    %5072 = vmatmul.f32.gmra.mxu0 %v340
    %v5073 = vpop.f32.mrf.mxu0
    %v5074 = vadd.f32 %v4961, %v5073
    %5075 = vmatmul.f32.gmra.mxu0 %v342
    %v5076 = vpop.f32.mrf.mxu0
    %v5077 = vadd.f32 %v4964, %v5076
    %5078 = vmatmul.f32.gmra.mxu0 %v344
    %v5079 = vpop.f32.mrf.mxu0
    %v5080 = vadd.f32 %v4967, %v5079
    %5081 = vdwg.mxu0
    %v5082 = vxor.u32 %v4987, 2147483648
    %v5083 = vxor.u32 %v4990, 2147483648
    %v5084 = vxor.u32 %v4993, 2147483648
    %v5085 = vxor.u32 %v4996, 2147483648
    %v5086 = vxor.u32 %v4999, 2147483648
    %v5087 = vxor.u32 %v5002, 2147483648
    %v5088 = vxor.u32 %v5005, 2147483648
    %v5089 = vxor.u32 %v5008, 2147483648
    %v5090 = vxor.u32 %v5011, 2147483648
    %v5091 = vxor.u32 %v5014, 2147483648
    %v5092 = vxor.u32 %v5017, 2147483648
    %v5093 = vxor.u32 %v5020, 2147483648
    %v5094 = vxor.u32 %v5023, 2147483648
    %v5095 = vxor.u32 %v5026, 2147483648
    %v5096 = vxor.u32 %v5029, 2147483648
    %v5097 = vxor.u32 %v5032, 2147483648
    %v5098 = vxor.u32 %v5035, 2147483648
    %v5099 = vxor.u32 %v5038, 2147483648
    %v5100 = vxor.u32 %v5041, 2147483648
    %v5101 = vxor.u32 %v5044, 2147483648
    %v5102 = vxor.u32 %v5047, 2147483648
    %v5103 = vxor.u32 %v5050, 2147483648
    %v5104 = vxor.u32 %v5053, 2147483648
    %v5105 = vxor.u32 %v5056, 2147483648
    %v5106 = vxor.u32 %v5059, 2147483648
    %v5107 = vxor.u32 %v5062, 2147483648
    %v5108 = vxor.u32 %v5065, 2147483648
    %v5109 = vxor.u32 %v5068, 2147483648
    %v5110 = vxor.u32 %v5071, 2147483648
    %v5111 = vxor.u32 %v5074, 2147483648
    %v5112 = vxor.u32 %v5077, 2147483648
    %v5113 = vxor.u32 %v5080, 2147483648
    %v5114 = vmul.f32 %v5082, 1.442695
    %v5115 = vpow.pop %v5114
    %v5116 = vmul.f32 %v5083, 1.442695
    %v5117 = vpow.pop %v5116
    %v5118 = vmul.f32 %v5084, 1.442695
    %v5119 = vpow.pop %v5118
    %v5120 = vmul.f32 %v5085, 1.442695
    %v5121 = vpow.pop %v5120
    %v5122 = vmul.f32 %v5086, 1.442695
    %v5123 = vpow.pop %v5122
    %v5124 = vmul.f32 %v5087, 1.442695
    %v5125 = vpow.pop %v5124
    %v5126 = vmul.f32 %v5088, 1.442695
    %v5127 = vpow.pop %v5126
    %v5128 = vmul.f32 %v5089, 1.442695
    %v5129 = vpow.pop %v5128
    %v5130 = vmul.f32 %v5090, 1.442695
    %v5131 = vpow.pop %v5130
    %v5132 = vmul.f32 %v5091, 1.442695
    %v5133 = vpow.pop %v5132
    %v5134 = vmul.f32 %v5092, 1.442695
    %v5135 = vpow.pop %v5134
    %v5136 = vmul.f32 %v5093, 1.442695
    %v5137 = vpow.pop %v5136
    %v5138 = vmul.f32 %v5094, 1.442695
    %v5139 = vpow.pop %v5138
    %v5140 = vmul.f32 %v5095, 1.442695
    %v5141 = vpow.pop %v5140
    %v5142 = vmul.f32 %v5096, 1.442695
    %v5143 = vpow.pop %v5142
    %v5144 = vmul.f32 %v5097, 1.442695
    %v5145 = vpow.pop %v5144
    %v5146 = vmul.f32 %v5098, 1.442695
    %v5147 = vpow.pop %v5146
    %v5148 = vmul.f32 %v5099, 1.442695
    %v5149 = vpow.pop %v5148
    %v5150 = vmul.f32 %v5100, 1.442695
    %v5151 = vpow.pop %v5150
    %v5152 = vmul.f32 %v5101, 1.442695
    %v5153 = vpow.pop %v5152
    %v5154 = vmul.f32 %v5102, 1.442695
    %v5155 = vpow.pop %v5154
    %v5156 = vmul.f32 %v5103, 1.442695
    %v5157 = vpow.pop %v5156
    %v5158 = vmul.f32 %v5104, 1.442695
    %v5159 = vpow.pop %v5158
    %v5160 = vmul.f32 %v5105, 1.442695
    %v5161 = vpow.pop %v5160
    %v5162 = vmul.f32 %v5106, 1.442695
    %v5163 = vpow.pop %v5162
    %v5164 = vmul.f32 %v5107, 1.442695
    %v5165 = vpow.pop %v5164
    %v5166 = vmul.f32 %v5108, 1.442695
    %v5167 = vpow.pop %v5166
    %v5168 = vmul.f32 %v5109, 1.442695
    %v5169 = vpow.pop %v5168
    %v5170 = vmul.f32 %v5110, 1.442695
    %v5171 = vpow.pop %v5170
    %v5172 = vmul.f32 %v5111, 1.442695
    %v5173 = vpow.pop %v5172
    %v5174 = vmul.f32 %v5112, 1.442695
    %v5175 = vpow.pop %v5174
    %v5176 = vmul.f32 %v5113, 1.442695
    %v5177 = vpow.pop %v5176
    %v5178 = vadd.f32 %v5115, 1.0
    %v5179 = vadd.f32 %v5117, 1.0
    %v5180 = vadd.f32 %v5119, 1.0
    %v5181 = vadd.f32 %v5121, 1.0
    %v5182 = vadd.f32 %v5123, 1.0
    %v5183 = vadd.f32 %v5125, 1.0
    %v5184 = vadd.f32 %v5127, 1.0
    %v5185 = vadd.f32 %v5129, 1.0
    %v5186 = vadd.f32 %v5131, 1.0
    %v5187 = vadd.f32 %v5133, 1.0
    %v5188 = vadd.f32 %v5135, 1.0
    %v5189 = vadd.f32 %v5137, 1.0
    %v5190 = vadd.f32 %v5139, 1.0
    %v5191 = vadd.f32 %v5141, 1.0
    %v5192 = vadd.f32 %v5143, 1.0
    %v5193 = vadd.f32 %v5145, 1.0
    %v5194 = vadd.f32 %v5147, 1.0
    %v5195 = vadd.f32 %v5149, 1.0
    %v5196 = vadd.f32 %v5151, 1.0
    %v5197 = vadd.f32 %v5153, 1.0
    %v5198 = vadd.f32 %v5155, 1.0
    %v5199 = vadd.f32 %v5157, 1.0
    %v5200 = vadd.f32 %v5159, 1.0
    %v5201 = vadd.f32 %v5161, 1.0
    %v5202 = vadd.f32 %v5163, 1.0
    %v5203 = vadd.f32 %v5165, 1.0
    %v5204 = vadd.f32 %v5167, 1.0
    %v5205 = vadd.f32 %v5169, 1.0
    %v5206 = vadd.f32 %v5171, 1.0
    %v5207 = vadd.f32 %v5173, 1.0
    %v5208 = vadd.f32 %v5175, 1.0
    %v5209 = vadd.f32 %v5177, 1.0
    %v5210 = vrcp.pop %v5178
    %v5211 = vmul.f32 %v5178, %v5210
    %v5212 = vsub.f32 1.0, %v5211
    %v5213 = vmul.f32 %v5210, %v5212
    %v5214 = vadd.f32 %v5210, %v5213
    %vm5215 = vweird.f32 %v5178
    %vm5216 = vweird.f32 %v5210
    %vm5217 = vmor %vm5215, %vm5216
    %v5218 = vsel %vm5217, %v5210, %v5214
    %v5219 = vand.u32 2147483647, %v5178
    %vm5220 = vcmp.eq.f32.partialorder %v5219, 8.507059e+37
    %v5221 = vand.u32 %v5178, 2147483648
    %v5222 = vor.u32 1.1754944e-38, %v5221
    %v5223 = vsel %vm5220, %v5222, %v5218
    %v5224 = vmul.f32 1.0, %v5223
    %v5225 = vrcp.pop %v5179
    %v5226 = vmul.f32 %v5179, %v5225
    %v5227 = vsub.f32 1.0, %v5226
    %v5228 = vmul.f32 %v5225, %v5227
    %v5229 = vadd.f32 %v5225, %v5228
    %vm5230 = vweird.f32 %v5179
    %vm5231 = vweird.f32 %v5225
    %vm5232 = vmor %vm5230, %vm5231
    %v5233 = vsel %vm5232, %v5225, %v5229
    %v5234 = vand.u32 2147483647, %v5179
    %vm5235 = vcmp.eq.f32.partialorder %v5234, 8.507059e+37
    %v5236 = vand.u32 %v5179, 2147483648
    %v5237 = vor.u32 1.1754944e-38, %v5236
    %v5238 = vsel %vm5235, %v5237, %v5233
    %v5239 = vmul.f32 1.0, %v5238
    %v5240 = vrcp.pop %v5180
    %v5241 = vmul.f32 %v5180, %v5240
    %v5242 = vsub.f32 1.0, %v5241
    %v5243 = vmul.f32 %v5240, %v5242
    %v5244 = vadd.f32 %v5240, %v5243
    %vm5245 = vweird.f32 %v5180
    %vm5246 = vweird.f32 %v5240
    %vm5247 = vmor %vm5245, %vm5246
    %v5248 = vsel %vm5247, %v5240, %v5244
    %v5249 = vand.u32 2147483647, %v5180
    %vm5250 = vcmp.eq.f32.partialorder %v5249, 8.507059e+37
    %v5251 = vand.u32 %v5180, 2147483648
    %v5252 = vor.u32 1.1754944e-38, %v5251
    %v5253 = vsel %vm5250, %v5252, %v5248
    %v5254 = vmul.f32 1.0, %v5253
    %v5255 = vrcp.pop %v5181
    %v5256 = vmul.f32 %v5181, %v5255
    %v5257 = vsub.f32 1.0, %v5256
    %v5258 = vmul.f32 %v5255, %v5257
    %v5259 = vadd.f32 %v5255, %v5258
    %vm5260 = vweird.f32 %v5181
    %vm5261 = vweird.f32 %v5255
    %vm5262 = vmor %vm5260, %vm5261
    %v5263 = vsel %vm5262, %v5255, %v5259
    %v5264 = vand.u32 2147483647, %v5181
    %vm5265 = vcmp.eq.f32.partialorder %v5264, 8.507059e+37
    %v5266 = vand.u32 %v5181, 2147483648
    %v5267 = vor.u32 1.1754944e-38, %v5266
    %v5268 = vsel %vm5265, %v5267, %v5263
    %v5269 = vmul.f32 1.0, %v5268
    %v5270 = vrcp.pop %v5182
    %v5271 = vmul.f32 %v5182, %v5270
    %v5272 = vsub.f32 1.0, %v5271
    %v5273 = vmul.f32 %v5270, %v5272
    %v5274 = vadd.f32 %v5270, %v5273
    %vm5275 = vweird.f32 %v5182
    %vm5276 = vweird.f32 %v5270
    %vm5277 = vmor %vm5275, %vm5276
    %v5278 = vsel %vm5277, %v5270, %v5274
    %v5279 = vand.u32 2147483647, %v5182
    %vm5280 = vcmp.eq.f32.partialorder %v5279, 8.507059e+37
    %v5281 = vand.u32 %v5182, 2147483648
    %v5282 = vor.u32 1.1754944e-38, %v5281
    %v5283 = vsel %vm5280, %v5282, %v5278
    %v5284 = vmul.f32 1.0, %v5283
    %v5285 = vrcp.pop %v5183
    %v5286 = vmul.f32 %v5183, %v5285
    %v5287 = vsub.f32 1.0, %v5286
    %v5288 = vmul.f32 %v5285, %v5287
    %v5289 = vadd.f32 %v5285, %v5288
    %vm5290 = vweird.f32 %v5183
    %vm5291 = vweird.f32 %v5285
    %vm5292 = vmor %vm5290, %vm5291
    %v5293 = vsel %vm5292, %v5285, %v5289
    %v5294 = vand.u32 2147483647, %v5183
    %vm5295 = vcmp.eq.f32.partialorder %v5294, 8.507059e+37
    %v5296 = vand.u32 %v5183, 2147483648
    %v5297 = vor.u32 1.1754944e-38, %v5296
    %v5298 = vsel %vm5295, %v5297, %v5293
    %v5299 = vmul.f32 1.0, %v5298
    %v5300 = vrcp.pop %v5184
    %v5301 = vmul.f32 %v5184, %v5300
    %v5302 = vsub.f32 1.0, %v5301
    %v5303 = vmul.f32 %v5300, %v5302
    %v5304 = vadd.f32 %v5300, %v5303
    %vm5305 = vweird.f32 %v5184
    %vm5306 = vweird.f32 %v5300
    %vm5307 = vmor %vm5305, %vm5306
    %v5308 = vsel %vm5307, %v5300, %v5304
    %v5309 = vand.u32 2147483647, %v5184
    %vm5310 = vcmp.eq.f32.partialorder %v5309, 8.507059e+37
    %v5311 = vand.u32 %v5184, 2147483648
    %v5312 = vor.u32 1.1754944e-38, %v5311
    %v5313 = vsel %vm5310, %v5312, %v5308
    %v5314 = vmul.f32 1.0, %v5313
    %v5315 = vrcp.pop %v5185
    %v5316 = vmul.f32 %v5185, %v5315
    %v5317 = vsub.f32 1.0, %v5316
    %v5318 = vmul.f32 %v5315, %v5317
    %v5319 = vadd.f32 %v5315, %v5318
    %vm5320 = vweird.f32 %v5185
    %vm5321 = vweird.f32 %v5315
    %vm5322 = vmor %vm5320, %vm5321
    %v5323 = vsel %vm5322, %v5315, %v5319
    %v5324 = vand.u32 2147483647, %v5185
    %vm5325 = vcmp.eq.f32.partialorder %v5324, 8.507059e+37
    %v5326 = vand.u32 %v5185, 2147483648
    %v5327 = vor.u32 1.1754944e-38, %v5326
    %v5328 = vsel %vm5325, %v5327, %v5323
    %v5329 = vmul.f32 1.0, %v5328
    %v5330 = vrcp.pop %v5186
    %v5331 = vmul.f32 %v5186, %v5330
    %v5332 = vsub.f32 1.0, %v5331
    %v5333 = vmul.f32 %v5330, %v5332
    %v5334 = vadd.f32 %v5330, %v5333
    %vm5335 = vweird.f32 %v5186
    %vm5336 = vweird.f32 %v5330
    %vm5337 = vmor %vm5335, %vm5336
    %v5338 = vsel %vm5337, %v5330, %v5334
    %v5339 = vand.u32 2147483647, %v5186
    %vm5340 = vcmp.eq.f32.partialorder %v5339, 8.507059e+37
    %v5341 = vand.u32 %v5186, 2147483648
    %v5342 = vor.u32 1.1754944e-38, %v5341
    %v5343 = vsel %vm5340, %v5342, %v5338
    %v5344 = vmul.f32 1.0, %v5343
    %v5345 = vrcp.pop %v5187
    %v5346 = vmul.f32 %v5187, %v5345
    %v5347 = vsub.f32 1.0, %v5346
    %v5348 = vmul.f32 %v5345, %v5347
    %v5349 = vadd.f32 %v5345, %v5348
    %vm5350 = vweird.f32 %v5187
    %vm5351 = vweird.f32 %v5345
    %vm5352 = vmor %vm5350, %vm5351
    %v5353 = vsel %vm5352, %v5345, %v5349
    %v5354 = vand.u32 2147483647, %v5187
    %vm5355 = vcmp.eq.f32.partialorder %v5354, 8.507059e+37
    %v5356 = vand.u32 %v5187, 2147483648
    %v5357 = vor.u32 1.1754944e-38, %v5356
    %v5358 = vsel %vm5355, %v5357, %v5353
    %v5359 = vmul.f32 1.0, %v5358
    %v5360 = vrcp.pop %v5188
    %v5361 = vmul.f32 %v5188, %v5360
    %v5362 = vsub.f32 1.0, %v5361
    %v5363 = vmul.f32 %v5360, %v5362
    %v5364 = vadd.f32 %v5360, %v5363
    %vm5365 = vweird.f32 %v5188
    %vm5366 = vweird.f32 %v5360
    %vm5367 = vmor %vm5365, %vm5366
    %v5368 = vsel %vm5367, %v5360, %v5364
    %v5369 = vand.u32 2147483647, %v5188
    %vm5370 = vcmp.eq.f32.partialorder %v5369, 8.507059e+37
    %v5371 = vand.u32 %v5188, 2147483648
    %v5372 = vor.u32 1.1754944e-38, %v5371
    %v5373 = vsel %vm5370, %v5372, %v5368
    %v5374 = vmul.f32 1.0, %v5373
    %v5375 = vrcp.pop %v5189
    %v5376 = vmul.f32 %v5189, %v5375
    %v5377 = vsub.f32 1.0, %v5376
    %v5378 = vmul.f32 %v5375, %v5377
    %v5379 = vadd.f32 %v5375, %v5378
    %vm5380 = vweird.f32 %v5189
    %vm5381 = vweird.f32 %v5375
    %vm5382 = vmor %vm5380, %vm5381
    %v5383 = vsel %vm5382, %v5375, %v5379
    %v5384 = vand.u32 2147483647, %v5189
    %vm5385 = vcmp.eq.f32.partialorder %v5384, 8.507059e+37
    %v5386 = vand.u32 %v5189, 2147483648
    %v5387 = vor.u32 1.1754944e-38, %v5386
    %v5388 = vsel %vm5385, %v5387, %v5383
    %v5389 = vmul.f32 1.0, %v5388
    %v5390 = vrcp.pop %v5190
    %v5391 = vmul.f32 %v5190, %v5390
    %v5392 = vsub.f32 1.0, %v5391
    %v5393 = vmul.f32 %v5390, %v5392
    %v5394 = vadd.f32 %v5390, %v5393
    %vm5395 = vweird.f32 %v5190
    %vm5396 = vweird.f32 %v5390
    %vm5397 = vmor %vm5395, %vm5396
    %v5398 = vsel %vm5397, %v5390, %v5394
    %v5399 = vand.u32 2147483647, %v5190
    %vm5400 = vcmp.eq.f32.partialorder %v5399, 8.507059e+37
    %v5401 = vand.u32 %v5190, 2147483648
    %v5402 = vor.u32 1.1754944e-38, %v5401
    %v5403 = vsel %vm5400, %v5402, %v5398
    %v5404 = vmul.f32 1.0, %v5403
    %v5405 = vrcp.pop %v5191
    %v5406 = vmul.f32 %v5191, %v5405
    %v5407 = vsub.f32 1.0, %v5406
    %v5408 = vmul.f32 %v5405, %v5407
    %v5409 = vadd.f32 %v5405, %v5408
    %vm5410 = vweird.f32 %v5191
    %vm5411 = vweird.f32 %v5405
    %vm5412 = vmor %vm5410, %vm5411
    %v5413 = vsel %vm5412, %v5405, %v5409
    %v5414 = vand.u32 2147483647, %v5191
    %vm5415 = vcmp.eq.f32.partialorder %v5414, 8.507059e+37
    %v5416 = vand.u32 %v5191, 2147483648
    %v5417 = vor.u32 1.1754944e-38, %v5416
    %v5418 = vsel %vm5415, %v5417, %v5413
    %v5419 = vmul.f32 1.0, %v5418
    %v5420 = vrcp.pop %v5192
    %v5421 = vmul.f32 %v5192, %v5420
    %v5422 = vsub.f32 1.0, %v5421
    %v5423 = vmul.f32 %v5420, %v5422
    %v5424 = vadd.f32 %v5420, %v5423
    %vm5425 = vweird.f32 %v5192
    %vm5426 = vweird.f32 %v5420
    %vm5427 = vmor %vm5425, %vm5426
    %v5428 = vsel %vm5427, %v5420, %v5424
    %v5429 = vand.u32 2147483647, %v5192
    %vm5430 = vcmp.eq.f32.partialorder %v5429, 8.507059e+37
    %v5431 = vand.u32 %v5192, 2147483648
    %v5432 = vor.u32 1.1754944e-38, %v5431
    %v5433 = vsel %vm5430, %v5432, %v5428
    %v5434 = vmul.f32 1.0, %v5433
    %v5435 = vrcp.pop %v5193
    %v5436 = vmul.f32 %v5193, %v5435
    %v5437 = vsub.f32 1.0, %v5436
    %v5438 = vmul.f32 %v5435, %v5437
    %v5439 = vadd.f32 %v5435, %v5438
    %vm5440 = vweird.f32 %v5193
    %vm5441 = vweird.f32 %v5435
    %vm5442 = vmor %vm5440, %vm5441
    %v5443 = vsel %vm5442, %v5435, %v5439
    %v5444 = vand.u32 2147483647, %v5193
    %vm5445 = vcmp.eq.f32.partialorder %v5444, 8.507059e+37
    %v5446 = vand.u32 %v5193, 2147483648
    %v5447 = vor.u32 1.1754944e-38, %v5446
    %v5448 = vsel %vm5445, %v5447, %v5443
    %v5449 = vmul.f32 1.0, %v5448
    %v5450 = vrcp.pop %v5194
    %v5451 = vmul.f32 %v5194, %v5450
    %v5452 = vsub.f32 1.0, %v5451
    %v5453 = vmul.f32 %v5450, %v5452
    %v5454 = vadd.f32 %v5450, %v5453
    %vm5455 = vweird.f32 %v5194
    %vm5456 = vweird.f32 %v5450
    %vm5457 = vmor %vm5455, %vm5456
    %v5458 = vsel %vm5457, %v5450, %v5454
    %v5459 = vand.u32 2147483647, %v5194
    %vm5460 = vcmp.eq.f32.partialorder %v5459, 8.507059e+37
    %v5461 = vand.u32 %v5194, 2147483648
    %v5462 = vor.u32 1.1754944e-38, %v5461
    %v5463 = vsel %vm5460, %v5462, %v5458
    %v5464 = vmul.f32 1.0, %v5463
    %v5465 = vrcp.pop %v5195
    %v5466 = vmul.f32 %v5195, %v5465
    %v5467 = vsub.f32 1.0, %v5466
    %v5468 = vmul.f32 %v5465, %v5467
    %v5469 = vadd.f32 %v5465, %v5468
    %vm5470 = vweird.f32 %v5195
    %vm5471 = vweird.f32 %v5465
    %vm5472 = vmor %vm5470, %vm5471
    %v5473 = vsel %vm5472, %v5465, %v5469
    %v5474 = vand.u32 2147483647, %v5195
    %vm5475 = vcmp.eq.f32.partialorder %v5474, 8.507059e+37
    %v5476 = vand.u32 %v5195, 2147483648
    %v5477 = vor.u32 1.1754944e-38, %v5476
    %v5478 = vsel %vm5475, %v5477, %v5473
    %v5479 = vmul.f32 1.0, %v5478
    %v5480 = vrcp.pop %v5196
    %v5481 = vmul.f32 %v5196, %v5480
    %v5482 = vsub.f32 1.0, %v5481
    %v5483 = vmul.f32 %v5480, %v5482
    %v5484 = vadd.f32 %v5480, %v5483
    %vm5485 = vweird.f32 %v5196
    %vm5486 = vweird.f32 %v5480
    %vm5487 = vmor %vm5485, %vm5486
    %v5488 = vsel %vm5487, %v5480, %v5484
    %v5489 = vand.u32 2147483647, %v5196
    %vm5490 = vcmp.eq.f32.partialorder %v5489, 8.507059e+37
    %v5491 = vand.u32 %v5196, 2147483648
    %v5492 = vor.u32 1.1754944e-38, %v5491
    %v5493 = vsel %vm5490, %v5492, %v5488
    %v5494 = vmul.f32 1.0, %v5493
    %v5495 = vrcp.pop %v5197
    %v5496 = vmul.f32 %v5197, %v5495
    %v5497 = vsub.f32 1.0, %v5496
    %v5498 = vmul.f32 %v5495, %v5497
    %v5499 = vadd.f32 %v5495, %v5498
    %vm5500 = vweird.f32 %v5197
    %vm5501 = vweird.f32 %v5495
    %vm5502 = vmor %vm5500, %vm5501
    %v5503 = vsel %vm5502, %v5495, %v5499
    %v5504 = vand.u32 2147483647, %v5197
    %vm5505 = vcmp.eq.f32.partialorder %v5504, 8.507059e+37
    %v5506 = vand.u32 %v5197, 2147483648
    %v5507 = vor.u32 1.1754944e-38, %v5506
    %v5508 = vsel %vm5505, %v5507, %v5503
    %v5509 = vmul.f32 1.0, %v5508
    %v5510 = vrcp.pop %v5198
    %v5511 = vmul.f32 %v5198, %v5510
    %v5512 = vsub.f32 1.0, %v5511
    %v5513 = vmul.f32 %v5510, %v5512
    %v5514 = vadd.f32 %v5510, %v5513
    %vm5515 = vweird.f32 %v5198
    %vm5516 = vweird.f32 %v5510
    %vm5517 = vmor %vm5515, %vm5516
    %v5518 = vsel %vm5517, %v5510, %v5514
    %v5519 = vand.u32 2147483647, %v5198
    %vm5520 = vcmp.eq.f32.partialorder %v5519, 8.507059e+37
    %v5521 = vand.u32 %v5198, 2147483648
    %v5522 = vor.u32 1.1754944e-38, %v5521
    %v5523 = vsel %vm5520, %v5522, %v5518
    %v5524 = vmul.f32 1.0, %v5523
    %v5525 = vrcp.pop %v5199
    %v5526 = vmul.f32 %v5199, %v5525
    %v5527 = vsub.f32 1.0, %v5526
    %v5528 = vmul.f32 %v5525, %v5527
    %v5529 = vadd.f32 %v5525, %v5528
    %vm5530 = vweird.f32 %v5199
    %vm5531 = vweird.f32 %v5525
    %vm5532 = vmor %vm5530, %vm5531
    %v5533 = vsel %vm5532, %v5525, %v5529
    %v5534 = vand.u32 2147483647, %v5199
    %vm5535 = vcmp.eq.f32.partialorder %v5534, 8.507059e+37
    %v5536 = vand.u32 %v5199, 2147483648
    %v5537 = vor.u32 1.1754944e-38, %v5536
    %v5538 = vsel %vm5535, %v5537, %v5533
    %v5539 = vmul.f32 1.0, %v5538
    %v5540 = vrcp.pop %v5200
    %v5541 = vmul.f32 %v5200, %v5540
    %v5542 = vsub.f32 1.0, %v5541
    %v5543 = vmul.f32 %v5540, %v5542
    %v5544 = vadd.f32 %v5540, %v5543
    %vm5545 = vweird.f32 %v5200
    %vm5546 = vweird.f32 %v5540
    %vm5547 = vmor %vm5545, %vm5546
    %v5548 = vsel %vm5547, %v5540, %v5544
    %v5549 = vand.u32 2147483647, %v5200
    %vm5550 = vcmp.eq.f32.partialorder %v5549, 8.507059e+37
    %v5551 = vand.u32 %v5200, 2147483648
    %v5552 = vor.u32 1.1754944e-38, %v5551
    %v5553 = vsel %vm5550, %v5552, %v5548
    %v5554 = vmul.f32 1.0, %v5553
    %v5555 = vrcp.pop %v5201
    %v5556 = vmul.f32 %v5201, %v5555
    %v5557 = vsub.f32 1.0, %v5556
    %v5558 = vmul.f32 %v5555, %v5557
    %v5559 = vadd.f32 %v5555, %v5558
    %vm5560 = vweird.f32 %v5201
    %vm5561 = vweird.f32 %v5555
    %vm5562 = vmor %vm5560, %vm5561
    %v5563 = vsel %vm5562, %v5555, %v5559
    %v5564 = vand.u32 2147483647, %v5201
    %vm5565 = vcmp.eq.f32.partialorder %v5564, 8.507059e+37
    %v5566 = vand.u32 %v5201, 2147483648
    %v5567 = vor.u32 1.1754944e-38, %v5566
    %v5568 = vsel %vm5565, %v5567, %v5563
    %v5569 = vmul.f32 1.0, %v5568
    %v5570 = vrcp.pop %v5202
    %v5571 = vmul.f32 %v5202, %v5570
    %v5572 = vsub.f32 1.0, %v5571
    %v5573 = vmul.f32 %v5570, %v5572
    %v5574 = vadd.f32 %v5570, %v5573
    %vm5575 = vweird.f32 %v5202
    %vm5576 = vweird.f32 %v5570
    %vm5577 = vmor %vm5575, %vm5576
    %v5578 = vsel %vm5577, %v5570, %v5574
    %v5579 = vand.u32 2147483647, %v5202
    %vm5580 = vcmp.eq.f32.partialorder %v5579, 8.507059e+37
    %v5581 = vand.u32 %v5202, 2147483648
    %v5582 = vor.u32 1.1754944e-38, %v5581
    %v5583 = vsel %vm5580, %v5582, %v5578
    %v5584 = vmul.f32 1.0, %v5583
    %v5585 = vrcp.pop %v5203
    %v5586 = vmul.f32 %v5203, %v5585
    %v5587 = vsub.f32 1.0, %v5586
    %v5588 = vmul.f32 %v5585, %v5587
    %v5589 = vadd.f32 %v5585, %v5588
    %vm5590 = vweird.f32 %v5203
    %vm5591 = vweird.f32 %v5585
    %vm5592 = vmor %vm5590, %vm5591
    %v5593 = vsel %vm5592, %v5585, %v5589
    %v5594 = vand.u32 2147483647, %v5203
    %vm5595 = vcmp.eq.f32.partialorder %v5594, 8.507059e+37
    %v5596 = vand.u32 %v5203, 2147483648
    %v5597 = vor.u32 1.1754944e-38, %v5596
    %v5598 = vsel %vm5595, %v5597, %v5593
    %v5599 = vmul.f32 1.0, %v5598
    %v5600 = vrcp.pop %v5204
    %v5601 = vmul.f32 %v5204, %v5600
    %v5602 = vsub.f32 1.0, %v5601
    %v5603 = vmul.f32 %v5600, %v5602
    %v5604 = vadd.f32 %v5600, %v5603
    %vm5605 = vweird.f32 %v5204
    %vm5606 = vweird.f32 %v5600
    %vm5607 = vmor %vm5605, %vm5606
    %v5608 = vsel %vm5607, %v5600, %v5604
    %v5609 = vand.u32 2147483647, %v5204
    %vm5610 = vcmp.eq.f32.partialorder %v5609, 8.507059e+37
    %v5611 = vand.u32 %v5204, 2147483648
    %v5612 = vor.u32 1.1754944e-38, %v5611
    %v5613 = vsel %vm5610, %v5612, %v5608
    %v5614 = vmul.f32 1.0, %v5613
    %v5615 = vrcp.pop %v5205
    %v5616 = vmul.f32 %v5205, %v5615
    %v5617 = vsub.f32 1.0, %v5616
    %v5618 = vmul.f32 %v5615, %v5617
    %v5619 = vadd.f32 %v5615, %v5618
    %vm5620 = vweird.f32 %v5205
    %vm5621 = vweird.f32 %v5615
    %vm5622 = vmor %vm5620, %vm5621
    %v5623 = vsel %vm5622, %v5615, %v5619
    %v5624 = vand.u32 2147483647, %v5205
    %vm5625 = vcmp.eq.f32.partialorder %v5624, 8.507059e+37
    %v5626 = vand.u32 %v5205, 2147483648
    %v5627 = vor.u32 1.1754944e-38, %v5626
    %v5628 = vsel %vm5625, %v5627, %v5623
    %v5629 = vmul.f32 1.0, %v5628
    %v5630 = vrcp.pop %v5206
    %v5631 = vmul.f32 %v5206, %v5630
    %v5632 = vsub.f32 1.0, %v5631
    %v5633 = vmul.f32 %v5630, %v5632
    %v5634 = vadd.f32 %v5630, %v5633
    %vm5635 = vweird.f32 %v5206
    %vm5636 = vweird.f32 %v5630
    %vm5637 = vmor %vm5635, %vm5636
    %v5638 = vsel %vm5637, %v5630, %v5634
    %v5639 = vand.u32 2147483647, %v5206
    %vm5640 = vcmp.eq.f32.partialorder %v5639, 8.507059e+37
    %v5641 = vand.u32 %v5206, 2147483648
    %v5642 = vor.u32 1.1754944e-38, %v5641
    %v5643 = vsel %vm5640, %v5642, %v5638
    %v5644 = vmul.f32 1.0, %v5643
    %v5645 = vrcp.pop %v5207
    %v5646 = vmul.f32 %v5207, %v5645
    %v5647 = vsub.f32 1.0, %v5646
    %v5648 = vmul.f32 %v5645, %v5647
    %v5649 = vadd.f32 %v5645, %v5648
    %vm5650 = vweird.f32 %v5207
    %vm5651 = vweird.f32 %v5645
    %vm5652 = vmor %vm5650, %vm5651
    %v5653 = vsel %vm5652, %v5645, %v5649
    %v5654 = vand.u32 2147483647, %v5207
    %vm5655 = vcmp.eq.f32.partialorder %v5654, 8.507059e+37
    %v5656 = vand.u32 %v5207, 2147483648
    %v5657 = vor.u32 1.1754944e-38, %v5656
    %v5658 = vsel %vm5655, %v5657, %v5653
    %v5659 = vmul.f32 1.0, %v5658
    %v5660 = vrcp.pop %v5208
    %v5661 = vmul.f32 %v5208, %v5660
    %v5662 = vsub.f32 1.0, %v5661
    %v5663 = vmul.f32 %v5660, %v5662
    %v5664 = vadd.f32 %v5660, %v5663
    %vm5665 = vweird.f32 %v5208
    %vm5666 = vweird.f32 %v5660
    %vm5667 = vmor %vm5665, %vm5666
    %v5668 = vsel %vm5667, %v5660, %v5664
    %v5669 = vand.u32 2147483647, %v5208
    %vm5670 = vcmp.eq.f32.partialorder %v5669, 8.507059e+37
    %v5671 = vand.u32 %v5208, 2147483648
    %v5672 = vor.u32 1.1754944e-38, %v5671
    %v5673 = vsel %vm5670, %v5672, %v5668
    %v5674 = vmul.f32 1.0, %v5673
    %v5675 = vrcp.pop %v5209
    %v5676 = vmul.f32 %v5209, %v5675
    %v5677 = vsub.f32 1.0, %v5676
    %v5678 = vmul.f32 %v5675, %v5677
    %v5679 = vadd.f32 %v5675, %v5678
    %vm5680 = vweird.f32 %v5209
    %vm5681 = vweird.f32 %v5675
    %vm5682 = vmor %vm5680, %vm5681
    %v5683 = vsel %vm5682, %v5675, %v5679
    %v5684 = vand.u32 2147483647, %v5209
    %vm5685 = vcmp.eq.f32.partialorder %v5684, 8.507059e+37
    %v5686 = vand.u32 %v5209, 2147483648
    %v5687 = vor.u32 1.1754944e-38, %v5686
    %v5688 = vsel %vm5685, %v5687, %v5683
    %v5689 = vmul.f32 1.0, %v5688
    %5691 = vset.pattern.permute.xlu0 0
    %5692 = vperm.xlu0 %5691, %v810
    %v5693 = vpop.permute.xlu0 %5692
    %5696 = vset.pattern.permute.xlu0 0
    %5697 = vperm.xlu0 %5696, %v811
    %v5698 = vpop.permute.xlu0 %5697
    %5701 = vset.pattern.permute.xlu0 0
    %5702 = vperm.xlu0 %5701, %v812
    %v5703 = vpop.permute.xlu0 %5702
    %5706 = vset.pattern.permute.xlu0 0
    %5707 = vperm.xlu0 %5706, %v813
    %v5708 = vpop.permute.xlu0 %5707
    %5711 = vset.pattern.permute.xlu0 0
    %5712 = vperm.xlu0 %5711, %v814
    %v5713 = vpop.permute.xlu0 %5712
    %5716 = vset.pattern.permute.xlu0 0
    %5717 = vperm.xlu0 %5716, %v815
    %v5718 = vpop.permute.xlu0 %5717
    %5721 = vset.pattern.permute.xlu0 0
    %5722 = vperm.xlu0 %5721, %v816
    %v5723 = vpop.permute.xlu0 %5722
    %5726 = vset.pattern.permute.xlu0 0
    %5727 = vperm.xlu0 %5726, %v817
    %v5728 = vpop.permute.xlu0 %5727
    %5731 = vset.pattern.permute.xlu0 0
    %5732 = vperm.xlu0 %5731, %v818
    %v5733 = vpop.permute.xlu0 %5732
    %5736 = vset.pattern.permute.xlu0 0
    %5737 = vperm.xlu0 %5736, %v819
    %v5738 = vpop.permute.xlu0 %5737
    %5741 = vset.pattern.permute.xlu0 0
    %5742 = vperm.xlu0 %5741, %v820
    %v5743 = vpop.permute.xlu0 %5742
    %5746 = vset.pattern.permute.xlu0 0
    %5747 = vperm.xlu0 %5746, %v821
    %v5748 = vpop.permute.xlu0 %5747
    %5751 = vset.pattern.permute.xlu0 0
    %5752 = vperm.xlu0 %5751, %v822
    %v5753 = vpop.permute.xlu0 %5752
    %5756 = vset.pattern.permute.xlu0 0
    %5757 = vperm.xlu0 %5756, %v823
    %v5758 = vpop.permute.xlu0 %5757
    %5761 = vset.pattern.permute.xlu0 0
    %5762 = vperm.xlu0 %5761, %v824
    %v5763 = vpop.permute.xlu0 %5762
    %5766 = vset.pattern.permute.xlu0 0
    %5767 = vperm.xlu0 %5766, %v825
    %v5768 = vpop.permute.xlu0 %5767
    %5771 = vset.pattern.permute.xlu0 0
    %5772 = vperm.xlu0 %5771, %v826
    %v5773 = vpop.permute.xlu0 %5772
    %5776 = vset.pattern.permute.xlu0 0
    %5777 = vperm.xlu0 %5776, %v827
    %v5778 = vpop.permute.xlu0 %5777
    %5781 = vset.pattern.permute.xlu0 0
    %5782 = vperm.xlu0 %5781, %v828
    %v5783 = vpop.permute.xlu0 %5782
    %5786 = vset.pattern.permute.xlu0 0
    %5787 = vperm.xlu0 %5786, %v829
    %v5788 = vpop.permute.xlu0 %5787
    %5791 = vset.pattern.permute.xlu0 0
    %5792 = vperm.xlu0 %5791, %v830
    %v5793 = vpop.permute.xlu0 %5792
    %5796 = vset.pattern.permute.xlu0 0
    %5797 = vperm.xlu0 %5796, %v831
    %v5798 = vpop.permute.xlu0 %5797
    %5801 = vset.pattern.permute.xlu0 0
    %5802 = vperm.xlu0 %5801, %v832
    %v5803 = vpop.permute.xlu0 %5802
    %5806 = vset.pattern.permute.xlu0 0
    %5807 = vperm.xlu0 %5806, %v833
    %v5808 = vpop.permute.xlu0 %5807
    %5811 = vset.pattern.permute.xlu0 0
    %5812 = vperm.xlu0 %5811, %v834
    %v5813 = vpop.permute.xlu0 %5812
    %5816 = vset.pattern.permute.xlu0 0
    %5817 = vperm.xlu0 %5816, %v835
    %v5818 = vpop.permute.xlu0 %5817
    %5821 = vset.pattern.permute.xlu0 0
    %5822 = vperm.xlu0 %5821, %v836
    %v5823 = vpop.permute.xlu0 %5822
    %5826 = vset.pattern.permute.xlu0 0
    %5827 = vperm.xlu0 %5826, %v837
    %v5828 = vpop.permute.xlu0 %5827
    %5831 = vset.pattern.permute.xlu0 0
    %5832 = vperm.xlu0 %5831, %v838
    %v5833 = vpop.permute.xlu0 %5832
    %5836 = vset.pattern.permute.xlu0 0
    %5837 = vperm.xlu0 %5836, %v839
    %v5838 = vpop.permute.xlu0 %5837
    %5841 = vset.pattern.permute.xlu0 0
    %5842 = vperm.xlu0 %5841, %v840
    %v5843 = vpop.permute.xlu0 %5842
    %5846 = vset.pattern.permute.xlu0 0
    %5847 = vperm.xlu0 %5846, %v841
    %v5848 = vpop.permute.xlu0 %5847
    %v5850 = vmul.f32 %v5693, %v5224
    %v5851 = vmul.f32 %v5698, %v5239
    %v5852 = vmul.f32 %v5703, %v5254
    %v5853 = vmul.f32 %v5708, %v5269
    %v5854 = vmul.f32 %v5713, %v5284
    %v5855 = vmul.f32 %v5718, %v5299
    %v5856 = vmul.f32 %v5723, %v5314
    %v5857 = vmul.f32 %v5728, %v5329
    %v5858 = vmul.f32 %v5733, %v5344
    %v5859 = vmul.f32 %v5738, %v5359
    %v5860 = vmul.f32 %v5743, %v5374
    %v5861 = vmul.f32 %v5748, %v5389
    %v5862 = vmul.f32 %v5753, %v5404
    %v5863 = vmul.f32 %v5758, %v5419
    %v5864 = vmul.f32 %v5763, %v5434
    %v5865 = vmul.f32 %v5768, %v5449
    %v5866 = vmul.f32 %v5773, %v5464
    %v5867 = vmul.f32 %v5778, %v5479
    %v5868 = vmul.f32 %v5783, %v5494
    %v5869 = vmul.f32 %v5788, %v5509
    %v5870 = vmul.f32 %v5793, %v5524
    %v5871 = vmul.f32 %v5798, %v5539
    %v5872 = vmul.f32 %v5803, %v5554
    %v5873 = vmul.f32 %v5808, %v5569
    %v5874 = vmul.f32 %v5813, %v5584
    %v5875 = vmul.f32 %v5818, %v5599
    %v5876 = vmul.f32 %v5823, %v5614
    %v5877 = vmul.f32 %v5828, %v5629
    %v5878 = vmul.f32 %v5833, %v5644
    %v5879 = vmul.f32 %v5838, %v5659
    %v5880 = vmul.f32 %v5843, %v5674
    %v5881 = vmul.f32 %v5848, %v5689
    %v5882 = vsub.f32 1.0, %v5224
    %v5883 = vsub.f32 1.0, %v5239
    %v5884 = vsub.f32 1.0, %v5254
    %v5885 = vsub.f32 1.0, %v5269
    %v5886 = vsub.f32 1.0, %v5284
    %v5887 = vsub.f32 1.0, %v5299
    %v5888 = vsub.f32 1.0, %v5314
    %v5889 = vsub.f32 1.0, %v5329
    %v5890 = vsub.f32 1.0, %v5344
    %v5891 = vsub.f32 1.0, %v5359
    %v5892 = vsub.f32 1.0, %v5374
    %v5893 = vsub.f32 1.0, %v5389
    %v5894 = vsub.f32 1.0, %v5404
    %v5895 = vsub.f32 1.0, %v5419
    %v5896 = vsub.f32 1.0, %v5434
    %v5897 = vsub.f32 1.0, %v5449
    %v5898 = vsub.f32 1.0, %v5464
    %v5899 = vsub.f32 1.0, %v5479
    %v5900 = vsub.f32 1.0, %v5494
    %v5901 = vsub.f32 1.0, %v5509
    %v5902 = vsub.f32 1.0, %v5524
    %v5903 = vsub.f32 1.0, %v5539
    %v5904 = vsub.f32 1.0, %v5554
    %v5905 = vsub.f32 1.0, %v5569
    %v5906 = vsub.f32 1.0, %v5584
    %v5907 = vsub.f32 1.0, %v5599
    %v5908 = vsub.f32 1.0, %v5614
    %v5909 = vsub.f32 1.0, %v5629
    %v5910 = vsub.f32 1.0, %v5644
    %v5911 = vsub.f32 1.0, %v5659
    %v5912 = vsub.f32 1.0, %v5674
    %v5913 = vsub.f32 1.0, %v5689
    %v5914 = vmul.f32 %v5850, %v5882
    %v5915 = vmul.f32 %v5851, %v5883
    %v5916 = vmul.f32 %v5852, %v5884
    %v5917 = vmul.f32 %v5853, %v5885
    %v5918 = vmul.f32 %v5854, %v5886
    %v5919 = vmul.f32 %v5855, %v5887
    %v5920 = vmul.f32 %v5856, %v5888
    %v5921 = vmul.f32 %v5857, %v5889
    %v5922 = vmul.f32 %v5858, %v5890
    %v5923 = vmul.f32 %v5859, %v5891
    %v5924 = vmul.f32 %v5860, %v5892
    %v5925 = vmul.f32 %v5861, %v5893
    %v5926 = vmul.f32 %v5862, %v5894
    %v5927 = vmul.f32 %v5863, %v5895
    %v5928 = vmul.f32 %v5864, %v5896
    %v5929 = vmul.f32 %v5865, %v5897
    %v5930 = vmul.f32 %v5866, %v5898
    %v5931 = vmul.f32 %v5867, %v5899
    %v5932 = vmul.f32 %v5868, %v5900
    %v5933 = vmul.f32 %v5869, %v5901
    %v5934 = vmul.f32 %v5870, %v5902
    %v5935 = vmul.f32 %v5871, %v5903
    %v5936 = vmul.f32 %v5872, %v5904
    %v5937 = vmul.f32 %v5873, %v5905
    %v5938 = vmul.f32 %v5874, %v5906
    %v5939 = vmul.f32 %v5875, %v5907
    %v5940 = vmul.f32 %v5876, %v5908
    %v5941 = vmul.f32 %v5877, %v5909
    %v5942 = vmul.f32 %v5878, %v5910
    %v5943 = vmul.f32 %v5879, %v5911
    %v5944 = vmul.f32 %v5880, %v5912
    %v5945 = vmul.f32 %v5881, %v5913
    %5946 = vmatpush.msra.mxu0 %v5929
    %5947 = vmatpush.msra.mxu0 %v5928
    %5948 = vmatpush.msra.mxu0 %v5927
    %5949 = vmatpush.msra.mxu0 %v5926
    %5950 = vmatpush.msra.mxu0 %v5925
    %5951 = vmatpush.msra.mxu0 %v5924
    %5952 = vmatpush.msra.mxu0 %v5923
    %5953 = vmatpush.msra.mxu0 %v5922
    %5954 = vmatpush.msra.mxu0 %v5921
    %5955 = vmatpush.msra.mxu0 %v5920
    %5956 = vmatpush.msra.mxu0 %v5919
    %5957 = vmatpush.msra.mxu0 %v5918
    %5958 = vmatpush.msra.mxu0 %v5917
    %5959 = vmatpush.msra.mxu0 %v5916
    %5960 = vmatpush.msra.mxu0 %v5915
    %5961 = vmatpush.msra.mxu0 %v5914
    %5962 = vmatmul.f32.gmra.mxu0 %v540
    %v5963 = vpop.f32.mrf.mxu0
    %v5964 = vadd.f32 0.0, %v5963
    %5965 = vmatmul.f32.gmra.mxu0 %v542
    %v5966 = vpop.f32.mrf.mxu0
    %v5967 = vadd.f32 0.0, %v5966
    %5968 = vmatmul.f32.gmra.mxu0 %v544
    %v5969 = vpop.f32.mrf.mxu0
    %v5970 = vadd.f32 0.0, %v5969
    %5971 = vmatmul.f32.gmra.mxu0 %v546
    %v5972 = vpop.f32.mrf.mxu0
    %v5973 = vadd.f32 0.0, %v5972
    %5974 = vmatmul.f32.gmra.mxu0 %v548
    %v5975 = vpop.f32.mrf.mxu0
    %v5976 = vadd.f32 0.0, %v5975
    %5977 = vmatmul.f32.gmra.mxu0 %v550
    %v5978 = vpop.f32.mrf.mxu0
    %v5979 = vadd.f32 0.0, %v5978
    %5980 = vmatmul.f32.gmra.mxu0 %v552
    %v5981 = vpop.f32.mrf.mxu0
    %v5982 = vadd.f32 0.0, %v5981
    %5983 = vmatmul.f32.gmra.mxu0 %v554
    %v5984 = vpop.f32.mrf.mxu0
    %v5985 = vadd.f32 0.0, %v5984
    %5986 = vmatmul.f32.gmra.mxu0 %v556
    %v5987 = vpop.f32.mrf.mxu0
    %v5988 = vadd.f32 0.0, %v5987
    %5989 = vmatmul.f32.gmra.mxu0 %v558
    %v5990 = vpop.f32.mrf.mxu0
    %v5991 = vadd.f32 0.0, %v5990
    %5992 = vmatmul.f32.gmra.mxu0 %v560
    %v5993 = vpop.f32.mrf.mxu0
    %v5994 = vadd.f32 0.0, %v5993
    %5995 = vmatmul.f32.gmra.mxu0 %v562
    %v5996 = vpop.f32.mrf.mxu0
    %v5997 = vadd.f32 0.0, %v5996
    %5998 = vmatmul.f32.gmra.mxu0 %v564
    %v5999 = vpop.f32.mrf.mxu0
    %v6000 = vadd.f32 0.0, %v5999
    %6001 = vmatmul.f32.gmra.mxu0 %v566
    %v6002 = vpop.f32.mrf.mxu0
    %v6003 = vadd.f32 0.0, %v6002
    %6004 = vmatmul.f32.gmra.mxu0 %v568
    %v6005 = vpop.f32.mrf.mxu0
    %v6006 = vadd.f32 0.0, %v6005
    %6007 = vmatmul.f32.gmra.mxu0 %v570
    %v6008 = vpop.f32.mrf.mxu0
    %v6009 = vadd.f32 0.0, %v6008
    %6010 = vmatmul.f32.gmra.mxu0 %v572
    %v6011 = vpop.f32.mrf.mxu0
    %v6012 = vadd.f32 0.0, %v6011
    %6013 = vmatmul.f32.gmra.mxu0 %v574
    %v6014 = vpop.f32.mrf.mxu0
    %v6015 = vadd.f32 0.0, %v6014
    %6016 = vmatmul.f32.gmra.mxu0 %v576
    %v6017 = vpop.f32.mrf.mxu0
    %v6018 = vadd.f32 0.0, %v6017
    %6019 = vmatmul.f32.gmra.mxu0 %v578
    %v6020 = vpop.f32.mrf.mxu0
    %v6021 = vadd.f32 0.0, %v6020
    %6022 = vmatmul.f32.gmra.mxu0 %v580
    %v6023 = vpop.f32.mrf.mxu0
    %v6024 = vadd.f32 0.0, %v6023
    %6025 = vmatmul.f32.gmra.mxu0 %v582
    %v6026 = vpop.f32.mrf.mxu0
    %v6027 = vadd.f32 0.0, %v6026
    %6028 = vmatmul.f32.gmra.mxu0 %v584
    %v6029 = vpop.f32.mrf.mxu0
    %v6030 = vadd.f32 0.0, %v6029
    %6031 = vmatmul.f32.gmra.mxu0 %v586
    %v6032 = vpop.f32.mrf.mxu0
    %v6033 = vadd.f32 0.0, %v6032
    %6034 = vmatmul.f32.gmra.mxu0 %v588
    %v6035 = vpop.f32.mrf.mxu0
    %v6036 = vadd.f32 0.0, %v6035
    %6037 = vmatmul.f32.gmra.mxu0 %v590
    %v6038 = vpop.f32.mrf.mxu0
    %v6039 = vadd.f32 0.0, %v6038
    %6040 = vmatmul.f32.gmra.mxu0 %v592
    %v6041 = vpop.f32.mrf.mxu0
    %v6042 = vadd.f32 0.0, %v6041
    %6043 = vmatmul.f32.gmra.mxu0 %v594
    %v6044 = vpop.f32.mrf.mxu0
    %v6045 = vadd.f32 0.0, %v6044
    %6046 = vmatmul.f32.gmra.mxu0 %v596
    %v6047 = vpop.f32.mrf.mxu0
    %v6048 = vadd.f32 0.0, %v6047
    %6049 = vmatmul.f32.gmra.mxu0 %v598
    %v6050 = vpop.f32.mrf.mxu0
    %v6051 = vadd.f32 0.0, %v6050
    %6052 = vmatmul.f32.gmra.mxu0 %v600
    %v6053 = vpop.f32.mrf.mxu0
    %v6054 = vadd.f32 0.0, %v6053
    %6055 = vmatmul.f32.gmra.mxu0 %v602
    %v6056 = vpop.f32.mrf.mxu0
    %v6057 = vadd.f32 0.0, %v6056
    %6058 = vdwg.mxu0
    %6059 = vmatpush.msra.mxu0 %v5945
    %6060 = vmatpush.msra.mxu0 %v5944
    %6061 = vmatpush.msra.mxu0 %v5943
    %6062 = vmatpush.msra.mxu0 %v5942
    %6063 = vmatpush.msra.mxu0 %v5941
    %6064 = vmatpush.msra.mxu0 %v5940
    %6065 = vmatpush.msra.mxu0 %v5939
    %6066 = vmatpush.msra.mxu0 %v5938
    %6067 = vmatpush.msra.mxu0 %v5937
    %6068 = vmatpush.msra.mxu0 %v5936
    %6069 = vmatpush.msra.mxu0 %v5935
    %6070 = vmatpush.msra.mxu0 %v5934
    %6071 = vmatpush.msra.mxu0 %v5933
    %6072 = vmatpush.msra.mxu0 %v5932
    %6073 = vmatpush.msra.mxu0 %v5931
    %6074 = vmatpush.msra.mxu0 %v5930
    %6075 = vmatmul.f32.gmra.mxu0 %v541
    %v6076 = vpop.f32.mrf.mxu0
    %v6077 = vadd.f32 %v5964, %v6076
    %6078 = vmatmul.f32.gmra.mxu0 %v543
    %v6079 = vpop.f32.mrf.mxu0
    %v6080 = vadd.f32 %v5967, %v6079
    %6081 = vmatmul.f32.gmra.mxu0 %v545
    %v6082 = vpop.f32.mrf.mxu0
    %v6083 = vadd.f32 %v5970, %v6082
    %6084 = vmatmul.f32.gmra.mxu0 %v547
    %v6085 = vpop.f32.mrf.mxu0
    %v6086 = vadd.f32 %v5973, %v6085
    %6087 = vmatmul.f32.gmra.mxu0 %v549
    %v6088 = vpop.f32.mrf.mxu0
    %v6089 = vadd.f32 %v5976, %v6088
    %6090 = vmatmul.f32.gmra.mxu0 %v551
    %v6091 = vpop.f32.mrf.mxu0
    %v6092 = vadd.f32 %v5979, %v6091
    %6093 = vmatmul.f32.gmra.mxu0 %v553
    %v6094 = vpop.f32.mrf.mxu0
    %v6095 = vadd.f32 %v5982, %v6094
    %6096 = vmatmul.f32.gmra.mxu0 %v555
    %v6097 = vpop.f32.mrf.mxu0
    %v6098 = vadd.f32 %v5985, %v6097
    %6099 = vmatmul.f32.gmra.mxu0 %v557
    %v6100 = vpop.f32.mrf.mxu0
    %v6101 = vadd.f32 %v5988, %v6100
    %6102 = vmatmul.f32.gmra.mxu0 %v559
    %v6103 = vpop.f32.mrf.mxu0
    %v6104 = vadd.f32 %v5991, %v6103
    %6105 = vmatmul.f32.gmra.mxu0 %v561
    %v6106 = vpop.f32.mrf.mxu0
    %v6107 = vadd.f32 %v5994, %v6106
    %6108 = vmatmul.f32.gmra.mxu0 %v563
    %v6109 = vpop.f32.mrf.mxu0
    %v6110 = vadd.f32 %v5997, %v6109
    %6111 = vmatmul.f32.gmra.mxu0 %v565
    %v6112 = vpop.f32.mrf.mxu0
    %v6113 = vadd.f32 %v6000, %v6112
    %6114 = vmatmul.f32.gmra.mxu0 %v567
    %v6115 = vpop.f32.mrf.mxu0
    %v6116 = vadd.f32 %v6003, %v6115
    %6117 = vmatmul.f32.gmra.mxu0 %v569
    %v6118 = vpop.f32.mrf.mxu0
    %v6119 = vadd.f32 %v6006, %v6118
    %6120 = vmatmul.f32.gmra.mxu0 %v571
    %v6121 = vpop.f32.mrf.mxu0
    %v6122 = vadd.f32 %v6009, %v6121
    %6123 = vmatmul.f32.gmra.mxu0 %v573
    %v6124 = vpop.f32.mrf.mxu0
    %v6125 = vadd.f32 %v6012, %v6124
    %6126 = vmatmul.f32.gmra.mxu0 %v575
    %v6127 = vpop.f32.mrf.mxu0
    %v6128 = vadd.f32 %v6015, %v6127
    %6129 = vmatmul.f32.gmra.mxu0 %v577
    %v6130 = vpop.f32.mrf.mxu0
    %v6131 = vadd.f32 %v6018, %v6130
    %6132 = vmatmul.f32.gmra.mxu0 %v579
    %v6133 = vpop.f32.mrf.mxu0
    %v6134 = vadd.f32 %v6021, %v6133
    %6135 = vmatmul.f32.gmra.mxu0 %v581
    %v6136 = vpop.f32.mrf.mxu0
    %v6137 = vadd.f32 %v6024, %v6136
    %6138 = vmatmul.f32.gmra.mxu0 %v583
    %v6139 = vpop.f32.mrf.mxu0
    %v6140 = vadd.f32 %v6027, %v6139
    %6141 = vmatmul.f32.gmra.mxu0 %v585
    %v6142 = vpop.f32.mrf.mxu0
    %v6143 = vadd.f32 %v6030, %v6142
    %6144 = vmatmul.f32.gmra.mxu0 %v587
    %v6145 = vpop.f32.mrf.mxu0
    %v6146 = vadd.f32 %v6033, %v6145
    %6147 = vmatmul.f32.gmra.mxu0 %v589
    %v6148 = vpop.f32.mrf.mxu0
    %v6149 = vadd.f32 %v6036, %v6148
    %6150 = vmatmul.f32.gmra.mxu0 %v591
    %v6151 = vpop.f32.mrf.mxu0
    %v6152 = vadd.f32 %v6039, %v6151
    %6153 = vmatmul.f32.gmra.mxu0 %v593
    %v6154 = vpop.f32.mrf.mxu0
    %v6155 = vadd.f32 %v6042, %v6154
    %6156 = vmatmul.f32.gmra.mxu0 %v595
    %v6157 = vpop.f32.mrf.mxu0
    %v6158 = vadd.f32 %v6045, %v6157
    %6159 = vmatmul.f32.gmra.mxu0 %v597
    %v6160 = vpop.f32.mrf.mxu0
    %v6161 = vadd.f32 %v6048, %v6160
    %6162 = vmatmul.f32.gmra.mxu0 %v599
    %v6163 = vpop.f32.mrf.mxu0
    %v6164 = vadd.f32 %v6051, %v6163
    %6165 = vmatmul.f32.gmra.mxu0 %v601
    %v6166 = vpop.f32.mrf.mxu0
    %v6167 = vadd.f32 %v6054, %v6166
    %6168 = vmatmul.f32.gmra.mxu0 %v603
    %v6169 = vpop.f32.mrf.mxu0
    %v6170 = vadd.f32 %v6057, %v6169
    %6171 = vdwg.mxu0
    %v6172 = vmul.f32 %v6077, %v4230
    %v6173 = vmul.f32 %v6080, %v4245
    %v6174 = vmul.f32 %v6083, %v4260
    %v6175 = vmul.f32 %v6086, %v4275
    %v6176 = vmul.f32 %v6089, %v4290
    %v6177 = vmul.f32 %v6092, %v4305
    %v6178 = vmul.f32 %v6095, %v4320
    %v6179 = vmul.f32 %v6098, %v4335
    %v6180 = vmul.f32 %v6101, %v4350
    %v6181 = vmul.f32 %v6104, %v4365
    %v6182 = vmul.f32 %v6107, %v4380
    %v6183 = vmul.f32 %v6110, %v4395
    %v6184 = vmul.f32 %v6113, %v4410
    %v6185 = vmul.f32 %v6116, %v4425
    %v6186 = vmul.f32 %v6119, %v4440
    %v6187 = vmul.f32 %v6122, %v4455
    %v6188 = vmul.f32 %v6125, %v4470
    %v6189 = vmul.f32 %v6128, %v4485
    %v6190 = vmul.f32 %v6131, %v4500
    %v6191 = vmul.f32 %v6134, %v4515
    %v6192 = vmul.f32 %v6137, %v4530
    %v6193 = vmul.f32 %v6140, %v4545
    %v6194 = vmul.f32 %v6143, %v4560
    %v6195 = vmul.f32 %v6146, %v4575
    %v6196 = vmul.f32 %v6149, %v4590
    %v6197 = vmul.f32 %v6152, %v4605
    %v6198 = vmul.f32 %v6155, %v4620
    %v6199 = vmul.f32 %v6158, %v4635
    %v6200 = vmul.f32 %v6161, %v4650
    %v6201 = vmul.f32 %v6164, %v4665
    %v6202 = vmul.f32 %v6167, %v4680
    %v6203 = vmul.f32 %v6170, %v4695
    %v6204 = vsub.f32 1.0, %v4230
    %v6205 = vsub.f32 1.0, %v4245
    %v6206 = vsub.f32 1.0, %v4260
    %v6207 = vsub.f32 1.0, %v4275
    %v6208 = vsub.f32 1.0, %v4290
    %v6209 = vsub.f32 1.0, %v4305
    %v6210 = vsub.f32 1.0, %v4320
    %v6211 = vsub.f32 1.0, %v4335
    %v6212 = vsub.f32 1.0, %v4350
    %v6213 = vsub.f32 1.0, %v4365
    %v6214 = vsub.f32 1.0, %v4380
    %v6215 = vsub.f32 1.0, %v4395
    %v6216 = vsub.f32 1.0, %v4410
    %v6217 = vsub.f32 1.0, %v4425
    %v6218 = vsub.f32 1.0, %v4440
    %v6219 = vsub.f32 1.0, %v4455
    %v6220 = vsub.f32 1.0, %v4470
    %v6221 = vsub.f32 1.0, %v4485
    %v6222 = vsub.f32 1.0, %v4500
    %v6223 = vsub.f32 1.0, %v4515
    %v6224 = vsub.f32 1.0, %v4530
    %v6225 = vsub.f32 1.0, %v4545
    %v6226 = vsub.f32 1.0, %v4560
    %v6227 = vsub.f32 1.0, %v4575
    %v6228 = vsub.f32 1.0, %v4590
    %v6229 = vsub.f32 1.0, %v4605
    %v6230 = vsub.f32 1.0, %v4620
    %v6231 = vsub.f32 1.0, %v4635
    %v6232 = vsub.f32 1.0, %v4650
    %v6233 = vsub.f32 1.0, %v4665
    %v6234 = vsub.f32 1.0, %v4680
    %v6235 = vsub.f32 1.0, %v4695
    %v6236 = vmul.f32 %v6172, %v6204
    %v6237 = vmul.f32 %v6173, %v6205
    %v6238 = vmul.f32 %v6174, %v6206
    %v6239 = vmul.f32 %v6175, %v6207
    %v6240 = vmul.f32 %v6176, %v6208
    %v6241 = vmul.f32 %v6177, %v6209
    %v6242 = vmul.f32 %v6178, %v6210
    %v6243 = vmul.f32 %v6179, %v6211
    %v6244 = vmul.f32 %v6180, %v6212
    %v6245 = vmul.f32 %v6181, %v6213
    %v6246 = vmul.f32 %v6182, %v6214
    %v6247 = vmul.f32 %v6183, %v6215
    %v6248 = vmul.f32 %v6184, %v6216
    %v6249 = vmul.f32 %v6185, %v6217
    %v6250 = vmul.f32 %v6186, %v6218
    %v6251 = vmul.f32 %v6187, %v6219
    %v6252 = vmul.f32 %v6188, %v6220
    %v6253 = vmul.f32 %v6189, %v6221
    %v6254 = vmul.f32 %v6190, %v6222
    %v6255 = vmul.f32 %v6191, %v6223
    %v6256 = vmul.f32 %v6192, %v6224
    %v6257 = vmul.f32 %v6193, %v6225
    %v6258 = vmul.f32 %v6194, %v6226
    %v6259 = vmul.f32 %v6195, %v6227
    %v6260 = vmul.f32 %v6196, %v6228
    %v6261 = vmul.f32 %v6197, %v6229
    %v6262 = vmul.f32 %v6198, %v6230
    %v6263 = vmul.f32 %v6199, %v6231
    %v6264 = vmul.f32 %v6200, %v6232
    %v6265 = vmul.f32 %v6201, %v6233
    %v6266 = vmul.f32 %v6202, %v6234
    %v6267 = vmul.f32 %v6203, %v6235
    %6268 = vmatpush.msra.mxu0 %v6251
    %6269 = vmatpush.msra.mxu0 %v6250
    %6270 = vmatpush.msra.mxu0 %v6249
    %6271 = vmatpush.msra.mxu0 %v6248
    %6272 = vmatpush.msra.mxu0 %v6247
    %6273 = vmatpush.msra.mxu0 %v6246
    %6274 = vmatpush.msra.mxu0 %v6245
    %6275 = vmatpush.msra.mxu0 %v6244
    %6276 = vmatpush.msra.mxu0 %v6243
    %6277 = vmatpush.msra.mxu0 %v6242
    %6278 = vmatpush.msra.mxu0 %v6241
    %6279 = vmatpush.msra.mxu0 %v6240
    %6280 = vmatpush.msra.mxu0 %v6239
    %6281 = vmatpush.msra.mxu0 %v6238
    %6282 = vmatpush.msra.mxu0 %v6237
    %6283 = vmatpush.msra.mxu0 %v6236
    %6284 = vmatmul.f32.gmra.mxu0 %v475
    %v6285 = vpop.f32.mrf.mxu0
    %v6286 = vadd.f32 0.0, %v6285
    %6287 = vmatmul.f32.gmra.mxu0 %v477
    %v6288 = vpop.f32.mrf.mxu0
    %v6289 = vadd.f32 0.0, %v6288
    %6290 = vmatmul.f32.gmra.mxu0 %v479
    %v6291 = vpop.f32.mrf.mxu0
    %v6292 = vadd.f32 0.0, %v6291
    %6293 = vmatmul.f32.gmra.mxu0 %v481
    %v6294 = vpop.f32.mrf.mxu0
    %v6295 = vadd.f32 0.0, %v6294
    %6296 = vmatmul.f32.gmra.mxu0 %v483
    %v6297 = vpop.f32.mrf.mxu0
    %v6298 = vadd.f32 0.0, %v6297
    %6299 = vmatmul.f32.gmra.mxu0 %v485
    %v6300 = vpop.f32.mrf.mxu0
    %v6301 = vadd.f32 0.0, %v6300
    %6302 = vmatmul.f32.gmra.mxu0 %v487
    %v6303 = vpop.f32.mrf.mxu0
    %v6304 = vadd.f32 0.0, %v6303
    %6305 = vmatmul.f32.gmra.mxu0 %v489
    %v6306 = vpop.f32.mrf.mxu0
    %v6307 = vadd.f32 0.0, %v6306
    %6308 = vmatmul.f32.gmra.mxu0 %v491
    %v6309 = vpop.f32.mrf.mxu0
    %v6310 = vadd.f32 0.0, %v6309
    %6311 = vmatmul.f32.gmra.mxu0 %v493
    %v6312 = vpop.f32.mrf.mxu0
    %v6313 = vadd.f32 0.0, %v6312
    %6314 = vmatmul.f32.gmra.mxu0 %v495
    %v6315 = vpop.f32.mrf.mxu0
    %v6316 = vadd.f32 0.0, %v6315
    %6317 = vmatmul.f32.gmra.mxu0 %v497
    %v6318 = vpop.f32.mrf.mxu0
    %v6319 = vadd.f32 0.0, %v6318
    %6320 = vmatmul.f32.gmra.mxu0 %v499
    %v6321 = vpop.f32.mrf.mxu0
    %v6322 = vadd.f32 0.0, %v6321
    %6323 = vmatmul.f32.gmra.mxu0 %v501
    %v6324 = vpop.f32.mrf.mxu0
    %v6325 = vadd.f32 0.0, %v6324
    %6326 = vmatmul.f32.gmra.mxu0 %v503
    %v6327 = vpop.f32.mrf.mxu0
    %v6328 = vadd.f32 0.0, %v6327
    %6329 = vmatmul.f32.gmra.mxu0 %v505
    %v6330 = vpop.f32.mrf.mxu0
    %v6331 = vadd.f32 0.0, %v6330
    %6332 = vmatmul.f32.gmra.mxu0 %v507
    %v6333 = vpop.f32.mrf.mxu0
    %v6334 = vadd.f32 0.0, %v6333
    %6335 = vmatmul.f32.gmra.mxu0 %v509
    %v6336 = vpop.f32.mrf.mxu0
    %v6337 = vadd.f32 0.0, %v6336
    %6338 = vmatmul.f32.gmra.mxu0 %v511
    %v6339 = vpop.f32.mrf.mxu0
    %v6340 = vadd.f32 0.0, %v6339
    %6341 = vmatmul.f32.gmra.mxu0 %v513
    %v6342 = vpop.f32.mrf.mxu0
    %v6343 = vadd.f32 0.0, %v6342
    %6344 = vmatmul.f32.gmra.mxu0 %v515
    %v6345 = vpop.f32.mrf.mxu0
    %v6346 = vadd.f32 0.0, %v6345
    %6347 = vmatmul.f32.gmra.mxu0 %v517
    %v6348 = vpop.f32.mrf.mxu0
    %v6349 = vadd.f32 0.0, %v6348
    %6350 = vmatmul.f32.gmra.mxu0 %v519
    %v6351 = vpop.f32.mrf.mxu0
    %v6352 = vadd.f32 0.0, %v6351
    %6353 = vmatmul.f32.gmra.mxu0 %v521
    %v6354 = vpop.f32.mrf.mxu0
    %v6355 = vadd.f32 0.0, %v6354
    %6356 = vmatmul.f32.gmra.mxu0 %v523
    %v6357 = vpop.f32.mrf.mxu0
    %v6358 = vadd.f32 0.0, %v6357
    %6359 = vmatmul.f32.gmra.mxu0 %v525
    %v6360 = vpop.f32.mrf.mxu0
    %v6361 = vadd.f32 0.0, %v6360
    %6362 = vmatmul.f32.gmra.mxu0 %v527
    %v6363 = vpop.f32.mrf.mxu0
    %v6364 = vadd.f32 0.0, %v6363
    %6365 = vmatmul.f32.gmra.mxu0 %v529
    %v6366 = vpop.f32.mrf.mxu0
    %v6367 = vadd.f32 0.0, %v6366
    %6368 = vmatmul.f32.gmra.mxu0 %v531
    %v6369 = vpop.f32.mrf.mxu0
    %v6370 = vadd.f32 0.0, %v6369
    %6371 = vmatmul.f32.gmra.mxu0 %v533
    %v6372 = vpop.f32.mrf.mxu0
    %v6373 = vadd.f32 0.0, %v6372
    %6374 = vmatmul.f32.gmra.mxu0 %v535
    %v6375 = vpop.f32.mrf.mxu0
    %v6376 = vadd.f32 0.0, %v6375
    %6377 = vmatmul.f32.gmra.mxu0 %v537
    %v6378 = vpop.f32.mrf.mxu0
    %v6379 = vadd.f32 0.0, %v6378
    %6380 = vdwg.mxu0
    %6381 = vmatpush.msra.mxu0 %v6267
    %6382 = vmatpush.msra.mxu0 %v6266
    %6383 = vmatpush.msra.mxu0 %v6265
    %6384 = vmatpush.msra.mxu0 %v6264
    %6385 = vmatpush.msra.mxu0 %v6263
    %6386 = vmatpush.msra.mxu0 %v6262
    %6387 = vmatpush.msra.mxu0 %v6261
    %6388 = vmatpush.msra.mxu0 %v6260
    %6389 = vmatpush.msra.mxu0 %v6259
    %6390 = vmatpush.msra.mxu0 %v6258
    %6391 = vmatpush.msra.mxu0 %v6257
    %6392 = vmatpush.msra.mxu0 %v6256
    %6393 = vmatpush.msra.mxu0 %v6255
    %6394 = vmatpush.msra.mxu0 %v6254
    %6395 = vmatpush.msra.mxu0 %v6253
    %6396 = vmatpush.msra.mxu0 %v6252
    %6397 = vmatmul.f32.gmra.mxu0 %v476
    %v6398 = vpop.f32.mrf.mxu0
    %v6399 = vadd.f32 %v6286, %v6398
    %6400 = vmatmul.f32.gmra.mxu0 %v478
    %v6401 = vpop.f32.mrf.mxu0
    %v6402 = vadd.f32 %v6289, %v6401
    %6403 = vmatmul.f32.gmra.mxu0 %v480
    %v6404 = vpop.f32.mrf.mxu0
    %v6405 = vadd.f32 %v6292, %v6404
    %6406 = vmatmul.f32.gmra.mxu0 %v482
    %v6407 = vpop.f32.mrf.mxu0
    %v6408 = vadd.f32 %v6295, %v6407
    %6409 = vmatmul.f32.gmra.mxu0 %v484
    %v6410 = vpop.f32.mrf.mxu0
    %v6411 = vadd.f32 %v6298, %v6410
    %6412 = vmatmul.f32.gmra.mxu0 %v486
    %v6413 = vpop.f32.mrf.mxu0
    %v6414 = vadd.f32 %v6301, %v6413
    %6415 = vmatmul.f32.gmra.mxu0 %v488
    %v6416 = vpop.f32.mrf.mxu0
    %v6417 = vadd.f32 %v6304, %v6416
    %6418 = vmatmul.f32.gmra.mxu0 %v490
    %v6419 = vpop.f32.mrf.mxu0
    %v6420 = vadd.f32 %v6307, %v6419
    %6421 = vmatmul.f32.gmra.mxu0 %v492
    %v6422 = vpop.f32.mrf.mxu0
    %v6423 = vadd.f32 %v6310, %v6422
    %6424 = vmatmul.f32.gmra.mxu0 %v494
    %v6425 = vpop.f32.mrf.mxu0
    %v6426 = vadd.f32 %v6313, %v6425
    %6427 = vmatmul.f32.gmra.mxu0 %v496
    %v6428 = vpop.f32.mrf.mxu0
    %v6429 = vadd.f32 %v6316, %v6428
    %6430 = vmatmul.f32.gmra.mxu0 %v498
    %v6431 = vpop.f32.mrf.mxu0
    %v6432 = vadd.f32 %v6319, %v6431
    %6433 = vmatmul.f32.gmra.mxu0 %v500
    %v6434 = vpop.f32.mrf.mxu0
    %v6435 = vadd.f32 %v6322, %v6434
    %6436 = vmatmul.f32.gmra.mxu0 %v502
    %v6437 = vpop.f32.mrf.mxu0
    %v6438 = vadd.f32 %v6325, %v6437
    %6439 = vmatmul.f32.gmra.mxu0 %v504
    %v6440 = vpop.f32.mrf.mxu0
    %v6441 = vadd.f32 %v6328, %v6440
    %6442 = vmatmul.f32.gmra.mxu0 %v506
    %v6443 = vpop.f32.mrf.mxu0
    %v6444 = vadd.f32 %v6331, %v6443
    %6445 = vmatmul.f32.gmra.mxu0 %v508
    %v6446 = vpop.f32.mrf.mxu0
    %v6447 = vadd.f32 %v6334, %v6446
    %6448 = vmatmul.f32.gmra.mxu0 %v510
    %v6449 = vpop.f32.mrf.mxu0
    %v6450 = vadd.f32 %v6337, %v6449
    %6451 = vmatmul.f32.gmra.mxu0 %v512
    %v6452 = vpop.f32.mrf.mxu0
    %v6453 = vadd.f32 %v6340, %v6452
    %6454 = vmatmul.f32.gmra.mxu0 %v514
    %v6455 = vpop.f32.mrf.mxu0
    %v6456 = vadd.f32 %v6343, %v6455
    %6457 = vmatmul.f32.gmra.mxu0 %v516
    %v6458 = vpop.f32.mrf.mxu0
    %v6459 = vadd.f32 %v6346, %v6458
    %6460 = vmatmul.f32.gmra.mxu0 %v518
    %v6461 = vpop.f32.mrf.mxu0
    %v6462 = vadd.f32 %v6349, %v6461
    %6463 = vmatmul.f32.gmra.mxu0 %v520
    %v6464 = vpop.f32.mrf.mxu0
    %v6465 = vadd.f32 %v6352, %v6464
    %6466 = vmatmul.f32.gmra.mxu0 %v522
    %v6467 = vpop.f32.mrf.mxu0
    %v6468 = vadd.f32 %v6355, %v6467
    %6469 = vmatmul.f32.gmra.mxu0 %v524
    %v6470 = vpop.f32.mrf.mxu0
    %v6471 = vadd.f32 %v6358, %v6470
    %6472 = vmatmul.f32.gmra.mxu0 %v526
    %v6473 = vpop.f32.mrf.mxu0
    %v6474 = vadd.f32 %v6361, %v6473
    %6475 = vmatmul.f32.gmra.mxu0 %v528
    %v6476 = vpop.f32.mrf.mxu0
    %v6477 = vadd.f32 %v6364, %v6476
    %6478 = vmatmul.f32.gmra.mxu0 %v530
    %v6479 = vpop.f32.mrf.mxu0
    %v6480 = vadd.f32 %v6367, %v6479
    %6481 = vmatmul.f32.gmra.mxu0 %v532
    %v6482 = vpop.f32.mrf.mxu0
    %v6483 = vadd.f32 %v6370, %v6482
    %6484 = vmatmul.f32.gmra.mxu0 %v534
    %v6485 = vpop.f32.mrf.mxu0
    %v6486 = vadd.f32 %v6373, %v6485
    %6487 = vmatmul.f32.gmra.mxu0 %v536
    %v6488 = vpop.f32.mrf.mxu0
    %v6489 = vadd.f32 %v6376, %v6488
    %6490 = vmatmul.f32.gmra.mxu0 %v538
    %v6491 = vpop.f32.mrf.mxu0
    %v6492 = vadd.f32 %v6379, %v6491
    %6493 = vdwg.mxu0
    %v6494 = vmul.f32 %v6399, %v3236
    %v6495 = vmul.f32 %v6402, %v3251
    %v6496 = vmul.f32 %v6405, %v3266
    %v6497 = vmul.f32 %v6408, %v3281
    %v6498 = vmul.f32 %v6411, %v3296
    %v6499 = vmul.f32 %v6414, %v3311
    %v6500 = vmul.f32 %v6417, %v3326
    %v6501 = vmul.f32 %v6420, %v3341
    %v6502 = vmul.f32 %v6423, %v3356
    %v6503 = vmul.f32 %v6426, %v3371
    %v6504 = vmul.f32 %v6429, %v3386
    %v6505 = vmul.f32 %v6432, %v3401
    %v6506 = vmul.f32 %v6435, %v3416
    %v6507 = vmul.f32 %v6438, %v3431
    %v6508 = vmul.f32 %v6441, %v3446
    %v6509 = vmul.f32 %v6444, %v3461
    %v6510 = vmul.f32 %v6447, %v3476
    %v6511 = vmul.f32 %v6450, %v3491
    %v6512 = vmul.f32 %v6453, %v3506
    %v6513 = vmul.f32 %v6456, %v3521
    %v6514 = vmul.f32 %v6459, %v3536
    %v6515 = vmul.f32 %v6462, %v3551
    %v6516 = vmul.f32 %v6465, %v3566
    %v6517 = vmul.f32 %v6468, %v3581
    %v6518 = vmul.f32 %v6471, %v3596
    %v6519 = vmul.f32 %v6474, %v3611
    %v6520 = vmul.f32 %v6477, %v3626
    %v6521 = vmul.f32 %v6480, %v3641
    %v6522 = vmul.f32 %v6483, %v3656
    %v6523 = vmul.f32 %v6486, %v3671
    %v6524 = vmul.f32 %v6489, %v3686
    %v6525 = vmul.f32 %v6492, %v3701
    %v6526 = vsub.f32 1.0, %v3236
    %v6527 = vsub.f32 1.0, %v3251
    %v6528 = vsub.f32 1.0, %v3266
    %v6529 = vsub.f32 1.0, %v3281
    %v6530 = vsub.f32 1.0, %v3296
    %v6531 = vsub.f32 1.0, %v3311
    %v6532 = vsub.f32 1.0, %v3326
    %v6533 = vsub.f32 1.0, %v3341
    %v6534 = vsub.f32 1.0, %v3356
    %v6535 = vsub.f32 1.0, %v3371
    %v6536 = vsub.f32 1.0, %v3386
    %v6537 = vsub.f32 1.0, %v3401
    %v6538 = vsub.f32 1.0, %v3416
    %v6539 = vsub.f32 1.0, %v3431
    %v6540 = vsub.f32 1.0, %v3446
    %v6541 = vsub.f32 1.0, %v3461
    %v6542 = vsub.f32 1.0, %v3476
    %v6543 = vsub.f32 1.0, %v3491
    %v6544 = vsub.f32 1.0, %v3506
    %v6545 = vsub.f32 1.0, %v3521
    %v6546 = vsub.f32 1.0, %v3536
    %v6547 = vsub.f32 1.0, %v3551
    %v6548 = vsub.f32 1.0, %v3566
    %v6549 = vsub.f32 1.0, %v3581
    %v6550 = vsub.f32 1.0, %v3596
    %v6551 = vsub.f32 1.0, %v3611
    %v6552 = vsub.f32 1.0, %v3626
    %v6553 = vsub.f32 1.0, %v3641
    %v6554 = vsub.f32 1.0, %v3656
    %v6555 = vsub.f32 1.0, %v3671
    %v6556 = vsub.f32 1.0, %v3686
    %v6557 = vsub.f32 1.0, %v3701
    %v6558 = vmul.f32 %v6494, %v6526
    %v6559 = vmul.f32 %v6495, %v6527
    %v6560 = vmul.f32 %v6496, %v6528
    %v6561 = vmul.f32 %v6497, %v6529
    %v6562 = vmul.f32 %v6498, %v6530
    %v6563 = vmul.f32 %v6499, %v6531
    %v6564 = vmul.f32 %v6500, %v6532
    %v6565 = vmul.f32 %v6501, %v6533
    %v6566 = vmul.f32 %v6502, %v6534
    %v6567 = vmul.f32 %v6503, %v6535
    %v6568 = vmul.f32 %v6504, %v6536
    %v6569 = vmul.f32 %v6505, %v6537
    %v6570 = vmul.f32 %v6506, %v6538
    %v6571 = vmul.f32 %v6507, %v6539
    %v6572 = vmul.f32 %v6508, %v6540
    %v6573 = vmul.f32 %v6509, %v6541
    %v6574 = vmul.f32 %v6510, %v6542
    %v6575 = vmul.f32 %v6511, %v6543
    %v6576 = vmul.f32 %v6512, %v6544
    %v6577 = vmul.f32 %v6513, %v6545
    %v6578 = vmul.f32 %v6514, %v6546
    %v6579 = vmul.f32 %v6515, %v6547
    %v6580 = vmul.f32 %v6516, %v6548
    %v6581 = vmul.f32 %v6517, %v6549
    %v6582 = vmul.f32 %v6518, %v6550
    %v6583 = vmul.f32 %v6519, %v6551
    %v6584 = vmul.f32 %v6520, %v6552
    %v6585 = vmul.f32 %v6521, %v6553
    %v6586 = vmul.f32 %v6522, %v6554
    %v6587 = vmul.f32 %v6523, %v6555
    %v6588 = vmul.f32 %v6524, %v6556
    %v6589 = vmul.f32 %v6525, %v6557
    %6590 = vmatpush.msra.mxu0 %v6573
    %6591 = vmatpush.msra.mxu0 %v6572
    %6592 = vmatpush.msra.mxu0 %v6571
    %6593 = vmatpush.msra.mxu0 %v6570
    %6594 = vmatpush.msra.mxu0 %v6569
    %6595 = vmatpush.msra.mxu0 %v6568
    %6596 = vmatpush.msra.mxu0 %v6567
    %6597 = vmatpush.msra.mxu0 %v6566
    %6598 = vmatpush.msra.mxu0 %v6565
    %6599 = vmatpush.msra.mxu0 %v6564
    %6600 = vmatpush.msra.mxu0 %v6563
    %6601 = vmatpush.msra.mxu0 %v6562
    %6602 = vmatpush.msra.mxu0 %v6561
    %6603 = vmatpush.msra.mxu0 %v6560
    %6604 = vmatpush.msra.mxu0 %v6559
    %6605 = vmatpush.msra.mxu0 %v6558
    %6606 = vmatmul.f32.gmra.mxu0 %v410
    %v6607 = vpop.f32.mrf.mxu0
    %v6608 = vadd.f32 0.0, %v6607
    %6609 = vmatmul.f32.gmra.mxu0 %v412
    %v6610 = vpop.f32.mrf.mxu0
    %v6611 = vadd.f32 0.0, %v6610
    %6612 = vmatmul.f32.gmra.mxu0 %v414
    %v6613 = vpop.f32.mrf.mxu0
    %v6614 = vadd.f32 0.0, %v6613
    %6615 = vmatmul.f32.gmra.mxu0 %v416
    %v6616 = vpop.f32.mrf.mxu0
    %v6617 = vadd.f32 0.0, %v6616
    %6618 = vmatmul.f32.gmra.mxu0 %v418
    %v6619 = vpop.f32.mrf.mxu0
    %v6620 = vadd.f32 0.0, %v6619
    %6621 = vmatmul.f32.gmra.mxu0 %v420
    %v6622 = vpop.f32.mrf.mxu0
    %v6623 = vadd.f32 0.0, %v6622
    %6624 = vmatmul.f32.gmra.mxu0 %v422
    %v6625 = vpop.f32.mrf.mxu0
    %v6626 = vadd.f32 0.0, %v6625
    %6627 = vmatmul.f32.gmra.mxu0 %v424
    %v6628 = vpop.f32.mrf.mxu0
    %v6629 = vadd.f32 0.0, %v6628
    %6630 = vmatmul.f32.gmra.mxu0 %v426
    %v6631 = vpop.f32.mrf.mxu0
    %v6632 = vadd.f32 0.0, %v6631
    %6633 = vmatmul.f32.gmra.mxu0 %v428
    %v6634 = vpop.f32.mrf.mxu0
    %v6635 = vadd.f32 0.0, %v6634
    %6636 = vmatmul.f32.gmra.mxu0 %v430
    %v6637 = vpop.f32.mrf.mxu0
    %v6638 = vadd.f32 0.0, %v6637
    %6639 = vmatmul.f32.gmra.mxu0 %v432
    %v6640 = vpop.f32.mrf.mxu0
    %v6641 = vadd.f32 0.0, %v6640
    %6642 = vmatmul.f32.gmra.mxu0 %v434
    %v6643 = vpop.f32.mrf.mxu0
    %v6644 = vadd.f32 0.0, %v6643
    %6645 = vmatmul.f32.gmra.mxu0 %v436
    %v6646 = vpop.f32.mrf.mxu0
    %v6647 = vadd.f32 0.0, %v6646
    %6648 = vmatmul.f32.gmra.mxu0 %v438
    %v6649 = vpop.f32.mrf.mxu0
    %v6650 = vadd.f32 0.0, %v6649
    %6651 = vmatmul.f32.gmra.mxu0 %v440
    %v6652 = vpop.f32.mrf.mxu0
    %v6653 = vadd.f32 0.0, %v6652
    %6654 = vmatmul.f32.gmra.mxu0 %v442
    %v6655 = vpop.f32.mrf.mxu0
    %v6656 = vadd.f32 0.0, %v6655
    %6657 = vmatmul.f32.gmra.mxu0 %v444
    %v6658 = vpop.f32.mrf.mxu0
    %v6659 = vadd.f32 0.0, %v6658
    %6660 = vmatmul.f32.gmra.mxu0 %v446
    %v6661 = vpop.f32.mrf.mxu0
    %v6662 = vadd.f32 0.0, %v6661
    %6663 = vmatmul.f32.gmra.mxu0 %v448
    %v6664 = vpop.f32.mrf.mxu0
    %v6665 = vadd.f32 0.0, %v6664
    %6666 = vmatmul.f32.gmra.mxu0 %v450
    %v6667 = vpop.f32.mrf.mxu0
    %v6668 = vadd.f32 0.0, %v6667
    %6669 = vmatmul.f32.gmra.mxu0 %v452
    %v6670 = vpop.f32.mrf.mxu0
    %v6671 = vadd.f32 0.0, %v6670
    %6672 = vmatmul.f32.gmra.mxu0 %v454
    %v6673 = vpop.f32.mrf.mxu0
    %v6674 = vadd.f32 0.0, %v6673
    %6675 = vmatmul.f32.gmra.mxu0 %v456
    %v6676 = vpop.f32.mrf.mxu0
    %v6677 = vadd.f32 0.0, %v6676
    %6678 = vmatmul.f32.gmra.mxu0 %v458
    %v6679 = vpop.f32.mrf.mxu0
    %v6680 = vadd.f32 0.0, %v6679
    %6681 = vmatmul.f32.gmra.mxu0 %v460
    %v6682 = vpop.f32.mrf.mxu0
    %v6683 = vadd.f32 0.0, %v6682
    %6684 = vmatmul.f32.gmra.mxu0 %v462
    %v6685 = vpop.f32.mrf.mxu0
    %v6686 = vadd.f32 0.0, %v6685
    %6687 = vmatmul.f32.gmra.mxu0 %v464
    %v6688 = vpop.f32.mrf.mxu0
    %v6689 = vadd.f32 0.0, %v6688
    %6690 = vmatmul.f32.gmra.mxu0 %v466
    %v6691 = vpop.f32.mrf.mxu0
    %v6692 = vadd.f32 0.0, %v6691
    %6693 = vmatmul.f32.gmra.mxu0 %v468
    %v6694 = vpop.f32.mrf.mxu0
    %v6695 = vadd.f32 0.0, %v6694
    %6696 = vmatmul.f32.gmra.mxu0 %v470
    %v6697 = vpop.f32.mrf.mxu0
    %v6698 = vadd.f32 0.0, %v6697
    %6699 = vmatmul.f32.gmra.mxu0 %v472
    %v6700 = vpop.f32.mrf.mxu0
    %v6701 = vadd.f32 0.0, %v6700
    %6702 = vdwg.mxu0
    %6703 = vmatpush.msra.mxu0 %v6589
    %6704 = vmatpush.msra.mxu0 %v6588
    %6705 = vmatpush.msra.mxu0 %v6587
    %6706 = vmatpush.msra.mxu0 %v6586
    %6707 = vmatpush.msra.mxu0 %v6585
    %6708 = vmatpush.msra.mxu0 %v6584
    %6709 = vmatpush.msra.mxu0 %v6583
    %6710 = vmatpush.msra.mxu0 %v6582
    %6711 = vmatpush.msra.mxu0 %v6581
    %6712 = vmatpush.msra.mxu0 %v6580
    %6713 = vmatpush.msra.mxu0 %v6579
    %6714 = vmatpush.msra.mxu0 %v6578
    %6715 = vmatpush.msra.mxu0 %v6577
    %6716 = vmatpush.msra.mxu0 %v6576
    %6717 = vmatpush.msra.mxu0 %v6575
    %6718 = vmatpush.msra.mxu0 %v6574
    %6719 = vmatmul.f32.gmra.mxu0 %v411
    %v6720 = vpop.f32.mrf.mxu0
    %v6721 = vadd.f32 %v6608, %v6720
    %6722 = vmatmul.f32.gmra.mxu0 %v413
    %v6723 = vpop.f32.mrf.mxu0
    %v6724 = vadd.f32 %v6611, %v6723
    %6725 = vmatmul.f32.gmra.mxu0 %v415
    %v6726 = vpop.f32.mrf.mxu0
    %v6727 = vadd.f32 %v6614, %v6726
    %6728 = vmatmul.f32.gmra.mxu0 %v417
    %v6729 = vpop.f32.mrf.mxu0
    %v6730 = vadd.f32 %v6617, %v6729
    %6731 = vmatmul.f32.gmra.mxu0 %v419
    %v6732 = vpop.f32.mrf.mxu0
    %v6733 = vadd.f32 %v6620, %v6732
    %6734 = vmatmul.f32.gmra.mxu0 %v421
    %v6735 = vpop.f32.mrf.mxu0
    %v6736 = vadd.f32 %v6623, %v6735
    %6737 = vmatmul.f32.gmra.mxu0 %v423
    %v6738 = vpop.f32.mrf.mxu0
    %v6739 = vadd.f32 %v6626, %v6738
    %6740 = vmatmul.f32.gmra.mxu0 %v425
    %v6741 = vpop.f32.mrf.mxu0
    %v6742 = vadd.f32 %v6629, %v6741
    %6743 = vmatmul.f32.gmra.mxu0 %v427
    %v6744 = vpop.f32.mrf.mxu0
    %v6745 = vadd.f32 %v6632, %v6744
    %6746 = vmatmul.f32.gmra.mxu0 %v429
    %v6747 = vpop.f32.mrf.mxu0
    %v6748 = vadd.f32 %v6635, %v6747
    %6749 = vmatmul.f32.gmra.mxu0 %v431
    %v6750 = vpop.f32.mrf.mxu0
    %v6751 = vadd.f32 %v6638, %v6750
    %6752 = vmatmul.f32.gmra.mxu0 %v433
    %v6753 = vpop.f32.mrf.mxu0
    %v6754 = vadd.f32 %v6641, %v6753
    %6755 = vmatmul.f32.gmra.mxu0 %v435
    %v6756 = vpop.f32.mrf.mxu0
    %v6757 = vadd.f32 %v6644, %v6756
    %6758 = vmatmul.f32.gmra.mxu0 %v437
    %v6759 = vpop.f32.mrf.mxu0
    %v6760 = vadd.f32 %v6647, %v6759
    %6761 = vmatmul.f32.gmra.mxu0 %v439
    %v6762 = vpop.f32.mrf.mxu0
    %v6763 = vadd.f32 %v6650, %v6762
    %6764 = vmatmul.f32.gmra.mxu0 %v441
    %v6765 = vpop.f32.mrf.mxu0
    %v6766 = vadd.f32 %v6653, %v6765
    %6767 = vmatmul.f32.gmra.mxu0 %v443
    %v6768 = vpop.f32.mrf.mxu0
    %v6769 = vadd.f32 %v6656, %v6768
    %6770 = vmatmul.f32.gmra.mxu0 %v445
    %v6771 = vpop.f32.mrf.mxu0
    %v6772 = vadd.f32 %v6659, %v6771
    %6773 = vmatmul.f32.gmra.mxu0 %v447
    %v6774 = vpop.f32.mrf.mxu0
    %v6775 = vadd.f32 %v6662, %v6774
    %6776 = vmatmul.f32.gmra.mxu0 %v449
    %v6777 = vpop.f32.mrf.mxu0
    %v6778 = vadd.f32 %v6665, %v6777
    %6779 = vmatmul.f32.gmra.mxu0 %v451
    %v6780 = vpop.f32.mrf.mxu0
    %v6781 = vadd.f32 %v6668, %v6780
    %6782 = vmatmul.f32.gmra.mxu0 %v453
    %v6783 = vpop.f32.mrf.mxu0
    %v6784 = vadd.f32 %v6671, %v6783
    %6785 = vmatmul.f32.gmra.mxu0 %v455
    %v6786 = vpop.f32.mrf.mxu0
    %v6787 = vadd.f32 %v6674, %v6786
    %6788 = vmatmul.f32.gmra.mxu0 %v457
    %v6789 = vpop.f32.mrf.mxu0
    %v6790 = vadd.f32 %v6677, %v6789
    %6791 = vmatmul.f32.gmra.mxu0 %v459
    %v6792 = vpop.f32.mrf.mxu0
    %v6793 = vadd.f32 %v6680, %v6792
    %6794 = vmatmul.f32.gmra.mxu0 %v461
    %v6795 = vpop.f32.mrf.mxu0
    %v6796 = vadd.f32 %v6683, %v6795
    %6797 = vmatmul.f32.gmra.mxu0 %v463
    %v6798 = vpop.f32.mrf.mxu0
    %v6799 = vadd.f32 %v6686, %v6798
    %6800 = vmatmul.f32.gmra.mxu0 %v465
    %v6801 = vpop.f32.mrf.mxu0
    %v6802 = vadd.f32 %v6689, %v6801
    %6803 = vmatmul.f32.gmra.mxu0 %v467
    %v6804 = vpop.f32.mrf.mxu0
    %v6805 = vadd.f32 %v6692, %v6804
    %6806 = vmatmul.f32.gmra.mxu0 %v469
    %v6807 = vpop.f32.mrf.mxu0
    %v6808 = vadd.f32 %v6695, %v6807
    %6809 = vmatmul.f32.gmra.mxu0 %v471
    %v6810 = vpop.f32.mrf.mxu0
    %v6811 = vadd.f32 %v6698, %v6810
    %6812 = vmatmul.f32.gmra.mxu0 %v473
    %v6813 = vpop.f32.mrf.mxu0
    %v6814 = vadd.f32 %v6701, %v6813
    %6815 = vdwg.mxu0
    %v6816 = vmul.f32 %v6721, %v2242
    %v6817 = vmul.f32 %v6724, %v2257
    %v6818 = vmul.f32 %v6727, %v2272
    %v6819 = vmul.f32 %v6730, %v2287
    %v6820 = vmul.f32 %v6733, %v2302
    %v6821 = vmul.f32 %v6736, %v2317
    %v6822 = vmul.f32 %v6739, %v2332
    %v6823 = vmul.f32 %v6742, %v2347
    %v6824 = vmul.f32 %v6745, %v2362
    %v6825 = vmul.f32 %v6748, %v2377
    %v6826 = vmul.f32 %v6751, %v2392
    %v6827 = vmul.f32 %v6754, %v2407
    %v6828 = vmul.f32 %v6757, %v2422
    %v6829 = vmul.f32 %v6760, %v2437
    %v6830 = vmul.f32 %v6763, %v2452
    %v6831 = vmul.f32 %v6766, %v2467
    %v6832 = vmul.f32 %v6769, %v2482
    %v6833 = vmul.f32 %v6772, %v2497
    %v6834 = vmul.f32 %v6775, %v2512
    %v6835 = vmul.f32 %v6778, %v2527
    %v6836 = vmul.f32 %v6781, %v2542
    %v6837 = vmul.f32 %v6784, %v2557
    %v6838 = vmul.f32 %v6787, %v2572
    %v6839 = vmul.f32 %v6790, %v2587
    %v6840 = vmul.f32 %v6793, %v2602
    %v6841 = vmul.f32 %v6796, %v2617
    %v6842 = vmul.f32 %v6799, %v2632
    %v6843 = vmul.f32 %v6802, %v2647
    %v6844 = vmul.f32 %v6805, %v2662
    %v6845 = vmul.f32 %v6808, %v2677
    %v6846 = vmul.f32 %v6811, %v2692
    %v6847 = vmul.f32 %v6814, %v2707
    %v6848 = vsub.f32 1.0, %v2242
    %v6849 = vsub.f32 1.0, %v2257
    %v6850 = vsub.f32 1.0, %v2272
    %v6851 = vsub.f32 1.0, %v2287
    %v6852 = vsub.f32 1.0, %v2302
    %v6853 = vsub.f32 1.0, %v2317
    %v6854 = vsub.f32 1.0, %v2332
    %v6855 = vsub.f32 1.0, %v2347
    %v6856 = vsub.f32 1.0, %v2362
    %v6857 = vsub.f32 1.0, %v2377
    %v6858 = vsub.f32 1.0, %v2392
    %v6859 = vsub.f32 1.0, %v2407
    %v6860 = vsub.f32 1.0, %v2422
    %v6861 = vsub.f32 1.0, %v2437
    %v6862 = vsub.f32 1.0, %v2452
    %v6863 = vsub.f32 1.0, %v2467
    %v6864 = vsub.f32 1.0, %v2482
    %v6865 = vsub.f32 1.0, %v2497
    %v6866 = vsub.f32 1.0, %v2512
    %v6867 = vsub.f32 1.0, %v2527
    %v6868 = vsub.f32 1.0, %v2542
    %v6869 = vsub.f32 1.0, %v2557
    %v6870 = vsub.f32 1.0, %v2572
    %v6871 = vsub.f32 1.0, %v2587
    %v6872 = vsub.f32 1.0, %v2602
    %v6873 = vsub.f32 1.0, %v2617
    %v6874 = vsub.f32 1.0, %v2632
    %v6875 = vsub.f32 1.0, %v2647
    %v6876 = vsub.f32 1.0, %v2662
    %v6877 = vsub.f32 1.0, %v2677
    %v6878 = vsub.f32 1.0, %v2692
    %v6879 = vsub.f32 1.0, %v2707
    %v6880 = vmul.f32 %v6816, %v6848
    %v6881 = vmul.f32 %v6817, %v6849
    %v6882 = vmul.f32 %v6818, %v6850
    %v6883 = vmul.f32 %v6819, %v6851
    %v6884 = vmul.f32 %v6820, %v6852
    %v6885 = vmul.f32 %v6821, %v6853
    %v6886 = vmul.f32 %v6822, %v6854
    %v6887 = vmul.f32 %v6823, %v6855
    %v6888 = vmul.f32 %v6824, %v6856
    %v6889 = vmul.f32 %v6825, %v6857
    %v6890 = vmul.f32 %v6826, %v6858
    %v6891 = vmul.f32 %v6827, %v6859
    %v6892 = vmul.f32 %v6828, %v6860
    %v6893 = vmul.f32 %v6829, %v6861
    %v6894 = vmul.f32 %v6830, %v6862
    %v6895 = vmul.f32 %v6831, %v6863
    %v6896 = vmul.f32 %v6832, %v6864
    %v6897 = vmul.f32 %v6833, %v6865
    %v6898 = vmul.f32 %v6834, %v6866
    %v6899 = vmul.f32 %v6835, %v6867
    %v6900 = vmul.f32 %v6836, %v6868
    %v6901 = vmul.f32 %v6837, %v6869
    %v6902 = vmul.f32 %v6838, %v6870
    %v6903 = vmul.f32 %v6839, %v6871
    %v6904 = vmul.f32 %v6840, %v6872
    %v6905 = vmul.f32 %v6841, %v6873
    %v6906 = vmul.f32 %v6842, %v6874
    %v6907 = vmul.f32 %v6843, %v6875
    %v6908 = vmul.f32 %v6844, %v6876
    %v6909 = vmul.f32 %v6845, %v6877
    %v6910 = vmul.f32 %v6846, %v6878
    %v6911 = vmul.f32 %v6847, %v6879
    %6912 = vmatpush.msra.mxu0 %v6895
    %6913 = vmatpush.msra.mxu0 %v6894
    %6914 = vmatpush.msra.mxu0 %v6893
    %6915 = vmatpush.msra.mxu0 %v6892
    %6916 = vmatpush.msra.mxu0 %v6891
    %6917 = vmatpush.msra.mxu0 %v6890
    %6918 = vmatpush.msra.mxu0 %v6889
    %6919 = vmatpush.msra.mxu0 %v6888
    %6920 = vmatpush.msra.mxu0 %v6887
    %6921 = vmatpush.msra.mxu0 %v6886
    %6922 = vmatpush.msra.mxu0 %v6885
    %6923 = vmatpush.msra.mxu0 %v6884
    %6924 = vmatpush.msra.mxu0 %v6883
    %6925 = vmatpush.msra.mxu0 %v6882
    %6926 = vmatpush.msra.mxu0 %v6881
    %6927 = vmatpush.msra.mxu0 %v6880
    %6928 = vmatmul.f32.gmra.mxu0 %v345
    %v6929 = vpop.f32.mrf.mxu0
    %v6930 = vadd.f32 0.0, %v6929
    %6931 = vmatmul.f32.gmra.mxu0 %v347
    %v6932 = vpop.f32.mrf.mxu0
    %v6933 = vadd.f32 0.0, %v6932
    %6934 = vmatmul.f32.gmra.mxu0 %v349
    %v6935 = vpop.f32.mrf.mxu0
    %v6936 = vadd.f32 0.0, %v6935
    %6937 = vmatmul.f32.gmra.mxu0 %v351
    %v6938 = vpop.f32.mrf.mxu0
    %v6939 = vadd.f32 0.0, %v6938
    %6940 = vmatmul.f32.gmra.mxu0 %v353
    %v6941 = vpop.f32.mrf.mxu0
    %v6942 = vadd.f32 0.0, %v6941
    %6943 = vmatmul.f32.gmra.mxu0 %v355
    %v6944 = vpop.f32.mrf.mxu0
    %v6945 = vadd.f32 0.0, %v6944
    %6946 = vmatmul.f32.gmra.mxu0 %v357
    %v6947 = vpop.f32.mrf.mxu0
    %v6948 = vadd.f32 0.0, %v6947
    %6949 = vmatmul.f32.gmra.mxu0 %v359
    %v6950 = vpop.f32.mrf.mxu0
    %v6951 = vadd.f32 0.0, %v6950
    %6952 = vmatmul.f32.gmra.mxu0 %v361
    %v6953 = vpop.f32.mrf.mxu0
    %v6954 = vadd.f32 0.0, %v6953
    %6955 = vmatmul.f32.gmra.mxu0 %v363
    %v6956 = vpop.f32.mrf.mxu0
    %v6957 = vadd.f32 0.0, %v6956
    %6958 = vmatmul.f32.gmra.mxu0 %v365
    %v6959 = vpop.f32.mrf.mxu0
    %v6960 = vadd.f32 0.0, %v6959
    %6961 = vmatmul.f32.gmra.mxu0 %v367
    %v6962 = vpop.f32.mrf.mxu0
    %v6963 = vadd.f32 0.0, %v6962
    %6964 = vmatmul.f32.gmra.mxu0 %v369
    %v6965 = vpop.f32.mrf.mxu0
    %v6966 = vadd.f32 0.0, %v6965
    %6967 = vmatmul.f32.gmra.mxu0 %v371
    %v6968 = vpop.f32.mrf.mxu0
    %v6969 = vadd.f32 0.0, %v6968
    %6970 = vmatmul.f32.gmra.mxu0 %v373
    %v6971 = vpop.f32.mrf.mxu0
    %v6972 = vadd.f32 0.0, %v6971
    %6973 = vmatmul.f32.gmra.mxu0 %v375
    %v6974 = vpop.f32.mrf.mxu0
    %v6975 = vadd.f32 0.0, %v6974
    %6976 = vmatmul.f32.gmra.mxu0 %v377
    %v6977 = vpop.f32.mrf.mxu0
    %v6978 = vadd.f32 0.0, %v6977
    %6979 = vmatmul.f32.gmra.mxu0 %v379
    %v6980 = vpop.f32.mrf.mxu0
    %v6981 = vadd.f32 0.0, %v6980
    %6982 = vmatmul.f32.gmra.mxu0 %v381
    %v6983 = vpop.f32.mrf.mxu0
    %v6984 = vadd.f32 0.0, %v6983
    %6985 = vmatmul.f32.gmra.mxu0 %v383
    %v6986 = vpop.f32.mrf.mxu0
    %v6987 = vadd.f32 0.0, %v6986
    %6988 = vmatmul.f32.gmra.mxu0 %v385
    %v6989 = vpop.f32.mrf.mxu0
    %v6990 = vadd.f32 0.0, %v6989
    %6991 = vmatmul.f32.gmra.mxu0 %v387
    %v6992 = vpop.f32.mrf.mxu0
    %v6993 = vadd.f32 0.0, %v6992
    %6994 = vmatmul.f32.gmra.mxu0 %v389
    %v6995 = vpop.f32.mrf.mxu0
    %v6996 = vadd.f32 0.0, %v6995
    %6997 = vmatmul.f32.gmra.mxu0 %v391
    %v6998 = vpop.f32.mrf.mxu0
    %v6999 = vadd.f32 0.0, %v6998
    %7000 = vmatmul.f32.gmra.mxu0 %v393
    %v7001 = vpop.f32.mrf.mxu0
    %v7002 = vadd.f32 0.0, %v7001
    %7003 = vmatmul.f32.gmra.mxu0 %v395
    %v7004 = vpop.f32.mrf.mxu0
    %v7005 = vadd.f32 0.0, %v7004
    %7006 = vmatmul.f32.gmra.mxu0 %v397
    %v7007 = vpop.f32.mrf.mxu0
    %v7008 = vadd.f32 0.0, %v7007
    %7009 = vmatmul.f32.gmra.mxu0 %v399
    %v7010 = vpop.f32.mrf.mxu0
    %v7011 = vadd.f32 0.0, %v7010
    %7012 = vmatmul.f32.gmra.mxu0 %v401
    %v7013 = vpop.f32.mrf.mxu0
    %v7014 = vadd.f32 0.0, %v7013
    %7015 = vmatmul.f32.gmra.mxu0 %v403
    %v7016 = vpop.f32.mrf.mxu0
    %v7017 = vadd.f32 0.0, %v7016
    %7018 = vmatmul.f32.gmra.mxu0 %v405
    %v7019 = vpop.f32.mrf.mxu0
    %v7020 = vadd.f32 0.0, %v7019
    %7021 = vmatmul.f32.gmra.mxu0 %v407
    %v7022 = vpop.f32.mrf.mxu0
    %v7023 = vadd.f32 0.0, %v7022
    %7024 = vdwg.mxu0
    %7025 = vmatpush.msra.mxu0 %v6911
    %7026 = vmatpush.msra.mxu0 %v6910
    %7027 = vmatpush.msra.mxu0 %v6909
    %7028 = vmatpush.msra.mxu0 %v6908
    %7029 = vmatpush.msra.mxu0 %v6907
    %7030 = vmatpush.msra.mxu0 %v6906
    %7031 = vmatpush.msra.mxu0 %v6905
    %7032 = vmatpush.msra.mxu0 %v6904
    %7033 = vmatpush.msra.mxu0 %v6903
    %7034 = vmatpush.msra.mxu0 %v6902
    %7035 = vmatpush.msra.mxu0 %v6901
    %7036 = vmatpush.msra.mxu0 %v6900
    %7037 = vmatpush.msra.mxu0 %v6899
    %7038 = vmatpush.msra.mxu0 %v6898
    %7039 = vmatpush.msra.mxu0 %v6897
    %7040 = vmatpush.msra.mxu0 %v6896
    %7041 = vmatmul.f32.gmra.mxu0 %v346
    %v7042 = vpop.f32.mrf.mxu0
    %v7043 = vadd.f32 %v6930, %v7042
    %7044 = vmatmul.f32.gmra.mxu0 %v348
    %v7045 = vpop.f32.mrf.mxu0
    %v7046 = vadd.f32 %v6933, %v7045
    %7047 = vmatmul.f32.gmra.mxu0 %v350
    %v7048 = vpop.f32.mrf.mxu0
    %v7049 = vadd.f32 %v6936, %v7048
    %7050 = vmatmul.f32.gmra.mxu0 %v352
    %v7051 = vpop.f32.mrf.mxu0
    %v7052 = vadd.f32 %v6939, %v7051
    %7053 = vmatmul.f32.gmra.mxu0 %v354
    %v7054 = vpop.f32.mrf.mxu0
    %v7055 = vadd.f32 %v6942, %v7054
    %7056 = vmatmul.f32.gmra.mxu0 %v356
    %v7057 = vpop.f32.mrf.mxu0
    %v7058 = vadd.f32 %v6945, %v7057
    %7059 = vmatmul.f32.gmra.mxu0 %v358
    %v7060 = vpop.f32.mrf.mxu0
    %v7061 = vadd.f32 %v6948, %v7060
    %7062 = vmatmul.f32.gmra.mxu0 %v360
    %v7063 = vpop.f32.mrf.mxu0
    %v7064 = vadd.f32 %v6951, %v7063
    %7065 = vmatmul.f32.gmra.mxu0 %v362
    %v7066 = vpop.f32.mrf.mxu0
    %v7067 = vadd.f32 %v6954, %v7066
    %7068 = vmatmul.f32.gmra.mxu0 %v364
    %v7069 = vpop.f32.mrf.mxu0
    %v7070 = vadd.f32 %v6957, %v7069
    %7071 = vmatmul.f32.gmra.mxu0 %v366
    %v7072 = vpop.f32.mrf.mxu0
    %v7073 = vadd.f32 %v6960, %v7072
    %7074 = vmatmul.f32.gmra.mxu0 %v368
    %v7075 = vpop.f32.mrf.mxu0
    %v7076 = vadd.f32 %v6963, %v7075
    %7077 = vmatmul.f32.gmra.mxu0 %v370
    %v7078 = vpop.f32.mrf.mxu0
    %v7079 = vadd.f32 %v6966, %v7078
    %7080 = vmatmul.f32.gmra.mxu0 %v372
    %v7081 = vpop.f32.mrf.mxu0
    %v7082 = vadd.f32 %v6969, %v7081
    %7083 = vmatmul.f32.gmra.mxu0 %v374
    %v7084 = vpop.f32.mrf.mxu0
    %v7085 = vadd.f32 %v6972, %v7084
    %7086 = vmatmul.f32.gmra.mxu0 %v376
    %v7087 = vpop.f32.mrf.mxu0
    %v7088 = vadd.f32 %v6975, %v7087
    %7089 = vmatmul.f32.gmra.mxu0 %v378
    %v7090 = vpop.f32.mrf.mxu0
    %v7091 = vadd.f32 %v6978, %v7090
    %7092 = vmatmul.f32.gmra.mxu0 %v380
    %v7093 = vpop.f32.mrf.mxu0
    %v7094 = vadd.f32 %v6981, %v7093
    %7095 = vmatmul.f32.gmra.mxu0 %v382
    %v7096 = vpop.f32.mrf.mxu0
    %v7097 = vadd.f32 %v6984, %v7096
    %7098 = vmatmul.f32.gmra.mxu0 %v384
    %v7099 = vpop.f32.mrf.mxu0
    %v7100 = vadd.f32 %v6987, %v7099
    %7101 = vmatmul.f32.gmra.mxu0 %v386
    %v7102 = vpop.f32.mrf.mxu0
    %v7103 = vadd.f32 %v6990, %v7102
    %7104 = vmatmul.f32.gmra.mxu0 %v388
    %v7105 = vpop.f32.mrf.mxu0
    %v7106 = vadd.f32 %v6993, %v7105
    %7107 = vmatmul.f32.gmra.mxu0 %v390
    %v7108 = vpop.f32.mrf.mxu0
    %v7109 = vadd.f32 %v6996, %v7108
    %7110 = vmatmul.f32.gmra.mxu0 %v392
    %v7111 = vpop.f32.mrf.mxu0
    %v7112 = vadd.f32 %v6999, %v7111
    %7113 = vmatmul.f32.gmra.mxu0 %v394
    %v7114 = vpop.f32.mrf.mxu0
    %v7115 = vadd.f32 %v7002, %v7114
    %7116 = vmatmul.f32.gmra.mxu0 %v396
    %v7117 = vpop.f32.mrf.mxu0
    %v7118 = vadd.f32 %v7005, %v7117
    %7119 = vmatmul.f32.gmra.mxu0 %v398
    %v7120 = vpop.f32.mrf.mxu0
    %v7121 = vadd.f32 %v7008, %v7120
    %7122 = vmatmul.f32.gmra.mxu0 %v400
    %v7123 = vpop.f32.mrf.mxu0
    %v7124 = vadd.f32 %v7011, %v7123
    %7125 = vmatmul.f32.gmra.mxu0 %v402
    %v7126 = vpop.f32.mrf.mxu0
    %v7127 = vadd.f32 %v7014, %v7126
    %7128 = vmatmul.f32.gmra.mxu0 %v404
    %v7129 = vpop.f32.mrf.mxu0
    %v7130 = vadd.f32 %v7017, %v7129
    %7131 = vmatmul.f32.gmra.mxu0 %v406
    %v7132 = vpop.f32.mrf.mxu0
    %v7133 = vadd.f32 %v7020, %v7132
    %7134 = vmatmul.f32.gmra.mxu0 %v408
    %v7135 = vpop.f32.mrf.mxu0
    %v7136 = vadd.f32 %v7023, %v7135
    %7137 = vdwg.mxu0
    %v7138 = vmul.f32 %v7043, %v1044
    %v7139 = vmul.f32 %v7046, %v1059
    %v7140 = vmul.f32 %v7049, %v1074
    %v7141 = vmul.f32 %v7052, %v1089
    %v7142 = vmul.f32 %v7055, %v1104
    %v7143 = vmul.f32 %v7058, %v1119
    %v7144 = vmul.f32 %v7061, %v1134
    %v7145 = vmul.f32 %v7064, %v1149
    %v7146 = vmul.f32 %v7067, %v1232
    %v7147 = vmul.f32 %v7070, %v1247
    %v7148 = vmul.f32 %v7073, %v1262
    %v7149 = vmul.f32 %v7076, %v1277
    %v7150 = vmul.f32 %v7079, %v1292
    %v7151 = vmul.f32 %v7082, %v1307
    %v7152 = vmul.f32 %v7085, %v1322
    %v7153 = vmul.f32 %v7088, %v1337
    %v7154 = vmul.f32 %v7091, %v1420
    %v7155 = vmul.f32 %v7094, %v1435
    %v7156 = vmul.f32 %v7097, %v1450
    %v7157 = vmul.f32 %v7100, %v1465
    %v7158 = vmul.f32 %v7103, %v1480
    %v7159 = vmul.f32 %v7106, %v1495
    %v7160 = vmul.f32 %v7109, %v1510
    %v7161 = vmul.f32 %v7112, %v1525
    %v7162 = vmul.f32 %v7115, %v1608
    %v7163 = vmul.f32 %v7118, %v1623
    %v7164 = vmul.f32 %v7121, %v1638
    %v7165 = vmul.f32 %v7124, %v1653
    %v7166 = vmul.f32 %v7127, %v1668
    %v7167 = vmul.f32 %v7130, %v1683
    %v7168 = vmul.f32 %v7133, %v1698
    %v7169 = vmul.f32 %v7136, %v1713
    %v7170 = vsub.f32 1.0, %v1044
    %v7171 = vsub.f32 1.0, %v1059
    %v7172 = vsub.f32 1.0, %v1074
    %v7173 = vsub.f32 1.0, %v1089
    %v7174 = vsub.f32 1.0, %v1104
    %v7175 = vsub.f32 1.0, %v1119
    %v7176 = vsub.f32 1.0, %v1134
    %v7177 = vsub.f32 1.0, %v1149
    %v7178 = vsub.f32 1.0, %v1232
    %v7179 = vsub.f32 1.0, %v1247
    %v7180 = vsub.f32 1.0, %v1262
    %v7181 = vsub.f32 1.0, %v1277
    %v7182 = vsub.f32 1.0, %v1292
    %v7183 = vsub.f32 1.0, %v1307
    %v7184 = vsub.f32 1.0, %v1322
    %v7185 = vsub.f32 1.0, %v1337
    %v7186 = vsub.f32 1.0, %v1420
    %v7187 = vsub.f32 1.0, %v1435
    %v7188 = vsub.f32 1.0, %v1450
    %v7189 = vsub.f32 1.0, %v1465
    %v7190 = vsub.f32 1.0, %v1480
    %v7191 = vsub.f32 1.0, %v1495
    %v7192 = vsub.f32 1.0, %v1510
    %v7193 = vsub.f32 1.0, %v1525
    %v7194 = vsub.f32 1.0, %v1608
    %v7195 = vsub.f32 1.0, %v1623
    %v7196 = vsub.f32 1.0, %v1638
    %v7197 = vsub.f32 1.0, %v1653
    %v7198 = vsub.f32 1.0, %v1668
    %v7199 = vsub.f32 1.0, %v1683
    %v7200 = vsub.f32 1.0, %v1698
    %v7201 = vsub.f32 1.0, %v1713
    %v7202 = vmul.f32 %v7138, %v7170
    %v7203 = vmul.f32 %v7139, %v7171
    %v7204 = vmul.f32 %v7140, %v7172
    %v7205 = vmul.f32 %v7141, %v7173
    %v7206 = vmul.f32 %v7142, %v7174
    %v7207 = vmul.f32 %v7143, %v7175
    %v7208 = vmul.f32 %v7144, %v7176
    %v7209 = vmul.f32 %v7145, %v7177
    %v7210 = vmul.f32 %v7146, %v7178
    %v7211 = vmul.f32 %v7147, %v7179
    %v7212 = vmul.f32 %v7148, %v7180
    %v7213 = vmul.f32 %v7149, %v7181
    %v7214 = vmul.f32 %v7150, %v7182
    %v7215 = vmul.f32 %v7151, %v7183
    %v7216 = vmul.f32 %v7152, %v7184
    %v7217 = vmul.f32 %v7153, %v7185
    %v7218 = vmul.f32 %v7154, %v7186
    %v7219 = vmul.f32 %v7155, %v7187
    %v7220 = vmul.f32 %v7156, %v7188
    %v7221 = vmul.f32 %v7157, %v7189
    %v7222 = vmul.f32 %v7158, %v7190
    %v7223 = vmul.f32 %v7159, %v7191
    %v7224 = vmul.f32 %v7160, %v7192
    %v7225 = vmul.f32 %v7161, %v7193
    %v7226 = vmul.f32 %v7162, %v7194
    %v7227 = vmul.f32 %v7163, %v7195
    %v7228 = vmul.f32 %v7164, %v7196
    %v7229 = vmul.f32 %v7165, %v7197
    %v7230 = vmul.f32 %v7166, %v7198
    %v7231 = vmul.f32 %v7167, %v7199
    %v7232 = vmul.f32 %v7168, %v7200
    %v7233 = vmul.f32 %v7169, %v7201
    %7235 = vset.pattern.permute.xlu0 0
    %7236 = vperm.xlu0 %7235, %v743
    %v7237 = vpop.permute.xlu0 %7236
    %7240 = vset.pattern.permute.xlu0 0
    %7241 = vperm.xlu0 %7240, %v744
    %v7242 = vpop.permute.xlu0 %7241
    %7245 = vset.pattern.permute.xlu0 0
    %7246 = vperm.xlu0 %7245, %v745
    %v7247 = vpop.permute.xlu0 %7246
    %7250 = vset.pattern.permute.xlu0 0
    %7251 = vperm.xlu0 %7250, %v746
    %v7252 = vpop.permute.xlu0 %7251
    %7255 = vset.pattern.permute.xlu0 0
    %7256 = vperm.xlu0 %7255, %v747
    %v7257 = vpop.permute.xlu0 %7256
    %7260 = vset.pattern.permute.xlu0 0
    %7261 = vperm.xlu0 %7260, %v748
    %v7262 = vpop.permute.xlu0 %7261
    %7265 = vset.pattern.permute.xlu0 0
    %7266 = vperm.xlu0 %7265, %v749
    %v7267 = vpop.permute.xlu0 %7266
    %7270 = vset.pattern.permute.xlu0 0
    %7271 = vperm.xlu0 %7270, %v750
    %v7272 = vpop.permute.xlu0 %7271
    %7275 = vset.pattern.permute.xlu0 0
    %7276 = vperm.xlu0 %7275, %v751
    %v7277 = vpop.permute.xlu0 %7276
    %7280 = vset.pattern.permute.xlu0 0
    %7281 = vperm.xlu0 %7280, %v752
    %v7282 = vpop.permute.xlu0 %7281
    %7285 = vset.pattern.permute.xlu0 0
    %7286 = vperm.xlu0 %7285, %v753
    %v7287 = vpop.permute.xlu0 %7286
    %7290 = vset.pattern.permute.xlu0 0
    %7291 = vperm.xlu0 %7290, %v754
    %v7292 = vpop.permute.xlu0 %7291
    %7295 = vset.pattern.permute.xlu0 0
    %7296 = vperm.xlu0 %7295, %v755
    %v7297 = vpop.permute.xlu0 %7296
    %7300 = vset.pattern.permute.xlu0 0
    %7301 = vperm.xlu0 %7300, %v756
    %v7302 = vpop.permute.xlu0 %7301
    %7305 = vset.pattern.permute.xlu0 0
    %7306 = vperm.xlu0 %7305, %v757
    %v7307 = vpop.permute.xlu0 %7306
    %7310 = vset.pattern.permute.xlu0 0
    %7311 = vperm.xlu0 %7310, %v758
    %v7312 = vpop.permute.xlu0 %7311
    %7315 = vset.pattern.permute.xlu0 0
    %7316 = vperm.xlu0 %7315, %v759
    %v7317 = vpop.permute.xlu0 %7316
    %7320 = vset.pattern.permute.xlu0 0
    %7321 = vperm.xlu0 %7320, %v760
    %v7322 = vpop.permute.xlu0 %7321
    %7325 = vset.pattern.permute.xlu0 0
    %7326 = vperm.xlu0 %7325, %v761
    %v7327 = vpop.permute.xlu0 %7326
    %7330 = vset.pattern.permute.xlu0 0
    %7331 = vperm.xlu0 %7330, %v762
    %v7332 = vpop.permute.xlu0 %7331
    %7335 = vset.pattern.permute.xlu0 0
    %7336 = vperm.xlu0 %7335, %v763
    %v7337 = vpop.permute.xlu0 %7336
    %7340 = vset.pattern.permute.xlu0 0
    %7341 = vperm.xlu0 %7340, %v764
    %v7342 = vpop.permute.xlu0 %7341
    %7345 = vset.pattern.permute.xlu0 0
    %7346 = vperm.xlu0 %7345, %v765
    %v7347 = vpop.permute.xlu0 %7346
    %7350 = vset.pattern.permute.xlu0 0
    %7351 = vperm.xlu0 %7350, %v766
    %v7352 = vpop.permute.xlu0 %7351
    %v7354 = vmul.f32 %v847, %v7202
    %v7355 = vmul.f32 %v852, %v7203
    %v7356 = vmul.f32 %v857, %v7204
    %v7357 = vmul.f32 %v862, %v7205
    %v7358 = vmul.f32 %v867, %v7206
    %v7359 = vmul.f32 %v872, %v7207
    %v7360 = vmul.f32 %v877, %v7208
    %v7361 = vmul.f32 %v882, %v7209
    %v7362 = vmul.f32 %v7237, %v7210
    %v7363 = vmul.f32 %v7242, %v7211
    %v7364 = vmul.f32 %v7247, %v7212
    %v7365 = vmul.f32 %v7252, %v7213
    %v7366 = vmul.f32 %v7257, %v7214
    %v7367 = vmul.f32 %v7262, %v7215
    %v7368 = vmul.f32 %v7267, %v7216
    %v7369 = vmul.f32 %v7272, %v7217
    %v7370 = vmul.f32 %v7277, %v7218
    %v7371 = vmul.f32 %v7282, %v7219
    %v7372 = vmul.f32 %v7287, %v7220
    %v7373 = vmul.f32 %v7292, %v7221
    %v7374 = vmul.f32 %v7297, %v7222
    %v7375 = vmul.f32 %v7302, %v7223
    %v7376 = vmul.f32 %v7307, %v7224
    %v7377 = vmul.f32 %v7312, %v7225
    %v7378 = vmul.f32 %v7317, %v7226
    %v7379 = vmul.f32 %v7322, %v7227
    %v7380 = vmul.f32 %v7327, %v7228
    %v7381 = vmul.f32 %v7332, %v7229
    %v7382 = vmul.f32 %v7337, %v7230
    %v7383 = vmul.f32 %v7342, %v7231
    %v7384 = vmul.f32 %v7347, %v7232
    %v7385 = vmul.f32 %v7352, %v7233
    %7387 = vset.pattern.permute.xlu0 0
    %7388 = vperm.xlu0 %7387, %v776
    %v7389 = vpop.permute.xlu0 %7388
    %7392 = vset.pattern.permute.xlu0 0
    %7393 = vperm.xlu0 %7392, %v777
    %v7394 = vpop.permute.xlu0 %7393
    %7397 = vset.pattern.permute.xlu0 0
    %7398 = vperm.xlu0 %7397, %v778
    %v7399 = vpop.permute.xlu0 %7398
    %7402 = vset.pattern.permute.xlu0 0
    %7403 = vperm.xlu0 %7402, %v779
    %v7404 = vpop.permute.xlu0 %7403
    %7407 = vset.pattern.permute.xlu0 0
    %7408 = vperm.xlu0 %7407, %v780
    %v7409 = vpop.permute.xlu0 %7408
    %7412 = vset.pattern.permute.xlu0 0
    %7413 = vperm.xlu0 %7412, %v781
    %v7414 = vpop.permute.xlu0 %7413
    %7417 = vset.pattern.permute.xlu0 0
    %7418 = vperm.xlu0 %7417, %v782
    %v7419 = vpop.permute.xlu0 %7418
    %7422 = vset.pattern.permute.xlu0 0
    %7423 = vperm.xlu0 %7422, %v783
    %v7424 = vpop.permute.xlu0 %7423
    %7427 = vset.pattern.permute.xlu0 0
    %7428 = vperm.xlu0 %7427, %v784
    %v7429 = vpop.permute.xlu0 %7428
    %7432 = vset.pattern.permute.xlu0 0
    %7433 = vperm.xlu0 %7432, %v785
    %v7434 = vpop.permute.xlu0 %7433
    %7437 = vset.pattern.permute.xlu0 0
    %7438 = vperm.xlu0 %7437, %v786
    %v7439 = vpop.permute.xlu0 %7438
    %7442 = vset.pattern.permute.xlu0 0
    %7443 = vperm.xlu0 %7442, %v787
    %v7444 = vpop.permute.xlu0 %7443
    %7447 = vset.pattern.permute.xlu0 0
    %7448 = vperm.xlu0 %7447, %v788
    %v7449 = vpop.permute.xlu0 %7448
    %7452 = vset.pattern.permute.xlu0 0
    %7453 = vperm.xlu0 %7452, %v789
    %v7454 = vpop.permute.xlu0 %7453
    %7457 = vset.pattern.permute.xlu0 0
    %7458 = vperm.xlu0 %7457, %v790
    %v7459 = vpop.permute.xlu0 %7458
    %7462 = vset.pattern.permute.xlu0 0
    %7463 = vperm.xlu0 %7462, %v791
    %v7464 = vpop.permute.xlu0 %7463
    %7467 = vset.pattern.permute.xlu0 0
    %7468 = vperm.xlu0 %7467, %v792
    %v7469 = vpop.permute.xlu0 %7468
    %7472 = vset.pattern.permute.xlu0 0
    %7473 = vperm.xlu0 %7472, %v793
    %v7474 = vpop.permute.xlu0 %7473
    %7477 = vset.pattern.permute.xlu0 0
    %7478 = vperm.xlu0 %7477, %v794
    %v7479 = vpop.permute.xlu0 %7478
    %7482 = vset.pattern.permute.xlu0 0
    %7483 = vperm.xlu0 %7482, %v795
    %v7484 = vpop.permute.xlu0 %7483
    %7487 = vset.pattern.permute.xlu0 0
    %7488 = vperm.xlu0 %7487, %v796
    %v7489 = vpop.permute.xlu0 %7488
    %7492 = vset.pattern.permute.xlu0 0
    %7493 = vperm.xlu0 %7492, %v797
    %v7494 = vpop.permute.xlu0 %7493
    %7497 = vset.pattern.permute.xlu0 0
    %7498 = vperm.xlu0 %7497, %v798
    %v7499 = vpop.permute.xlu0 %7498
    %7502 = vset.pattern.permute.xlu0 0
    %7503 = vperm.xlu0 %7502, %v799
    %v7504 = vpop.permute.xlu0 %7503
    %v7506 = vmul.f32 %v896, %v7202
    %v7507 = vmul.f32 %v901, %v7203
    %v7508 = vmul.f32 %v906, %v7204
    %v7509 = vmul.f32 %v911, %v7205
    %v7510 = vmul.f32 %v916, %v7206
    %v7511 = vmul.f32 %v921, %v7207
    %v7512 = vmul.f32 %v926, %v7208
    %v7513 = vmul.f32 %v931, %v7209
    %v7514 = vmul.f32 %v7389, %v7210
    %v7515 = vmul.f32 %v7394, %v7211
    %v7516 = vmul.f32 %v7399, %v7212
    %v7517 = vmul.f32 %v7404, %v7213
    %v7518 = vmul.f32 %v7409, %v7214
    %v7519 = vmul.f32 %v7414, %v7215
    %v7520 = vmul.f32 %v7419, %v7216
    %v7521 = vmul.f32 %v7424, %v7217
    %v7522 = vmul.f32 %v7429, %v7218
    %v7523 = vmul.f32 %v7434, %v7219
    %v7524 = vmul.f32 %v7439, %v7220
    %v7525 = vmul.f32 %v7444, %v7221
    %v7526 = vmul.f32 %v7449, %v7222
    %v7527 = vmul.f32 %v7454, %v7223
    %v7528 = vmul.f32 %v7459, %v7224
    %v7529 = vmul.f32 %v7464, %v7225
    %v7530 = vmul.f32 %v7469, %v7226
    %v7531 = vmul.f32 %v7474, %v7227
    %v7532 = vmul.f32 %v7479, %v7228
    %v7533 = vmul.f32 %v7484, %v7229
    %v7534 = vmul.f32 %v7489, %v7230
    %v7535 = vmul.f32 %v7494, %v7231
    %v7536 = vmul.f32 %v7499, %v7232
    %v7537 = vmul.f32 %v7504, %v7233
    %v7538 = vadd.f32 %v7354, %v7355
    %v7539 = vadd.f32 %v7538, %v7356
    %v7540 = vadd.f32 %v7539, %v7357
    %v7541 = vadd.f32 %v7540, %v7358
    %v7542 = vadd.f32 %v7541, %v7359
    %v7543 = vadd.f32 %v7542, %v7360
    %v7544 = vadd.f32 %v7543, %v7361
    %v7545 = vrot.slane %v7544, 4
    %v7546 = vadd.f32 %v7544, %v7545
    %v7547 = vrot.slane %v7546, 2
    %v7548 = vadd.f32 %v7546, %v7547
    %v7549 = vrot.slane %v7548, 1
    %v7550 = vadd.f32 %v7548, %v7549
    %v7551 = vadd.f32 %v7506, %v7507
    %v7552 = vadd.f32 %v7551, %v7508
    %v7553 = vadd.f32 %v7552, %v7509
    %v7554 = vadd.f32 %v7553, %v7510
    %v7555 = vadd.f32 %v7554, %v7511
    %v7556 = vadd.f32 %v7555, %v7512
    %v7557 = vadd.f32 %v7556, %v7513
    %v7558 = vrot.slane %v7557, 4
    %v7559 = vadd.f32 %v7557, %v7558
    %v7560 = vrot.slane %v7559, 2
    %v7561 = vadd.f32 %v7559, %v7560
    %v7562 = vrot.slane %v7561, 1
    %v7563 = vadd.f32 %v7561, %v7562
    %7564 = vst [vmem:[%s6] sm:$0x1] %v7550
    %7565 = vst [vmem:[%s6 + $0x4] sm:$0x1] %v7563
    %v7566 = vadd.f32 %v7362, %v7363
    %v7567 = vadd.f32 %v7566, %v7364
    %v7568 = vadd.f32 %v7567, %v7365
    %v7569 = vadd.f32 %v7568, %v7366
    %v7570 = vadd.f32 %v7569, %v7367
    %v7571 = vadd.f32 %v7570, %v7368
    %v7572 = vadd.f32 %v7571, %v7369
    %v7573 = vrot.slane %v7572, 4
    %v7574 = vadd.f32 %v7572, %v7573
    %v7575 = vrot.slane %v7574, 2
    %v7576 = vadd.f32 %v7574, %v7575
    %v7577 = vrot.slane %v7576, 1
    %v7578 = vadd.f32 %v7576, %v7577
    %v7579 = vadd.f32 %v7514, %v7515
    %v7580 = vadd.f32 %v7579, %v7516
    %v7581 = vadd.f32 %v7580, %v7517
    %v7582 = vadd.f32 %v7581, %v7518
    %v7583 = vadd.f32 %v7582, %v7519
    %v7584 = vadd.f32 %v7583, %v7520
    %v7585 = vadd.f32 %v7584, %v7521
    %v7586 = vrot.slane %v7585, 4
    %v7587 = vadd.f32 %v7585, %v7586
    %v7588 = vrot.slane %v7587, 2
    %v7589 = vadd.f32 %v7587, %v7588
    %v7590 = vrot.slane %v7589, 1
    %v7591 = vadd.f32 %v7589, %v7590
    %7592 = vst [vmem:[%s6 + $0x1] sm:$0x1] %v7578
    %7593 = vst [vmem:[%s6 + $0x5] sm:$0x1] %v7591
    %v7594 = vadd.f32 %v7370, %v7371
    %v7595 = vadd.f32 %v7594, %v7372
    %v7596 = vadd.f32 %v7595, %v7373
    %v7597 = vadd.f32 %v7596, %v7374
    %v7598 = vadd.f32 %v7597, %v7375
    %v7599 = vadd.f32 %v7598, %v7376
    %v7600 = vadd.f32 %v7599, %v7377
    %v7601 = vrot.slane %v7600, 4
    %v7602 = vadd.f32 %v7600, %v7601
    %v7603 = vrot.slane %v7602, 2
    %v7604 = vadd.f32 %v7602, %v7603
    %v7605 = vrot.slane %v7604, 1
    %v7606 = vadd.f32 %v7604, %v7605
    %v7607 = vadd.f32 %v7522, %v7523
    %v7608 = vadd.f32 %v7607, %v7524
    %v7609 = vadd.f32 %v7608, %v7525
    %v7610 = vadd.f32 %v7609, %v7526
    %v7611 = vadd.f32 %v7610, %v7527
    %v7612 = vadd.f32 %v7611, %v7528
    %v7613 = vadd.f32 %v7612, %v7529
    %v7614 = vrot.slane %v7613, 4
    %v7615 = vadd.f32 %v7613, %v7614
    %v7616 = vrot.slane %v7615, 2
    %v7617 = vadd.f32 %v7615, %v7616
    %v7618 = vrot.slane %v7617, 1
    %v7619 = vadd.f32 %v7617, %v7618
    %7620 = vst [vmem:[%s6 + $0x2] sm:$0x1] %v7606
    %7621 = vst [vmem:[%s6 + $0x6] sm:$0x1] %v7619
    %v7622 = vadd.f32 %v7378, %v7379
    %v7623 = vadd.f32 %v7622, %v7380
    %v7624 = vadd.f32 %v7623, %v7381
    %v7625 = vadd.f32 %v7624, %v7382
    %v7626 = vadd.f32 %v7625, %v7383
    %v7627 = vadd.f32 %v7626, %v7384
    %v7628 = vadd.f32 %v7627, %v7385
    %v7629 = vrot.slane %v7628, 4
    %v7630 = vadd.f32 %v7628, %v7629
    %v7631 = vrot.slane %v7630, 2
    %v7632 = vadd.f32 %v7630, %v7631
    %v7633 = vrot.slane %v7632, 1
    %v7634 = vadd.f32 %v7632, %v7633
    %v7635 = vadd.f32 %v7530, %v7531
    %v7636 = vadd.f32 %v7635, %v7532
    %v7637 = vadd.f32 %v7636, %v7533
    %v7638 = vadd.f32 %v7637, %v7534
    %v7639 = vadd.f32 %v7638, %v7535
    %v7640 = vadd.f32 %v7639, %v7536
    %v7641 = vadd.f32 %v7640, %v7537
    %v7642 = vrot.slane %v7641, 4
    %v7643 = vadd.f32 %v7641, %v7642
    %v7644 = vrot.slane %v7643, 2
    %v7645 = vadd.f32 %v7643, %v7644
    %v7646 = vrot.slane %v7645, 1
    %v7647 = vadd.f32 %v7645, %v7646
    %7648 = vst [vmem:[%s6 + $0x3] sm:$0x1] %v7634
    %7649 = vst [vmem:[%s6 + $0x7] sm:$0x1] %v7647
    // Predicated region
    $region42: #{_lambda_.1} parent=1 // pred_check
      _
    $region43: #{_lambda_.1} parent=1 // pred_check_branch
      %7651 = sbr.rel (0) target = $region45
    $region44: #{_lambda_.1} parent=1 // pred_region
      _
    $region45: #{_lambda_.1} parent=1 // pred_fallthru
      _
    // Predicated region
    $region46: #{_lambda_.1} parent=1 // pred_check
      _
    $region47: #{_lambda_.1} parent=1 // pred_check_branch
      %7653 = sbr.rel (0) target = $region49
    $region48: #{_lambda_.1} parent=1 // pred_region
      _
    $region49: #{_lambda_.1} parent=1 // pred_fallthru
      _
    %7654 = vsyncpa [#allocation3], 1
    %7655 = vsyncpa [#allocation5], 1
    %7656 = vsyncpa [#allocation8], 1

</llo_original>
